<compile_context>
chip_gen: v7x
topology: tpu7x:2x2x1
jax: 0.10.0
libtpu: 0.0.40
codegen_flags: <defaults>
</compile_context>

<pallas_src>
import numpy as np

import jax
import jax.numpy as jnp
from jax import lax
from jax.experimental import pallas as pl
from jax.experimental.pallas import tpu as pltpu


# ----------------------------- Pallas kernel ------------------------------- #

def _convnet_fused_kernel(
    x_ref,
    t1_ref, r1_ref, p1_ref, a1_ref, hs1_ref,
    t2_ref, r2_ref, p2_ref, a2_ref, hs2_ref,
    t3_ref, r3_ref, p3_ref, a3_ref, hs3_ref,
    w1_ref, b1_ref, w2_ref, b2_ref,
    o_ref,
):
    f32 = jnp.float32

    def conv_bn_relu_pool(x, t_ref, r_ref, p_ref, a_ref, hs_ref):
        # x: (H, W*Cin) wide feature map of one image (channels fastest on lanes).
        # 3x3 'same' conv == sum over the 3 row taps kh of   R[kh] @ (x @ T[kh])
        # where T[kh] is the block-Toeplitz (W*Cin, W*Cout) column-tap weight and
        # R[kh] an (H, H) 0/1 row-shift matrix (its zero rows realize the zero pad).
        z = jnp.dot(r_ref[0],
                    jnp.dot(x, t_ref[0], preferred_element_type=f32),
                    preferred_element_type=f32)
        for kh in (1, 2):
            z = z + jnp.dot(r_ref[kh],
                            jnp.dot(x, t_ref[kh], preferred_element_type=f32),
                            preferred_element_type=f32)
        # fused BatchNorm affine + ReLU (f32, VPU)
        z = jnp.maximum(z * a_ref[0] + a_ref[1], 0.0)
        # 2x2 max pool: column pairs via 0/1 selection right-matmuls, row pairs
        # via 0/1 selection left-matmuls, elementwise max -- no strided or
        # sublane-relayout ops anywhere.
        zc = jnp.maximum(jnp.dot(z, p_ref[0], preferred_element_type=f32),
                         jnp.dot(z, p_ref[1], preferred_element_type=f32))
        return jnp.maximum(jnp.dot(hs_ref[0], zc, preferred_element_type=f32),
                           jnp.dot(hs_ref[1], zc, preferred_element_type=f32))

    x = x_ref[0]                                                        # (32, 96)
    x = conv_bn_relu_pool(x, t1_ref, r1_ref, p1_ref, a1_ref, hs1_ref)   # (16, 256)
    x = conv_bn_relu_pool(x, t2_ref, r2_ref, p2_ref, a2_ref, hs2_ref)   # (8, 256)
    x = conv_bn_relu_pool(x, t3_ref, r3_ref, p3_ref, a3_ref, hs3_ref)   # (4, 256)

    # Flatten (4, 256) -> (1, 1024): one-hot row-selection matmuls + lane concat
    # (avoids a sublane->lane relayout reshape).  Lane order is (h, w, c); the
    # matching permutation of fc1's rows is folded in at init time.
    row_ids = lax.broadcasted_iota(jnp.int32, (1, 4), 1)
    feat = jnp.concatenate(
        [jnp.dot((row_ids == r).astype(f32), x, preferred_element_type=f32)
         for r in range(4)], axis=1)                                    # (1, 1024)

    h = jnp.maximum(
        jnp.dot(feat, w1_ref[...], preferred_element_type=f32) + b1_ref[...], 0.0)
    # TODO(synk): training-mode Dropout(0.5) would use pltpu.prng_seed /
    # pltpu.prng_random_bits here; eval-mode dropout is the identity.
    logits = jnp.dot(h, w2_ref[...], preferred_element_type=f32) + b2_ref[...]
    o_ref[...] = logits.reshape(1, 1, 128)                   # lane-dense store


# ------------------------------ JAX wrapper -------------------------------- #

def _vmem_limit_bytes(resident_bytes):
    """Generation-aware VMEM budget (v7x: 64 MiB/core vs 128 MiB on v5e/v6e)."""
    try:
        cap = int(pltpu.get_tpu_info().vmem_capacity_bytes)
    except Exception:
        cap = 64 << 20
    need = 2 * int(resident_bytes) + (8 << 20)   # double-buffered blocks + slack
    return int(min(max(need, 32 << 20), int(0.85 * cap)))


def _const_spec(arr):
    nd = arr.ndim
    return pl.BlockSpec(tuple(arr.shape), lambda b, n=nd: (0,) * n)


@jax.jit
def convnet_forward(x_nchw, kp):
    n, c, hh, ww = x_nchw.shape
    assert (c, hh, ww) == (3, 32, 32), "fc1 = Linear(64*4*4, 256) needs 3x32x32 input"
    # NCHW -> per-image "wide" rows: (N, H, W*C), channels fastest on lanes.
    x_wide = jnp.transpose(x_nchw, (0, 2, 3, 1)).reshape(n, 32, 96).astype(jnp.float32)

    operands = [x_wide]
    in_specs = [pl.BlockSpec((1, 32, 96), lambda b: (b, 0, 0))]
    for s in ("s1", "s2", "s3"):
        for name in ("t", "r", "p", "a", "hs"):
            arr = kp[s][name]
            operands.append(arr)
            in_specs.append(_const_spec(arr))
    for name in ("w1", "b1", "w2", "b2"):
        arr = kp[name]
        operands.append(arr)
        in_specs.append(_const_spec(arr))

    resident = sum(int(np.prod(a.shape)) * a.dtype.itemsize for a in operands[1:])

    # advisory cost estimate (structured-matmul FLOPs, ~10x the "ideal" conv)
    flops_img = 2 * 1024 * 256 + 2 * 256 * 128
    for s, h_s in (("s1", 32), ("s2", 16), ("s3", 8)):
        t, p = kp[s]["t"], kp[s]["p"]
        flops_img += 3 * 2 * h_s * t.shape[1] * t.shape[2]     # column-tap matmuls
        flops_img += 3 * 2 * h_s * h_s * t.shape[2]            # row-tap matmuls
        flops_img += 2 * 2 * h_s * p.shape[1] * p.shape[2]     # width-pool matmuls
        flops_img += 2 * 2 * (h_s // 2) * h_s * p.shape[2]     # height-pool matmuls

    out = pl.pallas_call(
        _convnet_fused_kernel,
        out_shape=jax.ShapeDtypeStruct((n, 1, 128), jnp.float32),
        grid_spec=pltpu.PrefetchScalarGridSpec(
            num_scalar_prefetch=0,
            grid=(n,),                         # >= 2 steps -> v7x megacore engages
            in_specs=in_specs,
            out_specs=pl.BlockSpec((1, 1, 128), lambda b: (b, 0, 0)),
        ),
        compiler_params=pltpu.CompilerParams(
            dimension_semantics=("parallel",),
            vmem_limit_bytes=_vmem_limit_bytes(resident),
        ),
        cost_estimate=pl.CostEstimate(
            flops=n * flops_img,
            transcendentals=0,
            bytes_accessed=resident + n * (32 * 96 * 4 + 128 * 4),
        ),
    )(*operands)
    return out[:, 0, :10]


# --------------------------- parameters / setup ---------------------------- #

def init_params(key):
    """Raw parameters in the PyTorch module's native layouts."""
    ks = jax.random.split(key, 13)

    def conv_init(kw, kb, cin, cout):
        bound = 1.0 / (cin * 9) ** 0.5
        w = jax.random.uniform(kw, (cout, cin, 3, 3), jnp.float32, -bound, bound)
        b = jax.random.uniform(kb, (cout,), jnp.float32, -bound, bound)
        return w, b

    def bn_init(k, c):
        k1, k2, k3, k4 = jax.random.split(k, 4)
        gamma = 1.0 + 0.1 * jax.random.normal(k1, (c,), jnp.float32)
        beta = 0.1 * jax.random.normal(k2, (c,), jnp.float32)
        mean = 0.1 * jax.random.normal(k3, (c,), jnp.float32)
        var = 1.0 + 0.1 * jax.random.uniform(k4, (c,), jnp.float32)
        return gamma, beta, mean, var

    raw = {}
    for i, (cin, cout) in enumerate([(3, 16), (16, 32), (32, 64)]):
        w, b = conv_init(ks[3 * i], ks[3 * i + 1], cin, cout)
        raw[f"conv{i + 1}"] = (w, b) + bn_init(ks[3 * i + 2], cout)

    def linear_init(kw, kb, fin, fout):
        bound = 1.0 / fin ** 0.5
        w = jax.random.uniform(kw, (fin, fout), jnp.float32, -bound, bound)
        b = jax.random.uniform(kb, (1, fout), jnp.float32, -bound, bound)
        return w, b

    w1, b1 = linear_init(ks[9], ks[10], 64 * 4 * 4, 256)   # rows in torch (c,h,w) order
    w2, b2 = linear_init(ks[11], ks[12], 256, 10)
    raw["fc"] = (w1, b1, w2, b2)
    return raw


def build_kernel_params(raw, eps=1e-5):
    """Host-precomputed structured matrices for the fused kernel."""
    kp = {}
    widths = {1: 32, 2: 16, 3: 8}
    for i in (1, 2, 3):
        w, b, gamma, beta, mean, var = (
            np.asarray(jax.device_get(a), np.float32) for a in raw[f"conv{i}"])
        width = widths[i]
        cout, cin = w.shape[0], w.shape[1]

        # column-tap block-Toeplitz weights: T[kh][(w,ci),(w',co)] = W[co,ci,kh,w-w'+1]
        t = np.zeros((3, width * cin, width * cout), np.float32)
        for kh in range(3):
            for kw in range(3):
                t[kh] += np.kron(np.eye(width, k=1 - kw, dtype=np.float32),
                                 w[:, :, kh, kw].T)
        # row-tap shift matrices (zero rows encode the 'same' zero padding)
        r = np.stack([np.eye(width, k=kh - 1, dtype=np.float32) for kh in range(3)])
        # 2x2 max-pool pair-selection matrices (columns: right-matmul; rows: left)
        eye_w = np.eye(width, dtype=np.float32)
        pe = np.kron(eye_w[:, 0::2], np.eye(cout, dtype=np.float32))
        po = np.kron(eye_w[:, 1::2], np.eye(cout, dtype=np.float32))
        ha, hb = eye_w[0::2, :], eye_w[1::2, :]
        # fused BatchNorm affine, tiled over the wide (w, c) lane order
        scale = gamma / np.sqrt(var + eps)
        shift = (b - mean) * scale + beta
        a = np.stack([np.tile(scale, width), np.tile(shift, width)])[:, None, :]

        kp[f"s{i}"] = {
            "t": jnp.asarray(t),
            "r": jnp.asarray(r),
            "p": jnp.asarray(np.stack([pe, po])),
            "a": jnp.asarray(a),
            "hs": jnp.asarray(np.stack([ha, hb])),
        }

    w1, b1, w2, b2 = (np.asarray(jax.device_get(a), np.float32) for a in raw["fc"])
    # fold torch's NCHW x.view(N,-1) row order (c,h,w) into fc1's rows so the
    # kernel's (h,w,c) lane-concat flatten needs no transpose
    w1 = w1.reshape(64, 4, 4, 256).transpose(1, 2, 0, 3).reshape(1024, 256)
    # pad fc2 to 128 lane-dense output columns; host slices logits[:, :10]
    w2p = np.zeros((256, 128), np.float32)
    w2p[:, :10] = w2
    b2p = np.zeros((1, 128), np.float32)
    b2p[:, :10] = b2
    kp["w1"] = jnp.asarray(w1)
    kp["b1"] = jnp.asarray(b1)
    kp["w2"] = jnp.asarray(w2p)
    kp["b2"] = jnp.asarray(b2p)
    return kp


# ------------------------ pure-JAX reference (check) ------------------------ #

def reference_forward(x_nchw, raw, eps=1e-5):
    hp = lax.Precision.HIGHEST
    x = x_nchw.astype(jnp.float32)
    for i in (1, 2, 3):
        w, b, gamma, beta, mean, var = raw[f"conv{i}"]
        y = lax.conv_general_dilated(
            x, w, (1, 1), "SAME",
            dimension_numbers=("NCHW", "OIHW", "NCHW"), precision=hp)
        y = y + b[None, :, None, None]
        y = (y - mean[None, :, None, None]) \
            * (gamma / jnp.sqrt(var + eps))[None, :, None, None] \
            + beta[None, :, None, None]
        y = jnp.maximum(y, 0.0)
        x = lax.reduce_window(y, -jnp.inf, lax.max,
                              (1, 1, 2, 2), (1, 1, 2, 2), "VALID")
    w1, b1, w2, b2 = raw["fc"]
    feat = x.reshape(x.shape[0], -1)                 # torch NCHW .view(N, -1)
    h = jnp.maximum(jnp.dot(feat, w1, precision=hp) + b1, 0.0)
    return jnp.dot(h, w2, precision=hp) + b2


# ---------------------------------- main ------------------------------------ #

if __name__ == "__main__":
    key = jax.random.PRNGKey(0)
    k_params, k_x = jax.random.split(key)
    raw = init_params(k_params)
    kparams = build_kernel_params(raw)

    # CIFAR-10-shaped input (spatial 32 is required by fc1 = Linear(64*4*4, 256)).
    x = jax.random.normal(k_x, (2, 3, 32, 32), jnp.float32)      # NCHW like PyTorch

    logits = convnet_forward(x, kparams)
    logits = jax.block_until_ready(logits)
    assert logits.shape == (2, 10) and logits.dtype == jnp.float32

    ref = reference_forward(x, raw)
    np.testing.assert_allclose(np.asarray(logits), np.asarray(ref),
                               rtol=5e-3, atol=5e-3)
    print("KERNEL_OK")
</pallas_src>

<mosaic_0001>
module attributes {stable_mosaic.version = 11 : i64} {
  func.func @_convnet_fused_kernel(%arg0: i32, %arg1: memref<1x32x96xf32, #tpu.memory_space<vmem>>, %arg2: memref<3x96x512xf32, #tpu.memory_space<vmem>>, %arg3: memref<3x32x32xf32, #tpu.memory_space<vmem>>, %arg4: memref<2x512x256xf32, #tpu.memory_space<vmem>>, %arg5: memref<2x1x512xf32, #tpu.memory_space<vmem>>, %arg6: memref<2x16x32xf32, #tpu.memory_space<vmem>>, %arg7: memref<3x256x512xf32, #tpu.memory_space<vmem>>, %arg8: memref<3x16x16xf32, #tpu.memory_space<vmem>>, %arg9: memref<2x512x256xf32, #tpu.memory_space<vmem>>, %arg10: memref<2x1x512xf32, #tpu.memory_space<vmem>>, %arg11: memref<2x8x16xf32, #tpu.memory_space<vmem>>, %arg12: memref<3x256x512xf32, #tpu.memory_space<vmem>>, %arg13: memref<3x8x8xf32, #tpu.memory_space<vmem>>, %arg14: memref<2x512x256xf32, #tpu.memory_space<vmem>>, %arg15: memref<2x1x512xf32, #tpu.memory_space<vmem>>, %arg16: memref<2x4x8xf32, #tpu.memory_space<vmem>>, %arg17: memref<1024x256xf32, #tpu.memory_space<vmem>>, %arg18: memref<1x256xf32, #tpu.memory_space<vmem>>, %arg19: memref<256x128xf32, #tpu.memory_space<vmem>>, %arg20: memref<1x128xf32, #tpu.memory_space<vmem>>, %arg21: memref<1x1x128xf32, #tpu.memory_space<vmem>>) attributes {dimension_semantics = [#tpu.dimension_semantics<parallel>], iteration_bounds = array<i64: 2>, scalar_prefetch = 0 : i64, scratch_operands = 0 : i64, tpu.core_type = #tpu.core_type<tc>, window_params = [{transform_indices = @transform_0, window_bounds = array<i64: 1, 32, 96>}, {pipeline_mode = #tpu.pipeline_mode<synchronous>, transform_indices = @transform_1, window_bounds = array<i64: 3, 96, 512>}, {pipeline_mode = #tpu.pipeline_mode<synchronous>, transform_indices = @transform_2, window_bounds = array<i64: 3, 32, 32>}, {pipeline_mode = #tpu.pipeline_mode<synchronous>, transform_indices = @transform_3, window_bounds = array<i64: 2, 512, 256>}, {pipeline_mode = #tpu.pipeline_mode<synchronous>, transform_indices = @transform_4, window_bounds = array<i64: 2, 1, 512>}, {pipeline_mode = #tpu.pipeline_mode<synchronous>, transform_indices = @transform_5, window_bounds = array<i64: 2, 16, 32>}, {pipeline_mode = #tpu.pipeline_mode<synchronous>, transform_indices = @transform_6, window_bounds = array<i64: 3, 256, 512>}, {pipeline_mode = #tpu.pipeline_mode<synchronous>, transform_indices = @transform_7, window_bounds = array<i64: 3, 16, 16>}, {pipeline_mode = #tpu.pipeline_mode<synchronous>, transform_indices = @transform_8, window_bounds = array<i64: 2, 512, 256>}, {pipeline_mode = #tpu.pipeline_mode<synchronous>, transform_indices = @transform_9, window_bounds = array<i64: 2, 1, 512>}, {pipeline_mode = #tpu.pipeline_mode<synchronous>, transform_indices = @transform_10, window_bounds = array<i64: 2, 8, 16>}, {pipeline_mode = #tpu.pipeline_mode<synchronous>, transform_indices = @transform_11, window_bounds = array<i64: 3, 256, 512>}, {pipeline_mode = #tpu.pipeline_mode<synchronous>, transform_indices = @transform_12, window_bounds = array<i64: 3, 8, 8>}, {pipeline_mode = #tpu.pipeline_mode<synchronous>, transform_indices = @transform_13, window_bounds = array<i64: 2, 512, 256>}, {pipeline_mode = #tpu.pipeline_mode<synchronous>, transform_indices = @transform_14, window_bounds = array<i64: 2, 1, 512>}, {pipeline_mode = #tpu.pipeline_mode<synchronous>, transform_indices = @transform_15, window_bounds = array<i64: 2, 4, 8>}, {pipeline_mode = #tpu.pipeline_mode<synchronous>, transform_indices = @transform_16, window_bounds = array<i64: 1024, 256>}, {pipeline_mode = #tpu.pipeline_mode<synchronous>, transform_indices = @transform_17, window_bounds = array<i64: 1, 256>}, {pipeline_mode = #tpu.pipeline_mode<synchronous>, transform_indices = @transform_18, window_bounds = array<i64: 256, 128>}, {pipeline_mode = #tpu.pipeline_mode<synchronous>, transform_indices = @transform_19, window_bounds = array<i64: 1, 128>}, {transform_indices = @transform_20, window_bounds = array<i64: 1, 1, 128>}]} {
    %c0 = arith.constant 0 : index
    %c0_0 = arith.constant 0 : index
    %c0_1 = arith.constant 0 : index
    %0 = vector.load %arg1[%c0, %c0_0, %c0_1] : memref<1x32x96xf32, #tpu.memory_space<vmem>>, vector<1x32x96xf32>
    %1 = vector.shape_cast %0 : vector<1x32x96xf32> to vector<32x96xf32>
    %c0_2 = arith.constant 0 : index
    %c0_3 = arith.constant 0 : index
    %c0_4 = arith.constant 0 : index
    %2 = vector.load %arg3[%c0_2, %c0_3, %c0_4] : memref<3x32x32xf32, #tpu.memory_space<vmem>>, vector<1x32x32xf32>
    %3 = vector.shape_cast %2 : vector<1x32x32xf32> to vector<32x32xf32>
    %c0_5 = arith.constant 0 : index
    %c0_6 = arith.constant 0 : index
    %c0_7 = arith.constant 0 : index
    %4 = vector.load %arg2[%c0_5, %c0_6, %c0_7] : memref<3x96x512xf32, #tpu.memory_space<vmem>>, vector<1x96x512xf32>
    %5 = vector.shape_cast %4 : vector<1x96x512xf32> to vector<96x512xf32>
    %cst = arith.constant dense<0.000000e+00> : vector<32x512xf32>
    %6 = tpu.matmul %1, %5, %cst {dimension_numbers = #tpu.dot_dimension_numbers<[1], [0], [0], [1], [0, 0, 1, 1], [], []>} : vector<32x96xf32>, vector<96x512xf32>, vector<32x512xf32> -> vector<32x512xf32>
    %cst_8 = arith.constant dense<0.000000e+00> : vector<32x512xf32>
    %7 = tpu.matmul %3, %6, %cst_8 {dimension_numbers = #tpu.dot_dimension_numbers<[1], [0], [0], [1], [0, 0, 1, 1], [], []>} : vector<32x32xf32>, vector<32x512xf32>, vector<32x512xf32> -> vector<32x512xf32>
    %c1 = arith.constant 1 : index
    %c0_9 = arith.constant 0 : index
    %c0_10 = arith.constant 0 : index
    %8 = vector.load %arg3[%c1, %c0_9, %c0_10] : memref<3x32x32xf32, #tpu.memory_space<vmem>>, vector<1x32x32xf32>
    %9 = vector.shape_cast %8 : vector<1x32x32xf32> to vector<32x32xf32>
    %c1_11 = arith.constant 1 : index
    %c0_12 = arith.constant 0 : index
    %c0_13 = arith.constant 0 : index
    %10 = vector.load %arg2[%c1_11, %c0_12, %c0_13] : memref<3x96x512xf32, #tpu.memory_space<vmem>>, vector<1x96x512xf32>
    %11 = vector.shape_cast %10 : vector<1x96x512xf32> to vector<96x512xf32>
    %cst_14 = arith.constant dense<0.000000e+00> : vector<32x512xf32>
    %12 = tpu.matmul %1, %11, %cst_14 {dimension_numbers = #tpu.dot_dimension_numbers<[1], [0], [0], [1], [0, 0, 1, 1], [], []>} : vector<32x96xf32>, vector<96x512xf32>, vector<32x512xf32> -> vector<32x512xf32>
    %cst_15 = arith.constant dense<0.000000e+00> : vector<32x512xf32>
    %13 = tpu.matmul %9, %12, %cst_15 {dimension_numbers = #tpu.dot_dimension_numbers<[1], [0], [0], [1], [0, 0, 1, 1], [], []>} : vector<32x32xf32>, vector<32x512xf32>, vector<32x512xf32> -> vector<32x512xf32>
    %14 = arith.addf %7, %13 : vector<32x512xf32>
    %c2 = arith.constant 2 : index
    %c0_16 = arith.constant 0 : index
    %c0_17 = arith.constant 0 : index
    %15 = vector.load %arg3[%c2, %c0_16, %c0_17] : memref<3x32x32xf32, #tpu.memory_space<vmem>>, vector<1x32x32xf32>
    %16 = vector.shape_cast %15 : vector<1x32x32xf32> to vector<32x32xf32>
    %c2_18 = arith.constant 2 : index
    %c0_19 = arith.constant 0 : index
    %c0_20 = arith.constant 0 : index
    %17 = vector.load %arg2[%c2_18, %c0_19, %c0_20] : memref<3x96x512xf32, #tpu.memory_space<vmem>>, vector<1x96x512xf32>
    %18 = vector.shape_cast %17 : vector<1x96x512xf32> to vector<96x512xf32>
    %cst_21 = arith.constant dense<0.000000e+00> : vector<32x512xf32>
    %19 = tpu.matmul %1, %18, %cst_21 {dimension_numbers = #tpu.dot_dimension_numbers<[1], [0], [0], [1], [0, 0, 1, 1], [], []>} : vector<32x96xf32>, vector<96x512xf32>, vector<32x512xf32> -> vector<32x512xf32>
    %cst_22 = arith.constant dense<0.000000e+00> : vector<32x512xf32>
    %20 = tpu.matmul %16, %19, %cst_22 {dimension_numbers = #tpu.dot_dimension_numbers<[1], [0], [0], [1], [0, 0, 1, 1], [], []>} : vector<32x32xf32>, vector<32x512xf32>, vector<32x512xf32> -> vector<32x512xf32>
    %21 = arith.addf %14, %20 : vector<32x512xf32>
    %c0_23 = arith.constant 0 : index
    %c0_24 = arith.constant 0 : index
    %c0_25 = arith.constant 0 : index
    %22 = vector.load %arg5[%c0_23, %c0_24, %c0_25] : memref<2x1x512xf32, #tpu.memory_space<vmem>>, vector<1x1x512xf32>
    %23 = vector.shape_cast %22 : vector<1x1x512xf32> to vector<1x512xf32>
    %24 = vector.broadcast %23 : vector<1x512xf32> to vector<32x512xf32>
    %25 = arith.mulf %21, %24 : vector<32x512xf32>
    %c1_26 = arith.constant 1 : index
    %c0_27 = arith.constant 0 : index
    %c0_28 = arith.constant 0 : index
    %26 = vector.load %arg5[%c1_26, %c0_27, %c0_28] : memref<2x1x512xf32, #tpu.memory_space<vmem>>, vector<1x1x512xf32>
    %27 = vector.shape_cast %26 : vector<1x1x512xf32> to vector<1x512xf32>
    %28 = vector.broadcast %27 : vector<1x512xf32> to vector<32x512xf32>
    %29 = arith.addf %25, %28 : vector<32x512xf32>
    %cst_29 = arith.constant 0.000000e+00 : f32
    %30 = vector.broadcast %cst_29 : f32 to vector<32x512xf32>
    %31 = arith.maximumf %29, %30 : vector<32x512xf32>
    %c0_30 = arith.constant 0 : index
    %c0_31 = arith.constant 0 : index
    %c0_32 = arith.constant 0 : index
    %32 = vector.load %arg4[%c0_30, %c0_31, %c0_32] : memref<2x512x256xf32, #tpu.memory_space<vmem>>, vector<1x512x256xf32>
    %33 = vector.shape_cast %32 : vector<1x512x256xf32> to vector<512x256xf32>
    %cst_33 = arith.constant dense<0.000000e+00> : vector<32x256xf32>
    %34 = tpu.matmul %31, %33, %cst_33 {dimension_numbers = #tpu.dot_dimension_numbers<[1], [0], [0], [1], [0, 0, 1, 1], [], []>} : vector<32x512xf32>, vector<512x256xf32>, vector<32x256xf32> -> vector<32x256xf32>
    %c1_34 = arith.constant 1 : index
    %c0_35 = arith.constant 0 : index
    %c0_36 = arith.constant 0 : index
    %35 = vector.load %arg4[%c1_34, %c0_35, %c0_36] : memref<2x512x256xf32, #tpu.memory_space<vmem>>, vector<1x512x256xf32>
    %36 = vector.shape_cast %35 : vector<1x512x256xf32> to vector<512x256xf32>
    %cst_37 = arith.constant dense<0.000000e+00> : vector<32x256xf32>
    %37 = tpu.matmul %31, %36, %cst_37 {dimension_numbers = #tpu.dot_dimension_numbers<[1], [0], [0], [1], [0, 0, 1, 1], [], []>} : vector<32x512xf32>, vector<512x256xf32>, vector<32x256xf32> -> vector<32x256xf32>
    %38 = arith.maximumf %34, %37 : vector<32x256xf32>
    %c0_38 = arith.constant 0 : index
    %c0_39 = arith.constant 0 : index
    %c0_40 = arith.constant 0 : index
    %39 = vector.load %arg6[%c0_38, %c0_39, %c0_40] : memref<2x16x32xf32, #tpu.memory_space<vmem>>, vector<1x16x32xf32>
    %40 = vector.shape_cast %39 : vector<1x16x32xf32> to vector<16x32xf32>
    %cst_41 = arith.constant dense<0.000000e+00> : vector<16x256xf32>
    %41 = tpu.matmul %40, %38, %cst_41 {dimension_numbers = #tpu.dot_dimension_numbers<[1], [0], [0], [1], [0, 0, 1, 1], [], []>} : vector<16x32xf32>, vector<32x256xf32>, vector<16x256xf32> -> vector<16x256xf32>
    %c1_42 = arith.constant 1 : index
    %c0_43 = arith.constant 0 : index
    %c0_44 = arith.constant 0 : index
    %42 = vector.load %arg6[%c1_42, %c0_43, %c0_44] : memref<2x16x32xf32, #tpu.memory_space<vmem>>, vector<1x16x32xf32>
    %43 = vector.shape_cast %42 : vector<1x16x32xf32> to vector<16x32xf32>
    %cst_45 = arith.constant dense<0.000000e+00> : vector<16x256xf32>
    %44 = tpu.matmul %43, %38, %cst_45 {dimension_numbers = #tpu.dot_dimension_numbers<[1], [0], [0], [1], [0, 0, 1, 1], [], []>} : vector<16x32xf32>, vector<32x256xf32>, vector<16x256xf32> -> vector<16x256xf32>
    %45 = arith.maximumf %41, %44 : vector<16x256xf32>
    %c0_46 = arith.constant 0 : index
    %c0_47 = arith.constant 0 : index
    %c0_48 = arith.constant 0 : index
    %46 = vector.load %arg8[%c0_46, %c0_47, %c0_48] : memref<3x16x16xf32, #tpu.memory_space<vmem>>, vector<1x16x16xf32>
    %47 = vector.shape_cast %46 : vector<1x16x16xf32> to vector<16x16xf32>
    %c0_49 = arith.constant 0 : index
    %c0_50 = arith.constant 0 : index
    %c0_51 = arith.constant 0 : index
    %48 = vector.load %arg7[%c0_49, %c0_50, %c0_51] : memref<3x256x512xf32, #tpu.memory_space<vmem>>, vector<1x256x512xf32>
    %49 = vector.shape_cast %48 : vector<1x256x512xf32> to vector<256x512xf32>
    %cst_52 = arith.constant dense<0.000000e+00> : vector<16x512xf32>
    %50 = tpu.matmul %45, %49, %cst_52 {dimension_numbers = #tpu.dot_dimension_numbers<[1], [0], [0], [1], [0, 0, 1, 1], [], []>} : vector<16x256xf32>, vector<256x512xf32>, vector<16x512xf32> -> vector<16x512xf32>
    %cst_53 = arith.constant dense<0.000000e+00> : vector<16x512xf32>
    %51 = tpu.matmul %47, %50, %cst_53 {dimension_numbers = #tpu.dot_dimension_numbers<[1], [0], [0], [1], [0, 0, 1, 1], [], []>} : vector<16x16xf32>, vector<16x512xf32>, vector<16x512xf32> -> vector<16x512xf32>
    %c1_54 = arith.constant 1 : index
    %c0_55 = arith.constant 0 : index
    %c0_56 = arith.constant 0 : index
    %52 = vector.load %arg8[%c1_54, %c0_55, %c0_56] : memref<3x16x16xf32, #tpu.memory_space<vmem>>, vector<1x16x16xf32>
    %53 = vector.shape_cast %52 : vector<1x16x16xf32> to vector<16x16xf32>
    %c1_57 = arith.constant 1 : index
    %c0_58 = arith.constant 0 : index
    %c0_59 = arith.constant 0 : index
    %54 = vector.load %arg7[%c1_57, %c0_58, %c0_59] : memref<3x256x512xf32, #tpu.memory_space<vmem>>, vector<1x256x512xf32>
    %55 = vector.shape_cast %54 : vector<1x256x512xf32> to vector<256x512xf32>
    %cst_60 = arith.constant dense<0.000000e+00> : vector<16x512xf32>
    %56 = tpu.matmul %45, %55, %cst_60 {dimension_numbers = #tpu.dot_dimension_numbers<[1], [0], [0], [1], [0, 0, 1, 1], [], []>} : vector<16x256xf32>, vector<256x512xf32>, vector<16x512xf32> -> vector<16x512xf32>
    %cst_61 = arith.constant dense<0.000000e+00> : vector<16x512xf32>
    %57 = tpu.matmul %53, %56, %cst_61 {dimension_numbers = #tpu.dot_dimension_numbers<[1], [0], [0], [1], [0, 0, 1, 1], [], []>} : vector<16x16xf32>, vector<16x512xf32>, vector<16x512xf32> -> vector<16x512xf32>
    %58 = arith.addf %51, %57 : vector<16x512xf32>
    %c2_62 = arith.constant 2 : index
    %c0_63 = arith.constant 0 : index
    %c0_64 = arith.constant 0 : index
    %59 = vector.load %arg8[%c2_62, %c0_63, %c0_64] : memref<3x16x16xf32, #tpu.memory_space<vmem>>, vector<1x16x16xf32>
    %60 = vector.shape_cast %59 : vector<1x16x16xf32> to vector<16x16xf32>
    %c2_65 = arith.constant 2 : index
    %c0_66 = arith.constant 0 : index
    %c0_67 = arith.constant 0 : index
    %61 = vector.load %arg7[%c2_65, %c0_66, %c0_67] : memref<3x256x512xf32, #tpu.memory_space<vmem>>, vector<1x256x512xf32>
    %62 = vector.shape_cast %61 : vector<1x256x512xf32> to vector<256x512xf32>
    %cst_68 = arith.constant dense<0.000000e+00> : vector<16x512xf32>
    %63 = tpu.matmul %45, %62, %cst_68 {dimension_numbers = #tpu.dot_dimension_numbers<[1], [0], [0], [1], [0, 0, 1, 1], [], []>} : vector<16x256xf32>, vector<256x512xf32>, vector<16x512xf32> -> vector<16x512xf32>
    %cst_69 = arith.constant dense<0.000000e+00> : vector<16x512xf32>
    %64 = tpu.matmul %60, %63, %cst_69 {dimension_numbers = #tpu.dot_dimension_numbers<[1], [0], [0], [1], [0, 0, 1, 1], [], []>} : vector<16x16xf32>, vector<16x512xf32>, vector<16x512xf32> -> vector<16x512xf32>
    %65 = arith.addf %58, %64 : vector<16x512xf32>
    %c0_70 = arith.constant 0 : index
    %c0_71 = arith.constant 0 : index
    %c0_72 = arith.constant 0 : index
    %66 = vector.load %arg10[%c0_70, %c0_71, %c0_72] : memref<2x1x512xf32, #tpu.memory_space<vmem>>, vector<1x1x512xf32>
    %67 = vector.shape_cast %66 : vector<1x1x512xf32> to vector<1x512xf32>
    %68 = vector.broadcast %67 : vector<1x512xf32> to vector<16x512xf32>
    %69 = arith.mulf %65, %68 : vector<16x512xf32>
    %c1_73 = arith.constant 1 : index
    %c0_74 = arith.constant 0 : index
    %c0_75 = arith.constant 0 : index
    %70 = vector.load %arg10[%c1_73, %c0_74, %c0_75] : memref<2x1x512xf32, #tpu.memory_space<vmem>>, vector<1x1x512xf32>
    %71 = vector.shape_cast %70 : vector<1x1x512xf32> to vector<1x512xf32>
    %72 = vector.broadcast %71 : vector<1x512xf32> to vector<16x512xf32>
    %73 = arith.addf %69, %72 : vector<16x512xf32>
    %cst_76 = arith.constant 0.000000e+00 : f32
    %74 = vector.broadcast %cst_76 : f32 to vector<16x512xf32>
    %75 = arith.maximumf %73, %74 : vector<16x512xf32>
    %c0_77 = arith.constant 0 : index
    %c0_78 = arith.constant 0 : index
    %c0_79 = arith.constant 0 : index
    %76 = vector.load %arg9[%c0_77, %c0_78, %c0_79] : memref<2x512x256xf32, #tpu.memory_space<vmem>>, vector<1x512x256xf32>
    %77 = vector.shape_cast %76 : vector<1x512x256xf32> to vector<512x256xf32>
    %cst_80 = arith.constant dense<0.000000e+00> : vector<16x256xf32>
    %78 = tpu.matmul %75, %77, %cst_80 {dimension_numbers = #tpu.dot_dimension_numbers<[1], [0], [0], [1], [0, 0, 1, 1], [], []>} : vector<16x512xf32>, vector<512x256xf32>, vector<16x256xf32> -> vector<16x256xf32>
    %c1_81 = arith.constant 1 : index
    %c0_82 = arith.constant 0 : index
    %c0_83 = arith.constant 0 : index
    %79 = vector.load %arg9[%c1_81, %c0_82, %c0_83] : memref<2x512x256xf32, #tpu.memory_space<vmem>>, vector<1x512x256xf32>
    %80 = vector.shape_cast %79 : vector<1x512x256xf32> to vector<512x256xf32>
    %cst_84 = arith.constant dense<0.000000e+00> : vector<16x256xf32>
    %81 = tpu.matmul %75, %80, %cst_84 {dimension_numbers = #tpu.dot_dimension_numbers<[1], [0], [0], [1], [0, 0, 1, 1], [], []>} : vector<16x512xf32>, vector<512x256xf32>, vector<16x256xf32> -> vector<16x256xf32>
    %82 = arith.maximumf %78, %81 : vector<16x256xf32>
    %c0_85 = arith.constant 0 : index
    %c0_86 = arith.constant 0 : index
    %c0_87 = arith.constant 0 : index
    %83 = vector.load %arg11[%c0_85, %c0_86, %c0_87] : memref<2x8x16xf32, #tpu.memory_space<vmem>>, vector<1x8x16xf32>
    %84 = vector.shape_cast %83 : vector<1x8x16xf32> to vector<8x16xf32>
    %cst_88 = arith.constant dense<0.000000e+00> : vector<8x256xf32>
    %85 = tpu.matmul %84, %82, %cst_88 {dimension_numbers = #tpu.dot_dimension_numbers<[1], [0], [0], [1], [0, 0, 1, 1], [], []>} : vector<8x16xf32>, vector<16x256xf32>, vector<8x256xf32> -> vector<8x256xf32>
    %c1_89 = arith.constant 1 : index
    %c0_90 = arith.constant 0 : index
    %c0_91 = arith.constant 0 : index
    %86 = vector.load %arg11[%c1_89, %c0_90, %c0_91] : memref<2x8x16xf32, #tpu.memory_space<vmem>>, vector<1x8x16xf32>
    %87 = vector.shape_cast %86 : vector<1x8x16xf32> to vector<8x16xf32>
    %cst_92 = arith.constant dense<0.000000e+00> : vector<8x256xf32>
    %88 = tpu.matmul %87, %82, %cst_92 {dimension_numbers = #tpu.dot_dimension_numbers<[1], [0], [0], [1], [0, 0, 1, 1], [], []>} : vector<8x16xf32>, vector<16x256xf32>, vector<8x256xf32> -> vector<8x256xf32>
    %89 = arith.maximumf %85, %88 : vector<8x256xf32>
    %c0_93 = arith.constant 0 : index
    %c0_94 = arith.constant 0 : index
    %c0_95 = arith.constant 0 : index
    %90 = vector.load %arg13[%c0_93, %c0_94, %c0_95] : memref<3x8x8xf32, #tpu.memory_space<vmem>>, vector<1x8x8xf32>
    %91 = vector.shape_cast %90 : vector<1x8x8xf32> to vector<8x8xf32>
    %c0_96 = arith.constant 0 : index
    %c0_97 = arith.constant 0 : index
    %c0_98 = arith.constant 0 : index
    %92 = vector.load %arg12[%c0_96, %c0_97, %c0_98] : memref<3x256x512xf32, #tpu.memory_space<vmem>>, vector<1x256x512xf32>
    %93 = vector.shape_cast %92 : vector<1x256x512xf32> to vector<256x512xf32>
    %cst_99 = arith.constant dense<0.000000e+00> : vector<8x512xf32>
    %94 = tpu.matmul %89, %93, %cst_99 {dimension_numbers = #tpu.dot_dimension_numbers<[1], [0], [0], [1], [0, 0, 1, 1], [], []>} : vector<8x256xf32>, vector<256x512xf32>, vector<8x512xf32> -> vector<8x512xf32>
    %cst_100 = arith.constant dense<0.000000e+00> : vector<8x512xf32>
    %95 = tpu.matmul %91, %94, %cst_100 {dimension_numbers = #tpu.dot_dimension_numbers<[1], [0], [0], [1], [0, 0, 1, 1], [], []>} : vector<8x8xf32>, vector<8x512xf32>, vector<8x512xf32> -> vector<8x512xf32>
    %c1_101 = arith.constant 1 : index
    %c0_102 = arith.constant 0 : index
    %c0_103 = arith.constant 0 : index
    %96 = vector.load %arg13[%c1_101, %c0_102, %c0_103] : memref<3x8x8xf32, #tpu.memory_space<vmem>>, vector<1x8x8xf32>
    %97 = vector.shape_cast %96 : vector<1x8x8xf32> to vector<8x8xf32>
    %c1_104 = arith.constant 1 : index
    %c0_105 = arith.constant 0 : index
    %c0_106 = arith.constant 0 : index
    %98 = vector.load %arg12[%c1_104, %c0_105, %c0_106] : memref<3x256x512xf32, #tpu.memory_space<vmem>>, vector<1x256x512xf32>
    %99 = vector.shape_cast %98 : vector<1x256x512xf32> to vector<256x512xf32>
    %cst_107 = arith.constant dense<0.000000e+00> : vector<8x512xf32>
    %100 = tpu.matmul %89, %99, %cst_107 {dimension_numbers = #tpu.dot_dimension_numbers<[1], [0], [0], [1], [0, 0, 1, 1], [], []>} : vector<8x256xf32>, vector<256x512xf32>, vector<8x512xf32> -> vector<8x512xf32>
    %cst_108 = arith.constant dense<0.000000e+00> : vector<8x512xf32>
    %101 = tpu.matmul %97, %100, %cst_108 {dimension_numbers = #tpu.dot_dimension_numbers<[1], [0], [0], [1], [0, 0, 1, 1], [], []>} : vector<8x8xf32>, vector<8x512xf32>, vector<8x512xf32> -> vector<8x512xf32>
    %102 = arith.addf %95, %101 : vector<8x512xf32>
    %c2_109 = arith.constant 2 : index
    %c0_110 = arith.constant 0 : index
    %c0_111 = arith.constant 0 : index
    %103 = vector.load %arg13[%c2_109, %c0_110, %c0_111] : memref<3x8x8xf32, #tpu.memory_space<vmem>>, vector<1x8x8xf32>
    %104 = vector.shape_cast %103 : vector<1x8x8xf32> to vector<8x8xf32>
    %c2_112 = arith.constant 2 : index
    %c0_113 = arith.constant 0 : index
    %c0_114 = arith.constant 0 : index
    %105 = vector.load %arg12[%c2_112, %c0_113, %c0_114] : memref<3x256x512xf32, #tpu.memory_space<vmem>>, vector<1x256x512xf32>
    %106 = vector.shape_cast %105 : vector<1x256x512xf32> to vector<256x512xf32>
    %cst_115 = arith.constant dense<0.000000e+00> : vector<8x512xf32>
    %107 = tpu.matmul %89, %106, %cst_115 {dimension_numbers = #tpu.dot_dimension_numbers<[1], [0], [0], [1], [0, 0, 1, 1], [], []>} : vector<8x256xf32>, vector<256x512xf32>, vector<8x512xf32> -> vector<8x512xf32>
    %cst_116 = arith.constant dense<0.000000e+00> : vector<8x512xf32>
    %108 = tpu.matmul %104, %107, %cst_116 {dimension_numbers = #tpu.dot_dimension_numbers<[1], [0], [0], [1], [0, 0, 1, 1], [], []>} : vector<8x8xf32>, vector<8x512xf32>, vector<8x512xf32> -> vector<8x512xf32>
    %109 = arith.addf %102, %108 : vector<8x512xf32>
    %c0_117 = arith.constant 0 : index
    %c0_118 = arith.constant 0 : index
    %c0_119 = arith.constant 0 : index
    %110 = vector.load %arg15[%c0_117, %c0_118, %c0_119] : memref<2x1x512xf32, #tpu.memory_space<vmem>>, vector<1x1x512xf32>
    %111 = vector.shape_cast %110 : vector<1x1x512xf32> to vector<1x512xf32>
    %112 = vector.broadcast %111 : vector<1x512xf32> to vector<8x512xf32>
    %113 = arith.mulf %109, %112 : vector<8x512xf32>
    %c1_120 = arith.constant 1 : index
    %c0_121 = arith.constant 0 : index
    %c0_122 = arith.constant 0 : index
    %114 = vector.load %arg15[%c1_120, %c0_121, %c0_122] : memref<2x1x512xf32, #tpu.memory_space<vmem>>, vector<1x1x512xf32>
    %115 = vector.shape_cast %114 : vector<1x1x512xf32> to vector<1x512xf32>
    %116 = vector.broadcast %115 : vector<1x512xf32> to vector<8x512xf32>
    %117 = arith.addf %113, %116 : vector<8x512xf32>
    %cst_123 = arith.constant 0.000000e+00 : f32
    %118 = vector.broadcast %cst_123 : f32 to vector<8x512xf32>
    %119 = arith.maximumf %117, %118 : vector<8x512xf32>
    %c0_124 = arith.constant 0 : index
    %c0_125 = arith.constant 0 : index
    %c0_126 = arith.constant 0 : index
    %120 = vector.load %arg14[%c0_124, %c0_125, %c0_126] : memref<2x512x256xf32, #tpu.memory_space<vmem>>, vector<1x512x256xf32>
    %121 = vector.shape_cast %120 : vector<1x512x256xf32> to vector<512x256xf32>
    %cst_127 = arith.constant dense<0.000000e+00> : vector<8x256xf32>
    %122 = tpu.matmul %119, %121, %cst_127 {dimension_numbers = #tpu.dot_dimension_numbers<[1], [0], [0], [1], [0, 0, 1, 1], [], []>} : vector<8x512xf32>, vector<512x256xf32>, vector<8x256xf32> -> vector<8x256xf32>
    %c1_128 = arith.constant 1 : index
    %c0_129 = arith.constant 0 : index
    %c0_130 = arith.constant 0 : index
    %123 = vector.load %arg14[%c1_128, %c0_129, %c0_130] : memref<2x512x256xf32, #tpu.memory_space<vmem>>, vector<1x512x256xf32>
    %124 = vector.shape_cast %123 : vector<1x512x256xf32> to vector<512x256xf32>
    %cst_131 = arith.constant dense<0.000000e+00> : vector<8x256xf32>
    %125 = tpu.matmul %119, %124, %cst_131 {dimension_numbers = #tpu.dot_dimension_numbers<[1], [0], [0], [1], [0, 0, 1, 1], [], []>} : vector<8x512xf32>, vector<512x256xf32>, vector<8x256xf32> -> vector<8x256xf32>
    %126 = arith.maximumf %122, %125 : vector<8x256xf32>
    %c0_132 = arith.constant 0 : index
    %c0_133 = arith.constant 0 : index
    %c0_134 = arith.constant 0 : index
    %127 = vector.load %arg16[%c0_132, %c0_133, %c0_134] : memref<2x4x8xf32, #tpu.memory_space<vmem>>, vector<1x4x8xf32>
    %128 = vector.shape_cast %127 : vector<1x4x8xf32> to vector<4x8xf32>
    %cst_135 = arith.constant dense<0.000000e+00> : vector<4x256xf32>
    %129 = tpu.matmul %128, %126, %cst_135 {dimension_numbers = #tpu.dot_dimension_numbers<[1], [0], [0], [1], [0, 0, 1, 1], [], []>} : vector<4x8xf32>, vector<8x256xf32>, vector<4x256xf32> -> vector<4x256xf32>
    %c1_136 = arith.constant 1 : index
    %c0_137 = arith.constant 0 : index
    %c0_138 = arith.constant 0 : index
    %130 = vector.load %arg16[%c1_136, %c0_137, %c0_138] : memref<2x4x8xf32, #tpu.memory_space<vmem>>, vector<1x4x8xf32>
    %131 = vector.shape_cast %130 : vector<1x4x8xf32> to vector<4x8xf32>
    %cst_139 = arith.constant dense<0.000000e+00> : vector<4x256xf32>
    %132 = tpu.matmul %131, %126, %cst_139 {dimension_numbers = #tpu.dot_dimension_numbers<[1], [0], [0], [1], [0, 0, 1, 1], [], []>} : vector<4x8xf32>, vector<8x256xf32>, vector<4x256xf32> -> vector<4x256xf32>
    %133 = arith.maximumf %129, %132 : vector<4x256xf32>
    %134 = tpu.iota {dimensions = array<i32: 1>} : vector<1x4xi32>
    %c0_i32 = arith.constant 0 : i32
    %135 = vector.broadcast %c0_i32 : i32 to vector<1x4xi32>
    %136 = arith.cmpi eq, %134, %135 : vector<1x4xi32>
    %137 = arith.extui %136 : vector<1x4xi1> to vector<1x4xi32>
    %138 = arith.sitofp %137 : vector<1x4xi32> to vector<1x4xf32>
    %cst_140 = arith.constant dense<0.000000e+00> : vector<1x256xf32>
    %139 = tpu.matmul %138, %133, %cst_140 {dimension_numbers = #tpu.dot_dimension_numbers<[1], [0], [0], [1], [0, 0, 1, 1], [], []>} : vector<1x4xf32>, vector<4x256xf32>, vector<1x256xf32> -> vector<1x256xf32>
    %c1_i32 = arith.constant 1 : i32
    %140 = vector.broadcast %c1_i32 : i32 to vector<1x4xi32>
    %141 = arith.cmpi eq, %134, %140 : vector<1x4xi32>
    %142 = arith.extui %141 : vector<1x4xi1> to vector<1x4xi32>
    %143 = arith.sitofp %142 : vector<1x4xi32> to vector<1x4xf32>
    %cst_141 = arith.constant dense<0.000000e+00> : vector<1x256xf32>
    %144 = tpu.matmul %143, %133, %cst_141 {dimension_numbers = #tpu.dot_dimension_numbers<[1], [0], [0], [1], [0, 0, 1, 1], [], []>} : vector<1x4xf32>, vector<4x256xf32>, vector<1x256xf32> -> vector<1x256xf32>
    %c2_i32 = arith.constant 2 : i32
    %145 = vector.broadcast %c2_i32 : i32 to vector<1x4xi32>
    %146 = arith.cmpi eq, %134, %145 : vector<1x4xi32>
    %147 = arith.extui %146 : vector<1x4xi1> to vector<1x4xi32>
    %148 = arith.sitofp %147 : vector<1x4xi32> to vector<1x4xf32>
    %cst_142 = arith.constant dense<0.000000e+00> : vector<1x256xf32>
    %149 = tpu.matmul %148, %133, %cst_142 {dimension_numbers = #tpu.dot_dimension_numbers<[1], [0], [0], [1], [0, 0, 1, 1], [], []>} : vector<1x4xf32>, vector<4x256xf32>, vector<1x256xf32> -> vector<1x256xf32>
    %c3_i32 = arith.constant 3 : i32
    %150 = vector.broadcast %c3_i32 : i32 to vector<1x4xi32>
    %151 = arith.cmpi eq, %134, %150 : vector<1x4xi32>
    %152 = arith.extui %151 : vector<1x4xi1> to vector<1x4xi32>
    %153 = arith.sitofp %152 : vector<1x4xi32> to vector<1x4xf32>
    %cst_143 = arith.constant dense<0.000000e+00> : vector<1x256xf32>
    %154 = tpu.matmul %153, %133, %cst_143 {dimension_numbers = #tpu.dot_dimension_numbers<[1], [0], [0], [1], [0, 0, 1, 1], [], []>} : vector<1x4xf32>, vector<4x256xf32>, vector<1x256xf32> -> vector<1x256xf32>
    %155 = tpu.concatenate %139, %144, %149, %154 in 1 : vector<1x256xf32>, vector<1x256xf32>, vector<1x256xf32>, vector<1x256xf32> -> vector<1x1024xf32>
    %c0_144 = arith.constant 0 : index
    %c0_145 = arith.constant 0 : index
    %156 = vector.load %arg17[%c0_144, %c0_145] : memref<1024x256xf32, #tpu.memory_space<vmem>>, vector<1024x256xf32>
    %cst_146 = arith.constant dense<0.000000e+00> : vector<1x256xf32>
    %157 = tpu.matmul %155, %156, %cst_146 {dimension_numbers = #tpu.dot_dimension_numbers<[1], [0], [0], [1], [0, 0, 1, 1], [], []>} : vector<1x1024xf32>, vector<1024x256xf32>, vector<1x256xf32> -> vector<1x256xf32>
    %c0_147 = arith.constant 0 : index
    %c0_148 = arith.constant 0 : index
    %158 = vector.load %arg18[%c0_147, %c0_148] : memref<1x256xf32, #tpu.memory_space<vmem>>, vector<1x256xf32>
    %159 = arith.addf %157, %158 : vector<1x256xf32>
    %cst_149 = arith.constant 0.000000e+00 : f32
    %160 = vector.broadcast %cst_149 : f32 to vector<1x256xf32>
    %161 = arith.maximumf %159, %160 : vector<1x256xf32>
    %c0_150 = arith.constant 0 : index
    %c0_151 = arith.constant 0 : index
    %162 = vector.load %arg19[%c0_150, %c0_151] : memref<256x128xf32, #tpu.memory_space<vmem>>, vector<256x128xf32>
    %cst_152 = arith.constant dense<0.000000e+00> : vector<1x128xf32>
    %163 = tpu.matmul %161, %162, %cst_152 {dimension_numbers = #tpu.dot_dimension_numbers<[1], [0], [0], [1], [0, 0, 1, 1], [], []>} : vector<1x256xf32>, vector<256x128xf32>, vector<1x128xf32> -> vector<1x128xf32>
    %c0_153 = arith.constant 0 : index
    %c0_154 = arith.constant 0 : index
    %164 = vector.load %arg20[%c0_153, %c0_154] : memref<1x128xf32, #tpu.memory_space<vmem>>, vector<1x128xf32>
    %165 = arith.addf %163, %164 : vector<1x128xf32>
    %166 = vector.shape_cast %165 : vector<1x128xf32> to vector<1x1x128xf32>
    %c0_155 = arith.constant 0 : index
    %c0_156 = arith.constant 0 : index
    %c0_157 = arith.constant 0 : index
    %167 = vector.load %arg21[%c0_155, %c0_156, %c0_157] : memref<1x1x128xf32, #tpu.memory_space<vmem>>, vector<1x1x128xf32>
    tpu.vector_store %arg21[%c0_155, %c0_156, %c0_157], %166 {strides = array<i32>} : memref<1x1x128xf32, #tpu.memory_space<vmem>>, vector<1x1x128xf32>,
    return
  }
  func.func @transform_0(%arg0: i32) -> (i32, i32, i32) {
    %c0_i32 = arith.constant 0 : i32
    %c0_i32_0 = arith.constant 0 : i32
    %c0_i32_1 = arith.constant 0 : i32
    return %arg0, %c0_i32, %c0_i32_0 : i32, i32, i32
  }
  func.func @transform_1(%arg0: i32) -> (i32, i32, i32) {
    %c0_i32 = arith.constant 0 : i32
    %c0_i32_0 = arith.constant 0 : i32
    %c0_i32_1 = arith.constant 0 : i32
    %c0_i32_2 = arith.constant 0 : i32
    return %c0_i32, %c0_i32_0, %c0_i32_1 : i32, i32, i32
  }
  func.func @transform_2(%arg0: i32) -> (i32, i32, i32) {
    %c0_i32 = arith.constant 0 : i32
    %c0_i32_0 = arith.constant 0 : i32
    %c0_i32_1 = arith.constant 0 : i32
    %c0_i32_2 = arith.constant 0 : i32
    return %c0_i32, %c0_i32_0, %c0_i32_1 : i32, i32, i32
  }
  func.func @transform_3(%arg0: i32) -> (i32, i32, i32) {
    %c0_i32 = arith.constant 0 : i32
    %c0_i32_0 = arith.constant 0 : i32
    %c0_i32_1 = arith.constant 0 : i32
    %c0_i32_2 = arith.constant 0 : i32
    return %c0_i32, %c0_i32_0, %c0_i32_1 : i32, i32, i32
  }
  func.func @transform_4(%arg0: i32) -> (i32, i32, i32) {
    %c0_i32 = arith.constant 0 : i32
    %c0_i32_0 = arith.constant 0 : i32
    %c0_i32_1 = arith.constant 0 : i32
    %c0_i32_2 = arith.constant 0 : i32
    return %c0_i32, %c0_i32_0, %c0_i32_1 : i32, i32, i32
  }
  func.func @transform_5(%arg0: i32) -> (i32, i32, i32) {
    %c0_i32 = arith.constant 0 : i32
    %c0_i32_0 = arith.constant 0 : i32
    %c0_i32_1 = arith.constant 0 : i32
    %c0_i32_2 = arith.constant 0 : i32
    return %c0_i32, %c0_i32_0, %c0_i32_1 : i32, i32, i32
  }
  func.func @transform_6(%arg0: i32) -> (i32, i32, i32) {
    %c0_i32 = arith.constant 0 : i32
    %c0_i32_0 = arith.constant 0 : i32
    %c0_i32_1 = arith.constant 0 : i32
    %c0_i32_2 = arith.constant 0 : i32
    return %c0_i32, %c0_i32_0, %c0_i32_1 : i32, i32, i32
  }
  func.func @transform_7(%arg0: i32) -> (i32, i32, i32) {
    %c0_i32 = arith.constant 0 : i32
    %c0_i32_0 = arith.constant 0 : i32
    %c0_i32_1 = arith.constant 0 : i32
    %c0_i32_2 = arith.constant 0 : i32
    return %c0_i32, %c0_i32_0, %c0_i32_1 : i32, i32, i32
  }
  func.func @transform_8(%arg0: i32) -> (i32, i32, i32) {
    %c0_i32 = arith.constant 0 : i32
    %c0_i32_0 = arith.constant 0 : i32
    %c0_i32_1 = arith.constant 0 : i32
    %c0_i32_2 = arith.constant 0 : i32
    return %c0_i32, %c0_i32_0, %c0_i32_1 : i32, i32, i32
  }
  func.func @transform_9(%arg0: i32) -> (i32, i32, i32) {
    %c0_i32 = arith.constant 0 : i32
    %c0_i32_0 = arith.constant 0 : i32
    %c0_i32_1 = arith.constant 0 : i32
    %c0_i32_2 = arith.constant 0 : i32
    return %c0_i32, %c0_i32_0, %c0_i32_1 : i32, i32, i32
  }
  func.func @transform_10(%arg0: i32) -> (i32, i32, i32) {
    %c0_i32 = arith.constant 0 : i32
    %c0_i32_0 = arith.constant 0 : i32
    %c0_i32_1 = arith.constant 0 : i32
    %c0_i32_2 = arith.constant 0 : i32
    return %c0_i32, %c0_i32_0, %c0_i32_1 : i32, i32, i32
  }
  func.func @transform_11(%arg0: i32) -> (i32, i32, i32) {
    %c0_i32 = arith.constant 0 : i32
    %c0_i32_0 = arith.constant 0 : i32
    %c0_i32_1 = arith.constant 0 : i32
    %c0_i32_2 = arith.constant 0 : i32
    return %c0_i32, %c0_i32_0, %c0_i32_1 : i32, i32, i32
  }
  func.func @transform_12(%arg0: i32) -> (i32, i32, i32) {
    %c0_i32 = arith.constant 0 : i32
    %c0_i32_0 = arith.constant 0 : i32
    %c0_i32_1 = arith.constant 0 : i32
    %c0_i32_2 = arith.constant 0 : i32
    return %c0_i32, %c0_i32_0, %c0_i32_1 : i32, i32, i32
  }
  func.func @transform_13(%arg0: i32) -> (i32, i32, i32) {
    %c0_i32 = arith.constant 0 : i32
    %c0_i32_0 = arith.constant 0 : i32
    %c0_i32_1 = arith.constant 0 : i32
    %c0_i32_2 = arith.constant 0 : i32
    return %c0_i32, %c0_i32_0, %c0_i32_1 : i32, i32, i32
  }
  func.func @transform_14(%arg0: i32) -> (i32, i32, i32) {
    %c0_i32 = arith.constant 0 : i32
    %c0_i32_0 = arith.constant 0 : i32
    %c0_i32_1 = arith.constant 0 : i32
    %c0_i32_2 = arith.constant 0 : i32
    return %c0_i32, %c0_i32_0, %c0_i32_1 : i32, i32, i32
  }
  func.func @transform_15(%arg0: i32) -> (i32, i32, i32) {
    %c0_i32 = arith.constant 0 : i32
    %c0_i32_0 = arith.constant 0 : i32
    %c0_i32_1 = arith.constant 0 : i32
    %c0_i32_2 = arith.constant 0 : i32
    return %c0_i32, %c0_i32_0, %c0_i32_1 : i32, i32, i32
  }
  func.func @transform_16(%arg0: i32) -> (i32, i32) {
    %c0_i32 = arith.constant 0 : i32
    %c0_i32_0 = arith.constant 0 : i32
    %c0_i32_1 = arith.constant 0 : i32
    return %c0_i32, %c0_i32_0 : i32, i32
  }
  func.func @transform_17(%arg0: i32) -> (i32, i32) {
    %c0_i32 = arith.constant 0 : i32
    %c0_i32_0 = arith.constant 0 : i32
    %c0_i32_1 = arith.constant 0 : i32
    return %c0_i32, %c0_i32_0 : i32, i32
  }
  func.func @transform_18(%arg0: i32) -> (i32, i32) {
    %c0_i32 = arith.constant 0 : i32
    %c0_i32_0 = arith.constant 0 : i32
    %c0_i32_1 = arith.constant 0 : i32
    return %c0_i32, %c0_i32_0 : i32, i32
  }
  func.func @transform_19(%arg0: i32) -> (i32, i32) {
    %c0_i32 = arith.constant 0 : i32
    %c0_i32_0 = arith.constant 0 : i32
    %c0_i32_1 = arith.constant 0 : i32
    return %c0_i32, %c0_i32_0 : i32, i32
  }
  func.func @transform_20(%arg0: i32) -> (i32, i32, i32) {
    %c0_i32 = arith.constant 0 : i32
    %c0_i32_0 = arith.constant 0 : i32
    %c0_i32_1 = arith.constant 0 : i32
    return %arg0, %c0_i32, %c0_i32_0 : i32, i32, i32
  }
}

</mosaic_0001>

<llo_original>
// kernel: convnet_forward.1
$region0: #{convnet_forward.1}
  #allocation0 [shape = 'u32[]', space=smem, size = 0x4, offset = 0x4, fixed_abs, tag = 'smem constant byte address 0x4 - core index']
  #allocation1 [shape = 'u32[144,128]{1,0:T(1,128)}', space=vmem, size = 0x12000, scoped, tag = 'internal scratch']
  %s0 = inlined_call_operand.vmem [shape: f32[2,32,96], index: 0, kind: input, shape index: {}]
  %s1 = inlined_call_operand.hbm [shape: f32[3,96,512], index: 1, kind: input, shape index: {}]
  %s2 = inlined_call_operand.hbm [shape: f32[3,32,32], index: 2, kind: input, shape index: {}]
  %s3 = inlined_call_operand.hbm [shape: f32[2,512,256], index: 3, kind: input, shape index: {}]
  %s4 = inlined_call_operand.hbm [shape: f32[2,1,512], index: 4, kind: input, shape index: {}]
  %s5 = inlined_call_operand.hbm [shape: f32[2,16,32], index: 5, kind: input, shape index: {}]
  %s6 = inlined_call_operand.hbm [shape: f32[3,256,512], index: 6, kind: input, shape index: {}]
  %s7 = inlined_call_operand.hbm [shape: f32[3,16,16], index: 7, kind: input, shape index: {}]
  %s8 = inlined_call_operand.hbm [shape: f32[2,512,256], index: 8, kind: input, shape index: {}]
  %s9 = inlined_call_operand.hbm [shape: f32[2,1,512], index: 9, kind: input, shape index: {}]
  %s10 = inlined_call_operand.hbm [shape: f32[2,8,16], index: 10, kind: input, shape index: {}]
  %s11 = inlined_call_operand.hbm [shape: f32[3,256,512], index: 11, kind: input, shape index: {}]
  %s12 = inlined_call_operand.hbm [shape: f32[3,8,8], index: 12, kind: input, shape index: {}]
  %s13 = inlined_call_operand.hbm [shape: f32[2,512,256], index: 13, kind: input, shape index: {}]
  %s14 = inlined_call_operand.hbm [shape: f32[2,1,512], index: 14, kind: input, shape index: {}]
  %s15 = inlined_call_operand.hbm [shape: f32[2,4,8], index: 15, kind: input, shape index: {}]
  %s16 = inlined_call_operand.hbm [shape: f32[1024,256], index: 16, kind: input, shape index: {}]
  %s17 = inlined_call_operand.hbm [shape: f32[1,256], index: 17, kind: input, shape index: {}]
  %s18 = inlined_call_operand.hbm [shape: f32[256,128], index: 18, kind: input, shape index: {}]
  %s19 = inlined_call_operand.hbm [shape: f32[1,128], index: 19, kind: input, shape index: {}]
  %s20 = inlined_call_operand.hbm [shape: f32[2,1,128], index: 20, kind: output, shape index: {}]
  %s21 = sld [smem:[#allocation0]]
  $region189: #{convnet_forward.1} parent=0
    _
  %s23 = ssub.s32 1, %s21
  %s24 = scalar_select 0, %s23, %s21
  $region1: #{convnet_forward.1} parent=0
    #allocation2 [shape = 'u8[589824]{0}', space=vmem, size = 0x90000, scoped, tag = 'input window, operand 1, single buffered']
    #allocation3 [shape = 's32[2]{0}', space=sflag, size = 0x8, scoped, tag = 'scoped memory for convnet_forward.1']
    #allocation4 [shape = 's32[2]{0}', space=sflag, size = 0x8, scoped, tag = 'scoped memory for convnet_forward.1']
    #allocation5 [shape = 'u8[49152]{0}', space=vmem, size = 0xc000, scoped, tag = 'input window, operand 2, single buffered']
    #allocation6 [shape = 's32[1]{0}', space=sflag, size = 0x4, scoped, tag = 'scoped memory for convnet_forward.1']
    #allocation7 [shape = 'u8[1048576]{0}', space=vmem, size = 0x100000, scoped, tag = 'input window, operand 3, single buffered']
    #allocation8 [shape = 'u8[4096]{0}', space=vmem, size = 0x1000, scoped, tag = 'input window, operand 4, single buffered']
    #allocation9 [shape = 's32[1]{0}', space=sflag, size = 0x4, scoped, tag = 'scoped memory for convnet_forward.1']
    #allocation10 [shape = 'u8[16384]{0}', space=vmem, size = 0x4000, scoped, tag = 'input window, operand 5, single buffered']
    #allocation11 [shape = 'u8[1572864]{0}', space=vmem, size = 0x180000, scoped, tag = 'input window, operand 6, single buffered']
    #allocation12 [shape = 's32[1]{0}', space=sflag, size = 0x4, scoped, tag = 'scoped memory for convnet_forward.1']
    #allocation13 [shape = 'u8[24576]{0}', space=vmem, size = 0x6000, scoped, tag = 'input window, operand 7, single buffered']
    #allocation14 [shape = 'u8[1048576]{0}', space=vmem, size = 0x100000, scoped, tag = 'input window, operand 8, single buffered']
    #allocation15 [shape = 's32[1]{0}', space=sflag, size = 0x4, scoped, tag = 'scoped memory for convnet_forward.1']
    #allocation16 [shape = 'u8[4096]{0}', space=vmem, size = 0x1000, scoped, tag = 'input window, operand 9, single buffered']
    #allocation17 [shape = 'u8[8192]{0}', space=vmem, size = 0x2000, scoped, tag = 'input window, operand 10, single buffered']
    #allocation18 [shape = 's32[1]{0}', space=sflag, size = 0x4, scoped, tag = 'scoped memory for convnet_forward.1']
    #allocation19 [shape = 'u8[1572864]{0}', space=vmem, size = 0x180000, scoped, tag = 'input window, operand 11, single buffered']
    #allocation20 [shape = 'u8[12288]{0}', space=vmem, size = 0x3000, scoped, tag = 'input window, operand 12, single buffered']
    #allocation21 [shape = 's32[1]{0}', space=sflag, size = 0x4, scoped, tag = 'scoped memory for convnet_forward.1']
    #allocation22 [shape = 'u8[1048576]{0}', space=vmem, size = 0x100000, scoped, tag = 'input window, operand 13, single buffered']
    #allocation23 [shape = 'u8[4096]{0}', space=vmem, size = 0x1000, scoped, tag = 'input window, operand 14, single buffered']
    #allocation24 [shape = 's32[1]{0}', space=sflag, size = 0x4, scoped, tag = 'scoped memory for convnet_forward.1']
    #allocation25 [shape = 'u8[4096]{0}', space=vmem, size = 0x1000, scoped, tag = 'input window, operand 15, single buffered']
    #allocation26 [shape = 'u8[1048576]{0}', space=vmem, size = 0x100000, scoped, tag = 'input window, operand 16, single buffered']
    #allocation27 [shape = 's32[1]{0}', space=sflag, size = 0x4, scoped, tag = 'scoped memory for convnet_forward.1']
    #allocation28 [shape = 'u8[1024]{0}', space=vmem, size = 0x400, scoped, tag = 'input window, operand 17, single buffered']
    #allocation29 [shape = 'u8[131072]{0}', space=vmem, size = 0x20000, scoped, tag = 'input window, operand 18, single buffered']
    #allocation30 [shape = 's32[1]{0}', space=sflag, size = 0x4, scoped, tag = 'scoped memory for convnet_forward.1']
    #allocation31 [shape = 'u8[512]{0}', space=vmem, size = 0x400, scoped, tag = 'input window, operand 19, single buffered']
    #allocation32 [shape = 'u8[1024]{0}', space=vmem, size = 0x400, scoped, tag = 'output window, operand 0']
    %25 = vsyncpa [#allocation3], 0
    %26 = vsyncpa [#allocation6], 0
    %27 = vsyncpa [#allocation9], 0
    %28 = vsyncpa [#allocation12], 0
    %29 = vsyncpa [#allocation15], 0
    %30 = vsyncpa [#allocation18], 0
    %31 = vsyncpa [#allocation21], 0
    %32 = vsyncpa [#allocation24], 0
    %33 = vsyncpa [#allocation27], 0
    %34 = vsyncpa [#allocation30], 0
    %35 = vsyncpa [#allocation4], 0
    %s36 = scalar_lea.sflag [#allocation4], 1
    %37 = vsyncpa %s36, 0
    loop: start=0, step=1, limit=4
    $region2: #{convnet_forward.1} parent=1 // loop_pre_header
      _
    $region3: #{convnet_forward.1} parent=1 // loop_header
      %s39 = sphi 0, %s43
      %p40 = scmp.ge.s32.totalorder %s39, 4
      %s49 = sphi 0, %s51
      %s52 = sphi 0, %s49
      %s53 = sphi 0, %s52
      %s69 = sphi 0, %s53
      %s73 = sphi 0, %s73
      %s75 = sphi 0, %s73
      %s76 = sphi 0, %s75
      %s90 = sphi 0, %s76
      %s94 = sphi 0, %s94
      %s96 = sphi 0, %s94
      %s97 = sphi 0, %s96
      %s111 = sphi 0, %s97
      %s115 = sphi 0, %s115
      %s117 = sphi 0, %s115
      %s118 = sphi 0, %s117
      %s132 = sphi 0, %s118
      %s136 = sphi 0, %s136
      %s138 = sphi 0, %s136
      %s139 = sphi 0, %s138
      %s153 = sphi 0, %s139
      %s157 = sphi 0, %s157
      %s159 = sphi 0, %s157
      %s160 = sphi 0, %s159
      %s174 = sphi 0, %s160
      %s178 = sphi 0, %s178
      %s180 = sphi 0, %s178
      %s181 = sphi 0, %s180
      %s195 = sphi 0, %s181
      %s199 = sphi 0, %s199
      %s201 = sphi 0, %s199
      %s202 = sphi 0, %s201
      %s216 = sphi 0, %s202
      %s220 = sphi 0, %s220
      %s222 = sphi 0, %s220
      %s223 = sphi 0, %s222
      %s237 = sphi 0, %s223
      %s241 = sphi 0, %s241
      %s243 = sphi 0, %s241
      %s244 = sphi 0, %s243
      %s258 = sphi 0, %s244
      %s262 = sphi 0, %s262
      %s264 = sphi 0, %s262
      %s265 = sphi 0, %s264
      %s279 = sphi 0, %s265
      %s283 = sphi 0, %s283
      %s285 = sphi 0, %s283
      %s286 = sphi 0, %s285
      %s300 = sphi 0, %s286
      %s304 = sphi 0, %s304
      %s306 = sphi 0, %s304
      %s307 = sphi 0, %s306
      %s321 = sphi 0, %s307
      %s325 = sphi 0, %s325
      %s327 = sphi 0, %s325
      %s328 = sphi 0, %s327
      %s342 = sphi 0, %s328
      %s346 = sphi 0, %s346
      %s348 = sphi 0, %s346
      %s349 = sphi 0, %s348
      %s363 = sphi 0, %s349
      %s367 = sphi 0, %s367
      %s369 = sphi 0, %s367
      %s370 = sphi 0, %s369
      %s384 = sphi 0, %s370
      %s388 = sphi 0, %s388
      %s390 = sphi 0, %s388
      %s391 = sphi 0, %s390
      %s405 = sphi 0, %s391
      %s409 = sphi 0, %s409
      %s411 = sphi 0, %s409
      %s412 = sphi 0, %s411
      %s426 = sphi 0, %s412
      %s430 = sphi 0, %s430
      %s432 = sphi 0, %s430
      %s433 = sphi 0, %s432
      %s447 = sphi 0, %s433
      %s451 = sphi 0, %s451
      %s453 = sphi 0, %s451
      %s454 = sphi 0, %s453
      %s468 = sphi 0, %s454
      %s474 = sphi 0, %s476
      %s477 = sphi 0, %s474
      %s478 = sphi 0, %s477
      %s494 = sphi 0, %s478
    $region4: #{convnet_forward.1} parent=1 // loop_header_branch
      %42 = sbr.rel (%p40) target = $region8
    $region5: #{convnet_forward.1} parent=1 // loop_body
      %s44 = ssub.s32 %s39, 1
      %s45 = ssub.s32 %s39, 2
      %s46 = sadd.s32 %s39, 1
      %s47 = ssub.s32 %s39, %s46
      %p48 = scmp.eq.s32.totalorder %s47, 0
      %s50 = sadd.s32 %s49, 1
      %s51 = scalar_select %p48, %s49, %s50
      %p54 = pneg %p48
      %p55 = scmp.eq.s32.totalorder %s39, 1
      %p56 = por %p54, %p55
      %p57 = scmp.ne.s32.totalorder %s49, %s52
      %p58 = scmp.eq.s32.totalorder %s39, 0
      %p59 = por %p57, %p58
      %p60 = scmp.ne.s32.totalorder %s49, %s52
      %p61 = scmp.eq.s32.totalorder %s44, 1
      %p62 = por %p60, %p61
      %p63 = scmp.ne.s32.totalorder %s52, %s53
      %p64 = scmp.eq.s32.totalorder %s44, 0
      %p65 = por %p63, %p64
      %p66 = scmp.ne.s32.totalorder %s52, %s53
      %p67 = scmp.eq.s32.totalorder %s45, 1
      %p68 = por %p66, %p67
      %p70 = scmp.ne.s32.totalorder %s53, %s69
      %p71 = scmp.eq.s32.totalorder %s45, 0
      %p72 = por %p70, %p71
      %s74 = sadd.s32 %s73, 1
      %p77 = scmp.eq.s32.totalorder %s39, 1
      %p78 = scmp.ne.s32.totalorder %s73, %s75
      %p79 = scmp.eq.s32.totalorder %s39, 0
      %p80 = por %p78, %p79
      %p81 = scmp.ne.s32.totalorder %s73, %s75
      %p82 = scmp.eq.s32.totalorder %s44, 1
      %p83 = por %p81, %p82
      %p84 = scmp.ne.s32.totalorder %s75, %s76
      %p85 = scmp.eq.s32.totalorder %s44, 0
      %p86 = por %p84, %p85
      %p87 = scmp.ne.s32.totalorder %s75, %s76
      %p88 = scmp.eq.s32.totalorder %s45, 1
      %p89 = por %p87, %p88
      %p91 = scmp.ne.s32.totalorder %s76, %s90
      %p92 = scmp.eq.s32.totalorder %s45, 0
      %p93 = por %p91, %p92
      %s95 = sadd.s32 %s94, 1
      %p98 = scmp.eq.s32.totalorder %s39, 1
      %p99 = scmp.ne.s32.totalorder %s94, %s96
      %p100 = scmp.eq.s32.totalorder %s39, 0
      %p101 = por %p99, %p100
      %p102 = scmp.ne.s32.totalorder %s94, %s96
      %p103 = scmp.eq.s32.totalorder %s44, 1
      %p104 = por %p102, %p103
      %p105 = scmp.ne.s32.totalorder %s96, %s97
      %p106 = scmp.eq.s32.totalorder %s44, 0
      %p107 = por %p105, %p106
      %p108 = scmp.ne.s32.totalorder %s96, %s97
      %p109 = scmp.eq.s32.totalorder %s45, 1
      %p110 = por %p108, %p109
      %p112 = scmp.ne.s32.totalorder %s97, %s111
      %p113 = scmp.eq.s32.totalorder %s45, 0
      %p114 = por %p112, %p113
      %s116 = sadd.s32 %s115, 1
      %p119 = scmp.eq.s32.totalorder %s39, 1
      %p120 = scmp.ne.s32.totalorder %s115, %s117
      %p121 = scmp.eq.s32.totalorder %s39, 0
      %p122 = por %p120, %p121
      %p123 = scmp.ne.s32.totalorder %s115, %s117
      %p124 = scmp.eq.s32.totalorder %s44, 1
      %p125 = por %p123, %p124
      %p126 = scmp.ne.s32.totalorder %s117, %s118
      %p127 = scmp.eq.s32.totalorder %s44, 0
      %p128 = por %p126, %p127
      %p129 = scmp.ne.s32.totalorder %s117, %s118
      %p130 = scmp.eq.s32.totalorder %s45, 1
      %p131 = por %p129, %p130
      %p133 = scmp.ne.s32.totalorder %s118, %s132
      %p134 = scmp.eq.s32.totalorder %s45, 0
      %p135 = por %p133, %p134
      %s137 = sadd.s32 %s136, 1
      %p140 = scmp.eq.s32.totalorder %s39, 1
      %p141 = scmp.ne.s32.totalorder %s136, %s138
      %p142 = scmp.eq.s32.totalorder %s39, 0
      %p143 = por %p141, %p142
      %p144 = scmp.ne.s32.totalorder %s136, %s138
      %p145 = scmp.eq.s32.totalorder %s44, 1
      %p146 = por %p144, %p145
      %p147 = scmp.ne.s32.totalorder %s138, %s139
      %p148 = scmp.eq.s32.totalorder %s44, 0
      %p149 = por %p147, %p148
      %p150 = scmp.ne.s32.totalorder %s138, %s139
      %p151 = scmp.eq.s32.totalorder %s45, 1
      %p152 = por %p150, %p151
      %p154 = scmp.ne.s32.totalorder %s139, %s153
      %p155 = scmp.eq.s32.totalorder %s45, 0
      %p156 = por %p154, %p155
      %s158 = sadd.s32 %s157, 1
      %p161 = scmp.eq.s32.totalorder %s39, 1
      %p162 = scmp.ne.s32.totalorder %s157, %s159
      %p163 = scmp.eq.s32.totalorder %s39, 0
      %p164 = por %p162, %p163
      %p165 = scmp.ne.s32.totalorder %s157, %s159
      %p166 = scmp.eq.s32.totalorder %s44, 1
      %p167 = por %p165, %p166
      %p168 = scmp.ne.s32.totalorder %s159, %s160
      %p169 = scmp.eq.s32.totalorder %s44, 0
      %p170 = por %p168, %p169
      %p171 = scmp.ne.s32.totalorder %s159, %s160
      %p172 = scmp.eq.s32.totalorder %s45, 1
      %p173 = por %p171, %p172
      %p175 = scmp.ne.s32.totalorder %s160, %s174
      %p176 = scmp.eq.s32.totalorder %s45, 0
      %p177 = por %p175, %p176
      %s179 = sadd.s32 %s178, 1
      %p182 = scmp.eq.s32.totalorder %s39, 1
      %p183 = scmp.ne.s32.totalorder %s178, %s180
      %p184 = scmp.eq.s32.totalorder %s39, 0
      %p185 = por %p183, %p184
      %p186 = scmp.ne.s32.totalorder %s178, %s180
      %p187 = scmp.eq.s32.totalorder %s44, 1
      %p188 = por %p186, %p187
      %p189 = scmp.ne.s32.totalorder %s180, %s181
      %p190 = scmp.eq.s32.totalorder %s44, 0
      %p191 = por %p189, %p190
      %p192 = scmp.ne.s32.totalorder %s180, %s181
      %p193 = scmp.eq.s32.totalorder %s45, 1
      %p194 = por %p192, %p193
      %p196 = scmp.ne.s32.totalorder %s181, %s195
      %p197 = scmp.eq.s32.totalorder %s45, 0
      %p198 = por %p196, %p197
      %s200 = sadd.s32 %s199, 1
      %p203 = scmp.eq.s32.totalorder %s39, 1
      %p204 = scmp.ne.s32.totalorder %s199, %s201
      %p205 = scmp.eq.s32.totalorder %s39, 0
      %p206 = por %p204, %p205
      %p207 = scmp.ne.s32.totalorder %s199, %s201
      %p208 = scmp.eq.s32.totalorder %s44, 1
      %p209 = por %p207, %p208
      %p210 = scmp.ne.s32.totalorder %s201, %s202
      %p211 = scmp.eq.s32.totalorder %s44, 0
      %p212 = por %p210, %p211
      %p213 = scmp.ne.s32.totalorder %s201, %s202
      %p214 = scmp.eq.s32.totalorder %s45, 1
      %p215 = por %p213, %p214
      %p217 = scmp.ne.s32.totalorder %s202, %s216
      %p218 = scmp.eq.s32.totalorder %s45, 0
      %p219 = por %p217, %p218
      %s221 = sadd.s32 %s220, 1
      %p224 = scmp.eq.s32.totalorder %s39, 1
      %p225 = scmp.ne.s32.totalorder %s220, %s222
      %p226 = scmp.eq.s32.totalorder %s39, 0
      %p227 = por %p225, %p226
      %p228 = scmp.ne.s32.totalorder %s220, %s222
      %p229 = scmp.eq.s32.totalorder %s44, 1
      %p230 = por %p228, %p229
      %p231 = scmp.ne.s32.totalorder %s222, %s223
      %p232 = scmp.eq.s32.totalorder %s44, 0
      %p233 = por %p231, %p232
      %p234 = scmp.ne.s32.totalorder %s222, %s223
      %p235 = scmp.eq.s32.totalorder %s45, 1
      %p236 = por %p234, %p235
      %p238 = scmp.ne.s32.totalorder %s223, %s237
      %p239 = scmp.eq.s32.totalorder %s45, 0
      %p240 = por %p238, %p239
      %s242 = sadd.s32 %s241, 1
      %p245 = scmp.eq.s32.totalorder %s39, 1
      %p246 = scmp.ne.s32.totalorder %s241, %s243
      %p247 = scmp.eq.s32.totalorder %s39, 0
      %p248 = por %p246, %p247
      %p249 = scmp.ne.s32.totalorder %s241, %s243
      %p250 = scmp.eq.s32.totalorder %s44, 1
      %p251 = por %p249, %p250
      %p252 = scmp.ne.s32.totalorder %s243, %s244
      %p253 = scmp.eq.s32.totalorder %s44, 0
      %p254 = por %p252, %p253
      %p255 = scmp.ne.s32.totalorder %s243, %s244
      %p256 = scmp.eq.s32.totalorder %s45, 1
      %p257 = por %p255, %p256
      %p259 = scmp.ne.s32.totalorder %s244, %s258
      %p260 = scmp.eq.s32.totalorder %s45, 0
      %p261 = por %p259, %p260
      %s263 = sadd.s32 %s262, 1
      %p266 = scmp.eq.s32.totalorder %s39, 1
      %p267 = scmp.ne.s32.totalorder %s262, %s264
      %p268 = scmp.eq.s32.totalorder %s39, 0
      %p269 = por %p267, %p268
      %p270 = scmp.ne.s32.totalorder %s262, %s264
      %p271 = scmp.eq.s32.totalorder %s44, 1
      %p272 = por %p270, %p271
      %p273 = scmp.ne.s32.totalorder %s264, %s265
      %p274 = scmp.eq.s32.totalorder %s44, 0
      %p275 = por %p273, %p274
      %p276 = scmp.ne.s32.totalorder %s264, %s265
      %p277 = scmp.eq.s32.totalorder %s45, 1
      %p278 = por %p276, %p277
      %p280 = scmp.ne.s32.totalorder %s265, %s279
      %p281 = scmp.eq.s32.totalorder %s45, 0
      %p282 = por %p280, %p281
      %s284 = sadd.s32 %s283, 1
      %p287 = scmp.eq.s32.totalorder %s39, 1
      %p288 = scmp.ne.s32.totalorder %s283, %s285
      %p289 = scmp.eq.s32.totalorder %s39, 0
      %p290 = por %p288, %p289
      %p291 = scmp.ne.s32.totalorder %s283, %s285
      %p292 = scmp.eq.s32.totalorder %s44, 1
      %p293 = por %p291, %p292
      %p294 = scmp.ne.s32.totalorder %s285, %s286
      %p295 = scmp.eq.s32.totalorder %s44, 0
      %p296 = por %p294, %p295
      %p297 = scmp.ne.s32.totalorder %s285, %s286
      %p298 = scmp.eq.s32.totalorder %s45, 1
      %p299 = por %p297, %p298
      %p301 = scmp.ne.s32.totalorder %s286, %s300
      %p302 = scmp.eq.s32.totalorder %s45, 0
      %p303 = por %p301, %p302
      %s305 = sadd.s32 %s304, 1
      %p308 = scmp.eq.s32.totalorder %s39, 1
      %p309 = scmp.ne.s32.totalorder %s304, %s306
      %p310 = scmp.eq.s32.totalorder %s39, 0
      %p311 = por %p309, %p310
      %p312 = scmp.ne.s32.totalorder %s304, %s306
      %p313 = scmp.eq.s32.totalorder %s44, 1
      %p314 = por %p312, %p313
      %p315 = scmp.ne.s32.totalorder %s306, %s307
      %p316 = scmp.eq.s32.totalorder %s44, 0
      %p317 = por %p315, %p316
      %p318 = scmp.ne.s32.totalorder %s306, %s307
      %p319 = scmp.eq.s32.totalorder %s45, 1
      %p320 = por %p318, %p319
      %p322 = scmp.ne.s32.totalorder %s307, %s321
      %p323 = scmp.eq.s32.totalorder %s45, 0
      %p324 = por %p322, %p323
      %s326 = sadd.s32 %s325, 1
      %p329 = scmp.eq.s32.totalorder %s39, 1
      %p330 = scmp.ne.s32.totalorder %s325, %s327
      %p331 = scmp.eq.s32.totalorder %s39, 0
      %p332 = por %p330, %p331
      %p333 = scmp.ne.s32.totalorder %s325, %s327
      %p334 = scmp.eq.s32.totalorder %s44, 1
      %p335 = por %p333, %p334
      %p336 = scmp.ne.s32.totalorder %s327, %s328
      %p337 = scmp.eq.s32.totalorder %s44, 0
      %p338 = por %p336, %p337
      %p339 = scmp.ne.s32.totalorder %s327, %s328
      %p340 = scmp.eq.s32.totalorder %s45, 1
      %p341 = por %p339, %p340
      %p343 = scmp.ne.s32.totalorder %s328, %s342
      %p344 = scmp.eq.s32.totalorder %s45, 0
      %p345 = por %p343, %p344
      %s347 = sadd.s32 %s346, 1
      %p350 = scmp.eq.s32.totalorder %s39, 1
      %p351 = scmp.ne.s32.totalorder %s346, %s348
      %p352 = scmp.eq.s32.totalorder %s39, 0
      %p353 = por %p351, %p352
      %p354 = scmp.ne.s32.totalorder %s346, %s348
      %p355 = scmp.eq.s32.totalorder %s44, 1
      %p356 = por %p354, %p355
      %p357 = scmp.ne.s32.totalorder %s348, %s349
      %p358 = scmp.eq.s32.totalorder %s44, 0
      %p359 = por %p357, %p358
      %p360 = scmp.ne.s32.totalorder %s348, %s349
      %p361 = scmp.eq.s32.totalorder %s45, 1
      %p362 = por %p360, %p361
      %p364 = scmp.ne.s32.totalorder %s349, %s363
      %p365 = scmp.eq.s32.totalorder %s45, 0
      %p366 = por %p364, %p365
      %s368 = sadd.s32 %s367, 1
      %p371 = scmp.eq.s32.totalorder %s39, 1
      %p372 = scmp.ne.s32.totalorder %s367, %s369
      %p373 = scmp.eq.s32.totalorder %s39, 0
      %p374 = por %p372, %p373
      %p375 = scmp.ne.s32.totalorder %s367, %s369
      %p376 = scmp.eq.s32.totalorder %s44, 1
      %p377 = por %p375, %p376
      %p378 = scmp.ne.s32.totalorder %s369, %s370
      %p379 = scmp.eq.s32.totalorder %s44, 0
      %p380 = por %p378, %p379
      %p381 = scmp.ne.s32.totalorder %s369, %s370
      %p382 = scmp.eq.s32.totalorder %s45, 1
      %p383 = por %p381, %p382
      %p385 = scmp.ne.s32.totalorder %s370, %s384
      %p386 = scmp.eq.s32.totalorder %s45, 0
      %p387 = por %p385, %p386
      %s389 = sadd.s32 %s388, 1
      %p392 = scmp.eq.s32.totalorder %s39, 1
      %p393 = scmp.ne.s32.totalorder %s388, %s390
      %p394 = scmp.eq.s32.totalorder %s39, 0
      %p395 = por %p393, %p394
      %p396 = scmp.ne.s32.totalorder %s388, %s390
      %p397 = scmp.eq.s32.totalorder %s44, 1
      %p398 = por %p396, %p397
      %p399 = scmp.ne.s32.totalorder %s390, %s391
      %p400 = scmp.eq.s32.totalorder %s44, 0
      %p401 = por %p399, %p400
      %p402 = scmp.ne.s32.totalorder %s390, %s391
      %p403 = scmp.eq.s32.totalorder %s45, 1
      %p404 = por %p402, %p403
      %p406 = scmp.ne.s32.totalorder %s391, %s405
      %p407 = scmp.eq.s32.totalorder %s45, 0
      %p408 = por %p406, %p407
      %s410 = sadd.s32 %s409, 1
      %p413 = scmp.eq.s32.totalorder %s39, 1
      %p414 = scmp.ne.s32.totalorder %s409, %s411
      %p415 = scmp.eq.s32.totalorder %s39, 0
      %p416 = por %p414, %p415
      %p417 = scmp.ne.s32.totalorder %s409, %s411
      %p418 = scmp.eq.s32.totalorder %s44, 1
      %p419 = por %p417, %p418
      %p420 = scmp.ne.s32.totalorder %s411, %s412
      %p421 = scmp.eq.s32.totalorder %s44, 0
      %p422 = por %p420, %p421
      %p423 = scmp.ne.s32.totalorder %s411, %s412
      %p424 = scmp.eq.s32.totalorder %s45, 1
      %p425 = por %p423, %p424
      %p427 = scmp.ne.s32.totalorder %s412, %s426
      %p428 = scmp.eq.s32.totalorder %s45, 0
      %p429 = por %p427, %p428
      %s431 = sadd.s32 %s430, 1
      %p434 = scmp.eq.s32.totalorder %s39, 1
      %p435 = scmp.ne.s32.totalorder %s430, %s432
      %p436 = scmp.eq.s32.totalorder %s39, 0
      %p437 = por %p435, %p436
      %p438 = scmp.ne.s32.totalorder %s430, %s432
      %p439 = scmp.eq.s32.totalorder %s44, 1
      %p440 = por %p438, %p439
      %p441 = scmp.ne.s32.totalorder %s432, %s433
      %p442 = scmp.eq.s32.totalorder %s44, 0
      %p443 = por %p441, %p442
      %p444 = scmp.ne.s32.totalorder %s432, %s433
      %p445 = scmp.eq.s32.totalorder %s45, 1
      %p446 = por %p444, %p445
      %p448 = scmp.ne.s32.totalorder %s433, %s447
      %p449 = scmp.eq.s32.totalorder %s45, 0
      %p450 = por %p448, %p449
      %s452 = sadd.s32 %s451, 1
      %p455 = scmp.eq.s32.totalorder %s39, 1
      %p456 = scmp.ne.s32.totalorder %s451, %s453
      %p457 = scmp.eq.s32.totalorder %s39, 0
      %p458 = por %p456, %p457
      %p459 = scmp.ne.s32.totalorder %s451, %s453
      %p460 = scmp.eq.s32.totalorder %s44, 1
      %p461 = por %p459, %p460
      %p462 = scmp.ne.s32.totalorder %s453, %s454
      %p463 = scmp.eq.s32.totalorder %s44, 0
      %p464 = por %p462, %p463
      %p465 = scmp.ne.s32.totalorder %s453, %s454
      %p466 = scmp.eq.s32.totalorder %s45, 1
      %p467 = por %p465, %p466
      %p469 = scmp.ne.s32.totalorder %s454, %s468
      %p470 = scmp.eq.s32.totalorder %s45, 0
      %p471 = por %p469, %p470
      %s472 = ssub.s32 %s39, %s46
      %p473 = scmp.eq.s32.totalorder %s472, 0
      %s475 = sadd.s32 %s474, 1
      %s476 = scalar_select %p473, %s474, %s475
      %p479 = pneg %p473
      %p480 = scmp.eq.s32.totalorder %s39, 1
      %p481 = por %p479, %p480
      %p482 = scmp.ne.s32.totalorder %s474, %s477
      %p483 = scmp.eq.s32.totalorder %s39, 0
      %p484 = por %p482, %p483
      %p485 = scmp.ne.s32.totalorder %s474, %s477
      %p486 = scmp.eq.s32.totalorder %s44, 1
      %p487 = por %p485, %p486
      %p488 = scmp.ne.s32.totalorder %s477, %s478
      %p489 = scmp.eq.s32.totalorder %s44, 0
      %p490 = por %p488, %p489
      %p491 = scmp.ne.s32.totalorder %s477, %s478
      %p492 = scmp.eq.s32.totalorder %s45, 1
      %p493 = por %p491, %p492
      %p495 = scmp.ne.s32.totalorder %s478, %s494
      %p496 = scmp.eq.s32.totalorder %s45, 0
      %p497 = por %p495, %p496
      %p498 = scmp.le.s32.totalorder 1, %s39
      %p499 = scmp.lt.s32.totalorder %s39, 3
      %p500 = pnand %p498, %p499
      %p501 = pneg %p500
      // Predicated region
      $region9: #{convnet_forward.1} parent=5 // pred_check
        _
      $region10: #{convnet_forward.1} parent=5 // pred_check_branch
        %503 = sbr.rel (%p500) target = $region12
      $region11: #{convnet_forward.1} parent=5 // pred_region
        %s504 = ssub.s32 %s39, 1
        // Predicated region
        $region13: #{convnet_forward.1} parent=11 // pred_check
          %p505 = pneg %p86
        $region14: #{convnet_forward.1} parent=11 // pred_check_branch
          %507 = sbr.rel (%p505) target = $region16
        $region15: #{convnet_forward.1} parent=11 // pred_region
          %s509 = ssub.s32 18432, 18432
          %510 = vsyncadd [#allocation3], %s509
          %s511 = sshll.u32 [#allocation2], 4
          %s512 = int_to_ptr.vmem [resolvable:$true] %s511
          %517 = dma.hbm_to_vmem [thread:$0]  %s1, 18432, %s512, [#allocation3], 512, 512, 32
        $region16: #{convnet_forward.1} parent=11 // pred_fallthru
          _
        // Predicated region
        $region17: #{convnet_forward.1} parent=11 // pred_check
          %p518 = pneg %p107
        $region18: #{convnet_forward.1} parent=11 // pred_check_branch
          %520 = sbr.rel (%p518) target = $region20
        $region19: #{convnet_forward.1} parent=11 // pred_region
          %s522 = ssub.s32 1536, 1536
          %523 = vsyncadd [#allocation6], %s522
          %s524 = sshll.u32 [#allocation5], 4
          %s525 = int_to_ptr.vmem [resolvable:$true] %s524
          %530 = dma.hbm_to_vmem [thread:$0]  %s2, 1536, %s525, [#allocation6], 128, 128, 8
        $region20: #{convnet_forward.1} parent=11 // pred_fallthru
          _
        // Predicated region
        $region21: #{convnet_forward.1} parent=11 // pred_check
          %p531 = pneg %p128
        $region22: #{convnet_forward.1} parent=11 // pred_check_branch
          %533 = sbr.rel (%p531) target = $region24
        $region23: #{convnet_forward.1} parent=11 // pred_region
          %s535 = ssub.s32 32768, 32768
          %536 = vsyncadd [#allocation6], %s535
          %s537 = sshll.u32 [#allocation7], 4
          %s538 = int_to_ptr.vmem [resolvable:$true] %s537
          %543 = dma.hbm_to_vmem [thread:$0]  %s3, 32768, %s538, [#allocation6], 256, 256, 16
        $region24: #{convnet_forward.1} parent=11 // pred_fallthru
          _
        // Predicated region
        $region25: #{convnet_forward.1} parent=11 // pred_check
          %p544 = pneg %p149
        $region26: #{convnet_forward.1} parent=11 // pred_check_branch
          %546 = sbr.rel (%p544) target = $region28
        $region27: #{convnet_forward.1} parent=11 // pred_region
          %s548 = ssub.s32 128, 128
          %549 = vsyncadd [#allocation9], %s548
          %s550 = sshll.u32 [#allocation8], 4
          %s551 = int_to_ptr.vmem [resolvable:$true] %s550
          %556 = dma.hbm_to_vmem [thread:$0]  %s4, 128, %s551, [#allocation9], 64, 64, 4
        $region28: #{convnet_forward.1} parent=11 // pred_fallthru
          _
        // Predicated region
        $region29: #{convnet_forward.1} parent=11 // pred_check
          %p557 = pneg %p170
        $region30: #{convnet_forward.1} parent=11 // pred_check_branch
          %559 = sbr.rel (%p557) target = $region32
        $region31: #{convnet_forward.1} parent=11 // pred_region
          %s561 = ssub.s32 512, 512
          %562 = vsyncadd [#allocation9], %s561
          %s563 = sshll.u32 [#allocation10], 4
          %s564 = int_to_ptr.vmem [resolvable:$true] %s563
          %569 = dma.hbm_to_vmem [thread:$0]  %s5, 512, %s564, [#allocation9], 128, 128, 8
        $region32: #{convnet_forward.1} parent=11 // pred_fallthru
          _
        // Predicated region
        $region33: #{convnet_forward.1} parent=11 // pred_check
          %p570 = pneg %p191
        $region34: #{convnet_forward.1} parent=11 // pred_check_branch
          %572 = sbr.rel (%p570) target = $region36
        $region35: #{convnet_forward.1} parent=11 // pred_region
          %s574 = ssub.s32 49152, 49152
          %575 = vsyncadd [#allocation12], %s574
          %s576 = sshll.u32 [#allocation11], 4
          %s577 = int_to_ptr.vmem [resolvable:$true] %s576
          %582 = dma.hbm_to_vmem [thread:$0]  %s6, 49152, %s577, [#allocation12], 512, 512, 32
        $region36: #{convnet_forward.1} parent=11 // pred_fallthru
          _
        // Predicated region
        $region37: #{convnet_forward.1} parent=11 // pred_check
          %p583 = pneg %p212
        $region38: #{convnet_forward.1} parent=11 // pred_check_branch
          %585 = sbr.rel (%p583) target = $region40
        $region39: #{convnet_forward.1} parent=11 // pred_region
          %s587 = ssub.s32 768, 768
          %588 = vsyncadd [#allocation12], %s587
          %s589 = sshll.u32 [#allocation13], 4
          %s590 = int_to_ptr.vmem [resolvable:$true] %s589
          %595 = dma.hbm_to_vmem [thread:$0]  %s7, 768, %s590, [#allocation12], 128, 128, 8
        $region40: #{convnet_forward.1} parent=11 // pred_fallthru
          _
        // Predicated region
        $region41: #{convnet_forward.1} parent=11 // pred_check
          %p596 = pneg %p233
        $region42: #{convnet_forward.1} parent=11 // pred_check_branch
          %598 = sbr.rel (%p596) target = $region44
        $region43: #{convnet_forward.1} parent=11 // pred_region
          %s600 = ssub.s32 32768, 32768
          %601 = vsyncadd [#allocation15], %s600
          %s602 = sshll.u32 [#allocation14], 4
          %s603 = int_to_ptr.vmem [resolvable:$true] %s602
          %608 = dma.hbm_to_vmem [thread:$0]  %s8, 32768, %s603, [#allocation15], 256, 256, 16
        $region44: #{convnet_forward.1} parent=11 // pred_fallthru
          _
        // Predicated region
        $region45: #{convnet_forward.1} parent=11 // pred_check
          %p609 = pneg %p254
        $region46: #{convnet_forward.1} parent=11 // pred_check_branch
          %611 = sbr.rel (%p609) target = $region48
        $region47: #{convnet_forward.1} parent=11 // pred_region
          %s613 = ssub.s32 128, 128
          %614 = vsyncadd [#allocation15], %s613
          %s615 = sshll.u32 [#allocation16], 4
          %s616 = int_to_ptr.vmem [resolvable:$true] %s615
          %621 = dma.hbm_to_vmem [thread:$0]  %s9, 128, %s616, [#allocation15], 64, 64, 4
        $region48: #{convnet_forward.1} parent=11 // pred_fallthru
          _
        // Predicated region
        $region49: #{convnet_forward.1} parent=11 // pred_check
          %p622 = pneg %p275
        $region50: #{convnet_forward.1} parent=11 // pred_check_branch
          %624 = sbr.rel (%p622) target = $region52
        $region51: #{convnet_forward.1} parent=11 // pred_region
          %s626 = ssub.s32 256, 256
          %627 = vsyncadd [#allocation18], %s626
          %s628 = sshll.u32 [#allocation17], 4
          %s629 = int_to_ptr.vmem [resolvable:$true] %s628
          %634 = dma.hbm_to_vmem [thread:$0]  %s10, 256, %s629, [#allocation18], 128, 128, 8
        $region52: #{convnet_forward.1} parent=11 // pred_fallthru
          _
        // Predicated region
        $region53: #{convnet_forward.1} parent=11 // pred_check
          %p635 = pneg %p296
        $region54: #{convnet_forward.1} parent=11 // pred_check_branch
          %637 = sbr.rel (%p635) target = $region56
        $region55: #{convnet_forward.1} parent=11 // pred_region
          %s639 = ssub.s32 49152, 49152
          %640 = vsyncadd [#allocation18], %s639
          %s641 = sshll.u32 [#allocation19], 4
          %s642 = int_to_ptr.vmem [resolvable:$true] %s641
          %647 = dma.hbm_to_vmem [thread:$0]  %s11, 49152, %s642, [#allocation18], 512, 512, 32
        $region56: #{convnet_forward.1} parent=11 // pred_fallthru
          _
        // Predicated region
        $region57: #{convnet_forward.1} parent=11 // pred_check
          %p648 = pneg %p317
        $region58: #{convnet_forward.1} parent=11 // pred_check_branch
          %650 = sbr.rel (%p648) target = $region60
        $region59: #{convnet_forward.1} parent=11 // pred_region
          %s652 = ssub.s32 384, 384
          %653 = vsyncadd [#allocation21], %s652
          %s654 = sshll.u32 [#allocation20], 4
          %s655 = int_to_ptr.vmem [resolvable:$true] %s654
          %660 = dma.hbm_to_vmem [thread:$0]  %s12, 384, %s655, [#allocation21], 128, 128, 8
        $region60: #{convnet_forward.1} parent=11 // pred_fallthru
          _
        // Predicated region
        $region61: #{convnet_forward.1} parent=11 // pred_check
          %p661 = pneg %p338
        $region62: #{convnet_forward.1} parent=11 // pred_check_branch
          %663 = sbr.rel (%p661) target = $region64
        $region63: #{convnet_forward.1} parent=11 // pred_region
          %s665 = ssub.s32 32768, 32768
          %666 = vsyncadd [#allocation21], %s665
          %s667 = sshll.u32 [#allocation22], 4
          %s668 = int_to_ptr.vmem [resolvable:$true] %s667
          %673 = dma.hbm_to_vmem [thread:$0]  %s13, 32768, %s668, [#allocation21], 256, 256, 16
        $region64: #{convnet_forward.1} parent=11 // pred_fallthru
          _
        // Predicated region
        $region65: #{convnet_forward.1} parent=11 // pred_check
          %p674 = pneg %p359
        $region66: #{convnet_forward.1} parent=11 // pred_check_branch
          %676 = sbr.rel (%p674) target = $region68
        $region67: #{convnet_forward.1} parent=11 // pred_region
          %s678 = ssub.s32 128, 128
          %679 = vsyncadd [#allocation24], %s678
          %s680 = sshll.u32 [#allocation23], 4
          %s681 = int_to_ptr.vmem [resolvable:$true] %s680
          %686 = dma.hbm_to_vmem [thread:$0]  %s14, 128, %s681, [#allocation24], 64, 64, 4
        $region68: #{convnet_forward.1} parent=11 // pred_fallthru
          _
        // Predicated region
        $region69: #{convnet_forward.1} parent=11 // pred_check
          %p687 = pneg %p380
        $region70: #{convnet_forward.1} parent=11 // pred_check_branch
          %689 = sbr.rel (%p687) target = $region72
        $region71: #{convnet_forward.1} parent=11 // pred_region
          %s691 = ssub.s32 128, 128
          %692 = vsyncadd [#allocation24], %s691
          %s693 = sshll.u32 [#allocation25], 4
          %s694 = int_to_ptr.vmem [resolvable:$true] %s693
          %699 = dma.hbm_to_vmem [thread:$0]  %s15, 128, %s694, [#allocation24], 64, 64, 4
        $region72: #{convnet_forward.1} parent=11 // pred_fallthru
          _
        // Predicated region
        $region73: #{convnet_forward.1} parent=11 // pred_check
          %p700 = pneg %p401
        $region74: #{convnet_forward.1} parent=11 // pred_check_branch
          %702 = sbr.rel (%p700) target = $region76
        $region75: #{convnet_forward.1} parent=11 // pred_region
          %s704 = ssub.s32 32768, 32768
          %705 = vsyncadd [#allocation27], %s704
          %s706 = sshll.u32 [#allocation26], 4
          %s707 = int_to_ptr.vmem [resolvable:$true] %s706
          %712 = dma.hbm_to_vmem [thread:$0]  %s16, 32768, %s707, [#allocation27], 256, 256, 16
        $region76: #{convnet_forward.1} parent=11 // pred_fallthru
          _
        // Predicated region
        $region77: #{convnet_forward.1} parent=11 // pred_check
          %p713 = pneg %p422
        $region78: #{convnet_forward.1} parent=11 // pred_check_branch
          %715 = sbr.rel (%p713) target = $region80
        $region79: #{convnet_forward.1} parent=11 // pred_region
          %s717 = ssub.s32 32, 32
          %718 = vsyncadd [#allocation27], %s717
          %s720 = sshll.u32 [#allocation28], 4
          %s721 = int_to_ptr.vmem [resolvable:$true] %s720
          %723 = dma.hbm_to_vmem [thread:$0]  %s17, 32, %s721, [#allocation27]
        $region80: #{convnet_forward.1} parent=11 // pred_fallthru
          _
        // Predicated region
        $region81: #{convnet_forward.1} parent=11 // pred_check
          %p724 = pneg %p443
        $region82: #{convnet_forward.1} parent=11 // pred_check_branch
          %726 = sbr.rel (%p724) target = $region84
        $region83: #{convnet_forward.1} parent=11 // pred_region
          %s728 = ssub.s32 4096, 4096
          %729 = vsyncadd [#allocation30], %s728
          %s730 = sshll.u32 [#allocation29], 4
          %s731 = int_to_ptr.vmem [resolvable:$true] %s730
          %736 = dma.hbm_to_vmem [thread:$0]  %s18, 4096, %s731, [#allocation30], 128, 128, 8
        $region84: #{convnet_forward.1} parent=11 // pred_fallthru
          _
        // Predicated region
        $region85: #{convnet_forward.1} parent=11 // pred_check
          %p737 = pneg %p464
        $region86: #{convnet_forward.1} parent=11 // pred_check_branch
          %739 = sbr.rel (%p737) target = $region88
        $region87: #{convnet_forward.1} parent=11 // pred_region
          %s741 = ssub.s32 16, 16
          %742 = vsyncadd [#allocation30], %s741
          %s744 = sshll.u32 [#allocation31], 4
          %s745 = int_to_ptr.vmem [resolvable:$true] %s744
          %747 = dma.hbm_to_vmem [thread:$0]  %s19, 16, %s745, [#allocation30]
        $region88: #{convnet_forward.1} parent=11 // pred_fallthru
          _
      $region12: #{convnet_forward.1} parent=5 // pred_fallthru
        _
      %p748 = scmp.lt.s32.totalorder %s39, 2
      // Predicated region
      $region89: #{convnet_forward.1} parent=5 // pred_check
        %p749 = pneg %p748
      $region90: #{convnet_forward.1} parent=5 // pred_check_branch
        %751 = sbr.rel (%p749) target = $region92
      $region91: #{convnet_forward.1} parent=5 // pred_region
        // Predicated region
        $region93: #{convnet_forward.1} parent=91 // pred_check
          %p752 = pneg %p59
        $region94: #{convnet_forward.1} parent=91 // pred_check_branch
          %754 = sbr.rel (%p752) target = $region96
        $region95: #{convnet_forward.1} parent=91 // pred_region
          %p755 = scmp.lt.s32.totalorder %s39, 1
          %s756 = scalar_select %p755, %s39, 1
          %s757 = smul.addr %s756, 4
          %s758 = smul.addr %s757, 8
          %s759 = scalar_lea.vmem %s0, %s758
        $region96: #{convnet_forward.1} parent=91 // pred_fallthru
          _
      $region92: #{convnet_forward.1} parent=5 // pred_fallthru
        _
      %p760 = scmp.le.s32.totalorder 1, %s39
      %p761 = scmp.lt.s32.totalorder %s39, 3
      %p762 = pnand %p760, %p761
      %p763 = pneg %p762
      // Predicated region
      $region97: #{convnet_forward.1} parent=5 // pred_check
        _
      $region98: #{convnet_forward.1} parent=5 // pred_check_branch
        %765 = sbr.rel (%p762) target = $region100
      $region99: #{convnet_forward.1} parent=5 // pred_region
        %s766 = ssub.s32 %s39, 1
        // Predicated region
        $region101: #{convnet_forward.1} parent=99 // pred_check
          %p767 = pneg %p86
        $region102: #{convnet_forward.1} parent=99 // pred_check_branch
          %769 = sbr.rel (%p767) target = $region104
        $region103: #{convnet_forward.1} parent=99 // pred_region
          %770 = dma.done [#allocation3], 18432
        $region104: #{convnet_forward.1} parent=99 // pred_fallthru
          _
        // Predicated region
        $region105: #{convnet_forward.1} parent=99 // pred_check
          %p771 = pneg %p107
        $region106: #{convnet_forward.1} parent=99 // pred_check_branch
          %773 = sbr.rel (%p771) target = $region108
        $region107: #{convnet_forward.1} parent=99 // pred_region
          %774 = dma.done [#allocation6], 1536
        $region108: #{convnet_forward.1} parent=99 // pred_fallthru
          _
        // Predicated region
        $region109: #{convnet_forward.1} parent=99 // pred_check
          %p775 = pneg %p128
        $region110: #{convnet_forward.1} parent=99 // pred_check_branch
          %777 = sbr.rel (%p775) target = $region112
        $region111: #{convnet_forward.1} parent=99 // pred_region
          %778 = dma.done [#allocation6], 32768
        $region112: #{convnet_forward.1} parent=99 // pred_fallthru
          _
        // Predicated region
        $region113: #{convnet_forward.1} parent=99 // pred_check
          %p779 = pneg %p149
        $region114: #{convnet_forward.1} parent=99 // pred_check_branch
          %781 = sbr.rel (%p779) target = $region116
        $region115: #{convnet_forward.1} parent=99 // pred_region
          %782 = dma.done [#allocation9], 128
        $region116: #{convnet_forward.1} parent=99 // pred_fallthru
          _
        // Predicated region
        $region117: #{convnet_forward.1} parent=99 // pred_check
          %p783 = pneg %p170
        $region118: #{convnet_forward.1} parent=99 // pred_check_branch
          %785 = sbr.rel (%p783) target = $region120
        $region119: #{convnet_forward.1} parent=99 // pred_region
          %786 = dma.done [#allocation9], 512
        $region120: #{convnet_forward.1} parent=99 // pred_fallthru
          _
        // Predicated region
        $region121: #{convnet_forward.1} parent=99 // pred_check
          %p787 = pneg %p191
        $region122: #{convnet_forward.1} parent=99 // pred_check_branch
          %789 = sbr.rel (%p787) target = $region124
        $region123: #{convnet_forward.1} parent=99 // pred_region
          %790 = dma.done [#allocation12], 49152
        $region124: #{convnet_forward.1} parent=99 // pred_fallthru
          _
        // Predicated region
        $region125: #{convnet_forward.1} parent=99 // pred_check
          %p791 = pneg %p212
        $region126: #{convnet_forward.1} parent=99 // pred_check_branch
          %793 = sbr.rel (%p791) target = $region128
        $region127: #{convnet_forward.1} parent=99 // pred_region
          %794 = dma.done [#allocation12], 768
        $region128: #{convnet_forward.1} parent=99 // pred_fallthru
          _
        // Predicated region
        $region129: #{convnet_forward.1} parent=99 // pred_check
          %p795 = pneg %p233
        $region130: #{convnet_forward.1} parent=99 // pred_check_branch
          %797 = sbr.rel (%p795) target = $region132
        $region131: #{convnet_forward.1} parent=99 // pred_region
          %798 = dma.done [#allocation15], 32768
        $region132: #{convnet_forward.1} parent=99 // pred_fallthru
          _
        // Predicated region
        $region133: #{convnet_forward.1} parent=99 // pred_check
          %p799 = pneg %p254
        $region134: #{convnet_forward.1} parent=99 // pred_check_branch
          %801 = sbr.rel (%p799) target = $region136
        $region135: #{convnet_forward.1} parent=99 // pred_region
          %802 = dma.done [#allocation15], 128
        $region136: #{convnet_forward.1} parent=99 // pred_fallthru
          _
        // Predicated region
        $region137: #{convnet_forward.1} parent=99 // pred_check
          %p803 = pneg %p275
        $region138: #{convnet_forward.1} parent=99 // pred_check_branch
          %805 = sbr.rel (%p803) target = $region140
        $region139: #{convnet_forward.1} parent=99 // pred_region
          %806 = dma.done [#allocation18], 256
        $region140: #{convnet_forward.1} parent=99 // pred_fallthru
          _
        // Predicated region
        $region141: #{convnet_forward.1} parent=99 // pred_check
          %p807 = pneg %p296
        $region142: #{convnet_forward.1} parent=99 // pred_check_branch
          %809 = sbr.rel (%p807) target = $region144
        $region143: #{convnet_forward.1} parent=99 // pred_region
          %810 = dma.done [#allocation18], 49152
        $region144: #{convnet_forward.1} parent=99 // pred_fallthru
          _
        // Predicated region
        $region145: #{convnet_forward.1} parent=99 // pred_check
          %p811 = pneg %p317
        $region146: #{convnet_forward.1} parent=99 // pred_check_branch
          %813 = sbr.rel (%p811) target = $region148
        $region147: #{convnet_forward.1} parent=99 // pred_region
          %814 = dma.done [#allocation21], 384
        $region148: #{convnet_forward.1} parent=99 // pred_fallthru
          _
        // Predicated region
        $region149: #{convnet_forward.1} parent=99 // pred_check
          %p815 = pneg %p338
        $region150: #{convnet_forward.1} parent=99 // pred_check_branch
          %817 = sbr.rel (%p815) target = $region152
        $region151: #{convnet_forward.1} parent=99 // pred_region
          %818 = dma.done [#allocation21], 32768
        $region152: #{convnet_forward.1} parent=99 // pred_fallthru
          _
        // Predicated region
        $region153: #{convnet_forward.1} parent=99 // pred_check
          %p819 = pneg %p359
        $region154: #{convnet_forward.1} parent=99 // pred_check_branch
          %821 = sbr.rel (%p819) target = $region156
        $region155: #{convnet_forward.1} parent=99 // pred_region
          %822 = dma.done [#allocation24], 128
        $region156: #{convnet_forward.1} parent=99 // pred_fallthru
          _
        // Predicated region
        $region157: #{convnet_forward.1} parent=99 // pred_check
          %p823 = pneg %p380
        $region158: #{convnet_forward.1} parent=99 // pred_check_branch
          %825 = sbr.rel (%p823) target = $region160
        $region159: #{convnet_forward.1} parent=99 // pred_region
          %826 = dma.done [#allocation24], 128
        $region160: #{convnet_forward.1} parent=99 // pred_fallthru
          _
        // Predicated region
        $region161: #{convnet_forward.1} parent=99 // pred_check
          %p827 = pneg %p401
        $region162: #{convnet_forward.1} parent=99 // pred_check_branch
          %829 = sbr.rel (%p827) target = $region164
        $region163: #{convnet_forward.1} parent=99 // pred_region
          %830 = dma.done [#allocation27], 32768
        $region164: #{convnet_forward.1} parent=99 // pred_fallthru
          _
        // Predicated region
        $region165: #{convnet_forward.1} parent=99 // pred_check
          %p831 = pneg %p422
        $region166: #{convnet_forward.1} parent=99 // pred_check_branch
          %833 = sbr.rel (%p831) target = $region168
        $region167: #{convnet_forward.1} parent=99 // pred_region
          %834 = dma.done [#allocation27], 32
        $region168: #{convnet_forward.1} parent=99 // pred_fallthru
          _
        // Predicated region
        $region169: #{convnet_forward.1} parent=99 // pred_check
          %p835 = pneg %p443
        $region170: #{convnet_forward.1} parent=99 // pred_check_branch
          %837 = sbr.rel (%p835) target = $region172
        $region171: #{convnet_forward.1} parent=99 // pred_region
          %838 = dma.done [#allocation30], 4096
        $region172: #{convnet_forward.1} parent=99 // pred_fallthru
          _
        // Predicated region
        $region173: #{convnet_forward.1} parent=99 // pred_check
          %p839 = pneg %p464
        $region174: #{convnet_forward.1} parent=99 // pred_check_branch
          %841 = sbr.rel (%p839) target = $region176
        $region175: #{convnet_forward.1} parent=99 // pred_region
          %842 = dma.done [#allocation30], 16
        $region176: #{convnet_forward.1} parent=99 // pred_fallthru
          _
        %p843 = scmp.lt.s32.totalorder %s44, 1
        %s844 = scalar_select %p843, %s44, 1
        %s845 = smul.addr %s844, 4
        %s846 = smul.addr %s845, 8
        %s847 = scalar_lea.vmem %s0, %s846
        %p848 = pneg %p65
        %p849 = pneg %p62
        %p850 = pneg %p86
        %p851 = pneg %p83
        %p852 = pneg %p107
        %p853 = pneg %p104
        %p854 = pneg %p128
        %p855 = pneg %p125
        %p856 = pneg %p149
        %p857 = pneg %p146
        %p858 = pneg %p170
        %p859 = pneg %p167
        %p860 = pneg %p191
        %p861 = pneg %p188
        %p862 = pneg %p212
        %p863 = pneg %p209
        %p864 = pneg %p233
        %p865 = pneg %p230
        %p866 = pneg %p254
        %p867 = pneg %p251
        %p868 = pneg %p275
        %p869 = pneg %p272
        %p870 = pneg %p296
        %p871 = pneg %p293
        %p872 = pneg %p317
        %p873 = pneg %p314
        %p874 = pneg %p338
        %p875 = pneg %p335
        %p876 = pneg %p359
        %p877 = pneg %p356
        %p878 = pneg %p380
        %p879 = pneg %p377
        %p880 = pneg %p401
        %p881 = pneg %p398
        %p882 = pneg %p422
        %p883 = pneg %p419
        %p884 = pneg %p443
        %p885 = pneg %p440
        %p886 = pneg %p464
        %p887 = pneg %p461
        %p888 = pneg %p490
        %p889 = pneg %p487
        %s890 = sand.u32 %s477, 1
        %s891 = scalar_lea.sflag [#allocation4], %s890
        %s892 = sand.u32 %s477, 1
        %s893 = scalar_lea.vmem [#allocation32], %s892
        %p894 = scmp.lt.s32.totalorder %s44, 1
        %s895 = scalar_select %p894, %s44, 1
        %s896 = smul.addr %s895, 4
        %s897 = smul.addr %s896, 8
        %s898 = scalar_lea.vmem %s0, %s897
        %v899 = vld [vmem:[%s898] sm:$0xff]
        %v900 = vld [vmem:[%s898 + $0x8] sm:$0xff]
        %v901 = vld [vmem:[%s898 + $0x10] sm:$0xff]
        %v902 = vld [vmem:[%s898 + $0x18] sm:$0xff]
        %v903 = vld [vmem:[#allocation5] sm:$0xff]
        %v904 = vld [vmem:[#allocation5 + $0x8] sm:$0xff]
        %v905 = vld [vmem:[#allocation5 + $0x10] sm:$0xff]
        %v906 = vld [vmem:[#allocation5 + $0x18] sm:$0xff]
        %v907 = vld [vmem:[#allocation2] sm:$0xff]
        %v908 = vld [vmem:[#allocation2 + $0x8] sm:$0xff]
        %v909 = vld [vmem:[#allocation2 + $0x10] sm:$0xff]
        %v910 = vld [vmem:[#allocation2 + $0x18] sm:$0xff]
        %v911 = vld [vmem:[#allocation2 + $0x20] sm:$0xff]
        %v912 = vld [vmem:[#allocation2 + $0x28] sm:$0xff]
        %v913 = vld [vmem:[#allocation2 + $0x30] sm:$0xff]
        %v914 = vld [vmem:[#allocation2 + $0x38] sm:$0xff]
        %v915 = vld [vmem:[#allocation2 + $0x40] sm:$0xff]
        %v916 = vld [vmem:[#allocation2 + $0x48] sm:$0xff]
        %v917 = vld [vmem:[#allocation2 + $0x50] sm:$0xff]
        %v918 = vld [vmem:[#allocation2 + $0x58] sm:$0xff]
        %v919 = vld [vmem:[#allocation2 + $0x60] sm:$0xff]
        %v920 = vld [vmem:[#allocation2 + $0x68] sm:$0xff]
        %v921 = vld [vmem:[#allocation2 + $0x70] sm:$0xff]
        %v922 = vld [vmem:[#allocation2 + $0x78] sm:$0xff]
        %v923 = vld [vmem:[#allocation2 + $0x80] sm:$0xff]
        %v924 = vld [vmem:[#allocation2 + $0x88] sm:$0xff]
        %v925 = vld [vmem:[#allocation2 + $0x90] sm:$0xff]
        %v926 = vld [vmem:[#allocation2 + $0x98] sm:$0xff]
        %v927 = vld [vmem:[#allocation2 + $0xa0] sm:$0xff]
        %v928 = vld [vmem:[#allocation2 + $0xa8] sm:$0xff]
        %v929 = vld [vmem:[#allocation2 + $0xb0] sm:$0xff]
        %v930 = vld [vmem:[#allocation2 + $0xb8] sm:$0xff]
        %v931 = vld [vmem:[#allocation2 + $0xc0] sm:$0xff]
        %v932 = vld [vmem:[#allocation2 + $0xc8] sm:$0xff]
        %v933 = vld [vmem:[#allocation2 + $0xd0] sm:$0xff]
        %v934 = vld [vmem:[#allocation2 + $0xd8] sm:$0xff]
        %v935 = vld [vmem:[#allocation2 + $0xe0] sm:$0xff]
        %v936 = vld [vmem:[#allocation2 + $0xe8] sm:$0xff]
        %v937 = vld [vmem:[#allocation2 + $0xf0] sm:$0xff]
        %v938 = vld [vmem:[#allocation2 + $0xf8] sm:$0xff]
        %v939 = vld [vmem:[#allocation2 + $0x100] sm:$0xff]
        %v940 = vld [vmem:[#allocation2 + $0x108] sm:$0xff]
        %v941 = vld [vmem:[#allocation2 + $0x110] sm:$0xff]
        %v942 = vld [vmem:[#allocation2 + $0x118] sm:$0xff]
        %v943 = vld [vmem:[#allocation2 + $0x120] sm:$0xff]
        %v944 = vld [vmem:[#allocation2 + $0x128] sm:$0xff]
        %v945 = vld [vmem:[#allocation2 + $0x130] sm:$0xff]
        %v946 = vld [vmem:[#allocation2 + $0x138] sm:$0xff]
        %v947 = vld [vmem:[#allocation2 + $0x140] sm:$0xff]
        %v948 = vld [vmem:[#allocation2 + $0x148] sm:$0xff]
        %v949 = vld [vmem:[#allocation2 + $0x150] sm:$0xff]
        %v950 = vld [vmem:[#allocation2 + $0x158] sm:$0xff]
        %v951 = vld [vmem:[#allocation2 + $0x160] sm:$0xff]
        %v952 = vld [vmem:[#allocation2 + $0x168] sm:$0xff]
        %v953 = vld [vmem:[#allocation2 + $0x170] sm:$0xff]
        %v954 = vld [vmem:[#allocation2 + $0x178] sm:$0xff]
        %vm955 = vcmask 785408
        %v957 = vsel %vm955, %v899, 0
        %v960 = vsel %vm955, %v900, 0
        %v963 = vsel %vm955, %v901, 0
        %v966 = vsel %vm955, %v902, 0
        %968 = vmatprep.subr.mxu0 %v908
        %969 = vmatpush1.msra.mxu0 %v907
        %970 = vmatprep.subr.mxu0 %v912
        %971 = vmatpush1.msra.mxu0 %v911
        %972 = vmatprep.subr.mxu0 %v916
        %973 = vmatpush1.msra.mxu0 %v915
        %974 = vmatprep.subr.mxu0 %v920
        %975 = vmatpush1.msra.mxu0 %v919
        %976 = vmatprep.subr.mxu0 %v924
        %977 = vmatpush1.msra.mxu0 %v923
        %978 = vmatprep.subr.mxu0 %v928
        %979 = vmatpush1.msra.mxu0 %v927
        %980 = vmatprep.subr.mxu0 %v932
        %981 = vmatpush1.msra.mxu0 %v931
        %982 = vmatprep.subr.mxu0 %v936
        %983 = vmatpush1.msra.mxu0 %v935
        %984 = vmatprep.subr.mxu0 %v940
        %985 = vmatpush1.msra.mxu0 %v939
        %986 = vmatprep.subr.mxu0 %v944
        %987 = vmatpush1.msra.mxu0 %v943
        %988 = vmatprep.subr.mxu0 %v948
        %989 = vmatpush1.msra.mxu0 %v947
        %990 = vmatprep.subr.mxu0 %v952
        %991 = vmatpush1.msra.mxu0 %v951
        %992 = vmatprep.subr.mxu0 0.0
        %993 = vmatpush1.msra.mxu0 0.0
        %994 = vmatprep.subr.mxu0 0.0
        %995 = vmatpush1.msra.mxu0 0.0
        %996 = vmatprep.subr.mxu0 0.0
        %997 = vmatpush1.msra.mxu0 0.0
        %998 = vmatprep.subr.mxu0 0.0
        %999 = vmatpush1.msra.mxu0 0.0
        %1000 = vmatprep.subr.mxu0 0.0
        %1001 = vmatpush1.msra.mxu0 0.0
        %1002 = vmatprep.subr.mxu0 0.0
        %1003 = vmatpush1.msra.mxu0 0.0
        %1004 = vmatprep.subr.mxu0 0.0
        %1005 = vmatpush1.msra.mxu0 0.0
        %1006 = vmatprep.subr.mxu0 0.0
        %1007 = vmatpush1.msra.mxu0 0.0
        %1008 = vmatprep.subr.mxu0 0.0
        %1009 = vmatpush1.msra.mxu0 0.0
        %1010 = vmatprep.subr.mxu0 0.0
        %1011 = vmatpush1.msra.mxu0 0.0
        %1012 = vmatprep.subr.mxu0 0.0
        %1013 = vmatpush1.msra.mxu0 0.0
        %1014 = vmatprep.subr.mxu0 0.0
        %1015 = vmatpush1.msra.mxu0 0.0
        %1016 = vmatprep.subr.mxu0 0.0
        %1017 = vmatpush1.msra.mxu0 0.0
        %1018 = vmatprep.subr.mxu0 0.0
        %1019 = vmatpush1.msra.mxu0 0.0
        %1020 = vmatprep.subr.mxu0 0.0
        %1021 = vmatpush1.msra.mxu0 0.0
        %1022 = vmatprep.subr.mxu0 0.0
        %1023 = vmatpush1.msra.mxu0 0.0
        %1024 = vmatprep.subr.mxu0 0.0
        %1025 = vmatpush1.msra.mxu0 0.0
        %1026 = vmatprep.subr.mxu0 0.0
        %1027 = vmatpush1.msra.mxu0 0.0
        %1028 = vmatprep.subr.mxu0 0.0
        %1029 = vmatpush1.msra.mxu0 0.0
        %1030 = vmatprep.subr.mxu0 0.0
        %1031 = vmatpush1.msra.mxu0 0.0
        %1032 = vmatprep.mubr.f32.mxu0 0.0
        %1033 = vmatmul.mubr.f32.gmra.mrb[0].mxu0 %v957
        %v1034 = vpop.f32.mrb[0].mxu0
        %v1035 = vadd.f32 0.0, %v1034
        %v1036 = vpop.f32.mrb[0].mxu0
        %v1037 = vadd.f32 0.0, %v1036
        %1038 = vmatprep.mubr.f32.mxu0 0.0
        %1039 = vmatmul.mubr.f32.gmra.mrb[0].mxu0 %v960
        %v1040 = vpop.f32.mrb[0].mxu0
        %v1041 = vadd.f32 0.0, %v1040
        %v1042 = vpop.f32.mrb[0].mxu0
        %v1043 = vadd.f32 0.0, %v1042
        %1044 = vmatprep.mubr.f32.mxu0 0.0
        %1045 = vmatmul.mubr.f32.gmra.mrb[0].mxu0 %v963
        %v1046 = vpop.f32.mrb[0].mxu0
        %v1047 = vadd.f32 0.0, %v1046
        %v1048 = vpop.f32.mrb[0].mxu0
        %v1049 = vadd.f32 0.0, %v1048
        %1050 = vmatprep.mubr.f32.mxu0 0.0
        %1051 = vmatmul.mubr.f32.gmra.mrb[0].mxu0 %v966
        %v1052 = vpop.f32.mrb[0].mxu0
        %v1053 = vadd.f32 0.0, %v1052
        %v1054 = vpop.f32.mrb[0].mxu0
        %v1055 = vadd.f32 0.0, %v1054
        %1056 = vdwg.mxu0
        %1057 = vmatprep.subr.mxu0 %v910
        %1058 = vmatpush1.msra.mxu0 %v909
        %1059 = vmatprep.subr.mxu0 %v914
        %1060 = vmatpush1.msra.mxu0 %v913
        %1061 = vmatprep.subr.mxu0 %v918
        %1062 = vmatpush1.msra.mxu0 %v917
        %1063 = vmatprep.subr.mxu0 %v922
        %1064 = vmatpush1.msra.mxu0 %v921
        %1065 = vmatprep.subr.mxu0 %v926
        %1066 = vmatpush1.msra.mxu0 %v925
        %1067 = vmatprep.subr.mxu0 %v930
        %1068 = vmatpush1.msra.mxu0 %v929
        %1069 = vmatprep.subr.mxu0 %v934
        %1070 = vmatpush1.msra.mxu0 %v933
        %1071 = vmatprep.subr.mxu0 %v938
        %1072 = vmatpush1.msra.mxu0 %v937
        %1073 = vmatprep.subr.mxu0 %v942
        %1074 = vmatpush1.msra.mxu0 %v941
        %1075 = vmatprep.subr.mxu0 %v946
        %1076 = vmatpush1.msra.mxu0 %v945
        %1077 = vmatprep.subr.mxu0 %v950
        %1078 = vmatpush1.msra.mxu0 %v949
        %1079 = vmatprep.subr.mxu0 %v954
        %1080 = vmatpush1.msra.mxu0 %v953
        %1081 = vmatprep.subr.mxu0 0.0
        %1082 = vmatpush1.msra.mxu0 0.0
        %1083 = vmatprep.subr.mxu0 0.0
        %1084 = vmatpush1.msra.mxu0 0.0
        %1085 = vmatprep.subr.mxu0 0.0
        %1086 = vmatpush1.msra.mxu0 0.0
        %1087 = vmatprep.subr.mxu0 0.0
        %1088 = vmatpush1.msra.mxu0 0.0
        %1089 = vmatprep.subr.mxu0 0.0
        %1090 = vmatpush1.msra.mxu0 0.0
        %1091 = vmatprep.subr.mxu0 0.0
        %1092 = vmatpush1.msra.mxu0 0.0
        %1093 = vmatprep.subr.mxu0 0.0
        %1094 = vmatpush1.msra.mxu0 0.0
        %1095 = vmatprep.subr.mxu0 0.0
        %1096 = vmatpush1.msra.mxu0 0.0
        %1097 = vmatprep.subr.mxu0 0.0
        %1098 = vmatpush1.msra.mxu0 0.0
        %1099 = vmatprep.subr.mxu0 0.0
        %1100 = vmatpush1.msra.mxu0 0.0
        %1101 = vmatprep.subr.mxu0 0.0
        %1102 = vmatpush1.msra.mxu0 0.0
        %1103 = vmatprep.subr.mxu0 0.0
        %1104 = vmatpush1.msra.mxu0 0.0
        %1105 = vmatprep.subr.mxu0 0.0
        %1106 = vmatpush1.msra.mxu0 0.0
        %1107 = vmatprep.subr.mxu0 0.0
        %1108 = vmatpush1.msra.mxu0 0.0
        %1109 = vmatprep.subr.mxu0 0.0
        %1110 = vmatpush1.msra.mxu0 0.0
        %1111 = vmatprep.subr.mxu0 0.0
        %1112 = vmatpush1.msra.mxu0 0.0
        %1113 = vmatprep.subr.mxu0 0.0
        %1114 = vmatpush1.msra.mxu0 0.0
        %1115 = vmatprep.subr.mxu0 0.0
        %1116 = vmatpush1.msra.mxu0 0.0
        %1117 = vmatprep.subr.mxu0 0.0
        %1118 = vmatpush1.msra.mxu0 0.0
        %1119 = vmatprep.subr.mxu0 0.0
        %1120 = vmatpush1.msra.mxu0 0.0
        %1121 = vmatprep.mubr.f32.mxu0 0.0
        %1122 = vmatmul.mubr.f32.gmra.mrb[0].mxu0 %v957
        %v1123 = vpop.f32.mrb[0].mxu0
        %v1124 = vadd.f32 0.0, %v1123
        %v1125 = vpop.f32.mrb[0].mxu0
        %v1126 = vadd.f32 0.0, %v1125
        %1127 = vmatprep.mubr.f32.mxu0 0.0
        %1128 = vmatmul.mubr.f32.gmra.mrb[0].mxu0 %v960
        %v1129 = vpop.f32.mrb[0].mxu0
        %v1130 = vadd.f32 0.0, %v1129
        %v1131 = vpop.f32.mrb[0].mxu0
        %v1132 = vadd.f32 0.0, %v1131
        %1133 = vmatprep.mubr.f32.mxu0 0.0
        %1134 = vmatmul.mubr.f32.gmra.mrb[0].mxu0 %v963
        %v1135 = vpop.f32.mrb[0].mxu0
        %v1136 = vadd.f32 0.0, %v1135
        %v1137 = vpop.f32.mrb[0].mxu0
        %v1138 = vadd.f32 0.0, %v1137
        %1139 = vmatprep.mubr.f32.mxu0 0.0
        %1140 = vmatmul.mubr.f32.gmra.mrb[0].mxu0 %v966
        %v1141 = vpop.f32.mrb[0].mxu0
        %v1142 = vadd.f32 0.0, %v1141
        %v1143 = vpop.f32.mrb[0].mxu0
        %v1144 = vadd.f32 0.0, %v1143
        %1145 = vdwg.mxu0
        %s1146 = scalar_lea.vmem [#allocation5], 32
        %v1147 = vld [vmem:[%s1146] sm:$0xff]
        %v1148 = vld [vmem:[%s1146 + $0x8] sm:$0xff]
        %v1149 = vld [vmem:[%s1146 + $0x10] sm:$0xff]
        %v1150 = vld [vmem:[%s1146 + $0x18] sm:$0xff]
        %s1151 = scalar_lea.vmem [#allocation2], 384
        %v1152 = vld [vmem:[%s1151] sm:$0xff]
        %v1153 = vld [vmem:[%s1151 + $0x8] sm:$0xff]
        %v1154 = vld [vmem:[%s1151 + $0x10] sm:$0xff]
        %v1155 = vld [vmem:[%s1151 + $0x18] sm:$0xff]
        %v1156 = vld [vmem:[%s1151 + $0x20] sm:$0xff]
        %v1157 = vld [vmem:[%s1151 + $0x28] sm:$0xff]
        %v1158 = vld [vmem:[%s1151 + $0x30] sm:$0xff]
        %v1159 = vld [vmem:[%s1151 + $0x38] sm:$0xff]
        %v1160 = vld [vmem:[%s1151 + $0x40] sm:$0xff]
        %v1161 = vld [vmem:[%s1151 + $0x48] sm:$0xff]
        %v1162 = vld [vmem:[%s1151 + $0x50] sm:$0xff]
        %v1163 = vld [vmem:[%s1151 + $0x58] sm:$0xff]
        %v1164 = vld [vmem:[%s1151 + $0x60] sm:$0xff]
        %v1165 = vld [vmem:[%s1151 + $0x68] sm:$0xff]
        %v1166 = vld [vmem:[%s1151 + $0x70] sm:$0xff]
        %v1167 = vld [vmem:[%s1151 + $0x78] sm:$0xff]
        %v1168 = vld [vmem:[%s1151 + $0x80] sm:$0xff]
        %v1169 = vld [vmem:[%s1151 + $0x88] sm:$0xff]
        %v1170 = vld [vmem:[%s1151 + $0x90] sm:$0xff]
        %v1171 = vld [vmem:[%s1151 + $0x98] sm:$0xff]
        %v1172 = vld [vmem:[%s1151 + $0xa0] sm:$0xff]
        %v1173 = vld [vmem:[%s1151 + $0xa8] sm:$0xff]
        %v1174 = vld [vmem:[%s1151 + $0xb0] sm:$0xff]
        %v1175 = vld [vmem:[%s1151 + $0xb8] sm:$0xff]
        %v1176 = vld [vmem:[%s1151 + $0xc0] sm:$0xff]
        %v1177 = vld [vmem:[%s1151 + $0xc8] sm:$0xff]
        %v1178 = vld [vmem:[%s1151 + $0xd0] sm:$0xff]
        %v1179 = vld [vmem:[%s1151 + $0xd8] sm:$0xff]
        %v1180 = vld [vmem:[%s1151 + $0xe0] sm:$0xff]
        %v1181 = vld [vmem:[%s1151 + $0xe8] sm:$0xff]
        %v1182 = vld [vmem:[%s1151 + $0xf0] sm:$0xff]
        %v1183 = vld [vmem:[%s1151 + $0xf8] sm:$0xff]
        %v1184 = vld [vmem:[%s1151 + $0x100] sm:$0xff]
        %v1185 = vld [vmem:[%s1151 + $0x108] sm:$0xff]
        %v1186 = vld [vmem:[%s1151 + $0x110] sm:$0xff]
        %v1187 = vld [vmem:[%s1151 + $0x118] sm:$0xff]
        %v1188 = vld [vmem:[%s1151 + $0x120] sm:$0xff]
        %v1189 = vld [vmem:[%s1151 + $0x128] sm:$0xff]
        %v1190 = vld [vmem:[%s1151 + $0x130] sm:$0xff]
        %v1191 = vld [vmem:[%s1151 + $0x138] sm:$0xff]
        %v1192 = vld [vmem:[%s1151 + $0x140] sm:$0xff]
        %v1193 = vld [vmem:[%s1151 + $0x148] sm:$0xff]
        %v1194 = vld [vmem:[%s1151 + $0x150] sm:$0xff]
        %v1195 = vld [vmem:[%s1151 + $0x158] sm:$0xff]
        %v1196 = vld [vmem:[%s1151 + $0x160] sm:$0xff]
        %v1197 = vld [vmem:[%s1151 + $0x168] sm:$0xff]
        %v1198 = vld [vmem:[%s1151 + $0x170] sm:$0xff]
        %v1199 = vld [vmem:[%s1151 + $0x178] sm:$0xff]
        %1200 = vmatprep.subr.mxu0 %v1153
        %1201 = vmatpush1.msra.mxu0 %v1152
        %1202 = vmatprep.subr.mxu0 %v1157
        %1203 = vmatpush1.msra.mxu0 %v1156
        %1204 = vmatprep.subr.mxu0 %v1161
        %1205 = vmatpush1.msra.mxu0 %v1160
        %1206 = vmatprep.subr.mxu0 %v1165
        %1207 = vmatpush1.msra.mxu0 %v1164
        %1208 = vmatprep.subr.mxu0 %v1169
        %1209 = vmatpush1.msra.mxu0 %v1168
        %1210 = vmatprep.subr.mxu0 %v1173
        %1211 = vmatpush1.msra.mxu0 %v1172
        %1212 = vmatprep.subr.mxu0 %v1177
        %1213 = vmatpush1.msra.mxu0 %v1176
        %1214 = vmatprep.subr.mxu0 %v1181
        %1215 = vmatpush1.msra.mxu0 %v1180
        %1216 = vmatprep.subr.mxu0 %v1185
        %1217 = vmatpush1.msra.mxu0 %v1184
        %1218 = vmatprep.subr.mxu0 %v1189
        %1219 = vmatpush1.msra.mxu0 %v1188
        %1220 = vmatprep.subr.mxu0 %v1193
        %1221 = vmatpush1.msra.mxu0 %v1192
        %1222 = vmatprep.subr.mxu0 %v1197
        %1223 = vmatpush1.msra.mxu0 %v1196
        %1224 = vmatprep.subr.mxu0 0.0
        %1225 = vmatpush1.msra.mxu0 0.0
        %1226 = vmatprep.subr.mxu0 0.0
        %1227 = vmatpush1.msra.mxu0 0.0
        %1228 = vmatprep.subr.mxu0 0.0
        %1229 = vmatpush1.msra.mxu0 0.0
        %1230 = vmatprep.subr.mxu0 0.0
        %1231 = vmatpush1.msra.mxu0 0.0
        %1232 = vmatprep.subr.mxu0 0.0
        %1233 = vmatpush1.msra.mxu0 0.0
        %1234 = vmatprep.subr.mxu0 0.0
        %1235 = vmatpush1.msra.mxu0 0.0
        %1236 = vmatprep.subr.mxu0 0.0
        %1237 = vmatpush1.msra.mxu0 0.0
        %1238 = vmatprep.subr.mxu0 0.0
        %1239 = vmatpush1.msra.mxu0 0.0
        %1240 = vmatprep.subr.mxu0 0.0
        %1241 = vmatpush1.msra.mxu0 0.0
        %1242 = vmatprep.subr.mxu0 0.0
        %1243 = vmatpush1.msra.mxu0 0.0
        %1244 = vmatprep.subr.mxu0 0.0
        %1245 = vmatpush1.msra.mxu0 0.0
        %1246 = vmatprep.subr.mxu0 0.0
        %1247 = vmatpush1.msra.mxu0 0.0
        %1248 = vmatprep.subr.mxu0 0.0
        %1249 = vmatpush1.msra.mxu0 0.0
        %1250 = vmatprep.subr.mxu0 0.0
        %1251 = vmatpush1.msra.mxu0 0.0
        %1252 = vmatprep.subr.mxu0 0.0
        %1253 = vmatpush1.msra.mxu0 0.0
        %1254 = vmatprep.subr.mxu0 0.0
        %1255 = vmatpush1.msra.mxu0 0.0
        %1256 = vmatprep.subr.mxu0 0.0
        %1257 = vmatpush1.msra.mxu0 0.0
        %1258 = vmatprep.subr.mxu0 0.0
        %1259 = vmatpush1.msra.mxu0 0.0
        %1260 = vmatprep.subr.mxu0 0.0
        %1261 = vmatpush1.msra.mxu0 0.0
        %1262 = vmatprep.subr.mxu0 0.0
        %1263 = vmatpush1.msra.mxu0 0.0
        %1264 = vmatprep.mubr.f32.mxu0 0.0
        %1265 = vmatmul.mubr.f32.gmra.mrb[0].mxu0 %v957
        %v1266 = vpop.f32.mrb[0].mxu0
        %v1267 = vadd.f32 0.0, %v1266
        %v1268 = vpop.f32.mrb[0].mxu0
        %v1269 = vadd.f32 0.0, %v1268
        %1270 = vmatprep.mubr.f32.mxu0 0.0
        %1271 = vmatmul.mubr.f32.gmra.mrb[0].mxu0 %v960
        %v1272 = vpop.f32.mrb[0].mxu0
        %v1273 = vadd.f32 0.0, %v1272
        %v1274 = vpop.f32.mrb[0].mxu0
        %v1275 = vadd.f32 0.0, %v1274
        %1276 = vmatprep.mubr.f32.mxu0 0.0
        %1277 = vmatmul.mubr.f32.gmra.mrb[0].mxu0 %v963
        %v1278 = vpop.f32.mrb[0].mxu0
        %v1279 = vadd.f32 0.0, %v1278
        %v1280 = vpop.f32.mrb[0].mxu0
        %v1281 = vadd.f32 0.0, %v1280
        %1282 = vmatprep.mubr.f32.mxu0 0.0
        %1283 = vmatmul.mubr.f32.gmra.mrb[0].mxu0 %v966
        %v1284 = vpop.f32.mrb[0].mxu0
        %v1285 = vadd.f32 0.0, %v1284
        %v1286 = vpop.f32.mrb[0].mxu0
        %v1287 = vadd.f32 0.0, %v1286
        %1288 = vdwg.mxu0
        %1289 = vmatprep.subr.mxu0 %v1155
        %1290 = vmatpush1.msra.mxu0 %v1154
        %1291 = vmatprep.subr.mxu0 %v1159
        %1292 = vmatpush1.msra.mxu0 %v1158
        %1293 = vmatprep.subr.mxu0 %v1163
        %1294 = vmatpush1.msra.mxu0 %v1162
        %1295 = vmatprep.subr.mxu0 %v1167
        %1296 = vmatpush1.msra.mxu0 %v1166
        %1297 = vmatprep.subr.mxu0 %v1171
        %1298 = vmatpush1.msra.mxu0 %v1170
        %1299 = vmatprep.subr.mxu0 %v1175
        %1300 = vmatpush1.msra.mxu0 %v1174
        %1301 = vmatprep.subr.mxu0 %v1179
        %1302 = vmatpush1.msra.mxu0 %v1178
        %1303 = vmatprep.subr.mxu0 %v1183
        %1304 = vmatpush1.msra.mxu0 %v1182
        %1305 = vmatprep.subr.mxu0 %v1187
        %1306 = vmatpush1.msra.mxu0 %v1186
        %1307 = vmatprep.subr.mxu0 %v1191
        %1308 = vmatpush1.msra.mxu0 %v1190
        %1309 = vmatprep.subr.mxu0 %v1195
        %1310 = vmatpush1.msra.mxu0 %v1194
        %1311 = vmatprep.subr.mxu0 %v1199
        %1312 = vmatpush1.msra.mxu0 %v1198
        %1313 = vmatprep.subr.mxu0 0.0
        %1314 = vmatpush1.msra.mxu0 0.0
        %1315 = vmatprep.subr.mxu0 0.0
        %1316 = vmatpush1.msra.mxu0 0.0
        %1317 = vmatprep.subr.mxu0 0.0
        %1318 = vmatpush1.msra.mxu0 0.0
        %1319 = vmatprep.subr.mxu0 0.0
        %1320 = vmatpush1.msra.mxu0 0.0
        %1321 = vmatprep.subr.mxu0 0.0
        %1322 = vmatpush1.msra.mxu0 0.0
        %1323 = vmatprep.subr.mxu0 0.0
        %1324 = vmatpush1.msra.mxu0 0.0
        %1325 = vmatprep.subr.mxu0 0.0
        %1326 = vmatpush1.msra.mxu0 0.0
        %1327 = vmatprep.subr.mxu0 0.0
        %1328 = vmatpush1.msra.mxu0 0.0
        %1329 = vmatprep.subr.mxu0 0.0
        %1330 = vmatpush1.msra.mxu0 0.0
        %1331 = vmatprep.subr.mxu0 0.0
        %1332 = vmatpush1.msra.mxu0 0.0
        %1333 = vmatprep.subr.mxu0 0.0
        %1334 = vmatpush1.msra.mxu0 0.0
        %1335 = vmatprep.subr.mxu0 0.0
        %1336 = vmatpush1.msra.mxu0 0.0
        %1337 = vmatprep.subr.mxu0 0.0
        %1338 = vmatpush1.msra.mxu0 0.0
        %1339 = vmatprep.subr.mxu0 0.0
        %1340 = vmatpush1.msra.mxu0 0.0
        %1341 = vmatprep.subr.mxu0 0.0
        %1342 = vmatpush1.msra.mxu0 0.0
        %1343 = vmatprep.subr.mxu0 0.0
        %1344 = vmatpush1.msra.mxu0 0.0
        %1345 = vmatprep.subr.mxu0 0.0
        %1346 = vmatpush1.msra.mxu0 0.0
        %1347 = vmatprep.subr.mxu0 0.0
        %1348 = vmatpush1.msra.mxu0 0.0
        %1349 = vmatprep.subr.mxu0 0.0
        %1350 = vmatpush1.msra.mxu0 0.0
        %1351 = vmatprep.subr.mxu0 0.0
        %1352 = vmatpush1.msra.mxu0 0.0
        %1353 = vmatprep.mubr.f32.mxu0 0.0
        %1354 = vmatmul.mubr.f32.gmra.mrb[0].mxu0 %v957
        %v1355 = vpop.f32.mrb[0].mxu0
        %v1356 = vadd.f32 0.0, %v1355
        %v1357 = vpop.f32.mrb[0].mxu0
        %v1358 = vadd.f32 0.0, %v1357
        %1359 = vmatprep.mubr.f32.mxu0 0.0
        %1360 = vmatmul.mubr.f32.gmra.mrb[0].mxu0 %v960
        %v1361 = vpop.f32.mrb[0].mxu0
        %v1362 = vadd.f32 0.0, %v1361
        %v1363 = vpop.f32.mrb[0].mxu0
        %v1364 = vadd.f32 0.0, %v1363
        %1365 = vmatprep.mubr.f32.mxu0 0.0
        %1366 = vmatmul.mubr.f32.gmra.mrb[0].mxu0 %v963
        %v1367 = vpop.f32.mrb[0].mxu0
        %v1368 = vadd.f32 0.0, %v1367
        %v1369 = vpop.f32.mrb[0].mxu0
        %v1370 = vadd.f32 0.0, %v1369
        %1371 = vmatprep.mubr.f32.mxu0 0.0
        %1372 = vmatmul.mubr.f32.gmra.mrb[0].mxu0 %v966
        %v1373 = vpop.f32.mrb[0].mxu0
        %v1374 = vadd.f32 0.0, %v1373
        %v1375 = vpop.f32.mrb[0].mxu0
        %v1376 = vadd.f32 0.0, %v1375
        %1377 = vdwg.mxu0
        %vm1378 = vcmask 261120
        %v1380 = vsel %vm1378, %v1147, 0
        %v1383 = vsel %vm1378, %v1148, 0
        %v1386 = vsel %vm1378, %v1149, 0
        %v1389 = vsel %vm1378, %v1150, 0
        %1391 = vmatprep.subr.mxu0 %v1269
        %1392 = vmatpush1.msra.mxu0 %v1267
        %1393 = vmatprep.subr.mxu0 %v1275
        %1394 = vmatpush1.msra.mxu0 %v1273
        %1395 = vmatprep.subr.mxu0 %v1281
        %1396 = vmatpush1.msra.mxu0 %v1279
        %1397 = vmatprep.subr.mxu0 %v1287
        %1398 = vmatpush1.msra.mxu0 %v1285
        %1399 = vmatprep.subr.mxu0 0.0
        %1400 = vmatpush1.msra.mxu0 0.0
        %1401 = vmatprep.subr.mxu0 0.0
        %1402 = vmatpush1.msra.mxu0 0.0
        %1403 = vmatprep.subr.mxu0 0.0
        %1404 = vmatpush1.msra.mxu0 0.0
        %1405 = vmatprep.subr.mxu0 0.0
        %1406 = vmatpush1.msra.mxu0 0.0
        %1407 = vmatprep.subr.mxu0 0.0
        %1408 = vmatpush1.msra.mxu0 0.0
        %1409 = vmatprep.subr.mxu0 0.0
        %1410 = vmatpush1.msra.mxu0 0.0
        %1411 = vmatprep.subr.mxu0 0.0
        %1412 = vmatpush1.msra.mxu0 0.0
        %1413 = vmatprep.subr.mxu0 0.0
        %1414 = vmatpush1.msra.mxu0 0.0
        %1415 = vmatprep.subr.mxu0 0.0
        %1416 = vmatpush1.msra.mxu0 0.0
        %1417 = vmatprep.subr.mxu0 0.0
        %1418 = vmatpush1.msra.mxu0 0.0
        %1419 = vmatprep.subr.mxu0 0.0
        %1420 = vmatpush1.msra.mxu0 0.0
        %1421 = vmatprep.subr.mxu0 0.0
        %1422 = vmatpush1.msra.mxu0 0.0
        %1423 = vmatprep.subr.mxu0 0.0
        %1424 = vmatpush1.msra.mxu0 0.0
        %1425 = vmatprep.subr.mxu0 0.0
        %1426 = vmatpush1.msra.mxu0 0.0
        %1427 = vmatprep.subr.mxu0 0.0
        %1428 = vmatpush1.msra.mxu0 0.0
        %1429 = vmatprep.subr.mxu0 0.0
        %1430 = vmatpush1.msra.mxu0 0.0
        %1431 = vmatprep.subr.mxu0 0.0
        %1432 = vmatpush1.msra.mxu0 0.0
        %1433 = vmatprep.subr.mxu0 0.0
        %1434 = vmatpush1.msra.mxu0 0.0
        %1435 = vmatprep.subr.mxu0 0.0
        %1436 = vmatpush1.msra.mxu0 0.0
        %1437 = vmatprep.subr.mxu0 0.0
        %1438 = vmatpush1.msra.mxu0 0.0
        %1439 = vmatprep.subr.mxu0 0.0
        %1440 = vmatpush1.msra.mxu0 0.0
        %1441 = vmatprep.subr.mxu0 0.0
        %1442 = vmatpush1.msra.mxu0 0.0
        %1443 = vmatprep.subr.mxu0 0.0
        %1444 = vmatpush1.msra.mxu0 0.0
        %1445 = vmatprep.subr.mxu0 0.0
        %1446 = vmatpush1.msra.mxu0 0.0
        %1447 = vmatprep.subr.mxu0 0.0
        %1448 = vmatpush1.msra.mxu0 0.0
        %1449 = vmatprep.subr.mxu0 0.0
        %1450 = vmatpush1.msra.mxu0 0.0
        %1451 = vmatprep.subr.mxu0 0.0
        %1452 = vmatpush1.msra.mxu0 0.0
        %1453 = vmatprep.subr.mxu0 0.0
        %1454 = vmatpush1.msra.mxu0 0.0
        %1455 = vmatprep.mubr.f32.mxu0 0.0
        %1456 = vmatmul.mubr.f32.gmra.mrb[0].mxu0 %v1380
        %v1457 = vpop.f32.mrb[0].mxu0
        %v1458 = vadd.f32 0.0, %v1457
        %v1459 = vpop.f32.mrb[0].mxu0
        %v1460 = vadd.f32 0.0, %v1459
        %1461 = vmatprep.mubr.f32.mxu0 0.0
        %1462 = vmatmul.mubr.f32.gmra.mrb[0].mxu0 %v1383
        %v1463 = vpop.f32.mrb[0].mxu0
        %v1464 = vadd.f32 0.0, %v1463
        %v1465 = vpop.f32.mrb[0].mxu0
        %v1466 = vadd.f32 0.0, %v1465
        %1467 = vmatprep.mubr.f32.mxu0 0.0
        %1468 = vmatmul.mubr.f32.gmra.mrb[0].mxu0 %v1386
        %v1469 = vpop.f32.mrb[0].mxu0
        %v1470 = vadd.f32 0.0, %v1469
        %v1471 = vpop.f32.mrb[0].mxu0
        %v1472 = vadd.f32 0.0, %v1471
        %1473 = vmatprep.mubr.f32.mxu0 0.0
        %1474 = vmatmul.mubr.f32.gmra.mrb[0].mxu0 %v1389
        %v1475 = vpop.f32.mrb[0].mxu0
        %v1476 = vadd.f32 0.0, %v1475
        %v1477 = vpop.f32.mrb[0].mxu0
        %v1478 = vadd.f32 0.0, %v1477
        %1479 = vdwg.mxu0
        %1480 = vmatprep.subr.mxu0 %v1358
        %1481 = vmatpush1.msra.mxu0 %v1356
        %1482 = vmatprep.subr.mxu0 %v1364
        %1483 = vmatpush1.msra.mxu0 %v1362
        %1484 = vmatprep.subr.mxu0 %v1370
        %1485 = vmatpush1.msra.mxu0 %v1368
        %1486 = vmatprep.subr.mxu0 %v1376
        %1487 = vmatpush1.msra.mxu0 %v1374
        %1488 = vmatprep.subr.mxu0 0.0
        %1489 = vmatpush1.msra.mxu0 0.0
        %1490 = vmatprep.subr.mxu0 0.0
        %1491 = vmatpush1.msra.mxu0 0.0
        %1492 = vmatprep.subr.mxu0 0.0
        %1493 = vmatpush1.msra.mxu0 0.0
        %1494 = vmatprep.subr.mxu0 0.0
        %1495 = vmatpush1.msra.mxu0 0.0
        %1496 = vmatprep.subr.mxu0 0.0
        %1497 = vmatpush1.msra.mxu0 0.0
        %1498 = vmatprep.subr.mxu0 0.0
        %1499 = vmatpush1.msra.mxu0 0.0
        %1500 = vmatprep.subr.mxu0 0.0
        %1501 = vmatpush1.msra.mxu0 0.0
        %1502 = vmatprep.subr.mxu0 0.0
        %1503 = vmatpush1.msra.mxu0 0.0
        %1504 = vmatprep.subr.mxu0 0.0
        %1505 = vmatpush1.msra.mxu0 0.0
        %1506 = vmatprep.subr.mxu0 0.0
        %1507 = vmatpush1.msra.mxu0 0.0
        %1508 = vmatprep.subr.mxu0 0.0
        %1509 = vmatpush1.msra.mxu0 0.0
        %1510 = vmatprep.subr.mxu0 0.0
        %1511 = vmatpush1.msra.mxu0 0.0
        %1512 = vmatprep.subr.mxu0 0.0
        %1513 = vmatpush1.msra.mxu0 0.0
        %1514 = vmatprep.subr.mxu0 0.0
        %1515 = vmatpush1.msra.mxu0 0.0
        %1516 = vmatprep.subr.mxu0 0.0
        %1517 = vmatpush1.msra.mxu0 0.0
        %1518 = vmatprep.subr.mxu0 0.0
        %1519 = vmatpush1.msra.mxu0 0.0
        %1520 = vmatprep.subr.mxu0 0.0
        %1521 = vmatpush1.msra.mxu0 0.0
        %1522 = vmatprep.subr.mxu0 0.0
        %1523 = vmatpush1.msra.mxu0 0.0
        %1524 = vmatprep.subr.mxu0 0.0
        %1525 = vmatpush1.msra.mxu0 0.0
        %1526 = vmatprep.subr.mxu0 0.0
        %1527 = vmatpush1.msra.mxu0 0.0
        %1528 = vmatprep.subr.mxu0 0.0
        %1529 = vmatpush1.msra.mxu0 0.0
        %1530 = vmatprep.subr.mxu0 0.0
        %1531 = vmatpush1.msra.mxu0 0.0
        %1532 = vmatprep.subr.mxu0 0.0
        %1533 = vmatpush1.msra.mxu0 0.0
        %1534 = vmatprep.subr.mxu0 0.0
        %1535 = vmatpush1.msra.mxu0 0.0
        %1536 = vmatprep.subr.mxu0 0.0
        %1537 = vmatpush1.msra.mxu0 0.0
        %1538 = vmatprep.subr.mxu0 0.0
        %1539 = vmatpush1.msra.mxu0 0.0
        %1540 = vmatprep.subr.mxu0 0.0
        %1541 = vmatpush1.msra.mxu0 0.0
        %1542 = vmatprep.subr.mxu0 0.0
        %1543 = vmatpush1.msra.mxu0 0.0
        %1544 = vmatprep.mubr.f32.mxu0 0.0
        %1545 = vmatmul.mubr.f32.gmra.mrb[0].mxu0 %v1380
        %v1546 = vpop.f32.mrb[0].mxu0
        %v1547 = vadd.f32 0.0, %v1546
        %v1548 = vpop.f32.mrb[0].mxu0
        %v1549 = vadd.f32 0.0, %v1548
        %1550 = vmatprep.mubr.f32.mxu0 0.0
        %1551 = vmatmul.mubr.f32.gmra.mrb[0].mxu0 %v1383
        %v1552 = vpop.f32.mrb[0].mxu0
        %v1553 = vadd.f32 0.0, %v1552
        %v1554 = vpop.f32.mrb[0].mxu0
        %v1555 = vadd.f32 0.0, %v1554
        %1556 = vmatprep.mubr.f32.mxu0 0.0
        %1557 = vmatmul.mubr.f32.gmra.mrb[0].mxu0 %v1386
        %v1558 = vpop.f32.mrb[0].mxu0
        %v1559 = vadd.f32 0.0, %v1558
        %v1560 = vpop.f32.mrb[0].mxu0
        %v1561 = vadd.f32 0.0, %v1560
        %1562 = vmatprep.mubr.f32.mxu0 0.0
        %1563 = vmatmul.mubr.f32.gmra.mrb[0].mxu0 %v1389
        %v1564 = vpop.f32.mrb[0].mxu0
        %v1565 = vadd.f32 0.0, %v1564
        %v1566 = vpop.f32.mrb[0].mxu0
        %v1567 = vadd.f32 0.0, %v1566
        %1568 = vdwg.mxu0
        %v1570 = vsel %vm1378, %v903, 0
        %v1573 = vsel %vm1378, %v904, 0
        %v1576 = vsel %vm1378, %v905, 0
        %v1579 = vsel %vm1378, %v906, 0
        %1581 = vmatprep.subr.mxu0 %v1037
        %1582 = vmatpush1.msra.mxu0 %v1035
        %1583 = vmatprep.subr.mxu0 %v1043
        %1584 = vmatpush1.msra.mxu0 %v1041
        %1585 = vmatprep.subr.mxu0 %v1049
        %1586 = vmatpush1.msra.mxu0 %v1047
        %1587 = vmatprep.subr.mxu0 %v1055
        %1588 = vmatpush1.msra.mxu0 %v1053
        %1589 = vmatprep.subr.mxu0 0.0
        %1590 = vmatpush1.msra.mxu0 0.0
        %1591 = vmatprep.subr.mxu0 0.0
        %1592 = vmatpush1.msra.mxu0 0.0
        %1593 = vmatprep.subr.mxu0 0.0
        %1594 = vmatpush1.msra.mxu0 0.0
        %1595 = vmatprep.subr.mxu0 0.0
        %1596 = vmatpush1.msra.mxu0 0.0
        %1597 = vmatprep.subr.mxu0 0.0
        %1598 = vmatpush1.msra.mxu0 0.0
        %1599 = vmatprep.subr.mxu0 0.0
        %1600 = vmatpush1.msra.mxu0 0.0
        %1601 = vmatprep.subr.mxu0 0.0
        %1602 = vmatpush1.msra.mxu0 0.0
        %1603 = vmatprep.subr.mxu0 0.0
        %1604 = vmatpush1.msra.mxu0 0.0
        %1605 = vmatprep.subr.mxu0 0.0
        %1606 = vmatpush1.msra.mxu0 0.0
        %1607 = vmatprep.subr.mxu0 0.0
        %1608 = vmatpush1.msra.mxu0 0.0
        %1609 = vmatprep.subr.mxu0 0.0
        %1610 = vmatpush1.msra.mxu0 0.0
        %1611 = vmatprep.subr.mxu0 0.0
        %1612 = vmatpush1.msra.mxu0 0.0
        %1613 = vmatprep.subr.mxu0 0.0
        %1614 = vmatpush1.msra.mxu0 0.0
        %1615 = vmatprep.subr.mxu0 0.0
        %1616 = vmatpush1.msra.mxu0 0.0
        %1617 = vmatprep.subr.mxu0 0.0
        %1618 = vmatpush1.msra.mxu0 0.0
        %1619 = vmatprep.subr.mxu0 0.0
        %1620 = vmatpush1.msra.mxu0 0.0
        %1621 = vmatprep.subr.mxu0 0.0
        %1622 = vmatpush1.msra.mxu0 0.0
        %1623 = vmatprep.subr.mxu0 0.0
        %1624 = vmatpush1.msra.mxu0 0.0
        %1625 = vmatprep.subr.mxu0 0.0
        %1626 = vmatpush1.msra.mxu0 0.0
        %1627 = vmatprep.subr.mxu0 0.0
        %1628 = vmatpush1.msra.mxu0 0.0
        %1629 = vmatprep.subr.mxu0 0.0
        %1630 = vmatpush1.msra.mxu0 0.0
        %1631 = vmatprep.subr.mxu0 0.0
        %1632 = vmatpush1.msra.mxu0 0.0
        %1633 = vmatprep.subr.mxu0 0.0
        %1634 = vmatpush1.msra.mxu0 0.0
        %1635 = vmatprep.subr.mxu0 0.0
        %1636 = vmatpush1.msra.mxu0 0.0
        %1637 = vmatprep.subr.mxu0 0.0
        %1638 = vmatpush1.msra.mxu0 0.0
        %1639 = vmatprep.subr.mxu0 0.0
        %1640 = vmatpush1.msra.mxu0 0.0
        %1641 = vmatprep.subr.mxu0 0.0
        %1642 = vmatpush1.msra.mxu0 0.0
        %1643 = vmatprep.subr.mxu0 0.0
        %1644 = vmatpush1.msra.mxu0 0.0
        %1645 = vmatprep.mubr.f32.mxu0 0.0
        %1646 = vmatmul.mubr.f32.gmra.mrb[0].mxu0 %v1570
        %v1647 = vpop.f32.mrb[0].mxu0
        %v1648 = vadd.f32 %v1458, %v1647
        %v1649 = vpop.f32.mrb[0].mxu0
        %v1650 = vadd.f32 %v1460, %v1649
        %1651 = vmatprep.mubr.f32.mxu0 0.0
        %1652 = vmatmul.mubr.f32.gmra.mrb[0].mxu0 %v1573
        %v1653 = vpop.f32.mrb[0].mxu0
        %v1654 = vadd.f32 %v1464, %v1653
        %v1655 = vpop.f32.mrb[0].mxu0
        %v1656 = vadd.f32 %v1466, %v1655
        %1657 = vmatprep.mubr.f32.mxu0 0.0
        %1658 = vmatmul.mubr.f32.gmra.mrb[0].mxu0 %v1576
        %v1659 = vpop.f32.mrb[0].mxu0
        %v1660 = vadd.f32 %v1470, %v1659
        %v1661 = vpop.f32.mrb[0].mxu0
        %v1662 = vadd.f32 %v1472, %v1661
        %1663 = vmatprep.mubr.f32.mxu0 0.0
        %1664 = vmatmul.mubr.f32.gmra.mrb[0].mxu0 %v1579
        %v1665 = vpop.f32.mrb[0].mxu0
        %v1666 = vadd.f32 %v1476, %v1665
        %v1667 = vpop.f32.mrb[0].mxu0
        %v1668 = vadd.f32 %v1478, %v1667
        %1669 = vdwg.mxu0
        %1670 = vmatprep.subr.mxu0 %v1126
        %1671 = vmatpush1.msra.mxu0 %v1124
        %1672 = vmatprep.subr.mxu0 %v1132
        %1673 = vmatpush1.msra.mxu0 %v1130
        %1674 = vmatprep.subr.mxu0 %v1138
        %1675 = vmatpush1.msra.mxu0 %v1136
        %1676 = vmatprep.subr.mxu0 %v1144
        %1677 = vmatpush1.msra.mxu0 %v1142
        %1678 = vmatprep.subr.mxu0 0.0
        %1679 = vmatpush1.msra.mxu0 0.0
        %1680 = vmatprep.subr.mxu0 0.0
        %1681 = vmatpush1.msra.mxu0 0.0
        %1682 = vmatprep.subr.mxu0 0.0
        %1683 = vmatpush1.msra.mxu0 0.0
        %1684 = vmatprep.subr.mxu0 0.0
        %1685 = vmatpush1.msra.mxu0 0.0
        %1686 = vmatprep.subr.mxu0 0.0
        %1687 = vmatpush1.msra.mxu0 0.0
        %1688 = vmatprep.subr.mxu0 0.0
        %1689 = vmatpush1.msra.mxu0 0.0
        %1690 = vmatprep.subr.mxu0 0.0
        %1691 = vmatpush1.msra.mxu0 0.0
        %1692 = vmatprep.subr.mxu0 0.0
        %1693 = vmatpush1.msra.mxu0 0.0
        %1694 = vmatprep.subr.mxu0 0.0
        %1695 = vmatpush1.msra.mxu0 0.0
        %1696 = vmatprep.subr.mxu0 0.0
        %1697 = vmatpush1.msra.mxu0 0.0
        %1698 = vmatprep.subr.mxu0 0.0
        %1699 = vmatpush1.msra.mxu0 0.0
        %1700 = vmatprep.subr.mxu0 0.0
        %1701 = vmatpush1.msra.mxu0 0.0
        %1702 = vmatprep.subr.mxu0 0.0
        %1703 = vmatpush1.msra.mxu0 0.0
        %1704 = vmatprep.subr.mxu0 0.0
        %1705 = vmatpush1.msra.mxu0 0.0
        %1706 = vmatprep.subr.mxu0 0.0
        %1707 = vmatpush1.msra.mxu0 0.0
        %1708 = vmatprep.subr.mxu0 0.0
        %1709 = vmatpush1.msra.mxu0 0.0
        %1710 = vmatprep.subr.mxu0 0.0
        %1711 = vmatpush1.msra.mxu0 0.0
        %1712 = vmatprep.subr.mxu0 0.0
        %1713 = vmatpush1.msra.mxu0 0.0
        %1714 = vmatprep.subr.mxu0 0.0
        %1715 = vmatpush1.msra.mxu0 0.0
        %1716 = vmatprep.subr.mxu0 0.0
        %1717 = vmatpush1.msra.mxu0 0.0
        %1718 = vmatprep.subr.mxu0 0.0
        %1719 = vmatpush1.msra.mxu0 0.0
        %1720 = vmatprep.subr.mxu0 0.0
        %1721 = vmatpush1.msra.mxu0 0.0
        %1722 = vmatprep.subr.mxu0 0.0
        %1723 = vmatpush1.msra.mxu0 0.0
        %1724 = vmatprep.subr.mxu0 0.0
        %1725 = vmatpush1.msra.mxu0 0.0
        %1726 = vmatprep.subr.mxu0 0.0
        %1727 = vmatpush1.msra.mxu0 0.0
        %1728 = vmatprep.subr.mxu0 0.0
        %1729 = vmatpush1.msra.mxu0 0.0
        %1730 = vmatprep.subr.mxu0 0.0
        %1731 = vmatpush1.msra.mxu0 0.0
        %1732 = vmatprep.subr.mxu0 0.0
        %1733 = vmatpush1.msra.mxu0 0.0
        %1734 = vmatprep.mubr.f32.mxu0 0.0
        %1735 = vmatmul.mubr.f32.gmra.mrb[0].mxu0 %v1570
        %v1736 = vpop.f32.mrb[0].mxu0
        %v1737 = vadd.f32 %v1547, %v1736
        %v1738 = vpop.f32.mrb[0].mxu0
        %v1739 = vadd.f32 %v1549, %v1738
        %1740 = vmatprep.mubr.f32.mxu0 0.0
        %1741 = vmatmul.mubr.f32.gmra.mrb[0].mxu0 %v1573
        %v1742 = vpop.f32.mrb[0].mxu0
        %v1743 = vadd.f32 %v1553, %v1742
        %v1744 = vpop.f32.mrb[0].mxu0
        %v1745 = vadd.f32 %v1555, %v1744
        %1746 = vmatprep.mubr.f32.mxu0 0.0
        %1747 = vmatmul.mubr.f32.gmra.mrb[0].mxu0 %v1576
        %v1748 = vpop.f32.mrb[0].mxu0
        %v1749 = vadd.f32 %v1559, %v1748
        %v1750 = vpop.f32.mrb[0].mxu0
        %v1751 = vadd.f32 %v1561, %v1750
        %1752 = vmatprep.mubr.f32.mxu0 0.0
        %1753 = vmatmul.mubr.f32.gmra.mrb[0].mxu0 %v1579
        %v1754 = vpop.f32.mrb[0].mxu0
        %v1755 = vadd.f32 %v1565, %v1754
        %v1756 = vpop.f32.mrb[0].mxu0
        %v1757 = vadd.f32 %v1567, %v1756
        %1758 = vdwg.mxu0
        %s1759 = scalar_lea.vmem [#allocation5], 64
        %v1760 = vld [vmem:[%s1759] sm:$0xff]
        %v1761 = vld [vmem:[%s1759 + $0x8] sm:$0xff]
        %v1762 = vld [vmem:[%s1759 + $0x10] sm:$0xff]
        %v1763 = vld [vmem:[%s1759 + $0x18] sm:$0xff]
        %s1764 = scalar_lea.vmem [#allocation2], 768
        %v1765 = vld [vmem:[%s1764] sm:$0xff]
        %v1766 = vld [vmem:[%s1764 + $0x8] sm:$0xff]
        %v1767 = vld [vmem:[%s1764 + $0x10] sm:$0xff]
        %v1768 = vld [vmem:[%s1764 + $0x18] sm:$0xff]
        %v1769 = vld [vmem:[%s1764 + $0x20] sm:$0xff]
        %v1770 = vld [vmem:[%s1764 + $0x28] sm:$0xff]
        %v1771 = vld [vmem:[%s1764 + $0x30] sm:$0xff]
        %v1772 = vld [vmem:[%s1764 + $0x38] sm:$0xff]
        %v1773 = vld [vmem:[%s1764 + $0x40] sm:$0xff]
        %v1774 = vld [vmem:[%s1764 + $0x48] sm:$0xff]
        %v1775 = vld [vmem:[%s1764 + $0x50] sm:$0xff]
        %v1776 = vld [vmem:[%s1764 + $0x58] sm:$0xff]
        %v1777 = vld [vmem:[%s1764 + $0x60] sm:$0xff]
        %v1778 = vld [vmem:[%s1764 + $0x68] sm:$0xff]
        %v1779 = vld [vmem:[%s1764 + $0x70] sm:$0xff]
        %v1780 = vld [vmem:[%s1764 + $0x78] sm:$0xff]
        %v1781 = vld [vmem:[%s1764 + $0x80] sm:$0xff]
        %v1782 = vld [vmem:[%s1764 + $0x88] sm:$0xff]
        %v1783 = vld [vmem:[%s1764 + $0x90] sm:$0xff]
        %v1784 = vld [vmem:[%s1764 + $0x98] sm:$0xff]
        %v1785 = vld [vmem:[%s1764 + $0xa0] sm:$0xff]
        %v1786 = vld [vmem:[%s1764 + $0xa8] sm:$0xff]
        %v1787 = vld [vmem:[%s1764 + $0xb0] sm:$0xff]
        %v1788 = vld [vmem:[%s1764 + $0xb8] sm:$0xff]
        %v1789 = vld [vmem:[%s1764 + $0xc0] sm:$0xff]
        %v1790 = vld [vmem:[%s1764 + $0xc8] sm:$0xff]
        %v1791 = vld [vmem:[%s1764 + $0xd0] sm:$0xff]
        %v1792 = vld [vmem:[%s1764 + $0xd8] sm:$0xff]
        %v1793 = vld [vmem:[%s1764 + $0xe0] sm:$0xff]
        %v1794 = vld [vmem:[%s1764 + $0xe8] sm:$0xff]
        %v1795 = vld [vmem:[%s1764 + $0xf0] sm:$0xff]
        %v1796 = vld [vmem:[%s1764 + $0xf8] sm:$0xff]
        %v1797 = vld [vmem:[%s1764 + $0x100] sm:$0xff]
        %v1798 = vld [vmem:[%s1764 + $0x108] sm:$0xff]
        %v1799 = vld [vmem:[%s1764 + $0x110] sm:$0xff]
        %v1800 = vld [vmem:[%s1764 + $0x118] sm:$0xff]
        %v1801 = vld [vmem:[%s1764 + $0x120] sm:$0xff]
        %v1802 = vld [vmem:[%s1764 + $0x128] sm:$0xff]
        %v1803 = vld [vmem:[%s1764 + $0x130] sm:$0xff]
        %v1804 = vld [vmem:[%s1764 + $0x138] sm:$0xff]
        %v1805 = vld [vmem:[%s1764 + $0x140] sm:$0xff]
        %v1806 = vld [vmem:[%s1764 + $0x148] sm:$0xff]
        %v1807 = vld [vmem:[%s1764 + $0x150] sm:$0xff]
        %v1808 = vld [vmem:[%s1764 + $0x158] sm:$0xff]
        %v1809 = vld [vmem:[%s1764 + $0x160] sm:$0xff]
        %v1810 = vld [vmem:[%s1764 + $0x168] sm:$0xff]
        %v1811 = vld [vmem:[%s1764 + $0x170] sm:$0xff]
        %v1812 = vld [vmem:[%s1764 + $0x178] sm:$0xff]
        %1813 = vmatprep.subr.mxu0 %v1766
        %1814 = vmatpush1.msra.mxu0 %v1765
        %1815 = vmatprep.subr.mxu0 %v1770
        %1816 = vmatpush1.msra.mxu0 %v1769
        %1817 = vmatprep.subr.mxu0 %v1774
        %1818 = vmatpush1.msra.mxu0 %v1773
        %1819 = vmatprep.subr.mxu0 %v1778
        %1820 = vmatpush1.msra.mxu0 %v1777
        %1821 = vmatprep.subr.mxu0 %v1782
        %1822 = vmatpush1.msra.mxu0 %v1781
        %1823 = vmatprep.subr.mxu0 %v1786
        %1824 = vmatpush1.msra.mxu0 %v1785
        %1825 = vmatprep.subr.mxu0 %v1790
        %1826 = vmatpush1.msra.mxu0 %v1789
        %1827 = vmatprep.subr.mxu0 %v1794
        %1828 = vmatpush1.msra.mxu0 %v1793
        %1829 = vmatprep.subr.mxu0 %v1798
        %1830 = vmatpush1.msra.mxu0 %v1797
        %1831 = vmatprep.subr.mxu0 %v1802
        %1832 = vmatpush1.msra.mxu0 %v1801
        %1833 = vmatprep.subr.mxu0 %v1806
        %1834 = vmatpush1.msra.mxu0 %v1805
        %1835 = vmatprep.subr.mxu0 %v1810
        %1836 = vmatpush1.msra.mxu0 %v1809
        %1837 = vmatprep.subr.mxu0 0.0
        %1838 = vmatpush1.msra.mxu0 0.0
        %1839 = vmatprep.subr.mxu0 0.0
        %1840 = vmatpush1.msra.mxu0 0.0
        %1841 = vmatprep.subr.mxu0 0.0
        %1842 = vmatpush1.msra.mxu0 0.0
        %1843 = vmatprep.subr.mxu0 0.0
        %1844 = vmatpush1.msra.mxu0 0.0
        %1845 = vmatprep.subr.mxu0 0.0
        %1846 = vmatpush1.msra.mxu0 0.0
        %1847 = vmatprep.subr.mxu0 0.0
        %1848 = vmatpush1.msra.mxu0 0.0
        %1849 = vmatprep.subr.mxu0 0.0
        %1850 = vmatpush1.msra.mxu0 0.0
        %1851 = vmatprep.subr.mxu0 0.0
        %1852 = vmatpush1.msra.mxu0 0.0
        %1853 = vmatprep.subr.mxu0 0.0
        %1854 = vmatpush1.msra.mxu0 0.0
        %1855 = vmatprep.subr.mxu0 0.0
        %1856 = vmatpush1.msra.mxu0 0.0
        %1857 = vmatprep.subr.mxu0 0.0
        %1858 = vmatpush1.msra.mxu0 0.0
        %1859 = vmatprep.subr.mxu0 0.0
        %1860 = vmatpush1.msra.mxu0 0.0
        %1861 = vmatprep.subr.mxu0 0.0
        %1862 = vmatpush1.msra.mxu0 0.0
        %1863 = vmatprep.subr.mxu0 0.0
        %1864 = vmatpush1.msra.mxu0 0.0
        %1865 = vmatprep.subr.mxu0 0.0
        %1866 = vmatpush1.msra.mxu0 0.0
        %1867 = vmatprep.subr.mxu0 0.0
        %1868 = vmatpush1.msra.mxu0 0.0
        %1869 = vmatprep.subr.mxu0 0.0
        %1870 = vmatpush1.msra.mxu0 0.0
        %1871 = vmatprep.subr.mxu0 0.0
        %1872 = vmatpush1.msra.mxu0 0.0
        %1873 = vmatprep.subr.mxu0 0.0
        %1874 = vmatpush1.msra.mxu0 0.0
        %1875 = vmatprep.subr.mxu0 0.0
        %1876 = vmatpush1.msra.mxu0 0.0
        %1877 = vmatprep.mubr.f32.mxu0 0.0
        %1878 = vmatmul.mubr.f32.gmra.mrb[0].mxu0 %v957
        %v1879 = vpop.f32.mrb[0].mxu0
        %v1880 = vadd.f32 0.0, %v1879
        %v1881 = vpop.f32.mrb[0].mxu0
        %v1882 = vadd.f32 0.0, %v1881
        %1883 = vmatprep.mubr.f32.mxu0 0.0
        %1884 = vmatmul.mubr.f32.gmra.mrb[0].mxu0 %v960
        %v1885 = vpop.f32.mrb[0].mxu0
        %v1886 = vadd.f32 0.0, %v1885
        %v1887 = vpop.f32.mrb[0].mxu0
        %v1888 = vadd.f32 0.0, %v1887
        %1889 = vmatprep.mubr.f32.mxu0 0.0
        %1890 = vmatmul.mubr.f32.gmra.mrb[0].mxu0 %v963
        %v1891 = vpop.f32.mrb[0].mxu0
        %v1892 = vadd.f32 0.0, %v1891
        %v1893 = vpop.f32.mrb[0].mxu0
        %v1894 = vadd.f32 0.0, %v1893
        %1895 = vmatprep.mubr.f32.mxu0 0.0
        %1896 = vmatmul.mubr.f32.gmra.mrb[0].mxu0 %v966
        %v1897 = vpop.f32.mrb[0].mxu0
        %v1898 = vadd.f32 0.0, %v1897
        %v1899 = vpop.f32.mrb[0].mxu0
        %v1900 = vadd.f32 0.0, %v1899
        %1901 = vdwg.mxu0
        %1902 = vmatprep.subr.mxu0 %v1768
        %1903 = vmatpush1.msra.mxu0 %v1767
        %1904 = vmatprep.subr.mxu0 %v1772
        %1905 = vmatpush1.msra.mxu0 %v1771
        %1906 = vmatprep.subr.mxu0 %v1776
        %1907 = vmatpush1.msra.mxu0 %v1775
        %1908 = vmatprep.subr.mxu0 %v1780
        %1909 = vmatpush1.msra.mxu0 %v1779
        %1910 = vmatprep.subr.mxu0 %v1784
        %1911 = vmatpush1.msra.mxu0 %v1783
        %1912 = vmatprep.subr.mxu0 %v1788
        %1913 = vmatpush1.msra.mxu0 %v1787
        %1914 = vmatprep.subr.mxu0 %v1792
        %1915 = vmatpush1.msra.mxu0 %v1791
        %1916 = vmatprep.subr.mxu0 %v1796
        %1917 = vmatpush1.msra.mxu0 %v1795
        %1918 = vmatprep.subr.mxu0 %v1800
        %1919 = vmatpush1.msra.mxu0 %v1799
        %1920 = vmatprep.subr.mxu0 %v1804
        %1921 = vmatpush1.msra.mxu0 %v1803
        %1922 = vmatprep.subr.mxu0 %v1808
        %1923 = vmatpush1.msra.mxu0 %v1807
        %1924 = vmatprep.subr.mxu0 %v1812
        %1925 = vmatpush1.msra.mxu0 %v1811
        %1926 = vmatprep.subr.mxu0 0.0
        %1927 = vmatpush1.msra.mxu0 0.0
        %1928 = vmatprep.subr.mxu0 0.0
        %1929 = vmatpush1.msra.mxu0 0.0
        %1930 = vmatprep.subr.mxu0 0.0
        %1931 = vmatpush1.msra.mxu0 0.0
        %1932 = vmatprep.subr.mxu0 0.0
        %1933 = vmatpush1.msra.mxu0 0.0
        %1934 = vmatprep.subr.mxu0 0.0
        %1935 = vmatpush1.msra.mxu0 0.0
        %1936 = vmatprep.subr.mxu0 0.0
        %1937 = vmatpush1.msra.mxu0 0.0
        %1938 = vmatprep.subr.mxu0 0.0
        %1939 = vmatpush1.msra.mxu0 0.0
        %1940 = vmatprep.subr.mxu0 0.0
        %1941 = vmatpush1.msra.mxu0 0.0
        %1942 = vmatprep.subr.mxu0 0.0
        %1943 = vmatpush1.msra.mxu0 0.0
        %1944 = vmatprep.subr.mxu0 0.0
        %1945 = vmatpush1.msra.mxu0 0.0
        %1946 = vmatprep.subr.mxu0 0.0
        %1947 = vmatpush1.msra.mxu0 0.0
        %1948 = vmatprep.subr.mxu0 0.0
        %1949 = vmatpush1.msra.mxu0 0.0
        %1950 = vmatprep.subr.mxu0 0.0
        %1951 = vmatpush1.msra.mxu0 0.0
        %1952 = vmatprep.subr.mxu0 0.0
        %1953 = vmatpush1.msra.mxu0 0.0
        %1954 = vmatprep.subr.mxu0 0.0
        %1955 = vmatpush1.msra.mxu0 0.0
        %1956 = vmatprep.subr.mxu0 0.0
        %1957 = vmatpush1.msra.mxu0 0.0
        %1958 = vmatprep.subr.mxu0 0.0
        %1959 = vmatpush1.msra.mxu0 0.0
        %1960 = vmatprep.subr.mxu0 0.0
        %1961 = vmatpush1.msra.mxu0 0.0
        %1962 = vmatprep.subr.mxu0 0.0
        %1963 = vmatpush1.msra.mxu0 0.0
        %1964 = vmatprep.subr.mxu0 0.0
        %1965 = vmatpush1.msra.mxu0 0.0
        %1966 = vmatprep.mubr.f32.mxu0 0.0
        %1967 = vmatmul.mubr.f32.gmra.mrb[0].mxu0 %v957
        %v1968 = vpop.f32.mrb[0].mxu0
        %v1969 = vadd.f32 0.0, %v1968
        %v1970 = vpop.f32.mrb[0].mxu0
        %v1971 = vadd.f32 0.0, %v1970
        %1972 = vmatprep.mubr.f32.mxu0 0.0
        %1973 = vmatmul.mubr.f32.gmra.mrb[0].mxu0 %v960
        %v1974 = vpop.f32.mrb[0].mxu0
        %v1975 = vadd.f32 0.0, %v1974
        %v1976 = vpop.f32.mrb[0].mxu0
        %v1977 = vadd.f32 0.0, %v1976
        %1978 = vmatprep.mubr.f32.mxu0 0.0
        %1979 = vmatmul.mubr.f32.gmra.mrb[0].mxu0 %v963
        %v1980 = vpop.f32.mrb[0].mxu0
        %v1981 = vadd.f32 0.0, %v1980
        %v1982 = vpop.f32.mrb[0].mxu0
        %v1983 = vadd.f32 0.0, %v1982
        %1984 = vmatprep.mubr.f32.mxu0 0.0
        %1985 = vmatmul.mubr.f32.gmra.mrb[0].mxu0 %v966
        %v1986 = vpop.f32.mrb[0].mxu0
        %v1987 = vadd.f32 0.0, %v1986
        %v1988 = vpop.f32.mrb[0].mxu0
        %v1989 = vadd.f32 0.0, %v1988
        %1990 = vdwg.mxu0
        %v1992 = vsel %vm1378, %v1760, 0
        %v1995 = vsel %vm1378, %v1761, 0
        %v1998 = vsel %vm1378, %v1762, 0
        %v2001 = vsel %vm1378, %v1763, 0
        %2003 = vmatprep.subr.mxu0 %v1882
        %2004 = vmatpush1.msra.mxu0 %v1880
        %2005 = vmatprep.subr.mxu0 %v1888
        %2006 = vmatpush1.msra.mxu0 %v1886
        %2007 = vmatprep.subr.mxu0 %v1894
        %2008 = vmatpush1.msra.mxu0 %v1892
        %2009 = vmatprep.subr.mxu0 %v1900
        %2010 = vmatpush1.msra.mxu0 %v1898
        %2011 = vmatprep.subr.mxu0 0.0
        %2012 = vmatpush1.msra.mxu0 0.0
        %2013 = vmatprep.subr.mxu0 0.0
        %2014 = vmatpush1.msra.mxu0 0.0
        %2015 = vmatprep.subr.mxu0 0.0
        %2016 = vmatpush1.msra.mxu0 0.0
        %2017 = vmatprep.subr.mxu0 0.0
        %2018 = vmatpush1.msra.mxu0 0.0
        %2019 = vmatprep.subr.mxu0 0.0
        %2020 = vmatpush1.msra.mxu0 0.0
        %2021 = vmatprep.subr.mxu0 0.0
        %2022 = vmatpush1.msra.mxu0 0.0
        %2023 = vmatprep.subr.mxu0 0.0
        %2024 = vmatpush1.msra.mxu0 0.0
        %2025 = vmatprep.subr.mxu0 0.0
        %2026 = vmatpush1.msra.mxu0 0.0
        %2027 = vmatprep.subr.mxu0 0.0
        %2028 = vmatpush1.msra.mxu0 0.0
        %2029 = vmatprep.subr.mxu0 0.0
        %2030 = vmatpush1.msra.mxu0 0.0
        %2031 = vmatprep.subr.mxu0 0.0
        %2032 = vmatpush1.msra.mxu0 0.0
        %2033 = vmatprep.subr.mxu0 0.0
        %2034 = vmatpush1.msra.mxu0 0.0
        %2035 = vmatprep.subr.mxu0 0.0
        %2036 = vmatpush1.msra.mxu0 0.0
        %2037 = vmatprep.subr.mxu0 0.0
        %2038 = vmatpush1.msra.mxu0 0.0
        %2039 = vmatprep.subr.mxu0 0.0
        %2040 = vmatpush1.msra.mxu0 0.0
        %2041 = vmatprep.subr.mxu0 0.0
        %2042 = vmatpush1.msra.mxu0 0.0
        %2043 = vmatprep.subr.mxu0 0.0
        %2044 = vmatpush1.msra.mxu0 0.0
        %2045 = vmatprep.subr.mxu0 0.0
        %2046 = vmatpush1.msra.mxu0 0.0
        %2047 = vmatprep.subr.mxu0 0.0
        %2048 = vmatpush1.msra.mxu0 0.0
        %2049 = vmatprep.subr.mxu0 0.0
        %2050 = vmatpush1.msra.mxu0 0.0
        %2051 = vmatprep.subr.mxu0 0.0
        %2052 = vmatpush1.msra.mxu0 0.0
        %2053 = vmatprep.subr.mxu0 0.0
        %2054 = vmatpush1.msra.mxu0 0.0
        %2055 = vmatprep.subr.mxu0 0.0
        %2056 = vmatpush1.msra.mxu0 0.0
        %2057 = vmatprep.subr.mxu0 0.0
        %2058 = vmatpush1.msra.mxu0 0.0
        %2059 = vmatprep.subr.mxu0 0.0
        %2060 = vmatpush1.msra.mxu0 0.0
        %2061 = vmatprep.subr.mxu0 0.0
        %2062 = vmatpush1.msra.mxu0 0.0
        %2063 = vmatprep.subr.mxu0 0.0
        %2064 = vmatpush1.msra.mxu0 0.0
        %2065 = vmatprep.subr.mxu0 0.0
        %2066 = vmatpush1.msra.mxu0 0.0
        %2067 = vmatprep.mubr.f32.mxu0 0.0
        %2068 = vmatmul.mubr.f32.gmra.mrb[0].mxu0 %v1992
        %v2069 = vpop.f32.mrb[0].mxu0
        %v2070 = vadd.f32 0.0, %v2069
        %v2071 = vpop.f32.mrb[0].mxu0
        %v2072 = vadd.f32 0.0, %v2071
        %2073 = vmatprep.mubr.f32.mxu0 0.0
        %2074 = vmatmul.mubr.f32.gmra.mrb[0].mxu0 %v1995
        %v2075 = vpop.f32.mrb[0].mxu0
        %v2076 = vadd.f32 0.0, %v2075
        %v2077 = vpop.f32.mrb[0].mxu0
        %v2078 = vadd.f32 0.0, %v2077
        %2079 = vmatprep.mubr.f32.mxu0 0.0
        %2080 = vmatmul.mubr.f32.gmra.mrb[0].mxu0 %v1998
        %v2081 = vpop.f32.mrb[0].mxu0
        %v2082 = vadd.f32 0.0, %v2081
        %v2083 = vpop.f32.mrb[0].mxu0
        %v2084 = vadd.f32 0.0, %v2083
        %2085 = vmatprep.mubr.f32.mxu0 0.0
        %2086 = vmatmul.mubr.f32.gmra.mrb[0].mxu0 %v2001
        %v2087 = vpop.f32.mrb[0].mxu0
        %v2088 = vadd.f32 0.0, %v2087
        %v2089 = vpop.f32.mrb[0].mxu0
        %v2090 = vadd.f32 0.0, %v2089
        %2091 = vdwg.mxu0
        %2092 = vmatprep.subr.mxu0 %v1971
        %2093 = vmatpush1.msra.mxu0 %v1969
        %2094 = vmatprep.subr.mxu0 %v1977
        %2095 = vmatpush1.msra.mxu0 %v1975
        %2096 = vmatprep.subr.mxu0 %v1983
        %2097 = vmatpush1.msra.mxu0 %v1981
        %2098 = vmatprep.subr.mxu0 %v1989
        %2099 = vmatpush1.msra.mxu0 %v1987
        %2100 = vmatprep.subr.mxu0 0.0
        %2101 = vmatpush1.msra.mxu0 0.0
        %2102 = vmatprep.subr.mxu0 0.0
        %2103 = vmatpush1.msra.mxu0 0.0
        %2104 = vmatprep.subr.mxu0 0.0
        %2105 = vmatpush1.msra.mxu0 0.0
        %2106 = vmatprep.subr.mxu0 0.0
        %2107 = vmatpush1.msra.mxu0 0.0
        %2108 = vmatprep.subr.mxu0 0.0
        %2109 = vmatpush1.msra.mxu0 0.0
        %2110 = vmatprep.subr.mxu0 0.0
        %2111 = vmatpush1.msra.mxu0 0.0
        %2112 = vmatprep.subr.mxu0 0.0
        %2113 = vmatpush1.msra.mxu0 0.0
        %2114 = vmatprep.subr.mxu0 0.0
        %2115 = vmatpush1.msra.mxu0 0.0
        %2116 = vmatprep.subr.mxu0 0.0
        %2117 = vmatpush1.msra.mxu0 0.0
        %2118 = vmatprep.subr.mxu0 0.0
        %2119 = vmatpush1.msra.mxu0 0.0
        %2120 = vmatprep.subr.mxu0 0.0
        %2121 = vmatpush1.msra.mxu0 0.0
        %2122 = vmatprep.subr.mxu0 0.0
        %2123 = vmatpush1.msra.mxu0 0.0
        %2124 = vmatprep.subr.mxu0 0.0
        %2125 = vmatpush1.msra.mxu0 0.0
        %2126 = vmatprep.subr.mxu0 0.0
        %2127 = vmatpush1.msra.mxu0 0.0
        %2128 = vmatprep.subr.mxu0 0.0
        %2129 = vmatpush1.msra.mxu0 0.0
        %2130 = vmatprep.subr.mxu0 0.0
        %2131 = vmatpush1.msra.mxu0 0.0
        %2132 = vmatprep.subr.mxu0 0.0
        %2133 = vmatpush1.msra.mxu0 0.0
        %2134 = vmatprep.subr.mxu0 0.0
        %2135 = vmatpush1.msra.mxu0 0.0
        %2136 = vmatprep.subr.mxu0 0.0
        %2137 = vmatpush1.msra.mxu0 0.0
        %2138 = vmatprep.subr.mxu0 0.0
        %2139 = vmatpush1.msra.mxu0 0.0
        %2140 = vmatprep.subr.mxu0 0.0
        %2141 = vmatpush1.msra.mxu0 0.0
        %2142 = vmatprep.subr.mxu0 0.0
        %2143 = vmatpush1.msra.mxu0 0.0
        %2144 = vmatprep.subr.mxu0 0.0
        %2145 = vmatpush1.msra.mxu0 0.0
        %2146 = vmatprep.subr.mxu0 0.0
        %2147 = vmatpush1.msra.mxu0 0.0
        %2148 = vmatprep.subr.mxu0 0.0
        %2149 = vmatpush1.msra.mxu0 0.0
        %2150 = vmatprep.subr.mxu0 0.0
        %2151 = vmatpush1.msra.mxu0 0.0
        %2152 = vmatprep.subr.mxu0 0.0
        %2153 = vmatpush1.msra.mxu0 0.0
        %2154 = vmatprep.subr.mxu0 0.0
        %2155 = vmatpush1.msra.mxu0 0.0
        %2156 = vmatprep.mubr.f32.mxu0 0.0
        %2157 = vmatmul.mubr.f32.gmra.mrb[0].mxu0 %v1992
        %v2158 = vpop.f32.mrb[0].mxu0
        %v2159 = vadd.f32 0.0, %v2158
        %v2160 = vpop.f32.mrb[0].mxu0
        %v2161 = vadd.f32 0.0, %v2160
        %2162 = vmatprep.mubr.f32.mxu0 0.0
        %2163 = vmatmul.mubr.f32.gmra.mrb[0].mxu0 %v1995
        %v2164 = vpop.f32.mrb[0].mxu0
        %v2165 = vadd.f32 0.0, %v2164
        %v2166 = vpop.f32.mrb[0].mxu0
        %v2167 = vadd.f32 0.0, %v2166
        %2168 = vmatprep.mubr.f32.mxu0 0.0
        %2169 = vmatmul.mubr.f32.gmra.mrb[0].mxu0 %v1998
        %v2170 = vpop.f32.mrb[0].mxu0
        %v2171 = vadd.f32 0.0, %v2170
        %v2172 = vpop.f32.mrb[0].mxu0
        %v2173 = vadd.f32 0.0, %v2172
        %2174 = vmatprep.mubr.f32.mxu0 0.0
        %2175 = vmatmul.mubr.f32.gmra.mrb[0].mxu0 %v2001
        %v2176 = vpop.f32.mrb[0].mxu0
        %v2177 = vadd.f32 0.0, %v2176
        %v2178 = vpop.f32.mrb[0].mxu0
        %v2179 = vadd.f32 0.0, %v2178
        %2180 = vdwg.mxu0
        %v2181 = vadd.f32 %v1648, %v2070
        %v2182 = vadd.f32 %v1650, %v2072
        %v2183 = vadd.f32 %v1737, %v2159
        %v2184 = vadd.f32 %v1739, %v2161
        %v2185 = vadd.f32 %v1654, %v2076
        %v2186 = vadd.f32 %v1656, %v2078
        %v2187 = vadd.f32 %v1743, %v2165
        %v2188 = vadd.f32 %v1745, %v2167
        %v2189 = vadd.f32 %v1660, %v2082
        %v2190 = vadd.f32 %v1662, %v2084
        %v2191 = vadd.f32 %v1749, %v2171
        %v2192 = vadd.f32 %v1751, %v2173
        %v2193 = vadd.f32 %v1666, %v2088
        %v2194 = vadd.f32 %v1668, %v2090
        %v2195 = vadd.f32 %v1755, %v2177
        %v2196 = vadd.f32 %v1757, %v2179
        %v2197 = vld [vmem:[#allocation8] sm:$0xf]
        %v2199 = vlaneseq
        %v2200 = vshrl.u32 %v2199, 7
        %v2201 = vsub.s32 0, %v2200
        %v2202 = vrot.slane %v2197, %v2201
        %v2203 = vlaneseq
        %v2204 = vshrl.u32 %v2203, 7
        %v2205 = vsub.s32 1, %v2204
        %v2206 = vrot.slane %v2197, %v2205
        %v2207 = vlaneseq
        %v2208 = vshrl.u32 %v2207, 7
        %v2209 = vsub.s32 2, %v2208
        %v2210 = vrot.slane %v2197, %v2209
        %v2211 = vlaneseq
        %v2212 = vshrl.u32 %v2211, 7
        %v2213 = vsub.s32 3, %v2212
        %v2214 = vrot.slane %v2197, %v2213
        %v2219 = vmul.f32 %v2181, %v2202
        %v2220 = vmul.f32 %v2182, %v2206
        %v2221 = vmul.f32 %v2183, %v2210
        %v2222 = vmul.f32 %v2184, %v2214
        %v2223 = vmul.f32 %v2185, %v2202
        %v2224 = vmul.f32 %v2186, %v2206
        %v2225 = vmul.f32 %v2187, %v2210
        %v2226 = vmul.f32 %v2188, %v2214
        %v2227 = vmul.f32 %v2189, %v2202
        %v2228 = vmul.f32 %v2190, %v2206
        %v2229 = vmul.f32 %v2191, %v2210
        %v2230 = vmul.f32 %v2192, %v2214
        %v2231 = vmul.f32 %v2193, %v2202
        %v2232 = vmul.f32 %v2194, %v2206
        %v2233 = vmul.f32 %v2195, %v2210
        %v2234 = vmul.f32 %v2196, %v2214
        %s2235 = scalar_lea.vmem [#allocation8], 4
        %v2236 = vld [vmem:[%s2235] sm:$0xf]
        %v2238 = vlaneseq
        %v2239 = vshrl.u32 %v2238, 7
        %v2240 = vsub.s32 0, %v2239
        %v2241 = vrot.slane %v2236, %v2240
        %v2242 = vlaneseq
        %v2243 = vshrl.u32 %v2242, 7
        %v2244 = vsub.s32 1, %v2243
        %v2245 = vrot.slane %v2236, %v2244
        %v2246 = vlaneseq
        %v2247 = vshrl.u32 %v2246, 7
        %v2248 = vsub.s32 2, %v2247
        %v2249 = vrot.slane %v2236, %v2248
        %v2250 = vlaneseq
        %v2251 = vshrl.u32 %v2250, 7
        %v2252 = vsub.s32 3, %v2251
        %v2253 = vrot.slane %v2236, %v2252
        %v2258 = vadd.f32 %v2219, %v2241
        %v2259 = vadd.f32 %v2220, %v2245
        %v2260 = vadd.f32 %v2221, %v2249
        %v2261 = vadd.f32 %v2222, %v2253
        %v2262 = vadd.f32 %v2223, %v2241
        %v2263 = vadd.f32 %v2224, %v2245
        %v2264 = vadd.f32 %v2225, %v2249
        %v2265 = vadd.f32 %v2226, %v2253
        %v2266 = vadd.f32 %v2227, %v2241
        %v2267 = vadd.f32 %v2228, %v2245
        %v2268 = vadd.f32 %v2229, %v2249
        %v2269 = vadd.f32 %v2230, %v2253
        %v2270 = vadd.f32 %v2231, %v2241
        %v2271 = vadd.f32 %v2232, %v2245
        %v2272 = vadd.f32 %v2233, %v2249
        %v2273 = vadd.f32 %v2234, %v2253
        %v2274 = vmax.f32 %v2258, 0.0
        %v2275 = vmax.f32 %v2259, 0.0
        %v2276 = vmax.f32 %v2260, 0.0
        %v2277 = vmax.f32 %v2261, 0.0
        %v2278 = vmax.f32 %v2262, 0.0
        %v2279 = vmax.f32 %v2263, 0.0
        %v2280 = vmax.f32 %v2264, 0.0
        %v2281 = vmax.f32 %v2265, 0.0
        %v2282 = vmax.f32 %v2266, 0.0
        %v2283 = vmax.f32 %v2267, 0.0
        %v2284 = vmax.f32 %v2268, 0.0
        %v2285 = vmax.f32 %v2269, 0.0
        %v2286 = vmax.f32 %v2270, 0.0
        %v2287 = vmax.f32 %v2271, 0.0
        %v2288 = vmax.f32 %v2272, 0.0
        %v2289 = vmax.f32 %v2273, 0.0
        %v2290 = vld [vmem:[#allocation7] sm:$0xff]
        %v2291 = vld [vmem:[#allocation7 + $0x8] sm:$0xff]
        %v2292 = vld [vmem:[#allocation7 + $0x10] sm:$0xff]
        %v2293 = vld [vmem:[#allocation7 + $0x18] sm:$0xff]
        %v2294 = vld [vmem:[#allocation7 + $0x20] sm:$0xff]
        %v2295 = vld [vmem:[#allocation7 + $0x28] sm:$0xff]
        %v2296 = vld [vmem:[#allocation7 + $0x30] sm:$0xff]
        %v2297 = vld [vmem:[#allocation7 + $0x38] sm:$0xff]
        %v2298 = vld [vmem:[#allocation7 + $0x40] sm:$0xff]
        %v2299 = vld [vmem:[#allocation7 + $0x48] sm:$0xff]
        %v2300 = vld [vmem:[#allocation7 + $0x50] sm:$0xff]
        %v2301 = vld [vmem:[#allocation7 + $0x58] sm:$0xff]
        %v2302 = vld [vmem:[#allocation7 + $0x60] sm:$0xff]
        %v2303 = vld [vmem:[#allocation7 + $0x68] sm:$0xff]
        %v2304 = vld [vmem:[#allocation7 + $0x70] sm:$0xff]
        %v2305 = vld [vmem:[#allocation7 + $0x78] sm:$0xff]
        %v2306 = vld [vmem:[#allocation7 + $0x80] sm:$0xff]
        %v2307 = vld [vmem:[#allocation7 + $0x88] sm:$0xff]
        %v2308 = vld [vmem:[#allocation7 + $0x90] sm:$0xff]
        %v2309 = vld [vmem:[#allocation7 + $0x98] sm:$0xff]
        %v2310 = vld [vmem:[#allocation7 + $0xa0] sm:$0xff]
        %v2311 = vld [vmem:[#allocation7 + $0xa8] sm:$0xff]
        %v2312 = vld [vmem:[#allocation7 + $0xb0] sm:$0xff]
        %v2313 = vld [vmem:[#allocation7 + $0xb8] sm:$0xff]
        %v2314 = vld [vmem:[#allocation7 + $0xc0] sm:$0xff]
        %v2315 = vld [vmem:[#allocation7 + $0xc8] sm:$0xff]
        %v2316 = vld [vmem:[#allocation7 + $0xd0] sm:$0xff]
        %v2317 = vld [vmem:[#allocation7 + $0xd8] sm:$0xff]
        %v2318 = vld [vmem:[#allocation7 + $0xe0] sm:$0xff]
        %v2319 = vld [vmem:[#allocation7 + $0xe8] sm:$0xff]
        %v2320 = vld [vmem:[#allocation7 + $0xf0] sm:$0xff]
        %v2321 = vld [vmem:[#allocation7 + $0xf8] sm:$0xff]
        %v2322 = vld [vmem:[#allocation7 + $0x100] sm:$0xff]
        %v2323 = vld [vmem:[#allocation7 + $0x108] sm:$0xff]
        %v2324 = vld [vmem:[#allocation7 + $0x110] sm:$0xff]
        %v2325 = vld [vmem:[#allocation7 + $0x118] sm:$0xff]
        %v2326 = vld [vmem:[#allocation7 + $0x120] sm:$0xff]
        %v2327 = vld [vmem:[#allocation7 + $0x128] sm:$0xff]
        %v2328 = vld [vmem:[#allocation7 + $0x130] sm:$0xff]
        %v2329 = vld [vmem:[#allocation7 + $0x138] sm:$0xff]
        %v2330 = vld [vmem:[#allocation7 + $0x140] sm:$0xff]
        %v2331 = vld [vmem:[#allocation7 + $0x148] sm:$0xff]
        %v2332 = vld [vmem:[#allocation7 + $0x150] sm:$0xff]
        %v2333 = vld [vmem:[#allocation7 + $0x158] sm:$0xff]
        %v2334 = vld [vmem:[#allocation7 + $0x160] sm:$0xff]
        %v2335 = vld [vmem:[#allocation7 + $0x168] sm:$0xff]
        %v2336 = vld [vmem:[#allocation7 + $0x170] sm:$0xff]
        %v2337 = vld [vmem:[#allocation7 + $0x178] sm:$0xff]
        %v2338 = vld [vmem:[#allocation7 + $0x180] sm:$0xff]
        %v2339 = vld [vmem:[#allocation7 + $0x188] sm:$0xff]
        %v2340 = vld [vmem:[#allocation7 + $0x190] sm:$0xff]
        %v2341 = vld [vmem:[#allocation7 + $0x198] sm:$0xff]
        %v2342 = vld [vmem:[#allocation7 + $0x1a0] sm:$0xff]
        %v2343 = vld [vmem:[#allocation7 + $0x1a8] sm:$0xff]
        %v2344 = vld [vmem:[#allocation7 + $0x1b0] sm:$0xff]
        %v2345 = vld [vmem:[#allocation7 + $0x1b8] sm:$0xff]
        %v2346 = vld [vmem:[#allocation7 + $0x1c0] sm:$0xff]
        %v2347 = vld [vmem:[#allocation7 + $0x1c8] sm:$0xff]
        %v2348 = vld [vmem:[#allocation7 + $0x1d0] sm:$0xff]
        %v2349 = vld [vmem:[#allocation7 + $0x1d8] sm:$0xff]
        %v2350 = vld [vmem:[#allocation7 + $0x1e0] sm:$0xff]
        %v2351 = vld [vmem:[#allocation7 + $0x1e8] sm:$0xff]
        %v2352 = vld [vmem:[#allocation7 + $0x1f0] sm:$0xff]
        %v2353 = vld [vmem:[#allocation7 + $0x1f8] sm:$0xff]
        %v2354 = vld [vmem:[#allocation7 + $0x200] sm:$0xff]
        %v2355 = vld [vmem:[#allocation7 + $0x208] sm:$0xff]
        %v2356 = vld [vmem:[#allocation7 + $0x210] sm:$0xff]
        %v2357 = vld [vmem:[#allocation7 + $0x218] sm:$0xff]
        %v2358 = vld [vmem:[#allocation7 + $0x220] sm:$0xff]
        %v2359 = vld [vmem:[#allocation7 + $0x228] sm:$0xff]
        %v2360 = vld [vmem:[#allocation7 + $0x230] sm:$0xff]
        %v2361 = vld [vmem:[#allocation7 + $0x238] sm:$0xff]
        %v2362 = vld [vmem:[#allocation7 + $0x240] sm:$0xff]
        %v2363 = vld [vmem:[#allocation7 + $0x248] sm:$0xff]
        %v2364 = vld [vmem:[#allocation7 + $0x250] sm:$0xff]
        %v2365 = vld [vmem:[#allocation7 + $0x258] sm:$0xff]
        %v2366 = vld [vmem:[#allocation7 + $0x260] sm:$0xff]
        %v2367 = vld [vmem:[#allocation7 + $0x268] sm:$0xff]
        %v2368 = vld [vmem:[#allocation7 + $0x270] sm:$0xff]
        %v2369 = vld [vmem:[#allocation7 + $0x278] sm:$0xff]
        %v2370 = vld [vmem:[#allocation7 + $0x280] sm:$0xff]
        %v2371 = vld [vmem:[#allocation7 + $0x288] sm:$0xff]
        %v2372 = vld [vmem:[#allocation7 + $0x290] sm:$0xff]
        %v2373 = vld [vmem:[#allocation7 + $0x298] sm:$0xff]
        %v2374 = vld [vmem:[#allocation7 + $0x2a0] sm:$0xff]
        %v2375 = vld [vmem:[#allocation7 + $0x2a8] sm:$0xff]
        %v2376 = vld [vmem:[#allocation7 + $0x2b0] sm:$0xff]
        %v2377 = vld [vmem:[#allocation7 + $0x2b8] sm:$0xff]
        %v2378 = vld [vmem:[#allocation7 + $0x2c0] sm:$0xff]
        %v2379 = vld [vmem:[#allocation7 + $0x2c8] sm:$0xff]
        %v2380 = vld [vmem:[#allocation7 + $0x2d0] sm:$0xff]
        %v2381 = vld [vmem:[#allocation7 + $0x2d8] sm:$0xff]
        %v2382 = vld [vmem:[#allocation7 + $0x2e0] sm:$0xff]
        %v2383 = vld [vmem:[#allocation7 + $0x2e8] sm:$0xff]
        %v2384 = vld [vmem:[#allocation7 + $0x2f0] sm:$0xff]
        %v2385 = vld [vmem:[#allocation7 + $0x2f8] sm:$0xff]
        %v2386 = vld [vmem:[#allocation7 + $0x300] sm:$0xff]
        %v2387 = vld [vmem:[#allocation7 + $0x308] sm:$0xff]
        %v2388 = vld [vmem:[#allocation7 + $0x310] sm:$0xff]
        %v2389 = vld [vmem:[#allocation7 + $0x318] sm:$0xff]
        %v2390 = vld [vmem:[#allocation7 + $0x320] sm:$0xff]
        %v2391 = vld [vmem:[#allocation7 + $0x328] sm:$0xff]
        %v2392 = vld [vmem:[#allocation7 + $0x330] sm:$0xff]
        %v2393 = vld [vmem:[#allocation7 + $0x338] sm:$0xff]
        %v2394 = vld [vmem:[#allocation7 + $0x340] sm:$0xff]
        %v2395 = vld [vmem:[#allocation7 + $0x348] sm:$0xff]
        %v2396 = vld [vmem:[#allocation7 + $0x350] sm:$0xff]
        %v2397 = vld [vmem:[#allocation7 + $0x358] sm:$0xff]
        %v2398 = vld [vmem:[#allocation7 + $0x360] sm:$0xff]
        %v2399 = vld [vmem:[#allocation7 + $0x368] sm:$0xff]
        %v2400 = vld [vmem:[#allocation7 + $0x370] sm:$0xff]
        %v2401 = vld [vmem:[#allocation7 + $0x378] sm:$0xff]
        %v2402 = vld [vmem:[#allocation7 + $0x380] sm:$0xff]
        %v2403 = vld [vmem:[#allocation7 + $0x388] sm:$0xff]
        %v2404 = vld [vmem:[#allocation7 + $0x390] sm:$0xff]
        %v2405 = vld [vmem:[#allocation7 + $0x398] sm:$0xff]
        %v2406 = vld [vmem:[#allocation7 + $0x3a0] sm:$0xff]
        %v2407 = vld [vmem:[#allocation7 + $0x3a8] sm:$0xff]
        %v2408 = vld [vmem:[#allocation7 + $0x3b0] sm:$0xff]
        %v2409 = vld [vmem:[#allocation7 + $0x3b8] sm:$0xff]
        %v2410 = vld [vmem:[#allocation7 + $0x3c0] sm:$0xff]
        %v2411 = vld [vmem:[#allocation7 + $0x3c8] sm:$0xff]
        %v2412 = vld [vmem:[#allocation7 + $0x3d0] sm:$0xff]
        %v2413 = vld [vmem:[#allocation7 + $0x3d8] sm:$0xff]
        %v2414 = vld [vmem:[#allocation7 + $0x3e0] sm:$0xff]
        %v2415 = vld [vmem:[#allocation7 + $0x3e8] sm:$0xff]
        %v2416 = vld [vmem:[#allocation7 + $0x3f0] sm:$0xff]
        %v2417 = vld [vmem:[#allocation7 + $0x3f8] sm:$0xff]
        %2418 = vmatprep.subr.mxu0 %v2291
        %2419 = vmatpush1.msra.mxu0 %v2290
        %2420 = vmatprep.subr.mxu0 %v2293
        %2421 = vmatpush1.msra.mxu0 %v2292
        %2422 = vmatprep.subr.mxu0 %v2295
        %2423 = vmatpush1.msra.mxu0 %v2294
        %2424 = vmatprep.subr.mxu0 %v2297
        %2425 = vmatpush1.msra.mxu0 %v2296
        %2426 = vmatprep.subr.mxu0 %v2299
        %2427 = vmatpush1.msra.mxu0 %v2298
        %2428 = vmatprep.subr.mxu0 %v2301
        %2429 = vmatpush1.msra.mxu0 %v2300
        %2430 = vmatprep.subr.mxu0 %v2303
        %2431 = vmatpush1.msra.mxu0 %v2302
        %2432 = vmatprep.subr.mxu0 %v2305
        %2433 = vmatpush1.msra.mxu0 %v2304
        %2434 = vmatprep.subr.mxu0 %v2307
        %2435 = vmatpush1.msra.mxu0 %v2306
        %2436 = vmatprep.subr.mxu0 %v2309
        %2437 = vmatpush1.msra.mxu0 %v2308
        %2438 = vmatprep.subr.mxu0 %v2311
        %2439 = vmatpush1.msra.mxu0 %v2310
        %2440 = vmatprep.subr.mxu0 %v2313
        %2441 = vmatpush1.msra.mxu0 %v2312
        %2442 = vmatprep.subr.mxu0 %v2315
        %2443 = vmatpush1.msra.mxu0 %v2314
        %2444 = vmatprep.subr.mxu0 %v2317
        %2445 = vmatpush1.msra.mxu0 %v2316
        %2446 = vmatprep.subr.mxu0 %v2319
        %2447 = vmatpush1.msra.mxu0 %v2318
        %2448 = vmatprep.subr.mxu0 %v2321
        %2449 = vmatpush1.msra.mxu0 %v2320
        %2450 = vmatprep.subr.mxu0 %v2323
        %2451 = vmatpush1.msra.mxu0 %v2322
        %2452 = vmatprep.subr.mxu0 %v2325
        %2453 = vmatpush1.msra.mxu0 %v2324
        %2454 = vmatprep.subr.mxu0 %v2327
        %2455 = vmatpush1.msra.mxu0 %v2326
        %2456 = vmatprep.subr.mxu0 %v2329
        %2457 = vmatpush1.msra.mxu0 %v2328
        %2458 = vmatprep.subr.mxu0 %v2331
        %2459 = vmatpush1.msra.mxu0 %v2330
        %2460 = vmatprep.subr.mxu0 %v2333
        %2461 = vmatpush1.msra.mxu0 %v2332
        %2462 = vmatprep.subr.mxu0 %v2335
        %2463 = vmatpush1.msra.mxu0 %v2334
        %2464 = vmatprep.subr.mxu0 %v2337
        %2465 = vmatpush1.msra.mxu0 %v2336
        %2466 = vmatprep.subr.mxu0 %v2339
        %2467 = vmatpush1.msra.mxu0 %v2338
        %2468 = vmatprep.subr.mxu0 %v2341
        %2469 = vmatpush1.msra.mxu0 %v2340
        %2470 = vmatprep.subr.mxu0 %v2343
        %2471 = vmatpush1.msra.mxu0 %v2342
        %2472 = vmatprep.subr.mxu0 %v2345
        %2473 = vmatpush1.msra.mxu0 %v2344
        %2474 = vmatprep.subr.mxu0 %v2347
        %2475 = vmatpush1.msra.mxu0 %v2346
        %2476 = vmatprep.subr.mxu0 %v2349
        %2477 = vmatpush1.msra.mxu0 %v2348
        %2478 = vmatprep.subr.mxu0 %v2351
        %2479 = vmatpush1.msra.mxu0 %v2350
        %2480 = vmatprep.subr.mxu0 %v2353
        %2481 = vmatpush1.msra.mxu0 %v2352
        %2482 = vmatprep.mubr.f32.mxu0 %v2275
        %2483 = vmatmul.mubr.f32.gmra.mrb[0].mxu0 %v2274
        %v2484 = vpop.f32.mrb[0].mxu0
        %v2485 = vadd.f32 0.0, %v2484
        %v2486 = vpop.f32.mrb[0].mxu0
        %v2487 = vadd.f32 0.0, %v2486
        %2488 = vmatprep.mubr.f32.mxu0 %v2279
        %2489 = vmatmul.mubr.f32.gmra.mrb[0].mxu0 %v2278
        %v2490 = vpop.f32.mrb[0].mxu0
        %v2491 = vadd.f32 0.0, %v2490
        %v2492 = vpop.f32.mrb[0].mxu0
        %v2493 = vadd.f32 0.0, %v2492
        %2494 = vmatprep.mubr.f32.mxu0 %v2283
        %2495 = vmatmul.mubr.f32.gmra.mrb[0].mxu0 %v2282
        %v2496 = vpop.f32.mrb[0].mxu0
        %v2497 = vadd.f32 0.0, %v2496
        %v2498 = vpop.f32.mrb[0].mxu0
        %v2499 = vadd.f32 0.0, %v2498
        %2500 = vmatprep.mubr.f32.mxu0 %v2287
        %2501 = vmatmul.mubr.f32.gmra.mrb[0].mxu0 %v2286
        %v2502 = vpop.f32.mrb[0].mxu0
        %v2503 = vadd.f32 0.0, %v2502
        %v2504 = vpop.f32.mrb[0].mxu0
        %v2505 = vadd.f32 0.0, %v2504
        %2506 = vdwg.mxu0
        %2507 = vmatprep.subr.mxu0 %v2355
        %2508 = vmatpush1.msra.mxu0 %v2354
        %2509 = vmatprep.subr.mxu0 %v2357
        %2510 = vmatpush1.msra.mxu0 %v2356
        %2511 = vmatprep.subr.mxu0 %v2359
        %2512 = vmatpush1.msra.mxu0 %v2358
        %2513 = vmatprep.subr.mxu0 %v2361
        %2514 = vmatpush1.msra.mxu0 %v2360
        %2515 = vmatprep.subr.mxu0 %v2363
        %2516 = vmatpush1.msra.mxu0 %v2362
        %2517 = vmatprep.subr.mxu0 %v2365
        %2518 = vmatpush1.msra.mxu0 %v2364
        %2519 = vmatprep.subr.mxu0 %v2367
        %2520 = vmatpush1.msra.mxu0 %v2366
        %2521 = vmatprep.subr.mxu0 %v2369
        %2522 = vmatpush1.msra.mxu0 %v2368
        %2523 = vmatprep.subr.mxu0 %v2371
        %2524 = vmatpush1.msra.mxu0 %v2370
        %2525 = vmatprep.subr.mxu0 %v2373
        %2526 = vmatpush1.msra.mxu0 %v2372
        %2527 = vmatprep.subr.mxu0 %v2375
        %2528 = vmatpush1.msra.mxu0 %v2374
        %2529 = vmatprep.subr.mxu0 %v2377
        %2530 = vmatpush1.msra.mxu0 %v2376
        %2531 = vmatprep.subr.mxu0 %v2379
        %2532 = vmatpush1.msra.mxu0 %v2378
        %2533 = vmatprep.subr.mxu0 %v2381
        %2534 = vmatpush1.msra.mxu0 %v2380
        %2535 = vmatprep.subr.mxu0 %v2383
        %2536 = vmatpush1.msra.mxu0 %v2382
        %2537 = vmatprep.subr.mxu0 %v2385
        %2538 = vmatpush1.msra.mxu0 %v2384
        %2539 = vmatprep.subr.mxu0 %v2387
        %2540 = vmatpush1.msra.mxu0 %v2386
        %2541 = vmatprep.subr.mxu0 %v2389
        %2542 = vmatpush1.msra.mxu0 %v2388
        %2543 = vmatprep.subr.mxu0 %v2391
        %2544 = vmatpush1.msra.mxu0 %v2390
        %2545 = vmatprep.subr.mxu0 %v2393
        %2546 = vmatpush1.msra.mxu0 %v2392
        %2547 = vmatprep.subr.mxu0 %v2395
        %2548 = vmatpush1.msra.mxu0 %v2394
        %2549 = vmatprep.subr.mxu0 %v2397
        %2550 = vmatpush1.msra.mxu0 %v2396
        %2551 = vmatprep.subr.mxu0 %v2399
        %2552 = vmatpush1.msra.mxu0 %v2398
        %2553 = vmatprep.subr.mxu0 %v2401
        %2554 = vmatpush1.msra.mxu0 %v2400
        %2555 = vmatprep.subr.mxu0 %v2403
        %2556 = vmatpush1.msra.mxu0 %v2402
        %2557 = vmatprep.subr.mxu0 %v2405
        %2558 = vmatpush1.msra.mxu0 %v2404
        %2559 = vmatprep.subr.mxu0 %v2407
        %2560 = vmatpush1.msra.mxu0 %v2406
        %2561 = vmatprep.subr.mxu0 %v2409
        %2562 = vmatpush1.msra.mxu0 %v2408
        %2563 = vmatprep.subr.mxu0 %v2411
        %2564 = vmatpush1.msra.mxu0 %v2410
        %2565 = vmatprep.subr.mxu0 %v2413
        %2566 = vmatpush1.msra.mxu0 %v2412
        %2567 = vmatprep.subr.mxu0 %v2415
        %2568 = vmatpush1.msra.mxu0 %v2414
        %2569 = vmatprep.subr.mxu0 %v2417
        %2570 = vmatpush1.msra.mxu0 %v2416
        %2571 = vmatprep.mubr.f32.mxu0 %v2277
        %2572 = vmatmul.mubr.f32.gmra.mrb[0].mxu0 %v2276
        %v2573 = vpop.f32.mrb[0].mxu0
        %v2574 = vadd.f32 %v2485, %v2573
        %v2575 = vpop.f32.mrb[0].mxu0
        %v2576 = vadd.f32 %v2487, %v2575
        %2577 = vmatprep.mubr.f32.mxu0 %v2281
        %2578 = vmatmul.mubr.f32.gmra.mrb[0].mxu0 %v2280
        %v2579 = vpop.f32.mrb[0].mxu0
        %v2580 = vadd.f32 %v2491, %v2579
        %v2581 = vpop.f32.mrb[0].mxu0
        %v2582 = vadd.f32 %v2493, %v2581
        %2583 = vmatprep.mubr.f32.mxu0 %v2285
        %2584 = vmatmul.mubr.f32.gmra.mrb[0].mxu0 %v2284
        %v2585 = vpop.f32.mrb[0].mxu0
        %v2586 = vadd.f32 %v2497, %v2585
        %v2587 = vpop.f32.mrb[0].mxu0
        %v2588 = vadd.f32 %v2499, %v2587
        %2589 = vmatprep.mubr.f32.mxu0 %v2289
        %2590 = vmatmul.mubr.f32.gmra.mrb[0].mxu0 %v2288
        %v2591 = vpop.f32.mrb[0].mxu0
        %v2592 = vadd.f32 %v2503, %v2591
        %v2593 = vpop.f32.mrb[0].mxu0
        %v2594 = vadd.f32 %v2505, %v2593
        %2595 = vdwg.mxu0
        %s2596 = scalar_lea.vmem [#allocation7], 1024
        %v2597 = vld [vmem:[%s2596] sm:$0xff]
        %v2598 = vld [vmem:[%s2596 + $0x8] sm:$0xff]
        %v2599 = vld [vmem:[%s2596 + $0x10] sm:$0xff]
        %v2600 = vld [vmem:[%s2596 + $0x18] sm:$0xff]
        %v2601 = vld [vmem:[%s2596 + $0x20] sm:$0xff]
        %v2602 = vld [vmem:[%s2596 + $0x28] sm:$0xff]
        %v2603 = vld [vmem:[%s2596 + $0x30] sm:$0xff]
        %v2604 = vld [vmem:[%s2596 + $0x38] sm:$0xff]
        %v2605 = vld [vmem:[%s2596 + $0x40] sm:$0xff]
        %v2606 = vld [vmem:[%s2596 + $0x48] sm:$0xff]
        %v2607 = vld [vmem:[%s2596 + $0x50] sm:$0xff]
        %v2608 = vld [vmem:[%s2596 + $0x58] sm:$0xff]
        %v2609 = vld [vmem:[%s2596 + $0x60] sm:$0xff]
        %v2610 = vld [vmem:[%s2596 + $0x68] sm:$0xff]
        %v2611 = vld [vmem:[%s2596 + $0x70] sm:$0xff]
        %v2612 = vld [vmem:[%s2596 + $0x78] sm:$0xff]
        %v2613 = vld [vmem:[%s2596 + $0x80] sm:$0xff]
        %v2614 = vld [vmem:[%s2596 + $0x88] sm:$0xff]
        %v2615 = vld [vmem:[%s2596 + $0x90] sm:$0xff]
        %v2616 = vld [vmem:[%s2596 + $0x98] sm:$0xff]
        %v2617 = vld [vmem:[%s2596 + $0xa0] sm:$0xff]
        %v2618 = vld [vmem:[%s2596 + $0xa8] sm:$0xff]
        %v2619 = vld [vmem:[%s2596 + $0xb0] sm:$0xff]
        %v2620 = vld [vmem:[%s2596 + $0xb8] sm:$0xff]
        %v2621 = vld [vmem:[%s2596 + $0xc0] sm:$0xff]
        %v2622 = vld [vmem:[%s2596 + $0xc8] sm:$0xff]
        %v2623 = vld [vmem:[%s2596 + $0xd0] sm:$0xff]
        %v2624 = vld [vmem:[%s2596 + $0xd8] sm:$0xff]
        %v2625 = vld [vmem:[%s2596 + $0xe0] sm:$0xff]
        %v2626 = vld [vmem:[%s2596 + $0xe8] sm:$0xff]
        %v2627 = vld [vmem:[%s2596 + $0xf0] sm:$0xff]
        %v2628 = vld [vmem:[%s2596 + $0xf8] sm:$0xff]
        %v2629 = vld [vmem:[%s2596 + $0x100] sm:$0xff]
        %v2630 = vld [vmem:[%s2596 + $0x108] sm:$0xff]
        %v2631 = vld [vmem:[%s2596 + $0x110] sm:$0xff]
        %v2632 = vld [vmem:[%s2596 + $0x118] sm:$0xff]
        %v2633 = vld [vmem:[%s2596 + $0x120] sm:$0xff]
        %v2634 = vld [vmem:[%s2596 + $0x128] sm:$0xff]
        %v2635 = vld [vmem:[%s2596 + $0x130] sm:$0xff]
        %v2636 = vld [vmem:[%s2596 + $0x138] sm:$0xff]
        %v2637 = vld [vmem:[%s2596 + $0x140] sm:$0xff]
        %v2638 = vld [vmem:[%s2596 + $0x148] sm:$0xff]
        %v2639 = vld [vmem:[%s2596 + $0x150] sm:$0xff]
        %v2640 = vld [vmem:[%s2596 + $0x158] sm:$0xff]
        %v2641 = vld [vmem:[%s2596 + $0x160] sm:$0xff]
        %v2642 = vld [vmem:[%s2596 + $0x168] sm:$0xff]
        %v2643 = vld [vmem:[%s2596 + $0x170] sm:$0xff]
        %v2644 = vld [vmem:[%s2596 + $0x178] sm:$0xff]
        %v2645 = vld [vmem:[%s2596 + $0x180] sm:$0xff]
        %v2646 = vld [vmem:[%s2596 + $0x188] sm:$0xff]
        %v2647 = vld [vmem:[%s2596 + $0x190] sm:$0xff]
        %v2648 = vld [vmem:[%s2596 + $0x198] sm:$0xff]
        %v2649 = vld [vmem:[%s2596 + $0x1a0] sm:$0xff]
        %v2650 = vld [vmem:[%s2596 + $0x1a8] sm:$0xff]
        %v2651 = vld [vmem:[%s2596 + $0x1b0] sm:$0xff]
        %v2652 = vld [vmem:[%s2596 + $0x1b8] sm:$0xff]
        %v2653 = vld [vmem:[%s2596 + $0x1c0] sm:$0xff]
        %v2654 = vld [vmem:[%s2596 + $0x1c8] sm:$0xff]
        %v2655 = vld [vmem:[%s2596 + $0x1d0] sm:$0xff]
        %v2656 = vld [vmem:[%s2596 + $0x1d8] sm:$0xff]
        %v2657 = vld [vmem:[%s2596 + $0x1e0] sm:$0xff]
        %v2658 = vld [vmem:[%s2596 + $0x1e8] sm:$0xff]
        %v2659 = vld [vmem:[%s2596 + $0x1f0] sm:$0xff]
        %v2660 = vld [vmem:[%s2596 + $0x1f8] sm:$0xff]
        %v2661 = vld [vmem:[%s2596 + $0x200] sm:$0xff]
        %v2662 = vld [vmem:[%s2596 + $0x208] sm:$0xff]
        %v2663 = vld [vmem:[%s2596 + $0x210] sm:$0xff]
        %v2664 = vld [vmem:[%s2596 + $0x218] sm:$0xff]
        %v2665 = vld [vmem:[%s2596 + $0x220] sm:$0xff]
        %v2666 = vld [vmem:[%s2596 + $0x228] sm:$0xff]
        %v2667 = vld [vmem:[%s2596 + $0x230] sm:$0xff]
        %v2668 = vld [vmem:[%s2596 + $0x238] sm:$0xff]
        %v2669 = vld [vmem:[%s2596 + $0x240] sm:$0xff]
        %v2670 = vld [vmem:[%s2596 + $0x248] sm:$0xff]
        %v2671 = vld [vmem:[%s2596 + $0x250] sm:$0xff]
        %v2672 = vld [vmem:[%s2596 + $0x258] sm:$0xff]
        %v2673 = vld [vmem:[%s2596 + $0x260] sm:$0xff]
        %v2674 = vld [vmem:[%s2596 + $0x268] sm:$0xff]
        %v2675 = vld [vmem:[%s2596 + $0x270] sm:$0xff]
        %v2676 = vld [vmem:[%s2596 + $0x278] sm:$0xff]
        %v2677 = vld [vmem:[%s2596 + $0x280] sm:$0xff]
        %v2678 = vld [vmem:[%s2596 + $0x288] sm:$0xff]
        %v2679 = vld [vmem:[%s2596 + $0x290] sm:$0xff]
        %v2680 = vld [vmem:[%s2596 + $0x298] sm:$0xff]
        %v2681 = vld [vmem:[%s2596 + $0x2a0] sm:$0xff]
        %v2682 = vld [vmem:[%s2596 + $0x2a8] sm:$0xff]
        %v2683 = vld [vmem:[%s2596 + $0x2b0] sm:$0xff]
        %v2684 = vld [vmem:[%s2596 + $0x2b8] sm:$0xff]
        %v2685 = vld [vmem:[%s2596 + $0x2c0] sm:$0xff]
        %v2686 = vld [vmem:[%s2596 + $0x2c8] sm:$0xff]
        %v2687 = vld [vmem:[%s2596 + $0x2d0] sm:$0xff]
        %v2688 = vld [vmem:[%s2596 + $0x2d8] sm:$0xff]
        %v2689 = vld [vmem:[%s2596 + $0x2e0] sm:$0xff]
        %v2690 = vld [vmem:[%s2596 + $0x2e8] sm:$0xff]
        %v2691 = vld [vmem:[%s2596 + $0x2f0] sm:$0xff]
        %v2692 = vld [vmem:[%s2596 + $0x2f8] sm:$0xff]
        %v2693 = vld [vmem:[%s2596 + $0x300] sm:$0xff]
        %v2694 = vld [vmem:[%s2596 + $0x308] sm:$0xff]
        %v2695 = vld [vmem:[%s2596 + $0x310] sm:$0xff]
        %v2696 = vld [vmem:[%s2596 + $0x318] sm:$0xff]
        %v2697 = vld [vmem:[%s2596 + $0x320] sm:$0xff]
        %v2698 = vld [vmem:[%s2596 + $0x328] sm:$0xff]
        %v2699 = vld [vmem:[%s2596 + $0x330] sm:$0xff]
        %v2700 = vld [vmem:[%s2596 + $0x338] sm:$0xff]
        %v2701 = vld [vmem:[%s2596 + $0x340] sm:$0xff]
        %v2702 = vld [vmem:[%s2596 + $0x348] sm:$0xff]
        %v2703 = vld [vmem:[%s2596 + $0x350] sm:$0xff]
        %v2704 = vld [vmem:[%s2596 + $0x358] sm:$0xff]
        %v2705 = vld [vmem:[%s2596 + $0x360] sm:$0xff]
        %v2706 = vld [vmem:[%s2596 + $0x368] sm:$0xff]
        %v2707 = vld [vmem:[%s2596 + $0x370] sm:$0xff]
        %v2708 = vld [vmem:[%s2596 + $0x378] sm:$0xff]
        %v2709 = vld [vmem:[%s2596 + $0x380] sm:$0xff]
        %v2710 = vld [vmem:[%s2596 + $0x388] sm:$0xff]
        %v2711 = vld [vmem:[%s2596 + $0x390] sm:$0xff]
        %v2712 = vld [vmem:[%s2596 + $0x398] sm:$0xff]
        %v2713 = vld [vmem:[%s2596 + $0x3a0] sm:$0xff]
        %v2714 = vld [vmem:[%s2596 + $0x3a8] sm:$0xff]
        %v2715 = vld [vmem:[%s2596 + $0x3b0] sm:$0xff]
        %v2716 = vld [vmem:[%s2596 + $0x3b8] sm:$0xff]
        %v2717 = vld [vmem:[%s2596 + $0x3c0] sm:$0xff]
        %v2718 = vld [vmem:[%s2596 + $0x3c8] sm:$0xff]
        %v2719 = vld [vmem:[%s2596 + $0x3d0] sm:$0xff]
        %v2720 = vld [vmem:[%s2596 + $0x3d8] sm:$0xff]
        %v2721 = vld [vmem:[%s2596 + $0x3e0] sm:$0xff]
        %v2722 = vld [vmem:[%s2596 + $0x3e8] sm:$0xff]
        %v2723 = vld [vmem:[%s2596 + $0x3f0] sm:$0xff]
        %v2724 = vld [vmem:[%s2596 + $0x3f8] sm:$0xff]
        %2725 = vmatprep.subr.mxu0 %v2598
        %2726 = vmatpush1.msra.mxu0 %v2597
        %2727 = vmatprep.subr.mxu0 %v2600
        %2728 = vmatpush1.msra.mxu0 %v2599
        %2729 = vmatprep.subr.mxu0 %v2602
        %2730 = vmatpush1.msra.mxu0 %v2601
        %2731 = vmatprep.subr.mxu0 %v2604
        %2732 = vmatpush1.msra.mxu0 %v2603
        %2733 = vmatprep.subr.mxu0 %v2606
        %2734 = vmatpush1.msra.mxu0 %v2605
        %2735 = vmatprep.subr.mxu0 %v2608
        %2736 = vmatpush1.msra.mxu0 %v2607
        %2737 = vmatprep.subr.mxu0 %v2610
        %2738 = vmatpush1.msra.mxu0 %v2609
        %2739 = vmatprep.subr.mxu0 %v2612
        %2740 = vmatpush1.msra.mxu0 %v2611
        %2741 = vmatprep.subr.mxu0 %v2614
        %2742 = vmatpush1.msra.mxu0 %v2613
        %2743 = vmatprep.subr.mxu0 %v2616
        %2744 = vmatpush1.msra.mxu0 %v2615
        %2745 = vmatprep.subr.mxu0 %v2618
        %2746 = vmatpush1.msra.mxu0 %v2617
        %2747 = vmatprep.subr.mxu0 %v2620
        %2748 = vmatpush1.msra.mxu0 %v2619
        %2749 = vmatprep.subr.mxu0 %v2622
        %2750 = vmatpush1.msra.mxu0 %v2621
        %2751 = vmatprep.subr.mxu0 %v2624
        %2752 = vmatpush1.msra.mxu0 %v2623
        %2753 = vmatprep.subr.mxu0 %v2626
        %2754 = vmatpush1.msra.mxu0 %v2625
        %2755 = vmatprep.subr.mxu0 %v2628
        %2756 = vmatpush1.msra.mxu0 %v2627
        %2757 = vmatprep.subr.mxu0 %v2630
        %2758 = vmatpush1.msra.mxu0 %v2629
        %2759 = vmatprep.subr.mxu0 %v2632
        %2760 = vmatpush1.msra.mxu0 %v2631
        %2761 = vmatprep.subr.mxu0 %v2634
        %2762 = vmatpush1.msra.mxu0 %v2633
        %2763 = vmatprep.subr.mxu0 %v2636
        %2764 = vmatpush1.msra.mxu0 %v2635
        %2765 = vmatprep.subr.mxu0 %v2638
        %2766 = vmatpush1.msra.mxu0 %v2637
        %2767 = vmatprep.subr.mxu0 %v2640
        %2768 = vmatpush1.msra.mxu0 %v2639
        %2769 = vmatprep.subr.mxu0 %v2642
        %2770 = vmatpush1.msra.mxu0 %v2641
        %2771 = vmatprep.subr.mxu0 %v2644
        %2772 = vmatpush1.msra.mxu0 %v2643
        %2773 = vmatprep.subr.mxu0 %v2646
        %2774 = vmatpush1.msra.mxu0 %v2645
        %2775 = vmatprep.subr.mxu0 %v2648
        %2776 = vmatpush1.msra.mxu0 %v2647
        %2777 = vmatprep.subr.mxu0 %v2650
        %2778 = vmatpush1.msra.mxu0 %v2649
        %2779 = vmatprep.subr.mxu0 %v2652
        %2780 = vmatpush1.msra.mxu0 %v2651
        %2781 = vmatprep.subr.mxu0 %v2654
        %2782 = vmatpush1.msra.mxu0 %v2653
        %2783 = vmatprep.subr.mxu0 %v2656
        %2784 = vmatpush1.msra.mxu0 %v2655
        %2785 = vmatprep.subr.mxu0 %v2658
        %2786 = vmatpush1.msra.mxu0 %v2657
        %2787 = vmatprep.subr.mxu0 %v2660
        %2788 = vmatpush1.msra.mxu0 %v2659
        %2789 = vmatprep.mubr.f32.mxu0 %v2275
        %2790 = vmatmul.mubr.f32.gmra.mrb[0].mxu0 %v2274
        %v2791 = vpop.f32.mrb[0].mxu0
        %v2792 = vadd.f32 0.0, %v2791
        %v2793 = vpop.f32.mrb[0].mxu0
        %v2794 = vadd.f32 0.0, %v2793
        %2795 = vmatprep.mubr.f32.mxu0 %v2279
        %2796 = vmatmul.mubr.f32.gmra.mrb[0].mxu0 %v2278
        %v2797 = vpop.f32.mrb[0].mxu0
        %v2798 = vadd.f32 0.0, %v2797
        %v2799 = vpop.f32.mrb[0].mxu0
        %v2800 = vadd.f32 0.0, %v2799
        %2801 = vmatprep.mubr.f32.mxu0 %v2283
        %2802 = vmatmul.mubr.f32.gmra.mrb[0].mxu0 %v2282
        %v2803 = vpop.f32.mrb[0].mxu0
        %v2804 = vadd.f32 0.0, %v2803
        %v2805 = vpop.f32.mrb[0].mxu0
        %v2806 = vadd.f32 0.0, %v2805
        %2807 = vmatprep.mubr.f32.mxu0 %v2287
        %2808 = vmatmul.mubr.f32.gmra.mrb[0].mxu0 %v2286
        %v2809 = vpop.f32.mrb[0].mxu0
        %v2810 = vadd.f32 0.0, %v2809
        %v2811 = vpop.f32.mrb[0].mxu0
        %v2812 = vadd.f32 0.0, %v2811
        %2813 = vdwg.mxu0
        %2814 = vmatprep.subr.mxu0 %v2662
        %2815 = vmatpush1.msra.mxu0 %v2661
        %2816 = vmatprep.subr.mxu0 %v2664
        %2817 = vmatpush1.msra.mxu0 %v2663
        %2818 = vmatprep.subr.mxu0 %v2666
        %2819 = vmatpush1.msra.mxu0 %v2665
        %2820 = vmatprep.subr.mxu0 %v2668
        %2821 = vmatpush1.msra.mxu0 %v2667
        %2822 = vmatprep.subr.mxu0 %v2670
        %2823 = vmatpush1.msra.mxu0 %v2669
        %2824 = vmatprep.subr.mxu0 %v2672
        %2825 = vmatpush1.msra.mxu0 %v2671
        %2826 = vmatprep.subr.mxu0 %v2674
        %2827 = vmatpush1.msra.mxu0 %v2673
        %2828 = vmatprep.subr.mxu0 %v2676
        %2829 = vmatpush1.msra.mxu0 %v2675
        %2830 = vmatprep.subr.mxu0 %v2678
        %2831 = vmatpush1.msra.mxu0 %v2677
        %2832 = vmatprep.subr.mxu0 %v2680
        %2833 = vmatpush1.msra.mxu0 %v2679
        %2834 = vmatprep.subr.mxu0 %v2682
        %2835 = vmatpush1.msra.mxu0 %v2681
        %2836 = vmatprep.subr.mxu0 %v2684
        %2837 = vmatpush1.msra.mxu0 %v2683
        %2838 = vmatprep.subr.mxu0 %v2686
        %2839 = vmatpush1.msra.mxu0 %v2685
        %2840 = vmatprep.subr.mxu0 %v2688
        %2841 = vmatpush1.msra.mxu0 %v2687
        %2842 = vmatprep.subr.mxu0 %v2690
        %2843 = vmatpush1.msra.mxu0 %v2689
        %2844 = vmatprep.subr.mxu0 %v2692
        %2845 = vmatpush1.msra.mxu0 %v2691
        %2846 = vmatprep.subr.mxu0 %v2694
        %2847 = vmatpush1.msra.mxu0 %v2693
        %2848 = vmatprep.subr.mxu0 %v2696
        %2849 = vmatpush1.msra.mxu0 %v2695
        %2850 = vmatprep.subr.mxu0 %v2698
        %2851 = vmatpush1.msra.mxu0 %v2697
        %2852 = vmatprep.subr.mxu0 %v2700
        %2853 = vmatpush1.msra.mxu0 %v2699
        %2854 = vmatprep.subr.mxu0 %v2702
        %2855 = vmatpush1.msra.mxu0 %v2701
        %2856 = vmatprep.subr.mxu0 %v2704
        %2857 = vmatpush1.msra.mxu0 %v2703
        %2858 = vmatprep.subr.mxu0 %v2706
        %2859 = vmatpush1.msra.mxu0 %v2705
        %2860 = vmatprep.subr.mxu0 %v2708
        %2861 = vmatpush1.msra.mxu0 %v2707
        %2862 = vmatprep.subr.mxu0 %v2710
        %2863 = vmatpush1.msra.mxu0 %v2709
        %2864 = vmatprep.subr.mxu0 %v2712
        %2865 = vmatpush1.msra.mxu0 %v2711
        %2866 = vmatprep.subr.mxu0 %v2714
        %2867 = vmatpush1.msra.mxu0 %v2713
        %2868 = vmatprep.subr.mxu0 %v2716
        %2869 = vmatpush1.msra.mxu0 %v2715
        %2870 = vmatprep.subr.mxu0 %v2718
        %2871 = vmatpush1.msra.mxu0 %v2717
        %2872 = vmatprep.subr.mxu0 %v2720
        %2873 = vmatpush1.msra.mxu0 %v2719
        %2874 = vmatprep.subr.mxu0 %v2722
        %2875 = vmatpush1.msra.mxu0 %v2721
        %2876 = vmatprep.subr.mxu0 %v2724
        %2877 = vmatpush1.msra.mxu0 %v2723
        %2878 = vmatprep.mubr.f32.mxu0 %v2277
        %2879 = vmatmul.mubr.f32.gmra.mrb[0].mxu0 %v2276
        %v2880 = vpop.f32.mrb[0].mxu0
        %v2881 = vadd.f32 %v2792, %v2880
        %v2882 = vpop.f32.mrb[0].mxu0
        %v2883 = vadd.f32 %v2794, %v2882
        %2884 = vmatprep.mubr.f32.mxu0 %v2281
        %2885 = vmatmul.mubr.f32.gmra.mrb[0].mxu0 %v2280
        %v2886 = vpop.f32.mrb[0].mxu0
        %v2887 = vadd.f32 %v2798, %v2886
        %v2888 = vpop.f32.mrb[0].mxu0
        %v2889 = vadd.f32 %v2800, %v2888
        %2890 = vmatprep.mubr.f32.mxu0 %v2285
        %2891 = vmatmul.mubr.f32.gmra.mrb[0].mxu0 %v2284
        %v2892 = vpop.f32.mrb[0].mxu0
        %v2893 = vadd.f32 %v2804, %v2892
        %v2894 = vpop.f32.mrb[0].mxu0
        %v2895 = vadd.f32 %v2806, %v2894
        %2896 = vmatprep.mubr.f32.mxu0 %v2289
        %2897 = vmatmul.mubr.f32.gmra.mrb[0].mxu0 %v2288
        %v2898 = vpop.f32.mrb[0].mxu0
        %v2899 = vadd.f32 %v2810, %v2898
        %v2900 = vpop.f32.mrb[0].mxu0
        %v2901 = vadd.f32 %v2812, %v2900
        %2902 = vdwg.mxu0
        %v2903 = vmax.f32 %v2574, %v2881
        %v2904 = vmax.f32 %v2576, %v2883
        %v2905 = vmax.f32 %v2580, %v2887
        %v2906 = vmax.f32 %v2582, %v2889
        %v2907 = vmax.f32 %v2586, %v2893
        %v2908 = vmax.f32 %v2588, %v2895
        %v2909 = vmax.f32 %v2592, %v2899
        %v2910 = vmax.f32 %v2594, %v2901
        %v2911 = vld [vmem:[#allocation10] sm:$0xff]
        %v2912 = vld [vmem:[#allocation10 + $0x8] sm:$0xff]
        %v2914 = vsel %vm1378, %v2911, 0
        %v2917 = vsel %vm1378, %v2912, 0
        %2919 = vmatprep.subr.mxu0 %v2904
        %2920 = vmatpush1.msra.mxu0 %v2903
        %2921 = vmatprep.subr.mxu0 %v2906
        %2922 = vmatpush1.msra.mxu0 %v2905
        %2923 = vmatprep.subr.mxu0 %v2908
        %2924 = vmatpush1.msra.mxu0 %v2907
        %2925 = vmatprep.subr.mxu0 %v2910
        %2926 = vmatpush1.msra.mxu0 %v2909
        %2927 = vmatprep.subr.mxu0 0.0
        %2928 = vmatpush1.msra.mxu0 0.0
        %2929 = vmatprep.subr.mxu0 0.0
        %2930 = vmatpush1.msra.mxu0 0.0
        %2931 = vmatprep.subr.mxu0 0.0
        %2932 = vmatpush1.msra.mxu0 0.0
        %2933 = vmatprep.subr.mxu0 0.0
        %2934 = vmatpush1.msra.mxu0 0.0
        %2935 = vmatprep.subr.mxu0 0.0
        %2936 = vmatpush1.msra.mxu0 0.0
        %2937 = vmatprep.subr.mxu0 0.0
        %2938 = vmatpush1.msra.mxu0 0.0
        %2939 = vmatprep.subr.mxu0 0.0
        %2940 = vmatpush1.msra.mxu0 0.0
        %2941 = vmatprep.subr.mxu0 0.0
        %2942 = vmatpush1.msra.mxu0 0.0
        %2943 = vmatprep.subr.mxu0 0.0
        %2944 = vmatpush1.msra.mxu0 0.0
        %2945 = vmatprep.subr.mxu0 0.0
        %2946 = vmatpush1.msra.mxu0 0.0
        %2947 = vmatprep.subr.mxu0 0.0
        %2948 = vmatpush1.msra.mxu0 0.0
        %2949 = vmatprep.subr.mxu0 0.0
        %2950 = vmatpush1.msra.mxu0 0.0
        %2951 = vmatprep.subr.mxu0 0.0
        %2952 = vmatpush1.msra.mxu0 0.0
        %2953 = vmatprep.subr.mxu0 0.0
        %2954 = vmatpush1.msra.mxu0 0.0
        %2955 = vmatprep.subr.mxu0 0.0
        %2956 = vmatpush1.msra.mxu0 0.0
        %2957 = vmatprep.subr.mxu0 0.0
        %2958 = vmatpush1.msra.mxu0 0.0
        %2959 = vmatprep.subr.mxu0 0.0
        %2960 = vmatpush1.msra.mxu0 0.0
        %2961 = vmatprep.subr.mxu0 0.0
        %2962 = vmatpush1.msra.mxu0 0.0
        %2963 = vmatprep.subr.mxu0 0.0
        %2964 = vmatpush1.msra.mxu0 0.0
        %2965 = vmatprep.subr.mxu0 0.0
        %2966 = vmatpush1.msra.mxu0 0.0
        %2967 = vmatprep.subr.mxu0 0.0
        %2968 = vmatpush1.msra.mxu0 0.0
        %2969 = vmatprep.subr.mxu0 0.0
        %2970 = vmatpush1.msra.mxu0 0.0
        %2971 = vmatprep.subr.mxu0 0.0
        %2972 = vmatpush1.msra.mxu0 0.0
        %2973 = vmatprep.subr.mxu0 0.0
        %2974 = vmatpush1.msra.mxu0 0.0
        %2975 = vmatprep.subr.mxu0 0.0
        %2976 = vmatpush1.msra.mxu0 0.0
        %2977 = vmatprep.subr.mxu0 0.0
        %2978 = vmatpush1.msra.mxu0 0.0
        %2979 = vmatprep.subr.mxu0 0.0
        %2980 = vmatpush1.msra.mxu0 0.0
        %2981 = vmatprep.subr.mxu0 0.0
        %2982 = vmatpush1.msra.mxu0 0.0
        %2983 = vmatprep.mubr.f32.mxu0 0.0
        %2984 = vmatmul.mubr.f32.gmra.mrb[0].mxu0 %v2914
        %v2985 = vpop.f32.mrb[0].mxu0
        %v2986 = vadd.f32 0.0, %v2985
        %v2987 = vpop.f32.mrb[0].mxu0
        %v2988 = vadd.f32 0.0, %v2987
        %2989 = vmatprep.mubr.f32.mxu0 0.0
        %2990 = vmatmul.mubr.f32.gmra.mrb[0].mxu0 %v2917
        %v2991 = vpop.f32.mrb[0].mxu0
        %v2992 = vadd.f32 0.0, %v2991
        %v2993 = vpop.f32.mrb[0].mxu0
        %v2994 = vadd.f32 0.0, %v2993
        %2995 = vdwg.mxu0
        %s2996 = scalar_lea.vmem [#allocation10], 16
        %v2997 = vld [vmem:[%s2996] sm:$0xff]
        %v2998 = vld [vmem:[%s2996 + $0x8] sm:$0xff]
        %v3000 = vsel %vm1378, %v2997, 0
        %v3003 = vsel %vm1378, %v2998, 0
        %3005 = vmatprep.subr.mxu0 %v2904
        %3006 = vmatpush1.msra.mxu0 %v2903
        %3007 = vmatprep.subr.mxu0 %v2906
        %3008 = vmatpush1.msra.mxu0 %v2905
        %3009 = vmatprep.subr.mxu0 %v2908
        %3010 = vmatpush1.msra.mxu0 %v2907
        %3011 = vmatprep.subr.mxu0 %v2910
        %3012 = vmatpush1.msra.mxu0 %v2909
        %3013 = vmatprep.subr.mxu0 0.0
        %3014 = vmatpush1.msra.mxu0 0.0
        %3015 = vmatprep.subr.mxu0 0.0
        %3016 = vmatpush1.msra.mxu0 0.0
        %3017 = vmatprep.subr.mxu0 0.0
        %3018 = vmatpush1.msra.mxu0 0.0
        %3019 = vmatprep.subr.mxu0 0.0
        %3020 = vmatpush1.msra.mxu0 0.0
        %3021 = vmatprep.subr.mxu0 0.0
        %3022 = vmatpush1.msra.mxu0 0.0
        %3023 = vmatprep.subr.mxu0 0.0
        %3024 = vmatpush1.msra.mxu0 0.0
        %3025 = vmatprep.subr.mxu0 0.0
        %3026 = vmatpush1.msra.mxu0 0.0
        %3027 = vmatprep.subr.mxu0 0.0
        %3028 = vmatpush1.msra.mxu0 0.0
        %3029 = vmatprep.subr.mxu0 0.0
        %3030 = vmatpush1.msra.mxu0 0.0
        %3031 = vmatprep.subr.mxu0 0.0
        %3032 = vmatpush1.msra.mxu0 0.0
        %3033 = vmatprep.subr.mxu0 0.0
        %3034 = vmatpush1.msra.mxu0 0.0
        %3035 = vmatprep.subr.mxu0 0.0
        %3036 = vmatpush1.msra.mxu0 0.0
        %3037 = vmatprep.subr.mxu0 0.0
        %3038 = vmatpush1.msra.mxu0 0.0
        %3039 = vmatprep.subr.mxu0 0.0
        %3040 = vmatpush1.msra.mxu0 0.0
        %3041 = vmatprep.subr.mxu0 0.0
        %3042 = vmatpush1.msra.mxu0 0.0
        %3043 = vmatprep.subr.mxu0 0.0
        %3044 = vmatpush1.msra.mxu0 0.0
        %3045 = vmatprep.subr.mxu0 0.0
        %3046 = vmatpush1.msra.mxu0 0.0
        %3047 = vmatprep.subr.mxu0 0.0
        %3048 = vmatpush1.msra.mxu0 0.0
        %3049 = vmatprep.subr.mxu0 0.0
        %3050 = vmatpush1.msra.mxu0 0.0
        %3051 = vmatprep.subr.mxu0 0.0
        %3052 = vmatpush1.msra.mxu0 0.0
        %3053 = vmatprep.subr.mxu0 0.0
        %3054 = vmatpush1.msra.mxu0 0.0
        %3055 = vmatprep.subr.mxu0 0.0
        %3056 = vmatpush1.msra.mxu0 0.0
        %3057 = vmatprep.subr.mxu0 0.0
        %3058 = vmatpush1.msra.mxu0 0.0
        %3059 = vmatprep.subr.mxu0 0.0
        %3060 = vmatpush1.msra.mxu0 0.0
        %3061 = vmatprep.subr.mxu0 0.0
        %3062 = vmatpush1.msra.mxu0 0.0
        %3063 = vmatprep.subr.mxu0 0.0
        %3064 = vmatpush1.msra.mxu0 0.0
        %3065 = vmatprep.subr.mxu0 0.0
        %3066 = vmatpush1.msra.mxu0 0.0
        %3067 = vmatprep.subr.mxu0 0.0
        %3068 = vmatpush1.msra.mxu0 0.0
        %3069 = vmatprep.mubr.f32.mxu0 0.0
        %3070 = vmatmul.mubr.f32.gmra.mrb[0].mxu0 %v3000
        %v3071 = vpop.f32.mrb[0].mxu0
        %v3072 = vadd.f32 0.0, %v3071
        %v3073 = vpop.f32.mrb[0].mxu0
        %v3074 = vadd.f32 0.0, %v3073
        %3075 = vmatprep.mubr.f32.mxu0 0.0
        %3076 = vmatmul.mubr.f32.gmra.mrb[0].mxu0 %v3003
        %v3077 = vpop.f32.mrb[0].mxu0
        %v3078 = vadd.f32 0.0, %v3077
        %v3079 = vpop.f32.mrb[0].mxu0
        %v3080 = vadd.f32 0.0, %v3079
        %3081 = vdwg.mxu0
        %v3082 = vmax.f32 %v2986, %v3072
        %v3083 = vmax.f32 %v2988, %v3074
        %v3084 = vmax.f32 %v2992, %v3078
        %v3085 = vmax.f32 %v2994, %v3080
        %v3086 = vld [vmem:[#allocation13] sm:$0xff]
        %v3087 = vld [vmem:[#allocation13 + $0x8] sm:$0xff]
        %v3088 = vld [vmem:[#allocation11] sm:$0xff]
        %v3089 = vld [vmem:[#allocation11 + $0x8] sm:$0xff]
        %v3090 = vld [vmem:[#allocation11 + $0x10] sm:$0xff]
        %v3091 = vld [vmem:[#allocation11 + $0x18] sm:$0xff]
        %v3092 = vld [vmem:[#allocation11 + $0x20] sm:$0xff]
        %v3093 = vld [vmem:[#allocation11 + $0x28] sm:$0xff]
        %v3094 = vld [vmem:[#allocation11 + $0x30] sm:$0xff]
        %v3095 = vld [vmem:[#allocation11 + $0x38] sm:$0xff]
        %v3096 = vld [vmem:[#allocation11 + $0x40] sm:$0xff]
        %v3097 = vld [vmem:[#allocation11 + $0x48] sm:$0xff]
        %v3098 = vld [vmem:[#allocation11 + $0x50] sm:$0xff]
        %v3099 = vld [vmem:[#allocation11 + $0x58] sm:$0xff]
        %v3100 = vld [vmem:[#allocation11 + $0x60] sm:$0xff]
        %v3101 = vld [vmem:[#allocation11 + $0x68] sm:$0xff]
        %v3102 = vld [vmem:[#allocation11 + $0x70] sm:$0xff]
        %v3103 = vld [vmem:[#allocation11 + $0x78] sm:$0xff]
        %v3104 = vld [vmem:[#allocation11 + $0x80] sm:$0xff]
        %v3105 = vld [vmem:[#allocation11 + $0x88] sm:$0xff]
        %v3106 = vld [vmem:[#allocation11 + $0x90] sm:$0xff]
        %v3107 = vld [vmem:[#allocation11 + $0x98] sm:$0xff]
        %v3108 = vld [vmem:[#allocation11 + $0xa0] sm:$0xff]
        %v3109 = vld [vmem:[#allocation11 + $0xa8] sm:$0xff]
        %v3110 = vld [vmem:[#allocation11 + $0xb0] sm:$0xff]
        %v3111 = vld [vmem:[#allocation11 + $0xb8] sm:$0xff]
        %v3112 = vld [vmem:[#allocation11 + $0xc0] sm:$0xff]
        %v3113 = vld [vmem:[#allocation11 + $0xc8] sm:$0xff]
        %v3114 = vld [vmem:[#allocation11 + $0xd0] sm:$0xff]
        %v3115 = vld [vmem:[#allocation11 + $0xd8] sm:$0xff]
        %v3116 = vld [vmem:[#allocation11 + $0xe0] sm:$0xff]
        %v3117 = vld [vmem:[#allocation11 + $0xe8] sm:$0xff]
        %v3118 = vld [vmem:[#allocation11 + $0xf0] sm:$0xff]
        %v3119 = vld [vmem:[#allocation11 + $0xf8] sm:$0xff]
        %v3120 = vld [vmem:[#allocation11 + $0x100] sm:$0xff]
        %v3121 = vld [vmem:[#allocation11 + $0x108] sm:$0xff]
        %v3122 = vld [vmem:[#allocation11 + $0x110] sm:$0xff]
        %v3123 = vld [vmem:[#allocation11 + $0x118] sm:$0xff]
        %v3124 = vld [vmem:[#allocation11 + $0x120] sm:$0xff]
        %v3125 = vld [vmem:[#allocation11 + $0x128] sm:$0xff]
        %v3126 = vld [vmem:[#allocation11 + $0x130] sm:$0xff]
        %v3127 = vld [vmem:[#allocation11 + $0x138] sm:$0xff]
        %v3128 = vld [vmem:[#allocation11 + $0x140] sm:$0xff]
        %v3129 = vld [vmem:[#allocation11 + $0x148] sm:$0xff]
        %v3130 = vld [vmem:[#allocation11 + $0x150] sm:$0xff]
        %v3131 = vld [vmem:[#allocation11 + $0x158] sm:$0xff]
        %v3132 = vld [vmem:[#allocation11 + $0x160] sm:$0xff]
        %v3133 = vld [vmem:[#allocation11 + $0x168] sm:$0xff]
        %v3134 = vld [vmem:[#allocation11 + $0x170] sm:$0xff]
        %v3135 = vld [vmem:[#allocation11 + $0x178] sm:$0xff]
        %v3136 = vld [vmem:[#allocation11 + $0x180] sm:$0xff]
        %v3137 = vld [vmem:[#allocation11 + $0x188] sm:$0xff]
        %v3138 = vld [vmem:[#allocation11 + $0x190] sm:$0xff]
        %v3139 = vld [vmem:[#allocation11 + $0x198] sm:$0xff]
        %v3140 = vld [vmem:[#allocation11 + $0x1a0] sm:$0xff]
        %v3141 = vld [vmem:[#allocation11 + $0x1a8] sm:$0xff]
        %v3142 = vld [vmem:[#allocation11 + $0x1b0] sm:$0xff]
        %v3143 = vld [vmem:[#allocation11 + $0x1b8] sm:$0xff]
        %v3144 = vld [vmem:[#allocation11 + $0x1c0] sm:$0xff]
        %v3145 = vld [vmem:[#allocation11 + $0x1c8] sm:$0xff]
        %v3146 = vld [vmem:[#allocation11 + $0x1d0] sm:$0xff]
        %v3147 = vld [vmem:[#allocation11 + $0x1d8] sm:$0xff]
        %v3148 = vld [vmem:[#allocation11 + $0x1e0] sm:$0xff]
        %v3149 = vld [vmem:[#allocation11 + $0x1e8] sm:$0xff]
        %v3150 = vld [vmem:[#allocation11 + $0x1f0] sm:$0xff]
        %v3151 = vld [vmem:[#allocation11 + $0x1f8] sm:$0xff]
        %v3152 = vld [vmem:[#allocation11 + $0x200] sm:$0xff]
        %v3153 = vld [vmem:[#allocation11 + $0x208] sm:$0xff]
        %v3154 = vld [vmem:[#allocation11 + $0x210] sm:$0xff]
        %v3155 = vld [vmem:[#allocation11 + $0x218] sm:$0xff]
        %v3156 = vld [vmem:[#allocation11 + $0x220] sm:$0xff]
        %v3157 = vld [vmem:[#allocation11 + $0x228] sm:$0xff]
        %v3158 = vld [vmem:[#allocation11 + $0x230] sm:$0xff]
        %v3159 = vld [vmem:[#allocation11 + $0x238] sm:$0xff]
        %v3160 = vld [vmem:[#allocation11 + $0x240] sm:$0xff]
        %v3161 = vld [vmem:[#allocation11 + $0x248] sm:$0xff]
        %v3162 = vld [vmem:[#allocation11 + $0x250] sm:$0xff]
        %v3163 = vld [vmem:[#allocation11 + $0x258] sm:$0xff]
        %v3164 = vld [vmem:[#allocation11 + $0x260] sm:$0xff]
        %v3165 = vld [vmem:[#allocation11 + $0x268] sm:$0xff]
        %v3166 = vld [vmem:[#allocation11 + $0x270] sm:$0xff]
        %v3167 = vld [vmem:[#allocation11 + $0x278] sm:$0xff]
        %v3168 = vld [vmem:[#allocation11 + $0x280] sm:$0xff]
        %v3169 = vld [vmem:[#allocation11 + $0x288] sm:$0xff]
        %v3170 = vld [vmem:[#allocation11 + $0x290] sm:$0xff]
        %v3171 = vld [vmem:[#allocation11 + $0x298] sm:$0xff]
        %v3172 = vld [vmem:[#allocation11 + $0x2a0] sm:$0xff]
        %v3173 = vld [vmem:[#allocation11 + $0x2a8] sm:$0xff]
        %v3174 = vld [vmem:[#allocation11 + $0x2b0] sm:$0xff]
        %v3175 = vld [vmem:[#allocation11 + $0x2b8] sm:$0xff]
        %v3176 = vld [vmem:[#allocation11 + $0x2c0] sm:$0xff]
        %v3177 = vld [vmem:[#allocation11 + $0x2c8] sm:$0xff]
        %v3178 = vld [vmem:[#allocation11 + $0x2d0] sm:$0xff]
        %v3179 = vld [vmem:[#allocation11 + $0x2d8] sm:$0xff]
        %v3180 = vld [vmem:[#allocation11 + $0x2e0] sm:$0xff]
        %v3181 = vld [vmem:[#allocation11 + $0x2e8] sm:$0xff]
        %v3182 = vld [vmem:[#allocation11 + $0x2f0] sm:$0xff]
        %v3183 = vld [vmem:[#allocation11 + $0x2f8] sm:$0xff]
        %v3184 = vld [vmem:[#allocation11 + $0x300] sm:$0xff]
        %v3185 = vld [vmem:[#allocation11 + $0x308] sm:$0xff]
        %v3186 = vld [vmem:[#allocation11 + $0x310] sm:$0xff]
        %v3187 = vld [vmem:[#allocation11 + $0x318] sm:$0xff]
        %v3188 = vld [vmem:[#allocation11 + $0x320] sm:$0xff]
        %v3189 = vld [vmem:[#allocation11 + $0x328] sm:$0xff]
        %v3190 = vld [vmem:[#allocation11 + $0x330] sm:$0xff]
        %v3191 = vld [vmem:[#allocation11 + $0x338] sm:$0xff]
        %v3192 = vld [vmem:[#allocation11 + $0x340] sm:$0xff]
        %v3193 = vld [vmem:[#allocation11 + $0x348] sm:$0xff]
        %v3194 = vld [vmem:[#allocation11 + $0x350] sm:$0xff]
        %v3195 = vld [vmem:[#allocation11 + $0x358] sm:$0xff]
        %v3196 = vld [vmem:[#allocation11 + $0x360] sm:$0xff]
        %v3197 = vld [vmem:[#allocation11 + $0x368] sm:$0xff]
        %v3198 = vld [vmem:[#allocation11 + $0x370] sm:$0xff]
        %v3199 = vld [vmem:[#allocation11 + $0x378] sm:$0xff]
        %v3200 = vld [vmem:[#allocation11 + $0x380] sm:$0xff]
        %v3201 = vld [vmem:[#allocation11 + $0x388] sm:$0xff]
        %v3202 = vld [vmem:[#allocation11 + $0x390] sm:$0xff]
        %v3203 = vld [vmem:[#allocation11 + $0x398] sm:$0xff]
        %v3204 = vld [vmem:[#allocation11 + $0x3a0] sm:$0xff]
        %v3205 = vld [vmem:[#allocation11 + $0x3a8] sm:$0xff]
        %v3206 = vld [vmem:[#allocation11 + $0x3b0] sm:$0xff]
        %v3207 = vld [vmem:[#allocation11 + $0x3b8] sm:$0xff]
        %v3208 = vld [vmem:[#allocation11 + $0x3c0] sm:$0xff]
        %v3209 = vld [vmem:[#allocation11 + $0x3c8] sm:$0xff]
        %v3210 = vld [vmem:[#allocation11 + $0x3d0] sm:$0xff]
        %v3211 = vld [vmem:[#allocation11 + $0x3d8] sm:$0xff]
        %v3212 = vld [vmem:[#allocation11 + $0x3e0] sm:$0xff]
        %v3213 = vld [vmem:[#allocation11 + $0x3e8] sm:$0xff]
        %v3214 = vld [vmem:[#allocation11 + $0x3f0] sm:$0xff]
        %v3215 = vld [vmem:[#allocation11 + $0x3f8] sm:$0xff]
        %3216 = vmatprep.subr.mxu0 %v3089
        %3217 = vmatpush1.msra.mxu0 %v3088
        %3218 = vmatprep.subr.mxu0 %v3093
        %3219 = vmatpush1.msra.mxu0 %v3092
        %3220 = vmatprep.subr.mxu0 %v3097
        %3221 = vmatpush1.msra.mxu0 %v3096
        %3222 = vmatprep.subr.mxu0 %v3101
        %3223 = vmatpush1.msra.mxu0 %v3100
        %3224 = vmatprep.subr.mxu0 %v3105
        %3225 = vmatpush1.msra.mxu0 %v3104
        %3226 = vmatprep.subr.mxu0 %v3109
        %3227 = vmatpush1.msra.mxu0 %v3108
        %3228 = vmatprep.subr.mxu0 %v3113
        %3229 = vmatpush1.msra.mxu0 %v3112
        %3230 = vmatprep.subr.mxu0 %v3117
        %3231 = vmatpush1.msra.mxu0 %v3116
        %3232 = vmatprep.subr.mxu0 %v3121
        %3233 = vmatpush1.msra.mxu0 %v3120
        %3234 = vmatprep.subr.mxu0 %v3125
        %3235 = vmatpush1.msra.mxu0 %v3124
        %3236 = vmatprep.subr.mxu0 %v3129
        %3237 = vmatpush1.msra.mxu0 %v3128
        %3238 = vmatprep.subr.mxu0 %v3133
        %3239 = vmatpush1.msra.mxu0 %v3132
        %3240 = vmatprep.subr.mxu0 %v3137
        %3241 = vmatpush1.msra.mxu0 %v3136
        %3242 = vmatprep.subr.mxu0 %v3141
        %3243 = vmatpush1.msra.mxu0 %v3140
        %3244 = vmatprep.subr.mxu0 %v3145
        %3245 = vmatpush1.msra.mxu0 %v3144
        %3246 = vmatprep.subr.mxu0 %v3149
        %3247 = vmatpush1.msra.mxu0 %v3148
        %3248 = vmatprep.subr.mxu0 %v3153
        %3249 = vmatpush1.msra.mxu0 %v3152
        %3250 = vmatprep.subr.mxu0 %v3157
        %3251 = vmatpush1.msra.mxu0 %v3156
        %3252 = vmatprep.subr.mxu0 %v3161
        %3253 = vmatpush1.msra.mxu0 %v3160
        %3254 = vmatprep.subr.mxu0 %v3165
        %3255 = vmatpush1.msra.mxu0 %v3164
        %3256 = vmatprep.subr.mxu0 %v3169
        %3257 = vmatpush1.msra.mxu0 %v3168
        %3258 = vmatprep.subr.mxu0 %v3173
        %3259 = vmatpush1.msra.mxu0 %v3172
        %3260 = vmatprep.subr.mxu0 %v3177
        %3261 = vmatpush1.msra.mxu0 %v3176
        %3262 = vmatprep.subr.mxu0 %v3181
        %3263 = vmatpush1.msra.mxu0 %v3180
        %3264 = vmatprep.subr.mxu0 %v3185
        %3265 = vmatpush1.msra.mxu0 %v3184
        %3266 = vmatprep.subr.mxu0 %v3189
        %3267 = vmatpush1.msra.mxu0 %v3188
        %3268 = vmatprep.subr.mxu0 %v3193
        %3269 = vmatpush1.msra.mxu0 %v3192
        %3270 = vmatprep.subr.mxu0 %v3197
        %3271 = vmatpush1.msra.mxu0 %v3196
        %3272 = vmatprep.subr.mxu0 %v3201
        %3273 = vmatpush1.msra.mxu0 %v3200
        %3274 = vmatprep.subr.mxu0 %v3205
        %3275 = vmatpush1.msra.mxu0 %v3204
        %3276 = vmatprep.subr.mxu0 %v3209
        %3277 = vmatpush1.msra.mxu0 %v3208
        %3278 = vmatprep.subr.mxu0 %v3213
        %3279 = vmatpush1.msra.mxu0 %v3212
        %3280 = vmatprep.mubr.f32.mxu0 %v3083
        %3281 = vmatmul.mubr.f32.gmra.mrb[0].mxu0 %v3082
        %v3282 = vpop.f32.mrb[0].mxu0
        %v3283 = vadd.f32 0.0, %v3282
        %v3284 = vpop.f32.mrb[0].mxu0
        %v3285 = vadd.f32 0.0, %v3284
        %3286 = vmatprep.mubr.f32.mxu0 %v3085
        %3287 = vmatmul.mubr.f32.gmra.mrb[0].mxu0 %v3084
        %v3288 = vpop.f32.mrb[0].mxu0
        %v3289 = vadd.f32 0.0, %v3288
        %v3290 = vpop.f32.mrb[0].mxu0
        %v3291 = vadd.f32 0.0, %v3290
        %3292 = vdwg.mxu0
        %3293 = vmatprep.subr.mxu0 %v3091
        %3294 = vmatpush1.msra.mxu0 %v3090
        %3295 = vmatprep.subr.mxu0 %v3095
        %3296 = vmatpush1.msra.mxu0 %v3094
        %3297 = vmatprep.subr.mxu0 %v3099
        %3298 = vmatpush1.msra.mxu0 %v3098
        %3299 = vmatprep.subr.mxu0 %v3103
        %3300 = vmatpush1.msra.mxu0 %v3102
        %3301 = vmatprep.subr.mxu0 %v3107
        %3302 = vmatpush1.msra.mxu0 %v3106
        %3303 = vmatprep.subr.mxu0 %v3111
        %3304 = vmatpush1.msra.mxu0 %v3110
        %3305 = vmatprep.subr.mxu0 %v3115
        %3306 = vmatpush1.msra.mxu0 %v3114
        %3307 = vmatprep.subr.mxu0 %v3119
        %3308 = vmatpush1.msra.mxu0 %v3118
        %3309 = vmatprep.subr.mxu0 %v3123
        %3310 = vmatpush1.msra.mxu0 %v3122
        %3311 = vmatprep.subr.mxu0 %v3127
        %3312 = vmatpush1.msra.mxu0 %v3126
        %3313 = vmatprep.subr.mxu0 %v3131
        %3314 = vmatpush1.msra.mxu0 %v3130
        %3315 = vmatprep.subr.mxu0 %v3135
        %3316 = vmatpush1.msra.mxu0 %v3134
        %3317 = vmatprep.subr.mxu0 %v3139
        %3318 = vmatpush1.msra.mxu0 %v3138
        %3319 = vmatprep.subr.mxu0 %v3143
        %3320 = vmatpush1.msra.mxu0 %v3142
        %3321 = vmatprep.subr.mxu0 %v3147
        %3322 = vmatpush1.msra.mxu0 %v3146
        %3323 = vmatprep.subr.mxu0 %v3151
        %3324 = vmatpush1.msra.mxu0 %v3150
        %3325 = vmatprep.subr.mxu0 %v3155
        %3326 = vmatpush1.msra.mxu0 %v3154
        %3327 = vmatprep.subr.mxu0 %v3159
        %3328 = vmatpush1.msra.mxu0 %v3158
        %3329 = vmatprep.subr.mxu0 %v3163
        %3330 = vmatpush1.msra.mxu0 %v3162
        %3331 = vmatprep.subr.mxu0 %v3167
        %3332 = vmatpush1.msra.mxu0 %v3166
        %3333 = vmatprep.subr.mxu0 %v3171
        %3334 = vmatpush1.msra.mxu0 %v3170
        %3335 = vmatprep.subr.mxu0 %v3175
        %3336 = vmatpush1.msra.mxu0 %v3174
        %3337 = vmatprep.subr.mxu0 %v3179
        %3338 = vmatpush1.msra.mxu0 %v3178
        %3339 = vmatprep.subr.mxu0 %v3183
        %3340 = vmatpush1.msra.mxu0 %v3182
        %3341 = vmatprep.subr.mxu0 %v3187
        %3342 = vmatpush1.msra.mxu0 %v3186
        %3343 = vmatprep.subr.mxu0 %v3191
        %3344 = vmatpush1.msra.mxu0 %v3190
        %3345 = vmatprep.subr.mxu0 %v3195
        %3346 = vmatpush1.msra.mxu0 %v3194
        %3347 = vmatprep.subr.mxu0 %v3199
        %3348 = vmatpush1.msra.mxu0 %v3198
        %3349 = vmatprep.subr.mxu0 %v3203
        %3350 = vmatpush1.msra.mxu0 %v3202
        %3351 = vmatprep.subr.mxu0 %v3207
        %3352 = vmatpush1.msra.mxu0 %v3206
        %3353 = vmatprep.subr.mxu0 %v3211
        %3354 = vmatpush1.msra.mxu0 %v3210
        %3355 = vmatprep.subr.mxu0 %v3215
        %3356 = vmatpush1.msra.mxu0 %v3214
        %3357 = vmatprep.mubr.f32.mxu0 %v3083
        %3358 = vmatmul.mubr.f32.gmra.mrb[0].mxu0 %v3082
        %v3359 = vpop.f32.mrb[0].mxu0
        %v3360 = vadd.f32 0.0, %v3359
        %v3361 = vpop.f32.mrb[0].mxu0
        %v3362 = vadd.f32 0.0, %v3361
        %3363 = vmatprep.mubr.f32.mxu0 %v3085
        %3364 = vmatmul.mubr.f32.gmra.mrb[0].mxu0 %v3084
        %v3365 = vpop.f32.mrb[0].mxu0
        %v3366 = vadd.f32 0.0, %v3365
        %v3367 = vpop.f32.mrb[0].mxu0
        %v3368 = vadd.f32 0.0, %v3367
        %3369 = vdwg.mxu0
        %s3370 = scalar_lea.vmem [#allocation13], 16
        %v3371 = vld [vmem:[%s3370] sm:$0xff]
        %v3372 = vld [vmem:[%s3370 + $0x8] sm:$0xff]
        %s3373 = scalar_lea.vmem [#allocation11], 1024
        %v3374 = vld [vmem:[%s3373] sm:$0xff]
        %v3375 = vld [vmem:[%s3373 + $0x8] sm:$0xff]
        %v3376 = vld [vmem:[%s3373 + $0x10] sm:$0xff]
        %v3377 = vld [vmem:[%s3373 + $0x18] sm:$0xff]
        %v3378 = vld [vmem:[%s3373 + $0x20] sm:$0xff]
        %v3379 = vld [vmem:[%s3373 + $0x28] sm:$0xff]
        %v3380 = vld [vmem:[%s3373 + $0x30] sm:$0xff]
        %v3381 = vld [vmem:[%s3373 + $0x38] sm:$0xff]
        %v3382 = vld [vmem:[%s3373 + $0x40] sm:$0xff]
        %v3383 = vld [vmem:[%s3373 + $0x48] sm:$0xff]
        %v3384 = vld [vmem:[%s3373 + $0x50] sm:$0xff]
        %v3385 = vld [vmem:[%s3373 + $0x58] sm:$0xff]
        %v3386 = vld [vmem:[%s3373 + $0x60] sm:$0xff]
        %v3387 = vld [vmem:[%s3373 + $0x68] sm:$0xff]
        %v3388 = vld [vmem:[%s3373 + $0x70] sm:$0xff]
        %v3389 = vld [vmem:[%s3373 + $0x78] sm:$0xff]
        %v3390 = vld [vmem:[%s3373 + $0x80] sm:$0xff]
        %v3391 = vld [vmem:[%s3373 + $0x88] sm:$0xff]
        %v3392 = vld [vmem:[%s3373 + $0x90] sm:$0xff]
        %v3393 = vld [vmem:[%s3373 + $0x98] sm:$0xff]
        %v3394 = vld [vmem:[%s3373 + $0xa0] sm:$0xff]
        %v3395 = vld [vmem:[%s3373 + $0xa8] sm:$0xff]
        %v3396 = vld [vmem:[%s3373 + $0xb0] sm:$0xff]
        %v3397 = vld [vmem:[%s3373 + $0xb8] sm:$0xff]
        %v3398 = vld [vmem:[%s3373 + $0xc0] sm:$0xff]
        %v3399 = vld [vmem:[%s3373 + $0xc8] sm:$0xff]
        %v3400 = vld [vmem:[%s3373 + $0xd0] sm:$0xff]
        %v3401 = vld [vmem:[%s3373 + $0xd8] sm:$0xff]
        %v3402 = vld [vmem:[%s3373 + $0xe0] sm:$0xff]
        %v3403 = vld [vmem:[%s3373 + $0xe8] sm:$0xff]
        %v3404 = vld [vmem:[%s3373 + $0xf0] sm:$0xff]
        %v3405 = vld [vmem:[%s3373 + $0xf8] sm:$0xff]
        %v3406 = vld [vmem:[%s3373 + $0x100] sm:$0xff]
        %v3407 = vld [vmem:[%s3373 + $0x108] sm:$0xff]
        %v3408 = vld [vmem:[%s3373 + $0x110] sm:$0xff]
        %v3409 = vld [vmem:[%s3373 + $0x118] sm:$0xff]
        %v3410 = vld [vmem:[%s3373 + $0x120] sm:$0xff]
        %v3411 = vld [vmem:[%s3373 + $0x128] sm:$0xff]
        %v3412 = vld [vmem:[%s3373 + $0x130] sm:$0xff]
        %v3413 = vld [vmem:[%s3373 + $0x138] sm:$0xff]
        %v3414 = vld [vmem:[%s3373 + $0x140] sm:$0xff]
        %v3415 = vld [vmem:[%s3373 + $0x148] sm:$0xff]
        %v3416 = vld [vmem:[%s3373 + $0x150] sm:$0xff]
        %v3417 = vld [vmem:[%s3373 + $0x158] sm:$0xff]
        %v3418 = vld [vmem:[%s3373 + $0x160] sm:$0xff]
        %v3419 = vld [vmem:[%s3373 + $0x168] sm:$0xff]
        %v3420 = vld [vmem:[%s3373 + $0x170] sm:$0xff]
        %v3421 = vld [vmem:[%s3373 + $0x178] sm:$0xff]
        %v3422 = vld [vmem:[%s3373 + $0x180] sm:$0xff]
        %v3423 = vld [vmem:[%s3373 + $0x188] sm:$0xff]
        %v3424 = vld [vmem:[%s3373 + $0x190] sm:$0xff]
        %v3425 = vld [vmem:[%s3373 + $0x198] sm:$0xff]
        %v3426 = vld [vmem:[%s3373 + $0x1a0] sm:$0xff]
        %v3427 = vld [vmem:[%s3373 + $0x1a8] sm:$0xff]
        %v3428 = vld [vmem:[%s3373 + $0x1b0] sm:$0xff]
        %v3429 = vld [vmem:[%s3373 + $0x1b8] sm:$0xff]
        %v3430 = vld [vmem:[%s3373 + $0x1c0] sm:$0xff]
        %v3431 = vld [vmem:[%s3373 + $0x1c8] sm:$0xff]
        %v3432 = vld [vmem:[%s3373 + $0x1d0] sm:$0xff]
        %v3433 = vld [vmem:[%s3373 + $0x1d8] sm:$0xff]
        %v3434 = vld [vmem:[%s3373 + $0x1e0] sm:$0xff]
        %v3435 = vld [vmem:[%s3373 + $0x1e8] sm:$0xff]
        %v3436 = vld [vmem:[%s3373 + $0x1f0] sm:$0xff]
        %v3437 = vld [vmem:[%s3373 + $0x1f8] sm:$0xff]
        %v3438 = vld [vmem:[%s3373 + $0x200] sm:$0xff]
        %v3439 = vld [vmem:[%s3373 + $0x208] sm:$0xff]
        %v3440 = vld [vmem:[%s3373 + $0x210] sm:$0xff]
        %v3441 = vld [vmem:[%s3373 + $0x218] sm:$0xff]
        %v3442 = vld [vmem:[%s3373 + $0x220] sm:$0xff]
        %v3443 = vld [vmem:[%s3373 + $0x228] sm:$0xff]
        %v3444 = vld [vmem:[%s3373 + $0x230] sm:$0xff]
        %v3445 = vld [vmem:[%s3373 + $0x238] sm:$0xff]
        %v3446 = vld [vmem:[%s3373 + $0x240] sm:$0xff]
        %v3447 = vld [vmem:[%s3373 + $0x248] sm:$0xff]
        %v3448 = vld [vmem:[%s3373 + $0x250] sm:$0xff]
        %v3449 = vld [vmem:[%s3373 + $0x258] sm:$0xff]
        %v3450 = vld [vmem:[%s3373 + $0x260] sm:$0xff]
        %v3451 = vld [vmem:[%s3373 + $0x268] sm:$0xff]
        %v3452 = vld [vmem:[%s3373 + $0x270] sm:$0xff]
        %v3453 = vld [vmem:[%s3373 + $0x278] sm:$0xff]
        %v3454 = vld [vmem:[%s3373 + $0x280] sm:$0xff]
        %v3455 = vld [vmem:[%s3373 + $0x288] sm:$0xff]
        %v3456 = vld [vmem:[%s3373 + $0x290] sm:$0xff]
        %v3457 = vld [vmem:[%s3373 + $0x298] sm:$0xff]
        %v3458 = vld [vmem:[%s3373 + $0x2a0] sm:$0xff]
        %v3459 = vld [vmem:[%s3373 + $0x2a8] sm:$0xff]
        %v3460 = vld [vmem:[%s3373 + $0x2b0] sm:$0xff]
        %v3461 = vld [vmem:[%s3373 + $0x2b8] sm:$0xff]
        %v3462 = vld [vmem:[%s3373 + $0x2c0] sm:$0xff]
        %v3463 = vld [vmem:[%s3373 + $0x2c8] sm:$0xff]
        %v3464 = vld [vmem:[%s3373 + $0x2d0] sm:$0xff]
        %v3465 = vld [vmem:[%s3373 + $0x2d8] sm:$0xff]
        %v3466 = vld [vmem:[%s3373 + $0x2e0] sm:$0xff]
        %v3467 = vld [vmem:[%s3373 + $0x2e8] sm:$0xff]
        %v3468 = vld [vmem:[%s3373 + $0x2f0] sm:$0xff]
        %v3469 = vld [vmem:[%s3373 + $0x2f8] sm:$0xff]
        %v3470 = vld [vmem:[%s3373 + $0x300] sm:$0xff]
        %v3471 = vld [vmem:[%s3373 + $0x308] sm:$0xff]
        %v3472 = vld [vmem:[%s3373 + $0x310] sm:$0xff]
        %v3473 = vld [vmem:[%s3373 + $0x318] sm:$0xff]
        %v3474 = vld [vmem:[%s3373 + $0x320] sm:$0xff]
        %v3475 = vld [vmem:[%s3373 + $0x328] sm:$0xff]
        %v3476 = vld [vmem:[%s3373 + $0x330] sm:$0xff]
        %v3477 = vld [vmem:[%s3373 + $0x338] sm:$0xff]
        %v3478 = vld [vmem:[%s3373 + $0x340] sm:$0xff]
        %v3479 = vld [vmem:[%s3373 + $0x348] sm:$0xff]
        %v3480 = vld [vmem:[%s3373 + $0x350] sm:$0xff]
        %v3481 = vld [vmem:[%s3373 + $0x358] sm:$0xff]
        %v3482 = vld [vmem:[%s3373 + $0x360] sm:$0xff]
        %v3483 = vld [vmem:[%s3373 + $0x368] sm:$0xff]
        %v3484 = vld [vmem:[%s3373 + $0x370] sm:$0xff]
        %v3485 = vld [vmem:[%s3373 + $0x378] sm:$0xff]
        %v3486 = vld [vmem:[%s3373 + $0x380] sm:$0xff]
        %v3487 = vld [vmem:[%s3373 + $0x388] sm:$0xff]
        %v3488 = vld [vmem:[%s3373 + $0x390] sm:$0xff]
        %v3489 = vld [vmem:[%s3373 + $0x398] sm:$0xff]
        %v3490 = vld [vmem:[%s3373 + $0x3a0] sm:$0xff]
        %v3491 = vld [vmem:[%s3373 + $0x3a8] sm:$0xff]
        %v3492 = vld [vmem:[%s3373 + $0x3b0] sm:$0xff]
        %v3493 = vld [vmem:[%s3373 + $0x3b8] sm:$0xff]
        %v3494 = vld [vmem:[%s3373 + $0x3c0] sm:$0xff]
        %v3495 = vld [vmem:[%s3373 + $0x3c8] sm:$0xff]
        %v3496 = vld [vmem:[%s3373 + $0x3d0] sm:$0xff]
        %v3497 = vld [vmem:[%s3373 + $0x3d8] sm:$0xff]
        %v3498 = vld [vmem:[%s3373 + $0x3e0] sm:$0xff]
        %v3499 = vld [vmem:[%s3373 + $0x3e8] sm:$0xff]
        %v3500 = vld [vmem:[%s3373 + $0x3f0] sm:$0xff]
        %v3501 = vld [vmem:[%s3373 + $0x3f8] sm:$0xff]
        %3502 = vmatprep.subr.mxu0 %v3375
        %3503 = vmatpush1.msra.mxu0 %v3374
        %3504 = vmatprep.subr.mxu0 %v3379
        %3505 = vmatpush1.msra.mxu0 %v3378
        %3506 = vmatprep.subr.mxu0 %v3383
        %3507 = vmatpush1.msra.mxu0 %v3382
        %3508 = vmatprep.subr.mxu0 %v3387
        %3509 = vmatpush1.msra.mxu0 %v3386
        %3510 = vmatprep.subr.mxu0 %v3391
        %3511 = vmatpush1.msra.mxu0 %v3390
        %3512 = vmatprep.subr.mxu0 %v3395
        %3513 = vmatpush1.msra.mxu0 %v3394
        %3514 = vmatprep.subr.mxu0 %v3399
        %3515 = vmatpush1.msra.mxu0 %v3398
        %3516 = vmatprep.subr.mxu0 %v3403
        %3517 = vmatpush1.msra.mxu0 %v3402
        %3518 = vmatprep.subr.mxu0 %v3407
        %3519 = vmatpush1.msra.mxu0 %v3406
        %3520 = vmatprep.subr.mxu0 %v3411
        %3521 = vmatpush1.msra.mxu0 %v3410
        %3522 = vmatprep.subr.mxu0 %v3415
        %3523 = vmatpush1.msra.mxu0 %v3414
        %3524 = vmatprep.subr.mxu0 %v3419
        %3525 = vmatpush1.msra.mxu0 %v3418
        %3526 = vmatprep.subr.mxu0 %v3423
        %3527 = vmatpush1.msra.mxu0 %v3422
        %3528 = vmatprep.subr.mxu0 %v3427
        %3529 = vmatpush1.msra.mxu0 %v3426
        %3530 = vmatprep.subr.mxu0 %v3431
        %3531 = vmatpush1.msra.mxu0 %v3430
        %3532 = vmatprep.subr.mxu0 %v3435
        %3533 = vmatpush1.msra.mxu0 %v3434
        %3534 = vmatprep.subr.mxu0 %v3439
        %3535 = vmatpush1.msra.mxu0 %v3438
        %3536 = vmatprep.subr.mxu0 %v3443
        %3537 = vmatpush1.msra.mxu0 %v3442
        %3538 = vmatprep.subr.mxu0 %v3447
        %3539 = vmatpush1.msra.mxu0 %v3446
        %3540 = vmatprep.subr.mxu0 %v3451
        %3541 = vmatpush1.msra.mxu0 %v3450
        %3542 = vmatprep.subr.mxu0 %v3455
        %3543 = vmatpush1.msra.mxu0 %v3454
        %3544 = vmatprep.subr.mxu0 %v3459
        %3545 = vmatpush1.msra.mxu0 %v3458
        %3546 = vmatprep.subr.mxu0 %v3463
        %3547 = vmatpush1.msra.mxu0 %v3462
        %3548 = vmatprep.subr.mxu0 %v3467
        %3549 = vmatpush1.msra.mxu0 %v3466
        %3550 = vmatprep.subr.mxu0 %v3471
        %3551 = vmatpush1.msra.mxu0 %v3470
        %3552 = vmatprep.subr.mxu0 %v3475
        %3553 = vmatpush1.msra.mxu0 %v3474
        %3554 = vmatprep.subr.mxu0 %v3479
        %3555 = vmatpush1.msra.mxu0 %v3478
        %3556 = vmatprep.subr.mxu0 %v3483
        %3557 = vmatpush1.msra.mxu0 %v3482
        %3558 = vmatprep.subr.mxu0 %v3487
        %3559 = vmatpush1.msra.mxu0 %v3486
        %3560 = vmatprep.subr.mxu0 %v3491
        %3561 = vmatpush1.msra.mxu0 %v3490
        %3562 = vmatprep.subr.mxu0 %v3495
        %3563 = vmatpush1.msra.mxu0 %v3494
        %3564 = vmatprep.subr.mxu0 %v3499
        %3565 = vmatpush1.msra.mxu0 %v3498
        %3566 = vmatprep.mubr.f32.mxu0 %v3083
        %3567 = vmatmul.mubr.f32.gmra.mrb[0].mxu0 %v3082
        %v3568 = vpop.f32.mrb[0].mxu0
        %v3569 = vadd.f32 0.0, %v3568
        %v3570 = vpop.f32.mrb[0].mxu0
        %v3571 = vadd.f32 0.0, %v3570
        %3572 = vmatprep.mubr.f32.mxu0 %v3085
        %3573 = vmatmul.mubr.f32.gmra.mrb[0].mxu0 %v3084
        %v3574 = vpop.f32.mrb[0].mxu0
        %v3575 = vadd.f32 0.0, %v3574
        %v3576 = vpop.f32.mrb[0].mxu0
        %v3577 = vadd.f32 0.0, %v3576
        %3578 = vdwg.mxu0
        %3579 = vmatprep.subr.mxu0 %v3377
        %3580 = vmatpush1.msra.mxu0 %v3376
        %3581 = vmatprep.subr.mxu0 %v3381
        %3582 = vmatpush1.msra.mxu0 %v3380
        %3583 = vmatprep.subr.mxu0 %v3385
        %3584 = vmatpush1.msra.mxu0 %v3384
        %3585 = vmatprep.subr.mxu0 %v3389
        %3586 = vmatpush1.msra.mxu0 %v3388
        %3587 = vmatprep.subr.mxu0 %v3393
        %3588 = vmatpush1.msra.mxu0 %v3392
        %3589 = vmatprep.subr.mxu0 %v3397
        %3590 = vmatpush1.msra.mxu0 %v3396
        %3591 = vmatprep.subr.mxu0 %v3401
        %3592 = vmatpush1.msra.mxu0 %v3400
        %3593 = vmatprep.subr.mxu0 %v3405
        %3594 = vmatpush1.msra.mxu0 %v3404
        %3595 = vmatprep.subr.mxu0 %v3409
        %3596 = vmatpush1.msra.mxu0 %v3408
        %3597 = vmatprep.subr.mxu0 %v3413
        %3598 = vmatpush1.msra.mxu0 %v3412
        %3599 = vmatprep.subr.mxu0 %v3417
        %3600 = vmatpush1.msra.mxu0 %v3416
        %3601 = vmatprep.subr.mxu0 %v3421
        %3602 = vmatpush1.msra.mxu0 %v3420
        %3603 = vmatprep.subr.mxu0 %v3425
        %3604 = vmatpush1.msra.mxu0 %v3424
        %3605 = vmatprep.subr.mxu0 %v3429
        %3606 = vmatpush1.msra.mxu0 %v3428
        %3607 = vmatprep.subr.mxu0 %v3433
        %3608 = vmatpush1.msra.mxu0 %v3432
        %3609 = vmatprep.subr.mxu0 %v3437
        %3610 = vmatpush1.msra.mxu0 %v3436
        %3611 = vmatprep.subr.mxu0 %v3441
        %3612 = vmatpush1.msra.mxu0 %v3440
        %3613 = vmatprep.subr.mxu0 %v3445
        %3614 = vmatpush1.msra.mxu0 %v3444
        %3615 = vmatprep.subr.mxu0 %v3449
        %3616 = vmatpush1.msra.mxu0 %v3448
        %3617 = vmatprep.subr.mxu0 %v3453
        %3618 = vmatpush1.msra.mxu0 %v3452
        %3619 = vmatprep.subr.mxu0 %v3457
        %3620 = vmatpush1.msra.mxu0 %v3456
        %3621 = vmatprep.subr.mxu0 %v3461
        %3622 = vmatpush1.msra.mxu0 %v3460
        %3623 = vmatprep.subr.mxu0 %v3465
        %3624 = vmatpush1.msra.mxu0 %v3464
        %3625 = vmatprep.subr.mxu0 %v3469
        %3626 = vmatpush1.msra.mxu0 %v3468
        %3627 = vmatprep.subr.mxu0 %v3473
        %3628 = vmatpush1.msra.mxu0 %v3472
        %3629 = vmatprep.subr.mxu0 %v3477
        %3630 = vmatpush1.msra.mxu0 %v3476
        %3631 = vmatprep.subr.mxu0 %v3481
        %3632 = vmatpush1.msra.mxu0 %v3480
        %3633 = vmatprep.subr.mxu0 %v3485
        %3634 = vmatpush1.msra.mxu0 %v3484
        %3635 = vmatprep.subr.mxu0 %v3489
        %3636 = vmatpush1.msra.mxu0 %v3488
        %3637 = vmatprep.subr.mxu0 %v3493
        %3638 = vmatpush1.msra.mxu0 %v3492
        %3639 = vmatprep.subr.mxu0 %v3497
        %3640 = vmatpush1.msra.mxu0 %v3496
        %3641 = vmatprep.subr.mxu0 %v3501
        %3642 = vmatpush1.msra.mxu0 %v3500
        %3643 = vmatprep.mubr.f32.mxu0 %v3083
        %3644 = vmatmul.mubr.f32.gmra.mrb[0].mxu0 %v3082
        %v3645 = vpop.f32.mrb[0].mxu0
        %v3646 = vadd.f32 0.0, %v3645
        %v3647 = vpop.f32.mrb[0].mxu0
        %v3648 = vadd.f32 0.0, %v3647
        %3649 = vmatprep.mubr.f32.mxu0 %v3085
        %3650 = vmatmul.mubr.f32.gmra.mrb[0].mxu0 %v3084
        %v3651 = vpop.f32.mrb[0].mxu0
        %v3652 = vadd.f32 0.0, %v3651
        %v3653 = vpop.f32.mrb[0].mxu0
        %v3654 = vadd.f32 0.0, %v3653
        %3655 = vdwg.mxu0
        %vm3656 = vcmask 130048
        %v3658 = vsel %vm3656, %v3371, 0
        %v3661 = vsel %vm3656, %v3372, 0
        %3663 = vmatprep.subr.mxu0 %v3571
        %3664 = vmatpush1.msra.mxu0 %v3569
        %3665 = vmatprep.subr.mxu0 %v3577
        %3666 = vmatpush1.msra.mxu0 %v3575
        %3667 = vmatprep.subr.mxu0 0.0
        %3668 = vmatpush1.msra.mxu0 0.0
        %3669 = vmatprep.subr.mxu0 0.0
        %3670 = vmatpush1.msra.mxu0 0.0
        %3671 = vmatprep.subr.mxu0 0.0
        %3672 = vmatpush1.msra.mxu0 0.0
        %3673 = vmatprep.subr.mxu0 0.0
        %3674 = vmatpush1.msra.mxu0 0.0
        %3675 = vmatprep.subr.mxu0 0.0
        %3676 = vmatpush1.msra.mxu0 0.0
        %3677 = vmatprep.subr.mxu0 0.0
        %3678 = vmatpush1.msra.mxu0 0.0
        %3679 = vmatprep.subr.mxu0 0.0
        %3680 = vmatpush1.msra.mxu0 0.0
        %3681 = vmatprep.subr.mxu0 0.0
        %3682 = vmatpush1.msra.mxu0 0.0
        %3683 = vmatprep.subr.mxu0 0.0
        %3684 = vmatpush1.msra.mxu0 0.0
        %3685 = vmatprep.subr.mxu0 0.0
        %3686 = vmatpush1.msra.mxu0 0.0
        %3687 = vmatprep.subr.mxu0 0.0
        %3688 = vmatpush1.msra.mxu0 0.0
        %3689 = vmatprep.subr.mxu0 0.0
        %3690 = vmatpush1.msra.mxu0 0.0
        %3691 = vmatprep.subr.mxu0 0.0
        %3692 = vmatpush1.msra.mxu0 0.0
        %3693 = vmatprep.subr.mxu0 0.0
        %3694 = vmatpush1.msra.mxu0 0.0
        %3695 = vmatprep.subr.mxu0 0.0
        %3696 = vmatpush1.msra.mxu0 0.0
        %3697 = vmatprep.subr.mxu0 0.0
        %3698 = vmatpush1.msra.mxu0 0.0
        %3699 = vmatprep.subr.mxu0 0.0
        %3700 = vmatpush1.msra.mxu0 0.0
        %3701 = vmatprep.subr.mxu0 0.0
        %3702 = vmatpush1.msra.mxu0 0.0
        %3703 = vmatprep.subr.mxu0 0.0
        %3704 = vmatpush1.msra.mxu0 0.0
        %3705 = vmatprep.subr.mxu0 0.0
        %3706 = vmatpush1.msra.mxu0 0.0
        %3707 = vmatprep.subr.mxu0 0.0
        %3708 = vmatpush1.msra.mxu0 0.0
        %3709 = vmatprep.subr.mxu0 0.0
        %3710 = vmatpush1.msra.mxu0 0.0
        %3711 = vmatprep.subr.mxu0 0.0
        %3712 = vmatpush1.msra.mxu0 0.0
        %3713 = vmatprep.subr.mxu0 0.0
        %3714 = vmatpush1.msra.mxu0 0.0
        %3715 = vmatprep.subr.mxu0 0.0
        %3716 = vmatpush1.msra.mxu0 0.0
        %3717 = vmatprep.subr.mxu0 0.0
        %3718 = vmatpush1.msra.mxu0 0.0
        %3719 = vmatprep.subr.mxu0 0.0
        %3720 = vmatpush1.msra.mxu0 0.0
        %3721 = vmatprep.subr.mxu0 0.0
        %3722 = vmatpush1.msra.mxu0 0.0
        %3723 = vmatprep.subr.mxu0 0.0
        %3724 = vmatpush1.msra.mxu0 0.0
        %3725 = vmatprep.subr.mxu0 0.0
        %3726 = vmatpush1.msra.mxu0 0.0
        %3727 = vmatprep.mubr.f32.mxu0 0.0
        %3728 = vmatmul.mubr.f32.gmra.mrb[0].mxu0 %v3658
        %v3729 = vpop.f32.mrb[0].mxu0
        %v3730 = vadd.f32 0.0, %v3729
        %v3731 = vpop.f32.mrb[0].mxu0
        %v3732 = vadd.f32 0.0, %v3731
        %3733 = vmatprep.mubr.f32.mxu0 0.0
        %3734 = vmatmul.mubr.f32.gmra.mrb[0].mxu0 %v3661
        %v3735 = vpop.f32.mrb[0].mxu0
        %v3736 = vadd.f32 0.0, %v3735
        %v3737 = vpop.f32.mrb[0].mxu0
        %v3738 = vadd.f32 0.0, %v3737
        %3739 = vdwg.mxu0
        %3740 = vmatprep.subr.mxu0 %v3648
        %3741 = vmatpush1.msra.mxu0 %v3646
        %3742 = vmatprep.subr.mxu0 %v3654
        %3743 = vmatpush1.msra.mxu0 %v3652
        %3744 = vmatprep.subr.mxu0 0.0
        %3745 = vmatpush1.msra.mxu0 0.0
        %3746 = vmatprep.subr.mxu0 0.0
        %3747 = vmatpush1.msra.mxu0 0.0
        %3748 = vmatprep.subr.mxu0 0.0
        %3749 = vmatpush1.msra.mxu0 0.0
        %3750 = vmatprep.subr.mxu0 0.0
        %3751 = vmatpush1.msra.mxu0 0.0
        %3752 = vmatprep.subr.mxu0 0.0
        %3753 = vmatpush1.msra.mxu0 0.0
        %3754 = vmatprep.subr.mxu0 0.0
        %3755 = vmatpush1.msra.mxu0 0.0
        %3756 = vmatprep.subr.mxu0 0.0
        %3757 = vmatpush1.msra.mxu0 0.0
        %3758 = vmatprep.subr.mxu0 0.0
        %3759 = vmatpush1.msra.mxu0 0.0
        %3760 = vmatprep.subr.mxu0 0.0
        %3761 = vmatpush1.msra.mxu0 0.0
        %3762 = vmatprep.subr.mxu0 0.0
        %3763 = vmatpush1.msra.mxu0 0.0
        %3764 = vmatprep.subr.mxu0 0.0
        %3765 = vmatpush1.msra.mxu0 0.0
        %3766 = vmatprep.subr.mxu0 0.0
        %3767 = vmatpush1.msra.mxu0 0.0
        %3768 = vmatprep.subr.mxu0 0.0
        %3769 = vmatpush1.msra.mxu0 0.0
        %3770 = vmatprep.subr.mxu0 0.0
        %3771 = vmatpush1.msra.mxu0 0.0
        %3772 = vmatprep.subr.mxu0 0.0
        %3773 = vmatpush1.msra.mxu0 0.0
        %3774 = vmatprep.subr.mxu0 0.0
        %3775 = vmatpush1.msra.mxu0 0.0
        %3776 = vmatprep.subr.mxu0 0.0
        %3777 = vmatpush1.msra.mxu0 0.0
        %3778 = vmatprep.subr.mxu0 0.0
        %3779 = vmatpush1.msra.mxu0 0.0
        %3780 = vmatprep.subr.mxu0 0.0
        %3781 = vmatpush1.msra.mxu0 0.0
        %3782 = vmatprep.subr.mxu0 0.0
        %3783 = vmatpush1.msra.mxu0 0.0
        %3784 = vmatprep.subr.mxu0 0.0
        %3785 = vmatpush1.msra.mxu0 0.0
        %3786 = vmatprep.subr.mxu0 0.0
        %3787 = vmatpush1.msra.mxu0 0.0
        %3788 = vmatprep.subr.mxu0 0.0
        %3789 = vmatpush1.msra.mxu0 0.0
        %3790 = vmatprep.subr.mxu0 0.0
        %3791 = vmatpush1.msra.mxu0 0.0
        %3792 = vmatprep.subr.mxu0 0.0
        %3793 = vmatpush1.msra.mxu0 0.0
        %3794 = vmatprep.subr.mxu0 0.0
        %3795 = vmatpush1.msra.mxu0 0.0
        %3796 = vmatprep.subr.mxu0 0.0
        %3797 = vmatpush1.msra.mxu0 0.0
        %3798 = vmatprep.subr.mxu0 0.0
        %3799 = vmatpush1.msra.mxu0 0.0
        %3800 = vmatprep.subr.mxu0 0.0
        %3801 = vmatpush1.msra.mxu0 0.0
        %3802 = vmatprep.subr.mxu0 0.0
        %3803 = vmatpush1.msra.mxu0 0.0
        %3804 = vmatprep.mubr.f32.mxu0 0.0
        %3805 = vmatmul.mubr.f32.gmra.mrb[0].mxu0 %v3658
        %v3806 = vpop.f32.mrb[0].mxu0
        %v3807 = vadd.f32 0.0, %v3806
        %v3808 = vpop.f32.mrb[0].mxu0
        %v3809 = vadd.f32 0.0, %v3808
        %3810 = vmatprep.mubr.f32.mxu0 0.0
        %3811 = vmatmul.mubr.f32.gmra.mrb[0].mxu0 %v3661
        %v3812 = vpop.f32.mrb[0].mxu0
        %v3813 = vadd.f32 0.0, %v3812
        %v3814 = vpop.f32.mrb[0].mxu0
        %v3815 = vadd.f32 0.0, %v3814
        %3816 = vdwg.mxu0
        %v3818 = vsel %vm3656, %v3086, 0
        %v3821 = vsel %vm3656, %v3087, 0
        %3823 = vmatprep.subr.mxu0 %v3285
        %3824 = vmatpush1.msra.mxu0 %v3283
        %3825 = vmatprep.subr.mxu0 %v3291
        %3826 = vmatpush1.msra.mxu0 %v3289
        %3827 = vmatprep.subr.mxu0 0.0
        %3828 = vmatpush1.msra.mxu0 0.0
        %3829 = vmatprep.subr.mxu0 0.0
        %3830 = vmatpush1.msra.mxu0 0.0
        %3831 = vmatprep.subr.mxu0 0.0
        %3832 = vmatpush1.msra.mxu0 0.0
        %3833 = vmatprep.subr.mxu0 0.0
        %3834 = vmatpush1.msra.mxu0 0.0
        %3835 = vmatprep.subr.mxu0 0.0
        %3836 = vmatpush1.msra.mxu0 0.0
        %3837 = vmatprep.subr.mxu0 0.0
        %3838 = vmatpush1.msra.mxu0 0.0
        %3839 = vmatprep.subr.mxu0 0.0
        %3840 = vmatpush1.msra.mxu0 0.0
        %3841 = vmatprep.subr.mxu0 0.0
        %3842 = vmatpush1.msra.mxu0 0.0
        %3843 = vmatprep.subr.mxu0 0.0
        %3844 = vmatpush1.msra.mxu0 0.0
        %3845 = vmatprep.subr.mxu0 0.0
        %3846 = vmatpush1.msra.mxu0 0.0
        %3847 = vmatprep.subr.mxu0 0.0
        %3848 = vmatpush1.msra.mxu0 0.0
        %3849 = vmatprep.subr.mxu0 0.0
        %3850 = vmatpush1.msra.mxu0 0.0
        %3851 = vmatprep.subr.mxu0 0.0
        %3852 = vmatpush1.msra.mxu0 0.0
        %3853 = vmatprep.subr.mxu0 0.0
        %3854 = vmatpush1.msra.mxu0 0.0
        %3855 = vmatprep.subr.mxu0 0.0
        %3856 = vmatpush1.msra.mxu0 0.0
        %3857 = vmatprep.subr.mxu0 0.0
        %3858 = vmatpush1.msra.mxu0 0.0
        %3859 = vmatprep.subr.mxu0 0.0
        %3860 = vmatpush1.msra.mxu0 0.0
        %3861 = vmatprep.subr.mxu0 0.0
        %3862 = vmatpush1.msra.mxu0 0.0
        %3863 = vmatprep.subr.mxu0 0.0
        %3864 = vmatpush1.msra.mxu0 0.0
        %3865 = vmatprep.subr.mxu0 0.0
        %3866 = vmatpush1.msra.mxu0 0.0
        %3867 = vmatprep.subr.mxu0 0.0
        %3868 = vmatpush1.msra.mxu0 0.0
        %3869 = vmatprep.subr.mxu0 0.0
        %3870 = vmatpush1.msra.mxu0 0.0
        %3871 = vmatprep.subr.mxu0 0.0
        %3872 = vmatpush1.msra.mxu0 0.0
        %3873 = vmatprep.subr.mxu0 0.0
        %3874 = vmatpush1.msra.mxu0 0.0
        %3875 = vmatprep.subr.mxu0 0.0
        %3876 = vmatpush1.msra.mxu0 0.0
        %3877 = vmatprep.subr.mxu0 0.0
        %3878 = vmatpush1.msra.mxu0 0.0
        %3879 = vmatprep.subr.mxu0 0.0
        %3880 = vmatpush1.msra.mxu0 0.0
        %3881 = vmatprep.subr.mxu0 0.0
        %3882 = vmatpush1.msra.mxu0 0.0
        %3883 = vmatprep.subr.mxu0 0.0
        %3884 = vmatpush1.msra.mxu0 0.0
        %3885 = vmatprep.subr.mxu0 0.0
        %3886 = vmatpush1.msra.mxu0 0.0
        %3887 = vmatprep.mubr.f32.mxu0 0.0
        %3888 = vmatmul.mubr.f32.gmra.mrb[0].mxu0 %v3818
        %v3889 = vpop.f32.mrb[0].mxu0
        %v3890 = vadd.f32 %v3730, %v3889
        %v3891 = vpop.f32.mrb[0].mxu0
        %v3892 = vadd.f32 %v3732, %v3891
        %3893 = vmatprep.mubr.f32.mxu0 0.0
        %3894 = vmatmul.mubr.f32.gmra.mrb[0].mxu0 %v3821
        %v3895 = vpop.f32.mrb[0].mxu0
        %v3896 = vadd.f32 %v3736, %v3895
        %v3897 = vpop.f32.mrb[0].mxu0
        %v3898 = vadd.f32 %v3738, %v3897
        %3899 = vdwg.mxu0
        %3900 = vmatprep.subr.mxu0 %v3362
        %3901 = vmatpush1.msra.mxu0 %v3360
        %3902 = vmatprep.subr.mxu0 %v3368
        %3903 = vmatpush1.msra.mxu0 %v3366
        %3904 = vmatprep.subr.mxu0 0.0
        %3905 = vmatpush1.msra.mxu0 0.0
        %3906 = vmatprep.subr.mxu0 0.0
        %3907 = vmatpush1.msra.mxu0 0.0
        %3908 = vmatprep.subr.mxu0 0.0
        %3909 = vmatpush1.msra.mxu0 0.0
        %3910 = vmatprep.subr.mxu0 0.0
        %3911 = vmatpush1.msra.mxu0 0.0
        %3912 = vmatprep.subr.mxu0 0.0
        %3913 = vmatpush1.msra.mxu0 0.0
        %3914 = vmatprep.subr.mxu0 0.0
        %3915 = vmatpush1.msra.mxu0 0.0
        %3916 = vmatprep.subr.mxu0 0.0
        %3917 = vmatpush1.msra.mxu0 0.0
        %3918 = vmatprep.subr.mxu0 0.0
        %3919 = vmatpush1.msra.mxu0 0.0
        %3920 = vmatprep.subr.mxu0 0.0
        %3921 = vmatpush1.msra.mxu0 0.0
        %3922 = vmatprep.subr.mxu0 0.0
        %3923 = vmatpush1.msra.mxu0 0.0
        %3924 = vmatprep.subr.mxu0 0.0
        %3925 = vmatpush1.msra.mxu0 0.0
        %3926 = vmatprep.subr.mxu0 0.0
        %3927 = vmatpush1.msra.mxu0 0.0
        %3928 = vmatprep.subr.mxu0 0.0
        %3929 = vmatpush1.msra.mxu0 0.0
        %3930 = vmatprep.subr.mxu0 0.0
        %3931 = vmatpush1.msra.mxu0 0.0
        %3932 = vmatprep.subr.mxu0 0.0
        %3933 = vmatpush1.msra.mxu0 0.0
        %3934 = vmatprep.subr.mxu0 0.0
        %3935 = vmatpush1.msra.mxu0 0.0
        %3936 = vmatprep.subr.mxu0 0.0
        %3937 = vmatpush1.msra.mxu0 0.0
        %3938 = vmatprep.subr.mxu0 0.0
        %3939 = vmatpush1.msra.mxu0 0.0
        %3940 = vmatprep.subr.mxu0 0.0
        %3941 = vmatpush1.msra.mxu0 0.0
        %3942 = vmatprep.subr.mxu0 0.0
        %3943 = vmatpush1.msra.mxu0 0.0
        %3944 = vmatprep.subr.mxu0 0.0
        %3945 = vmatpush1.msra.mxu0 0.0
        %3946 = vmatprep.subr.mxu0 0.0
        %3947 = vmatpush1.msra.mxu0 0.0
        %3948 = vmatprep.subr.mxu0 0.0
        %3949 = vmatpush1.msra.mxu0 0.0
        %3950 = vmatprep.subr.mxu0 0.0
        %3951 = vmatpush1.msra.mxu0 0.0
        %3952 = vmatprep.subr.mxu0 0.0
        %3953 = vmatpush1.msra.mxu0 0.0
        %3954 = vmatprep.subr.mxu0 0.0
        %3955 = vmatpush1.msra.mxu0 0.0
        %3956 = vmatprep.subr.mxu0 0.0
        %3957 = vmatpush1.msra.mxu0 0.0
        %3958 = vmatprep.subr.mxu0 0.0
        %3959 = vmatpush1.msra.mxu0 0.0
        %3960 = vmatprep.subr.mxu0 0.0
        %3961 = vmatpush1.msra.mxu0 0.0
        %3962 = vmatprep.subr.mxu0 0.0
        %3963 = vmatpush1.msra.mxu0 0.0
        %3964 = vmatprep.mubr.f32.mxu0 0.0
        %3965 = vmatmul.mubr.f32.gmra.mrb[0].mxu0 %v3818
        %v3966 = vpop.f32.mrb[0].mxu0
        %v3967 = vadd.f32 %v3807, %v3966
        %v3968 = vpop.f32.mrb[0].mxu0
        %v3969 = vadd.f32 %v3809, %v3968
        %3970 = vmatprep.mubr.f32.mxu0 0.0
        %3971 = vmatmul.mubr.f32.gmra.mrb[0].mxu0 %v3821
        %v3972 = vpop.f32.mrb[0].mxu0
        %v3973 = vadd.f32 %v3813, %v3972
        %v3974 = vpop.f32.mrb[0].mxu0
        %v3975 = vadd.f32 %v3815, %v3974
        %3976 = vdwg.mxu0
        %s3977 = scalar_lea.vmem [#allocation13], 32
        %v3978 = vld [vmem:[%s3977] sm:$0xff]
        %v3979 = vld [vmem:[%s3977 + $0x8] sm:$0xff]
        %s3980 = scalar_lea.vmem [#allocation11], 2048
        %v3981 = vld [vmem:[%s3980] sm:$0xff]
        %v3982 = vld [vmem:[%s3980 + $0x8] sm:$0xff]
        %v3983 = vld [vmem:[%s3980 + $0x10] sm:$0xff]
        %v3984 = vld [vmem:[%s3980 + $0x18] sm:$0xff]
        %v3985 = vld [vmem:[%s3980 + $0x20] sm:$0xff]
        %v3986 = vld [vmem:[%s3980 + $0x28] sm:$0xff]
        %v3987 = vld [vmem:[%s3980 + $0x30] sm:$0xff]
        %v3988 = vld [vmem:[%s3980 + $0x38] sm:$0xff]
        %v3989 = vld [vmem:[%s3980 + $0x40] sm:$0xff]
        %v3990 = vld [vmem:[%s3980 + $0x48] sm:$0xff]
        %v3991 = vld [vmem:[%s3980 + $0x50] sm:$0xff]
        %v3992 = vld [vmem:[%s3980 + $0x58] sm:$0xff]
        %v3993 = vld [vmem:[%s3980 + $0x60] sm:$0xff]
        %v3994 = vld [vmem:[%s3980 + $0x68] sm:$0xff]
        %v3995 = vld [vmem:[%s3980 + $0x70] sm:$0xff]
        %v3996 = vld [vmem:[%s3980 + $0x78] sm:$0xff]
        %v3997 = vld [vmem:[%s3980 + $0x80] sm:$0xff]
        %v3998 = vld [vmem:[%s3980 + $0x88] sm:$0xff]
        %v3999 = vld [vmem:[%s3980 + $0x90] sm:$0xff]
        %v4000 = vld [vmem:[%s3980 + $0x98] sm:$0xff]
        %v4001 = vld [vmem:[%s3980 + $0xa0] sm:$0xff]
        %v4002 = vld [vmem:[%s3980 + $0xa8] sm:$0xff]
        %v4003 = vld [vmem:[%s3980 + $0xb0] sm:$0xff]
        %v4004 = vld [vmem:[%s3980 + $0xb8] sm:$0xff]
        %v4005 = vld [vmem:[%s3980 + $0xc0] sm:$0xff]
        %v4006 = vld [vmem:[%s3980 + $0xc8] sm:$0xff]
        %v4007 = vld [vmem:[%s3980 + $0xd0] sm:$0xff]
        %v4008 = vld [vmem:[%s3980 + $0xd8] sm:$0xff]
        %v4009 = vld [vmem:[%s3980 + $0xe0] sm:$0xff]
        %v4010 = vld [vmem:[%s3980 + $0xe8] sm:$0xff]
        %v4011 = vld [vmem:[%s3980 + $0xf0] sm:$0xff]
        %v4012 = vld [vmem:[%s3980 + $0xf8] sm:$0xff]
        %v4013 = vld [vmem:[%s3980 + $0x100] sm:$0xff]
        %v4014 = vld [vmem:[%s3980 + $0x108] sm:$0xff]
        %v4015 = vld [vmem:[%s3980 + $0x110] sm:$0xff]
        %v4016 = vld [vmem:[%s3980 + $0x118] sm:$0xff]
        %v4017 = vld [vmem:[%s3980 + $0x120] sm:$0xff]
        %v4018 = vld [vmem:[%s3980 + $0x128] sm:$0xff]
        %v4019 = vld [vmem:[%s3980 + $0x130] sm:$0xff]
        %v4020 = vld [vmem:[%s3980 + $0x138] sm:$0xff]
        %v4021 = vld [vmem:[%s3980 + $0x140] sm:$0xff]
        %v4022 = vld [vmem:[%s3980 + $0x148] sm:$0xff]
        %v4023 = vld [vmem:[%s3980 + $0x150] sm:$0xff]
        %v4024 = vld [vmem:[%s3980 + $0x158] sm:$0xff]
        %v4025 = vld [vmem:[%s3980 + $0x160] sm:$0xff]
        %v4026 = vld [vmem:[%s3980 + $0x168] sm:$0xff]
        %v4027 = vld [vmem:[%s3980 + $0x170] sm:$0xff]
        %v4028 = vld [vmem:[%s3980 + $0x178] sm:$0xff]
        %v4029 = vld [vmem:[%s3980 + $0x180] sm:$0xff]
        %v4030 = vld [vmem:[%s3980 + $0x188] sm:$0xff]
        %v4031 = vld [vmem:[%s3980 + $0x190] sm:$0xff]
        %v4032 = vld [vmem:[%s3980 + $0x198] sm:$0xff]
        %v4033 = vld [vmem:[%s3980 + $0x1a0] sm:$0xff]
        %v4034 = vld [vmem:[%s3980 + $0x1a8] sm:$0xff]
        %v4035 = vld [vmem:[%s3980 + $0x1b0] sm:$0xff]
        %v4036 = vld [vmem:[%s3980 + $0x1b8] sm:$0xff]
        %v4037 = vld [vmem:[%s3980 + $0x1c0] sm:$0xff]
        %v4038 = vld [vmem:[%s3980 + $0x1c8] sm:$0xff]
        %v4039 = vld [vmem:[%s3980 + $0x1d0] sm:$0xff]
        %v4040 = vld [vmem:[%s3980 + $0x1d8] sm:$0xff]
        %v4041 = vld [vmem:[%s3980 + $0x1e0] sm:$0xff]
        %v4042 = vld [vmem:[%s3980 + $0x1e8] sm:$0xff]
        %v4043 = vld [vmem:[%s3980 + $0x1f0] sm:$0xff]
        %v4044 = vld [vmem:[%s3980 + $0x1f8] sm:$0xff]
        %v4045 = vld [vmem:[%s3980 + $0x200] sm:$0xff]
        %v4046 = vld [vmem:[%s3980 + $0x208] sm:$0xff]
        %v4047 = vld [vmem:[%s3980 + $0x210] sm:$0xff]
        %v4048 = vld [vmem:[%s3980 + $0x218] sm:$0xff]
        %v4049 = vld [vmem:[%s3980 + $0x220] sm:$0xff]
        %v4050 = vld [vmem:[%s3980 + $0x228] sm:$0xff]
        %v4051 = vld [vmem:[%s3980 + $0x230] sm:$0xff]
        %v4052 = vld [vmem:[%s3980 + $0x238] sm:$0xff]
        %v4053 = vld [vmem:[%s3980 + $0x240] sm:$0xff]
        %v4054 = vld [vmem:[%s3980 + $0x248] sm:$0xff]
        %v4055 = vld [vmem:[%s3980 + $0x250] sm:$0xff]
        %v4056 = vld [vmem:[%s3980 + $0x258] sm:$0xff]
        %v4057 = vld [vmem:[%s3980 + $0x260] sm:$0xff]
        %v4058 = vld [vmem:[%s3980 + $0x268] sm:$0xff]
        %v4059 = vld [vmem:[%s3980 + $0x270] sm:$0xff]
        %v4060 = vld [vmem:[%s3980 + $0x278] sm:$0xff]
        %v4061 = vld [vmem:[%s3980 + $0x280] sm:$0xff]
        %v4062 = vld [vmem:[%s3980 + $0x288] sm:$0xff]
        %v4063 = vld [vmem:[%s3980 + $0x290] sm:$0xff]
        %v4064 = vld [vmem:[%s3980 + $0x298] sm:$0xff]
        %v4065 = vld [vmem:[%s3980 + $0x2a0] sm:$0xff]
        %v4066 = vld [vmem:[%s3980 + $0x2a8] sm:$0xff]
        %v4067 = vld [vmem:[%s3980 + $0x2b0] sm:$0xff]
        %v4068 = vld [vmem:[%s3980 + $0x2b8] sm:$0xff]
        %v4069 = vld [vmem:[%s3980 + $0x2c0] sm:$0xff]
        %v4070 = vld [vmem:[%s3980 + $0x2c8] sm:$0xff]
        %v4071 = vld [vmem:[%s3980 + $0x2d0] sm:$0xff]
        %v4072 = vld [vmem:[%s3980 + $0x2d8] sm:$0xff]
        %v4073 = vld [vmem:[%s3980 + $0x2e0] sm:$0xff]
        %v4074 = vld [vmem:[%s3980 + $0x2e8] sm:$0xff]
        %v4075 = vld [vmem:[%s3980 + $0x2f0] sm:$0xff]
        %v4076 = vld [vmem:[%s3980 + $0x2f8] sm:$0xff]
        %v4077 = vld [vmem:[%s3980 + $0x300] sm:$0xff]
        %v4078 = vld [vmem:[%s3980 + $0x308] sm:$0xff]
        %v4079 = vld [vmem:[%s3980 + $0x310] sm:$0xff]
        %v4080 = vld [vmem:[%s3980 + $0x318] sm:$0xff]
        %v4081 = vld [vmem:[%s3980 + $0x320] sm:$0xff]
        %v4082 = vld [vmem:[%s3980 + $0x328] sm:$0xff]
        %v4083 = vld [vmem:[%s3980 + $0x330] sm:$0xff]
        %v4084 = vld [vmem:[%s3980 + $0x338] sm:$0xff]
        %v4085 = vld [vmem:[%s3980 + $0x340] sm:$0xff]
        %v4086 = vld [vmem:[%s3980 + $0x348] sm:$0xff]
        %v4087 = vld [vmem:[%s3980 + $0x350] sm:$0xff]
        %v4088 = vld [vmem:[%s3980 + $0x358] sm:$0xff]
        %v4089 = vld [vmem:[%s3980 + $0x360] sm:$0xff]
        %v4090 = vld [vmem:[%s3980 + $0x368] sm:$0xff]
        %v4091 = vld [vmem:[%s3980 + $0x370] sm:$0xff]
        %v4092 = vld [vmem:[%s3980 + $0x378] sm:$0xff]
        %v4093 = vld [vmem:[%s3980 + $0x380] sm:$0xff]
        %v4094 = vld [vmem:[%s3980 + $0x388] sm:$0xff]
        %v4095 = vld [vmem:[%s3980 + $0x390] sm:$0xff]
        %v4096 = vld [vmem:[%s3980 + $0x398] sm:$0xff]
        %v4097 = vld [vmem:[%s3980 + $0x3a0] sm:$0xff]
        %v4098 = vld [vmem:[%s3980 + $0x3a8] sm:$0xff]
        %v4099 = vld [vmem:[%s3980 + $0x3b0] sm:$0xff]
        %v4100 = vld [vmem:[%s3980 + $0x3b8] sm:$0xff]
        %v4101 = vld [vmem:[%s3980 + $0x3c0] sm:$0xff]
        %v4102 = vld [vmem:[%s3980 + $0x3c8] sm:$0xff]
        %v4103 = vld [vmem:[%s3980 + $0x3d0] sm:$0xff]
        %v4104 = vld [vmem:[%s3980 + $0x3d8] sm:$0xff]
        %v4105 = vld [vmem:[%s3980 + $0x3e0] sm:$0xff]
        %v4106 = vld [vmem:[%s3980 + $0x3e8] sm:$0xff]
        %v4107 = vld [vmem:[%s3980 + $0x3f0] sm:$0xff]
        %v4108 = vld [vmem:[%s3980 + $0x3f8] sm:$0xff]
        %4109 = vmatprep.subr.mxu0 %v3982
        %4110 = vmatpush1.msra.mxu0 %v3981
        %4111 = vmatprep.subr.mxu0 %v3986
        %4112 = vmatpush1.msra.mxu0 %v3985
        %4113 = vmatprep.subr.mxu0 %v3990
        %4114 = vmatpush1.msra.mxu0 %v3989
        %4115 = vmatprep.subr.mxu0 %v3994
        %4116 = vmatpush1.msra.mxu0 %v3993
        %4117 = vmatprep.subr.mxu0 %v3998
        %4118 = vmatpush1.msra.mxu0 %v3997
        %4119 = vmatprep.subr.mxu0 %v4002
        %4120 = vmatpush1.msra.mxu0 %v4001
        %4121 = vmatprep.subr.mxu0 %v4006
        %4122 = vmatpush1.msra.mxu0 %v4005
        %4123 = vmatprep.subr.mxu0 %v4010
        %4124 = vmatpush1.msra.mxu0 %v4009
        %4125 = vmatprep.subr.mxu0 %v4014
        %4126 = vmatpush1.msra.mxu0 %v4013
        %4127 = vmatprep.subr.mxu0 %v4018
        %4128 = vmatpush1.msra.mxu0 %v4017
        %4129 = vmatprep.subr.mxu0 %v4022
        %4130 = vmatpush1.msra.mxu0 %v4021
        %4131 = vmatprep.subr.mxu0 %v4026
        %4132 = vmatpush1.msra.mxu0 %v4025
        %4133 = vmatprep.subr.mxu0 %v4030
        %4134 = vmatpush1.msra.mxu0 %v4029
        %4135 = vmatprep.subr.mxu0 %v4034
        %4136 = vmatpush1.msra.mxu0 %v4033
        %4137 = vmatprep.subr.mxu0 %v4038
        %4138 = vmatpush1.msra.mxu0 %v4037
        %4139 = vmatprep.subr.mxu0 %v4042
        %4140 = vmatpush1.msra.mxu0 %v4041
        %4141 = vmatprep.subr.mxu0 %v4046
        %4142 = vmatpush1.msra.mxu0 %v4045
        %4143 = vmatprep.subr.mxu0 %v4050
        %4144 = vmatpush1.msra.mxu0 %v4049
        %4145 = vmatprep.subr.mxu0 %v4054
        %4146 = vmatpush1.msra.mxu0 %v4053
        %4147 = vmatprep.subr.mxu0 %v4058
        %4148 = vmatpush1.msra.mxu0 %v4057
        %4149 = vmatprep.subr.mxu0 %v4062
        %4150 = vmatpush1.msra.mxu0 %v4061
        %4151 = vmatprep.subr.mxu0 %v4066
        %4152 = vmatpush1.msra.mxu0 %v4065
        %4153 = vmatprep.subr.mxu0 %v4070
        %4154 = vmatpush1.msra.mxu0 %v4069
        %4155 = vmatprep.subr.mxu0 %v4074
        %4156 = vmatpush1.msra.mxu0 %v4073
        %4157 = vmatprep.subr.mxu0 %v4078
        %4158 = vmatpush1.msra.mxu0 %v4077
        %4159 = vmatprep.subr.mxu0 %v4082
        %4160 = vmatpush1.msra.mxu0 %v4081
        %4161 = vmatprep.subr.mxu0 %v4086
        %4162 = vmatpush1.msra.mxu0 %v4085
        %4163 = vmatprep.subr.mxu0 %v4090
        %4164 = vmatpush1.msra.mxu0 %v4089
        %4165 = vmatprep.subr.mxu0 %v4094
        %4166 = vmatpush1.msra.mxu0 %v4093
        %4167 = vmatprep.subr.mxu0 %v4098
        %4168 = vmatpush1.msra.mxu0 %v4097
        %4169 = vmatprep.subr.mxu0 %v4102
        %4170 = vmatpush1.msra.mxu0 %v4101
        %4171 = vmatprep.subr.mxu0 %v4106
        %4172 = vmatpush1.msra.mxu0 %v4105
        %4173 = vmatprep.mubr.f32.mxu0 %v3083
        %4174 = vmatmul.mubr.f32.gmra.mrb[0].mxu0 %v3082
        %v4175 = vpop.f32.mrb[0].mxu0
        %v4176 = vadd.f32 0.0, %v4175
        %v4177 = vpop.f32.mrb[0].mxu0
        %v4178 = vadd.f32 0.0, %v4177
        %4179 = vmatprep.mubr.f32.mxu0 %v3085
        %4180 = vmatmul.mubr.f32.gmra.mrb[0].mxu0 %v3084
        %v4181 = vpop.f32.mrb[0].mxu0
        %v4182 = vadd.f32 0.0, %v4181
        %v4183 = vpop.f32.mrb[0].mxu0
        %v4184 = vadd.f32 0.0, %v4183
        %4185 = vdwg.mxu0
        %4186 = vmatprep.subr.mxu0 %v3984
        %4187 = vmatpush1.msra.mxu0 %v3983
        %4188 = vmatprep.subr.mxu0 %v3988
        %4189 = vmatpush1.msra.mxu0 %v3987
        %4190 = vmatprep.subr.mxu0 %v3992
        %4191 = vmatpush1.msra.mxu0 %v3991
        %4192 = vmatprep.subr.mxu0 %v3996
        %4193 = vmatpush1.msra.mxu0 %v3995
        %4194 = vmatprep.subr.mxu0 %v4000
        %4195 = vmatpush1.msra.mxu0 %v3999
        %4196 = vmatprep.subr.mxu0 %v4004
        %4197 = vmatpush1.msra.mxu0 %v4003
        %4198 = vmatprep.subr.mxu0 %v4008
        %4199 = vmatpush1.msra.mxu0 %v4007
        %4200 = vmatprep.subr.mxu0 %v4012
        %4201 = vmatpush1.msra.mxu0 %v4011
        %4202 = vmatprep.subr.mxu0 %v4016
        %4203 = vmatpush1.msra.mxu0 %v4015
        %4204 = vmatprep.subr.mxu0 %v4020
        %4205 = vmatpush1.msra.mxu0 %v4019
        %4206 = vmatprep.subr.mxu0 %v4024
        %4207 = vmatpush1.msra.mxu0 %v4023
        %4208 = vmatprep.subr.mxu0 %v4028
        %4209 = vmatpush1.msra.mxu0 %v4027
        %4210 = vmatprep.subr.mxu0 %v4032
        %4211 = vmatpush1.msra.mxu0 %v4031
        %4212 = vmatprep.subr.mxu0 %v4036
        %4213 = vmatpush1.msra.mxu0 %v4035
        %4214 = vmatprep.subr.mxu0 %v4040
        %4215 = vmatpush1.msra.mxu0 %v4039
        %4216 = vmatprep.subr.mxu0 %v4044
        %4217 = vmatpush1.msra.mxu0 %v4043
        %4218 = vmatprep.subr.mxu0 %v4048
        %4219 = vmatpush1.msra.mxu0 %v4047
        %4220 = vmatprep.subr.mxu0 %v4052
        %4221 = vmatpush1.msra.mxu0 %v4051
        %4222 = vmatprep.subr.mxu0 %v4056
        %4223 = vmatpush1.msra.mxu0 %v4055
        %4224 = vmatprep.subr.mxu0 %v4060
        %4225 = vmatpush1.msra.mxu0 %v4059
        %4226 = vmatprep.subr.mxu0 %v4064
        %4227 = vmatpush1.msra.mxu0 %v4063
        %4228 = vmatprep.subr.mxu0 %v4068
        %4229 = vmatpush1.msra.mxu0 %v4067
        %4230 = vmatprep.subr.mxu0 %v4072
        %4231 = vmatpush1.msra.mxu0 %v4071
        %4232 = vmatprep.subr.mxu0 %v4076
        %4233 = vmatpush1.msra.mxu0 %v4075
        %4234 = vmatprep.subr.mxu0 %v4080
        %4235 = vmatpush1.msra.mxu0 %v4079
        %4236 = vmatprep.subr.mxu0 %v4084
        %4237 = vmatpush1.msra.mxu0 %v4083
        %4238 = vmatprep.subr.mxu0 %v4088
        %4239 = vmatpush1.msra.mxu0 %v4087
        %4240 = vmatprep.subr.mxu0 %v4092
        %4241 = vmatpush1.msra.mxu0 %v4091
        %4242 = vmatprep.subr.mxu0 %v4096
        %4243 = vmatpush1.msra.mxu0 %v4095
        %4244 = vmatprep.subr.mxu0 %v4100
        %4245 = vmatpush1.msra.mxu0 %v4099
        %4246 = vmatprep.subr.mxu0 %v4104
        %4247 = vmatpush1.msra.mxu0 %v4103
        %4248 = vmatprep.subr.mxu0 %v4108
        %4249 = vmatpush1.msra.mxu0 %v4107
        %4250 = vmatprep.mubr.f32.mxu0 %v3083
        %4251 = vmatmul.mubr.f32.gmra.mrb[0].mxu0 %v3082
        %v4252 = vpop.f32.mrb[0].mxu0
        %v4253 = vadd.f32 0.0, %v4252
        %v4254 = vpop.f32.mrb[0].mxu0
        %v4255 = vadd.f32 0.0, %v4254
        %4256 = vmatprep.mubr.f32.mxu0 %v3085
        %4257 = vmatmul.mubr.f32.gmra.mrb[0].mxu0 %v3084
        %v4258 = vpop.f32.mrb[0].mxu0
        %v4259 = vadd.f32 0.0, %v4258
        %v4260 = vpop.f32.mrb[0].mxu0
        %v4261 = vadd.f32 0.0, %v4260
        %4262 = vdwg.mxu0
        %v4264 = vsel %vm3656, %v3978, 0
        %v4267 = vsel %vm3656, %v3979, 0
        %4269 = vmatprep.subr.mxu0 %v4178
        %4270 = vmatpush1.msra.mxu0 %v4176
        %4271 = vmatprep.subr.mxu0 %v4184
        %4272 = vmatpush1.msra.mxu0 %v4182
        %4273 = vmatprep.subr.mxu0 0.0
        %4274 = vmatpush1.msra.mxu0 0.0
        %4275 = vmatprep.subr.mxu0 0.0
        %4276 = vmatpush1.msra.mxu0 0.0
        %4277 = vmatprep.subr.mxu0 0.0
        %4278 = vmatpush1.msra.mxu0 0.0
        %4279 = vmatprep.subr.mxu0 0.0
        %4280 = vmatpush1.msra.mxu0 0.0
        %4281 = vmatprep.subr.mxu0 0.0
        %4282 = vmatpush1.msra.mxu0 0.0
        %4283 = vmatprep.subr.mxu0 0.0
        %4284 = vmatpush1.msra.mxu0 0.0
        %4285 = vmatprep.subr.mxu0 0.0
        %4286 = vmatpush1.msra.mxu0 0.0
        %4287 = vmatprep.subr.mxu0 0.0
        %4288 = vmatpush1.msra.mxu0 0.0
        %4289 = vmatprep.subr.mxu0 0.0
        %4290 = vmatpush1.msra.mxu0 0.0
        %4291 = vmatprep.subr.mxu0 0.0
        %4292 = vmatpush1.msra.mxu0 0.0
        %4293 = vmatprep.subr.mxu0 0.0
        %4294 = vmatpush1.msra.mxu0 0.0
        %4295 = vmatprep.subr.mxu0 0.0
        %4296 = vmatpush1.msra.mxu0 0.0
        %4297 = vmatprep.subr.mxu0 0.0
        %4298 = vmatpush1.msra.mxu0 0.0
        %4299 = vmatprep.subr.mxu0 0.0
        %4300 = vmatpush1.msra.mxu0 0.0
        %4301 = vmatprep.subr.mxu0 0.0
        %4302 = vmatpush1.msra.mxu0 0.0
        %4303 = vmatprep.subr.mxu0 0.0
        %4304 = vmatpush1.msra.mxu0 0.0
        %4305 = vmatprep.subr.mxu0 0.0
        %4306 = vmatpush1.msra.mxu0 0.0
        %4307 = vmatprep.subr.mxu0 0.0
        %4308 = vmatpush1.msra.mxu0 0.0
        %4309 = vmatprep.subr.mxu0 0.0
        %4310 = vmatpush1.msra.mxu0 0.0
        %4311 = vmatprep.subr.mxu0 0.0
        %4312 = vmatpush1.msra.mxu0 0.0
        %4313 = vmatprep.subr.mxu0 0.0
        %4314 = vmatpush1.msra.mxu0 0.0
        %4315 = vmatprep.subr.mxu0 0.0
        %4316 = vmatpush1.msra.mxu0 0.0
        %4317 = vmatprep.subr.mxu0 0.0
        %4318 = vmatpush1.msra.mxu0 0.0
        %4319 = vmatprep.subr.mxu0 0.0
        %4320 = vmatpush1.msra.mxu0 0.0
        %4321 = vmatprep.subr.mxu0 0.0
        %4322 = vmatpush1.msra.mxu0 0.0
        %4323 = vmatprep.subr.mxu0 0.0
        %4324 = vmatpush1.msra.mxu0 0.0
        %4325 = vmatprep.subr.mxu0 0.0
        %4326 = vmatpush1.msra.mxu0 0.0
        %4327 = vmatprep.subr.mxu0 0.0
        %4328 = vmatpush1.msra.mxu0 0.0
        %4329 = vmatprep.subr.mxu0 0.0
        %4330 = vmatpush1.msra.mxu0 0.0
        %4331 = vmatprep.subr.mxu0 0.0
        %4332 = vmatpush1.msra.mxu0 0.0
        %4333 = vmatprep.mubr.f32.mxu0 0.0
        %4334 = vmatmul.mubr.f32.gmra.mrb[0].mxu0 %v4264
        %v4335 = vpop.f32.mrb[0].mxu0
        %v4336 = vadd.f32 0.0, %v4335
        %v4337 = vpop.f32.mrb[0].mxu0
        %v4338 = vadd.f32 0.0, %v4337
        %4339 = vmatprep.mubr.f32.mxu0 0.0
        %4340 = vmatmul.mubr.f32.gmra.mrb[0].mxu0 %v4267
        %v4341 = vpop.f32.mrb[0].mxu0
        %v4342 = vadd.f32 0.0, %v4341
        %v4343 = vpop.f32.mrb[0].mxu0
        %v4344 = vadd.f32 0.0, %v4343
        %4345 = vdwg.mxu0
        %4346 = vmatprep.subr.mxu0 %v4255
        %4347 = vmatpush1.msra.mxu0 %v4253
        %4348 = vmatprep.subr.mxu0 %v4261
        %4349 = vmatpush1.msra.mxu0 %v4259
        %4350 = vmatprep.subr.mxu0 0.0
        %4351 = vmatpush1.msra.mxu0 0.0
        %4352 = vmatprep.subr.mxu0 0.0
        %4353 = vmatpush1.msra.mxu0 0.0
        %4354 = vmatprep.subr.mxu0 0.0
        %4355 = vmatpush1.msra.mxu0 0.0
        %4356 = vmatprep.subr.mxu0 0.0
        %4357 = vmatpush1.msra.mxu0 0.0
        %4358 = vmatprep.subr.mxu0 0.0
        %4359 = vmatpush1.msra.mxu0 0.0
        %4360 = vmatprep.subr.mxu0 0.0
        %4361 = vmatpush1.msra.mxu0 0.0
        %4362 = vmatprep.subr.mxu0 0.0
        %4363 = vmatpush1.msra.mxu0 0.0
        %4364 = vmatprep.subr.mxu0 0.0
        %4365 = vmatpush1.msra.mxu0 0.0
        %4366 = vmatprep.subr.mxu0 0.0
        %4367 = vmatpush1.msra.mxu0 0.0
        %4368 = vmatprep.subr.mxu0 0.0
        %4369 = vmatpush1.msra.mxu0 0.0
        %4370 = vmatprep.subr.mxu0 0.0
        %4371 = vmatpush1.msra.mxu0 0.0
        %4372 = vmatprep.subr.mxu0 0.0
        %4373 = vmatpush1.msra.mxu0 0.0
        %4374 = vmatprep.subr.mxu0 0.0
        %4375 = vmatpush1.msra.mxu0 0.0
        %4376 = vmatprep.subr.mxu0 0.0
        %4377 = vmatpush1.msra.mxu0 0.0
        %4378 = vmatprep.subr.mxu0 0.0
        %4379 = vmatpush1.msra.mxu0 0.0
        %4380 = vmatprep.subr.mxu0 0.0
        %4381 = vmatpush1.msra.mxu0 0.0
        %4382 = vmatprep.subr.mxu0 0.0
        %4383 = vmatpush1.msra.mxu0 0.0
        %4384 = vmatprep.subr.mxu0 0.0
        %4385 = vmatpush1.msra.mxu0 0.0
        %4386 = vmatprep.subr.mxu0 0.0
        %4387 = vmatpush1.msra.mxu0 0.0
        %4388 = vmatprep.subr.mxu0 0.0
        %4389 = vmatpush1.msra.mxu0 0.0
        %4390 = vmatprep.subr.mxu0 0.0
        %4391 = vmatpush1.msra.mxu0 0.0
        %4392 = vmatprep.subr.mxu0 0.0
        %4393 = vmatpush1.msra.mxu0 0.0
        %4394 = vmatprep.subr.mxu0 0.0
        %4395 = vmatpush1.msra.mxu0 0.0
        %4396 = vmatprep.subr.mxu0 0.0
        %4397 = vmatpush1.msra.mxu0 0.0
        %4398 = vmatprep.subr.mxu0 0.0
        %4399 = vmatpush1.msra.mxu0 0.0
        %4400 = vmatprep.subr.mxu0 0.0
        %4401 = vmatpush1.msra.mxu0 0.0
        %4402 = vmatprep.subr.mxu0 0.0
        %4403 = vmatpush1.msra.mxu0 0.0
        %4404 = vmatprep.subr.mxu0 0.0
        %4405 = vmatpush1.msra.mxu0 0.0
        %4406 = vmatprep.subr.mxu0 0.0
        %4407 = vmatpush1.msra.mxu0 0.0
        %4408 = vmatprep.subr.mxu0 0.0
        %4409 = vmatpush1.msra.mxu0 0.0
        %4410 = vmatprep.mubr.f32.mxu0 0.0
        %4411 = vmatmul.mubr.f32.gmra.mrb[0].mxu0 %v4264
        %v4412 = vpop.f32.mrb[0].mxu0
        %v4413 = vadd.f32 0.0, %v4412
        %v4414 = vpop.f32.mrb[0].mxu0
        %v4415 = vadd.f32 0.0, %v4414
        %4416 = vmatprep.mubr.f32.mxu0 0.0
        %4417 = vmatmul.mubr.f32.gmra.mrb[0].mxu0 %v4267
        %v4418 = vpop.f32.mrb[0].mxu0
        %v4419 = vadd.f32 0.0, %v4418
        %v4420 = vpop.f32.mrb[0].mxu0
        %v4421 = vadd.f32 0.0, %v4420
        %4422 = vdwg.mxu0
        %v4423 = vadd.f32 %v3890, %v4336
        %v4424 = vadd.f32 %v3892, %v4338
        %v4425 = vadd.f32 %v3967, %v4413
        %v4426 = vadd.f32 %v3969, %v4415
        %v4427 = vadd.f32 %v3896, %v4342
        %v4428 = vadd.f32 %v3898, %v4344
        %v4429 = vadd.f32 %v3973, %v4419
        %v4430 = vadd.f32 %v3975, %v4421
        %v4431 = vld [vmem:[#allocation16] sm:$0xf]
        %v4433 = vlaneseq
        %v4434 = vshrl.u32 %v4433, 7
        %v4435 = vsub.s32 0, %v4434
        %v4436 = vrot.slane %v4431, %v4435
        %v4437 = vlaneseq
        %v4438 = vshrl.u32 %v4437, 7
        %v4439 = vsub.s32 1, %v4438
        %v4440 = vrot.slane %v4431, %v4439
        %v4441 = vlaneseq
        %v4442 = vshrl.u32 %v4441, 7
        %v4443 = vsub.s32 2, %v4442
        %v4444 = vrot.slane %v4431, %v4443
        %v4445 = vlaneseq
        %v4446 = vshrl.u32 %v4445, 7
        %v4447 = vsub.s32 3, %v4446
        %v4448 = vrot.slane %v4431, %v4447
        %v4453 = vmul.f32 %v4423, %v4436
        %v4454 = vmul.f32 %v4424, %v4440
        %v4455 = vmul.f32 %v4425, %v4444
        %v4456 = vmul.f32 %v4426, %v4448
        %v4457 = vmul.f32 %v4427, %v4436
        %v4458 = vmul.f32 %v4428, %v4440
        %v4459 = vmul.f32 %v4429, %v4444
        %v4460 = vmul.f32 %v4430, %v4448
        %s4461 = scalar_lea.vmem [#allocation16], 4
        %v4462 = vld [vmem:[%s4461] sm:$0xf]
        %v4464 = vlaneseq
        %v4465 = vshrl.u32 %v4464, 7
        %v4466 = vsub.s32 0, %v4465
        %v4467 = vrot.slane %v4462, %v4466
        %v4468 = vlaneseq
        %v4469 = vshrl.u32 %v4468, 7
        %v4470 = vsub.s32 1, %v4469
        %v4471 = vrot.slane %v4462, %v4470
        %v4472 = vlaneseq
        %v4473 = vshrl.u32 %v4472, 7
        %v4474 = vsub.s32 2, %v4473
        %v4475 = vrot.slane %v4462, %v4474
        %v4476 = vlaneseq
        %v4477 = vshrl.u32 %v4476, 7
        %v4478 = vsub.s32 3, %v4477
        %v4479 = vrot.slane %v4462, %v4478
        %v4484 = vadd.f32 %v4453, %v4467
        %v4485 = vadd.f32 %v4454, %v4471
        %v4486 = vadd.f32 %v4455, %v4475
        %v4487 = vadd.f32 %v4456, %v4479
        %v4488 = vadd.f32 %v4457, %v4467
        %v4489 = vadd.f32 %v4458, %v4471
        %v4490 = vadd.f32 %v4459, %v4475
        %v4491 = vadd.f32 %v4460, %v4479
        %v4492 = vmax.f32 %v4484, 0.0
        %v4493 = vmax.f32 %v4485, 0.0
        %v4494 = vmax.f32 %v4486, 0.0
        %v4495 = vmax.f32 %v4487, 0.0
        %v4496 = vmax.f32 %v4488, 0.0
        %v4497 = vmax.f32 %v4489, 0.0
        %v4498 = vmax.f32 %v4490, 0.0
        %v4499 = vmax.f32 %v4491, 0.0
        %v4500 = vld [vmem:[#allocation14] sm:$0xff]
        %v4501 = vld [vmem:[#allocation14 + $0x8] sm:$0xff]
        %v4502 = vld [vmem:[#allocation14 + $0x10] sm:$0xff]
        %v4503 = vld [vmem:[#allocation14 + $0x18] sm:$0xff]
        %v4504 = vld [vmem:[#allocation14 + $0x20] sm:$0xff]
        %v4505 = vld [vmem:[#allocation14 + $0x28] sm:$0xff]
        %v4506 = vld [vmem:[#allocation14 + $0x30] sm:$0xff]
        %v4507 = vld [vmem:[#allocation14 + $0x38] sm:$0xff]
        %v4508 = vld [vmem:[#allocation14 + $0x40] sm:$0xff]
        %v4509 = vld [vmem:[#allocation14 + $0x48] sm:$0xff]
        %v4510 = vld [vmem:[#allocation14 + $0x50] sm:$0xff]
        %v4511 = vld [vmem:[#allocation14 + $0x58] sm:$0xff]
        %v4512 = vld [vmem:[#allocation14 + $0x60] sm:$0xff]
        %v4513 = vld [vmem:[#allocation14 + $0x68] sm:$0xff]
        %v4514 = vld [vmem:[#allocation14 + $0x70] sm:$0xff]
        %v4515 = vld [vmem:[#allocation14 + $0x78] sm:$0xff]
        %v4516 = vld [vmem:[#allocation14 + $0x80] sm:$0xff]
        %v4517 = vld [vmem:[#allocation14 + $0x88] sm:$0xff]
        %v4518 = vld [vmem:[#allocation14 + $0x90] sm:$0xff]
        %v4519 = vld [vmem:[#allocation14 + $0x98] sm:$0xff]
        %v4520 = vld [vmem:[#allocation14 + $0xa0] sm:$0xff]
        %v4521 = vld [vmem:[#allocation14 + $0xa8] sm:$0xff]
        %v4522 = vld [vmem:[#allocation14 + $0xb0] sm:$0xff]
        %v4523 = vld [vmem:[#allocation14 + $0xb8] sm:$0xff]
        %v4524 = vld [vmem:[#allocation14 + $0xc0] sm:$0xff]
        %v4525 = vld [vmem:[#allocation14 + $0xc8] sm:$0xff]
        %v4526 = vld [vmem:[#allocation14 + $0xd0] sm:$0xff]
        %v4527 = vld [vmem:[#allocation14 + $0xd8] sm:$0xff]
        %v4528 = vld [vmem:[#allocation14 + $0xe0] sm:$0xff]
        %v4529 = vld [vmem:[#allocation14 + $0xe8] sm:$0xff]
        %v4530 = vld [vmem:[#allocation14 + $0xf0] sm:$0xff]
        %v4531 = vld [vmem:[#allocation14 + $0xf8] sm:$0xff]
        %v4532 = vld [vmem:[#allocation14 + $0x100] sm:$0xff]
        %v4533 = vld [vmem:[#allocation14 + $0x108] sm:$0xff]
        %v4534 = vld [vmem:[#allocation14 + $0x110] sm:$0xff]
        %v4535 = vld [vmem:[#allocation14 + $0x118] sm:$0xff]
        %v4536 = vld [vmem:[#allocation14 + $0x120] sm:$0xff]
        %v4537 = vld [vmem:[#allocation14 + $0x128] sm:$0xff]
        %v4538 = vld [vmem:[#allocation14 + $0x130] sm:$0xff]
        %v4539 = vld [vmem:[#allocation14 + $0x138] sm:$0xff]
        %v4540 = vld [vmem:[#allocation14 + $0x140] sm:$0xff]
        %v4541 = vld [vmem:[#allocation14 + $0x148] sm:$0xff]
        %v4542 = vld [vmem:[#allocation14 + $0x150] sm:$0xff]
        %v4543 = vld [vmem:[#allocation14 + $0x158] sm:$0xff]
        %v4544 = vld [vmem:[#allocation14 + $0x160] sm:$0xff]
        %v4545 = vld [vmem:[#allocation14 + $0x168] sm:$0xff]
        %v4546 = vld [vmem:[#allocation14 + $0x170] sm:$0xff]
        %v4547 = vld [vmem:[#allocation14 + $0x178] sm:$0xff]
        %v4548 = vld [vmem:[#allocation14 + $0x180] sm:$0xff]
        %v4549 = vld [vmem:[#allocation14 + $0x188] sm:$0xff]
        %v4550 = vld [vmem:[#allocation14 + $0x190] sm:$0xff]
        %v4551 = vld [vmem:[#allocation14 + $0x198] sm:$0xff]
        %v4552 = vld [vmem:[#allocation14 + $0x1a0] sm:$0xff]
        %v4553 = vld [vmem:[#allocation14 + $0x1a8] sm:$0xff]
        %v4554 = vld [vmem:[#allocation14 + $0x1b0] sm:$0xff]
        %v4555 = vld [vmem:[#allocation14 + $0x1b8] sm:$0xff]
        %v4556 = vld [vmem:[#allocation14 + $0x1c0] sm:$0xff]
        %v4557 = vld [vmem:[#allocation14 + $0x1c8] sm:$0xff]
        %v4558 = vld [vmem:[#allocation14 + $0x1d0] sm:$0xff]
        %v4559 = vld [vmem:[#allocation14 + $0x1d8] sm:$0xff]
        %v4560 = vld [vmem:[#allocation14 + $0x1e0] sm:$0xff]
        %v4561 = vld [vmem:[#allocation14 + $0x1e8] sm:$0xff]
        %v4562 = vld [vmem:[#allocation14 + $0x1f0] sm:$0xff]
        %v4563 = vld [vmem:[#allocation14 + $0x1f8] sm:$0xff]
        %v4564 = vld [vmem:[#allocation14 + $0x200] sm:$0xff]
        %v4565 = vld [vmem:[#allocation14 + $0x208] sm:$0xff]
        %v4566 = vld [vmem:[#allocation14 + $0x210] sm:$0xff]
        %v4567 = vld [vmem:[#allocation14 + $0x218] sm:$0xff]
        %v4568 = vld [vmem:[#allocation14 + $0x220] sm:$0xff]
        %v4569 = vld [vmem:[#allocation14 + $0x228] sm:$0xff]
        %v4570 = vld [vmem:[#allocation14 + $0x230] sm:$0xff]
        %v4571 = vld [vmem:[#allocation14 + $0x238] sm:$0xff]
        %v4572 = vld [vmem:[#allocation14 + $0x240] sm:$0xff]
        %v4573 = vld [vmem:[#allocation14 + $0x248] sm:$0xff]
        %v4574 = vld [vmem:[#allocation14 + $0x250] sm:$0xff]
        %v4575 = vld [vmem:[#allocation14 + $0x258] sm:$0xff]
        %v4576 = vld [vmem:[#allocation14 + $0x260] sm:$0xff]
        %v4577 = vld [vmem:[#allocation14 + $0x268] sm:$0xff]
        %v4578 = vld [vmem:[#allocation14 + $0x270] sm:$0xff]
        %v4579 = vld [vmem:[#allocation14 + $0x278] sm:$0xff]
        %v4580 = vld [vmem:[#allocation14 + $0x280] sm:$0xff]
        %v4581 = vld [vmem:[#allocation14 + $0x288] sm:$0xff]
        %v4582 = vld [vmem:[#allocation14 + $0x290] sm:$0xff]
        %v4583 = vld [vmem:[#allocation14 + $0x298] sm:$0xff]
        %v4584 = vld [vmem:[#allocation14 + $0x2a0] sm:$0xff]
        %v4585 = vld [vmem:[#allocation14 + $0x2a8] sm:$0xff]
        %v4586 = vld [vmem:[#allocation14 + $0x2b0] sm:$0xff]
        %v4587 = vld [vmem:[#allocation14 + $0x2b8] sm:$0xff]
        %v4588 = vld [vmem:[#allocation14 + $0x2c0] sm:$0xff]
        %v4589 = vld [vmem:[#allocation14 + $0x2c8] sm:$0xff]
        %v4590 = vld [vmem:[#allocation14 + $0x2d0] sm:$0xff]
        %v4591 = vld [vmem:[#allocation14 + $0x2d8] sm:$0xff]
        %v4592 = vld [vmem:[#allocation14 + $0x2e0] sm:$0xff]
        %v4593 = vld [vmem:[#allocation14 + $0x2e8] sm:$0xff]
        %v4594 = vld [vmem:[#allocation14 + $0x2f0] sm:$0xff]
        %v4595 = vld [vmem:[#allocation14 + $0x2f8] sm:$0xff]
        %v4596 = vld [vmem:[#allocation14 + $0x300] sm:$0xff]
        %v4597 = vld [vmem:[#allocation14 + $0x308] sm:$0xff]
        %v4598 = vld [vmem:[#allocation14 + $0x310] sm:$0xff]
        %v4599 = vld [vmem:[#allocation14 + $0x318] sm:$0xff]
        %v4600 = vld [vmem:[#allocation14 + $0x320] sm:$0xff]
        %v4601 = vld [vmem:[#allocation14 + $0x328] sm:$0xff]
        %v4602 = vld [vmem:[#allocation14 + $0x330] sm:$0xff]
        %v4603 = vld [vmem:[#allocation14 + $0x338] sm:$0xff]
        %v4604 = vld [vmem:[#allocation14 + $0x340] sm:$0xff]
        %v4605 = vld [vmem:[#allocation14 + $0x348] sm:$0xff]
        %v4606 = vld [vmem:[#allocation14 + $0x350] sm:$0xff]
        %v4607 = vld [vmem:[#allocation14 + $0x358] sm:$0xff]
        %v4608 = vld [vmem:[#allocation14 + $0x360] sm:$0xff]
        %v4609 = vld [vmem:[#allocation14 + $0x368] sm:$0xff]
        %v4610 = vld [vmem:[#allocation14 + $0x370] sm:$0xff]
        %v4611 = vld [vmem:[#allocation14 + $0x378] sm:$0xff]
        %v4612 = vld [vmem:[#allocation14 + $0x380] sm:$0xff]
        %v4613 = vld [vmem:[#allocation14 + $0x388] sm:$0xff]
        %v4614 = vld [vmem:[#allocation14 + $0x390] sm:$0xff]
        %v4615 = vld [vmem:[#allocation14 + $0x398] sm:$0xff]
        %v4616 = vld [vmem:[#allocation14 + $0x3a0] sm:$0xff]
        %v4617 = vld [vmem:[#allocation14 + $0x3a8] sm:$0xff]
        %v4618 = vld [vmem:[#allocation14 + $0x3b0] sm:$0xff]
        %v4619 = vld [vmem:[#allocation14 + $0x3b8] sm:$0xff]
        %v4620 = vld [vmem:[#allocation14 + $0x3c0] sm:$0xff]
        %v4621 = vld [vmem:[#allocation14 + $0x3c8] sm:$0xff]
        %v4622 = vld [vmem:[#allocation14 + $0x3d0] sm:$0xff]
        %v4623 = vld [vmem:[#allocation14 + $0x3d8] sm:$0xff]
        %v4624 = vld [vmem:[#allocation14 + $0x3e0] sm:$0xff]
        %v4625 = vld [vmem:[#allocation14 + $0x3e8] sm:$0xff]
        %v4626 = vld [vmem:[#allocation14 + $0x3f0] sm:$0xff]
        %v4627 = vld [vmem:[#allocation14 + $0x3f8] sm:$0xff]
        %4628 = vmatprep.subr.mxu0 %v4501
        %4629 = vmatpush1.msra.mxu0 %v4500
        %4630 = vmatprep.subr.mxu0 %v4503
        %4631 = vmatpush1.msra.mxu0 %v4502
        %4632 = vmatprep.subr.mxu0 %v4505
        %4633 = vmatpush1.msra.mxu0 %v4504
        %4634 = vmatprep.subr.mxu0 %v4507
        %4635 = vmatpush1.msra.mxu0 %v4506
        %4636 = vmatprep.subr.mxu0 %v4509
        %4637 = vmatpush1.msra.mxu0 %v4508
        %4638 = vmatprep.subr.mxu0 %v4511
        %4639 = vmatpush1.msra.mxu0 %v4510
        %4640 = vmatprep.subr.mxu0 %v4513
        %4641 = vmatpush1.msra.mxu0 %v4512
        %4642 = vmatprep.subr.mxu0 %v4515
        %4643 = vmatpush1.msra.mxu0 %v4514
        %4644 = vmatprep.subr.mxu0 %v4517
        %4645 = vmatpush1.msra.mxu0 %v4516
        %4646 = vmatprep.subr.mxu0 %v4519
        %4647 = vmatpush1.msra.mxu0 %v4518
        %4648 = vmatprep.subr.mxu0 %v4521
        %4649 = vmatpush1.msra.mxu0 %v4520
        %4650 = vmatprep.subr.mxu0 %v4523
        %4651 = vmatpush1.msra.mxu0 %v4522
        %4652 = vmatprep.subr.mxu0 %v4525
        %4653 = vmatpush1.msra.mxu0 %v4524
        %4654 = vmatprep.subr.mxu0 %v4527
        %4655 = vmatpush1.msra.mxu0 %v4526
        %4656 = vmatprep.subr.mxu0 %v4529
        %4657 = vmatpush1.msra.mxu0 %v4528
        %4658 = vmatprep.subr.mxu0 %v4531
        %4659 = vmatpush1.msra.mxu0 %v4530
        %4660 = vmatprep.subr.mxu0 %v4533
        %4661 = vmatpush1.msra.mxu0 %v4532
        %4662 = vmatprep.subr.mxu0 %v4535
        %4663 = vmatpush1.msra.mxu0 %v4534
        %4664 = vmatprep.subr.mxu0 %v4537
        %4665 = vmatpush1.msra.mxu0 %v4536
        %4666 = vmatprep.subr.mxu0 %v4539
        %4667 = vmatpush1.msra.mxu0 %v4538
        %4668 = vmatprep.subr.mxu0 %v4541
        %4669 = vmatpush1.msra.mxu0 %v4540
        %4670 = vmatprep.subr.mxu0 %v4543
        %4671 = vmatpush1.msra.mxu0 %v4542
        %4672 = vmatprep.subr.mxu0 %v4545
        %4673 = vmatpush1.msra.mxu0 %v4544
        %4674 = vmatprep.subr.mxu0 %v4547
        %4675 = vmatpush1.msra.mxu0 %v4546
        %4676 = vmatprep.subr.mxu0 %v4549
        %4677 = vmatpush1.msra.mxu0 %v4548
        %4678 = vmatprep.subr.mxu0 %v4551
        %4679 = vmatpush1.msra.mxu0 %v4550
        %4680 = vmatprep.subr.mxu0 %v4553
        %4681 = vmatpush1.msra.mxu0 %v4552
        %4682 = vmatprep.subr.mxu0 %v4555
        %4683 = vmatpush1.msra.mxu0 %v4554
        %4684 = vmatprep.subr.mxu0 %v4557
        %4685 = vmatpush1.msra.mxu0 %v4556
        %4686 = vmatprep.subr.mxu0 %v4559
        %4687 = vmatpush1.msra.mxu0 %v4558
        %4688 = vmatprep.subr.mxu0 %v4561
        %4689 = vmatpush1.msra.mxu0 %v4560
        %4690 = vmatprep.subr.mxu0 %v4563
        %4691 = vmatpush1.msra.mxu0 %v4562
        %4692 = vmatprep.mubr.f32.mxu0 %v4493
        %4693 = vmatmul.mubr.f32.gmra.mrb[0].mxu0 %v4492
        %v4694 = vpop.f32.mrb[0].mxu0
        %v4695 = vadd.f32 0.0, %v4694
        %v4696 = vpop.f32.mrb[0].mxu0
        %v4697 = vadd.f32 0.0, %v4696
        %4698 = vmatprep.mubr.f32.mxu0 %v4497
        %4699 = vmatmul.mubr.f32.gmra.mrb[0].mxu0 %v4496
        %v4700 = vpop.f32.mrb[0].mxu0
        %v4701 = vadd.f32 0.0, %v4700
        %v4702 = vpop.f32.mrb[0].mxu0
        %v4703 = vadd.f32 0.0, %v4702
        %4704 = vdwg.mxu0
        %4705 = vmatprep.subr.mxu0 %v4565
        %4706 = vmatpush1.msra.mxu0 %v4564
        %4707 = vmatprep.subr.mxu0 %v4567
        %4708 = vmatpush1.msra.mxu0 %v4566
        %4709 = vmatprep.subr.mxu0 %v4569
        %4710 = vmatpush1.msra.mxu0 %v4568
        %4711 = vmatprep.subr.mxu0 %v4571
        %4712 = vmatpush1.msra.mxu0 %v4570
        %4713 = vmatprep.subr.mxu0 %v4573
        %4714 = vmatpush1.msra.mxu0 %v4572
        %4715 = vmatprep.subr.mxu0 %v4575
        %4716 = vmatpush1.msra.mxu0 %v4574
        %4717 = vmatprep.subr.mxu0 %v4577
        %4718 = vmatpush1.msra.mxu0 %v4576
        %4719 = vmatprep.subr.mxu0 %v4579
        %4720 = vmatpush1.msra.mxu0 %v4578
        %4721 = vmatprep.subr.mxu0 %v4581
        %4722 = vmatpush1.msra.mxu0 %v4580
        %4723 = vmatprep.subr.mxu0 %v4583
        %4724 = vmatpush1.msra.mxu0 %v4582
        %4725 = vmatprep.subr.mxu0 %v4585
        %4726 = vmatpush1.msra.mxu0 %v4584
        %4727 = vmatprep.subr.mxu0 %v4587
        %4728 = vmatpush1.msra.mxu0 %v4586
        %4729 = vmatprep.subr.mxu0 %v4589
        %4730 = vmatpush1.msra.mxu0 %v4588
        %4731 = vmatprep.subr.mxu0 %v4591
        %4732 = vmatpush1.msra.mxu0 %v4590
        %4733 = vmatprep.subr.mxu0 %v4593
        %4734 = vmatpush1.msra.mxu0 %v4592
        %4735 = vmatprep.subr.mxu0 %v4595
        %4736 = vmatpush1.msra.mxu0 %v4594
        %4737 = vmatprep.subr.mxu0 %v4597
        %4738 = vmatpush1.msra.mxu0 %v4596
        %4739 = vmatprep.subr.mxu0 %v4599
        %4740 = vmatpush1.msra.mxu0 %v4598
        %4741 = vmatprep.subr.mxu0 %v4601
        %4742 = vmatpush1.msra.mxu0 %v4600
        %4743 = vmatprep.subr.mxu0 %v4603
        %4744 = vmatpush1.msra.mxu0 %v4602
        %4745 = vmatprep.subr.mxu0 %v4605
        %4746 = vmatpush1.msra.mxu0 %v4604
        %4747 = vmatprep.subr.mxu0 %v4607
        %4748 = vmatpush1.msra.mxu0 %v4606
        %4749 = vmatprep.subr.mxu0 %v4609
        %4750 = vmatpush1.msra.mxu0 %v4608
        %4751 = vmatprep.subr.mxu0 %v4611
        %4752 = vmatpush1.msra.mxu0 %v4610
        %4753 = vmatprep.subr.mxu0 %v4613
        %4754 = vmatpush1.msra.mxu0 %v4612
        %4755 = vmatprep.subr.mxu0 %v4615
        %4756 = vmatpush1.msra.mxu0 %v4614
        %4757 = vmatprep.subr.mxu0 %v4617
        %4758 = vmatpush1.msra.mxu0 %v4616
        %4759 = vmatprep.subr.mxu0 %v4619
        %4760 = vmatpush1.msra.mxu0 %v4618
        %4761 = vmatprep.subr.mxu0 %v4621
        %4762 = vmatpush1.msra.mxu0 %v4620
        %4763 = vmatprep.subr.mxu0 %v4623
        %4764 = vmatpush1.msra.mxu0 %v4622
        %4765 = vmatprep.subr.mxu0 %v4625
        %4766 = vmatpush1.msra.mxu0 %v4624
        %4767 = vmatprep.subr.mxu0 %v4627
        %4768 = vmatpush1.msra.mxu0 %v4626
        %4769 = vmatprep.mubr.f32.mxu0 %v4495
        %4770 = vmatmul.mubr.f32.gmra.mrb[0].mxu0 %v4494
        %v4771 = vpop.f32.mrb[0].mxu0
        %v4772 = vadd.f32 %v4695, %v4771
        %v4773 = vpop.f32.mrb[0].mxu0
        %v4774 = vadd.f32 %v4697, %v4773
        %4775 = vmatprep.mubr.f32.mxu0 %v4499
        %4776 = vmatmul.mubr.f32.gmra.mrb[0].mxu0 %v4498
        %v4777 = vpop.f32.mrb[0].mxu0
        %v4778 = vadd.f32 %v4701, %v4777
        %v4779 = vpop.f32.mrb[0].mxu0
        %v4780 = vadd.f32 %v4703, %v4779
        %4781 = vdwg.mxu0
        %s4782 = scalar_lea.vmem [#allocation14], 1024
        %v4783 = vld [vmem:[%s4782] sm:$0xff]
        %v4784 = vld [vmem:[%s4782 + $0x8] sm:$0xff]
        %v4785 = vld [vmem:[%s4782 + $0x10] sm:$0xff]
        %v4786 = vld [vmem:[%s4782 + $0x18] sm:$0xff]
        %v4787 = vld [vmem:[%s4782 + $0x20] sm:$0xff]
        %v4788 = vld [vmem:[%s4782 + $0x28] sm:$0xff]
        %v4789 = vld [vmem:[%s4782 + $0x30] sm:$0xff]
        %v4790 = vld [vmem:[%s4782 + $0x38] sm:$0xff]
        %v4791 = vld [vmem:[%s4782 + $0x40] sm:$0xff]
        %v4792 = vld [vmem:[%s4782 + $0x48] sm:$0xff]
        %v4793 = vld [vmem:[%s4782 + $0x50] sm:$0xff]
        %v4794 = vld [vmem:[%s4782 + $0x58] sm:$0xff]
        %v4795 = vld [vmem:[%s4782 + $0x60] sm:$0xff]
        %v4796 = vld [vmem:[%s4782 + $0x68] sm:$0xff]
        %v4797 = vld [vmem:[%s4782 + $0x70] sm:$0xff]
        %v4798 = vld [vmem:[%s4782 + $0x78] sm:$0xff]
        %v4799 = vld [vmem:[%s4782 + $0x80] sm:$0xff]
        %v4800 = vld [vmem:[%s4782 + $0x88] sm:$0xff]
        %v4801 = vld [vmem:[%s4782 + $0x90] sm:$0xff]
        %v4802 = vld [vmem:[%s4782 + $0x98] sm:$0xff]
        %v4803 = vld [vmem:[%s4782 + $0xa0] sm:$0xff]
        %v4804 = vld [vmem:[%s4782 + $0xa8] sm:$0xff]
        %v4805 = vld [vmem:[%s4782 + $0xb0] sm:$0xff]
        %v4806 = vld [vmem:[%s4782 + $0xb8] sm:$0xff]
        %v4807 = vld [vmem:[%s4782 + $0xc0] sm:$0xff]
        %v4808 = vld [vmem:[%s4782 + $0xc8] sm:$0xff]
        %v4809 = vld [vmem:[%s4782 + $0xd0] sm:$0xff]
        %v4810 = vld [vmem:[%s4782 + $0xd8] sm:$0xff]
        %v4811 = vld [vmem:[%s4782 + $0xe0] sm:$0xff]
        %v4812 = vld [vmem:[%s4782 + $0xe8] sm:$0xff]
        %v4813 = vld [vmem:[%s4782 + $0xf0] sm:$0xff]
        %v4814 = vld [vmem:[%s4782 + $0xf8] sm:$0xff]
        %v4815 = vld [vmem:[%s4782 + $0x100] sm:$0xff]
        %v4816 = vld [vmem:[%s4782 + $0x108] sm:$0xff]
        %v4817 = vld [vmem:[%s4782 + $0x110] sm:$0xff]
        %v4818 = vld [vmem:[%s4782 + $0x118] sm:$0xff]
        %v4819 = vld [vmem:[%s4782 + $0x120] sm:$0xff]
        %v4820 = vld [vmem:[%s4782 + $0x128] sm:$0xff]
        %v4821 = vld [vmem:[%s4782 + $0x130] sm:$0xff]
        %v4822 = vld [vmem:[%s4782 + $0x138] sm:$0xff]
        %v4823 = vld [vmem:[%s4782 + $0x140] sm:$0xff]
        %v4824 = vld [vmem:[%s4782 + $0x148] sm:$0xff]
        %v4825 = vld [vmem:[%s4782 + $0x150] sm:$0xff]
        %v4826 = vld [vmem:[%s4782 + $0x158] sm:$0xff]
        %v4827 = vld [vmem:[%s4782 + $0x160] sm:$0xff]
        %v4828 = vld [vmem:[%s4782 + $0x168] sm:$0xff]
        %v4829 = vld [vmem:[%s4782 + $0x170] sm:$0xff]
        %v4830 = vld [vmem:[%s4782 + $0x178] sm:$0xff]
        %v4831 = vld [vmem:[%s4782 + $0x180] sm:$0xff]
        %v4832 = vld [vmem:[%s4782 + $0x188] sm:$0xff]
        %v4833 = vld [vmem:[%s4782 + $0x190] sm:$0xff]
        %v4834 = vld [vmem:[%s4782 + $0x198] sm:$0xff]
        %v4835 = vld [vmem:[%s4782 + $0x1a0] sm:$0xff]
        %v4836 = vld [vmem:[%s4782 + $0x1a8] sm:$0xff]
        %v4837 = vld [vmem:[%s4782 + $0x1b0] sm:$0xff]
        %v4838 = vld [vmem:[%s4782 + $0x1b8] sm:$0xff]
        %v4839 = vld [vmem:[%s4782 + $0x1c0] sm:$0xff]
        %v4840 = vld [vmem:[%s4782 + $0x1c8] sm:$0xff]
        %v4841 = vld [vmem:[%s4782 + $0x1d0] sm:$0xff]
        %v4842 = vld [vmem:[%s4782 + $0x1d8] sm:$0xff]
        %v4843 = vld [vmem:[%s4782 + $0x1e0] sm:$0xff]
        %v4844 = vld [vmem:[%s4782 + $0x1e8] sm:$0xff]
        %v4845 = vld [vmem:[%s4782 + $0x1f0] sm:$0xff]
        %v4846 = vld [vmem:[%s4782 + $0x1f8] sm:$0xff]
        %v4847 = vld [vmem:[%s4782 + $0x200] sm:$0xff]
        %v4848 = vld [vmem:[%s4782 + $0x208] sm:$0xff]
        %v4849 = vld [vmem:[%s4782 + $0x210] sm:$0xff]
        %v4850 = vld [vmem:[%s4782 + $0x218] sm:$0xff]
        %v4851 = vld [vmem:[%s4782 + $0x220] sm:$0xff]
        %v4852 = vld [vmem:[%s4782 + $0x228] sm:$0xff]
        %v4853 = vld [vmem:[%s4782 + $0x230] sm:$0xff]
        %v4854 = vld [vmem:[%s4782 + $0x238] sm:$0xff]
        %v4855 = vld [vmem:[%s4782 + $0x240] sm:$0xff]
        %v4856 = vld [vmem:[%s4782 + $0x248] sm:$0xff]
        %v4857 = vld [vmem:[%s4782 + $0x250] sm:$0xff]
        %v4858 = vld [vmem:[%s4782 + $0x258] sm:$0xff]
        %v4859 = vld [vmem:[%s4782 + $0x260] sm:$0xff]
        %v4860 = vld [vmem:[%s4782 + $0x268] sm:$0xff]
        %v4861 = vld [vmem:[%s4782 + $0x270] sm:$0xff]
        %v4862 = vld [vmem:[%s4782 + $0x278] sm:$0xff]
        %v4863 = vld [vmem:[%s4782 + $0x280] sm:$0xff]
        %v4864 = vld [vmem:[%s4782 + $0x288] sm:$0xff]
        %v4865 = vld [vmem:[%s4782 + $0x290] sm:$0xff]
        %v4866 = vld [vmem:[%s4782 + $0x298] sm:$0xff]
        %v4867 = vld [vmem:[%s4782 + $0x2a0] sm:$0xff]
        %v4868 = vld [vmem:[%s4782 + $0x2a8] sm:$0xff]
        %v4869 = vld [vmem:[%s4782 + $0x2b0] sm:$0xff]
        %v4870 = vld [vmem:[%s4782 + $0x2b8] sm:$0xff]
        %v4871 = vld [vmem:[%s4782 + $0x2c0] sm:$0xff]
        %v4872 = vld [vmem:[%s4782 + $0x2c8] sm:$0xff]
        %v4873 = vld [vmem:[%s4782 + $0x2d0] sm:$0xff]
        %v4874 = vld [vmem:[%s4782 + $0x2d8] sm:$0xff]
        %v4875 = vld [vmem:[%s4782 + $0x2e0] sm:$0xff]
        %v4876 = vld [vmem:[%s4782 + $0x2e8] sm:$0xff]
        %v4877 = vld [vmem:[%s4782 + $0x2f0] sm:$0xff]
        %v4878 = vld [vmem:[%s4782 + $0x2f8] sm:$0xff]
        %v4879 = vld [vmem:[%s4782 + $0x300] sm:$0xff]
        %v4880 = vld [vmem:[%s4782 + $0x308] sm:$0xff]
        %v4881 = vld [vmem:[%s4782 + $0x310] sm:$0xff]
        %v4882 = vld [vmem:[%s4782 + $0x318] sm:$0xff]
        %v4883 = vld [vmem:[%s4782 + $0x320] sm:$0xff]
        %v4884 = vld [vmem:[%s4782 + $0x328] sm:$0xff]
        %v4885 = vld [vmem:[%s4782 + $0x330] sm:$0xff]
        %v4886 = vld [vmem:[%s4782 + $0x338] sm:$0xff]
        %v4887 = vld [vmem:[%s4782 + $0x340] sm:$0xff]
        %v4888 = vld [vmem:[%s4782 + $0x348] sm:$0xff]
        %v4889 = vld [vmem:[%s4782 + $0x350] sm:$0xff]
        %v4890 = vld [vmem:[%s4782 + $0x358] sm:$0xff]
        %v4891 = vld [vmem:[%s4782 + $0x360] sm:$0xff]
        %v4892 = vld [vmem:[%s4782 + $0x368] sm:$0xff]
        %v4893 = vld [vmem:[%s4782 + $0x370] sm:$0xff]
        %v4894 = vld [vmem:[%s4782 + $0x378] sm:$0xff]
        %v4895 = vld [vmem:[%s4782 + $0x380] sm:$0xff]
        %v4896 = vld [vmem:[%s4782 + $0x388] sm:$0xff]
        %v4897 = vld [vmem:[%s4782 + $0x390] sm:$0xff]
        %v4898 = vld [vmem:[%s4782 + $0x398] sm:$0xff]
        %v4899 = vld [vmem:[%s4782 + $0x3a0] sm:$0xff]
        %v4900 = vld [vmem:[%s4782 + $0x3a8] sm:$0xff]
        %v4901 = vld [vmem:[%s4782 + $0x3b0] sm:$0xff]
        %v4902 = vld [vmem:[%s4782 + $0x3b8] sm:$0xff]
        %v4903 = vld [vmem:[%s4782 + $0x3c0] sm:$0xff]
        %v4904 = vld [vmem:[%s4782 + $0x3c8] sm:$0xff]
        %v4905 = vld [vmem:[%s4782 + $0x3d0] sm:$0xff]
        %v4906 = vld [vmem:[%s4782 + $0x3d8] sm:$0xff]
        %v4907 = vld [vmem:[%s4782 + $0x3e0] sm:$0xff]
        %v4908 = vld [vmem:[%s4782 + $0x3e8] sm:$0xff]
        %v4909 = vld [vmem:[%s4782 + $0x3f0] sm:$0xff]
        %v4910 = vld [vmem:[%s4782 + $0x3f8] sm:$0xff]
        %4911 = vmatprep.subr.mxu0 %v4784
        %4912 = vmatpush1.msra.mxu0 %v4783
        %4913 = vmatprep.subr.mxu0 %v4786
        %4914 = vmatpush1.msra.mxu0 %v4785
        %4915 = vmatprep.subr.mxu0 %v4788
        %4916 = vmatpush1.msra.mxu0 %v4787
        %4917 = vmatprep.subr.mxu0 %v4790
        %4918 = vmatpush1.msra.mxu0 %v4789
        %4919 = vmatprep.subr.mxu0 %v4792
        %4920 = vmatpush1.msra.mxu0 %v4791
        %4921 = vmatprep.subr.mxu0 %v4794
        %4922 = vmatpush1.msra.mxu0 %v4793
        %4923 = vmatprep.subr.mxu0 %v4796
        %4924 = vmatpush1.msra.mxu0 %v4795
        %4925 = vmatprep.subr.mxu0 %v4798
        %4926 = vmatpush1.msra.mxu0 %v4797
        %4927 = vmatprep.subr.mxu0 %v4800
        %4928 = vmatpush1.msra.mxu0 %v4799
        %4929 = vmatprep.subr.mxu0 %v4802
        %4930 = vmatpush1.msra.mxu0 %v4801
        %4931 = vmatprep.subr.mxu0 %v4804
        %4932 = vmatpush1.msra.mxu0 %v4803
        %4933 = vmatprep.subr.mxu0 %v4806
        %4934 = vmatpush1.msra.mxu0 %v4805
        %4935 = vmatprep.subr.mxu0 %v4808
        %4936 = vmatpush1.msra.mxu0 %v4807
        %4937 = vmatprep.subr.mxu0 %v4810
        %4938 = vmatpush1.msra.mxu0 %v4809
        %4939 = vmatprep.subr.mxu0 %v4812
        %4940 = vmatpush1.msra.mxu0 %v4811
        %4941 = vmatprep.subr.mxu0 %v4814
        %4942 = vmatpush1.msra.mxu0 %v4813
        %4943 = vmatprep.subr.mxu0 %v4816
        %4944 = vmatpush1.msra.mxu0 %v4815
        %4945 = vmatprep.subr.mxu0 %v4818
        %4946 = vmatpush1.msra.mxu0 %v4817
        %4947 = vmatprep.subr.mxu0 %v4820
        %4948 = vmatpush1.msra.mxu0 %v4819
        %4949 = vmatprep.subr.mxu0 %v4822
        %4950 = vmatpush1.msra.mxu0 %v4821
        %4951 = vmatprep.subr.mxu0 %v4824
        %4952 = vmatpush1.msra.mxu0 %v4823
        %4953 = vmatprep.subr.mxu0 %v4826
        %4954 = vmatpush1.msra.mxu0 %v4825
        %4955 = vmatprep.subr.mxu0 %v4828
        %4956 = vmatpush1.msra.mxu0 %v4827
        %4957 = vmatprep.subr.mxu0 %v4830
        %4958 = vmatpush1.msra.mxu0 %v4829
        %4959 = vmatprep.subr.mxu0 %v4832
        %4960 = vmatpush1.msra.mxu0 %v4831
        %4961 = vmatprep.subr.mxu0 %v4834
        %4962 = vmatpush1.msra.mxu0 %v4833
        %4963 = vmatprep.subr.mxu0 %v4836
        %4964 = vmatpush1.msra.mxu0 %v4835
        %4965 = vmatprep.subr.mxu0 %v4838
        %4966 = vmatpush1.msra.mxu0 %v4837
        %4967 = vmatprep.subr.mxu0 %v4840
        %4968 = vmatpush1.msra.mxu0 %v4839
        %4969 = vmatprep.subr.mxu0 %v4842
        %4970 = vmatpush1.msra.mxu0 %v4841
        %4971 = vmatprep.subr.mxu0 %v4844
        %4972 = vmatpush1.msra.mxu0 %v4843
        %4973 = vmatprep.subr.mxu0 %v4846
        %4974 = vmatpush1.msra.mxu0 %v4845
        %4975 = vmatprep.mubr.f32.mxu0 %v4493
        %4976 = vmatmul.mubr.f32.gmra.mrb[0].mxu0 %v4492
        %v4977 = vpop.f32.mrb[0].mxu0
        %v4978 = vadd.f32 0.0, %v4977
        %v4979 = vpop.f32.mrb[0].mxu0
        %v4980 = vadd.f32 0.0, %v4979
        %4981 = vmatprep.mubr.f32.mxu0 %v4497
        %4982 = vmatmul.mubr.f32.gmra.mrb[0].mxu0 %v4496
        %v4983 = vpop.f32.mrb[0].mxu0
        %v4984 = vadd.f32 0.0, %v4983
        %v4985 = vpop.f32.mrb[0].mxu0
        %v4986 = vadd.f32 0.0, %v4985
        %4987 = vdwg.mxu0
        %4988 = vmatprep.subr.mxu0 %v4848
        %4989 = vmatpush1.msra.mxu0 %v4847
        %4990 = vmatprep.subr.mxu0 %v4850
        %4991 = vmatpush1.msra.mxu0 %v4849
        %4992 = vmatprep.subr.mxu0 %v4852
        %4993 = vmatpush1.msra.mxu0 %v4851
        %4994 = vmatprep.subr.mxu0 %v4854
        %4995 = vmatpush1.msra.mxu0 %v4853
        %4996 = vmatprep.subr.mxu0 %v4856
        %4997 = vmatpush1.msra.mxu0 %v4855
        %4998 = vmatprep.subr.mxu0 %v4858
        %4999 = vmatpush1.msra.mxu0 %v4857
        %5000 = vmatprep.subr.mxu0 %v4860
        %5001 = vmatpush1.msra.mxu0 %v4859
        %5002 = vmatprep.subr.mxu0 %v4862
        %5003 = vmatpush1.msra.mxu0 %v4861
        %5004 = vmatprep.subr.mxu0 %v4864
        %5005 = vmatpush1.msra.mxu0 %v4863
        %5006 = vmatprep.subr.mxu0 %v4866
        %5007 = vmatpush1.msra.mxu0 %v4865
        %5008 = vmatprep.subr.mxu0 %v4868
        %5009 = vmatpush1.msra.mxu0 %v4867
        %5010 = vmatprep.subr.mxu0 %v4870
        %5011 = vmatpush1.msra.mxu0 %v4869
        %5012 = vmatprep.subr.mxu0 %v4872
        %5013 = vmatpush1.msra.mxu0 %v4871
        %5014 = vmatprep.subr.mxu0 %v4874
        %5015 = vmatpush1.msra.mxu0 %v4873
        %5016 = vmatprep.subr.mxu0 %v4876
        %5017 = vmatpush1.msra.mxu0 %v4875
        %5018 = vmatprep.subr.mxu0 %v4878
        %5019 = vmatpush1.msra.mxu0 %v4877
        %5020 = vmatprep.subr.mxu0 %v4880
        %5021 = vmatpush1.msra.mxu0 %v4879
        %5022 = vmatprep.subr.mxu0 %v4882
        %5023 = vmatpush1.msra.mxu0 %v4881
        %5024 = vmatprep.subr.mxu0 %v4884
        %5025 = vmatpush1.msra.mxu0 %v4883
        %5026 = vmatprep.subr.mxu0 %v4886
        %5027 = vmatpush1.msra.mxu0 %v4885
        %5028 = vmatprep.subr.mxu0 %v4888
        %5029 = vmatpush1.msra.mxu0 %v4887
        %5030 = vmatprep.subr.mxu0 %v4890
        %5031 = vmatpush1.msra.mxu0 %v4889
        %5032 = vmatprep.subr.mxu0 %v4892
        %5033 = vmatpush1.msra.mxu0 %v4891
        %5034 = vmatprep.subr.mxu0 %v4894
        %5035 = vmatpush1.msra.mxu0 %v4893
        %5036 = vmatprep.subr.mxu0 %v4896
        %5037 = vmatpush1.msra.mxu0 %v4895
        %5038 = vmatprep.subr.mxu0 %v4898
        %5039 = vmatpush1.msra.mxu0 %v4897
        %5040 = vmatprep.subr.mxu0 %v4900
        %5041 = vmatpush1.msra.mxu0 %v4899
        %5042 = vmatprep.subr.mxu0 %v4902
        %5043 = vmatpush1.msra.mxu0 %v4901
        %5044 = vmatprep.subr.mxu0 %v4904
        %5045 = vmatpush1.msra.mxu0 %v4903
        %5046 = vmatprep.subr.mxu0 %v4906
        %5047 = vmatpush1.msra.mxu0 %v4905
        %5048 = vmatprep.subr.mxu0 %v4908
        %5049 = vmatpush1.msra.mxu0 %v4907
        %5050 = vmatprep.subr.mxu0 %v4910
        %5051 = vmatpush1.msra.mxu0 %v4909
        %5052 = vmatprep.mubr.f32.mxu0 %v4495
        %5053 = vmatmul.mubr.f32.gmra.mrb[0].mxu0 %v4494
        %v5054 = vpop.f32.mrb[0].mxu0
        %v5055 = vadd.f32 %v4978, %v5054
        %v5056 = vpop.f32.mrb[0].mxu0
        %v5057 = vadd.f32 %v4980, %v5056
        %5058 = vmatprep.mubr.f32.mxu0 %v4499
        %5059 = vmatmul.mubr.f32.gmra.mrb[0].mxu0 %v4498
        %v5060 = vpop.f32.mrb[0].mxu0
        %v5061 = vadd.f32 %v4984, %v5060
        %v5062 = vpop.f32.mrb[0].mxu0
        %v5063 = vadd.f32 %v4986, %v5062
        %5064 = vdwg.mxu0
        %v5065 = vmax.f32 %v4772, %v5055
        %v5066 = vmax.f32 %v4774, %v5057
        %v5067 = vmax.f32 %v4778, %v5061
        %v5068 = vmax.f32 %v4780, %v5063
        %v5069 = vld [vmem:[#allocation17] sm:$0xff]
        %v5071 = vsel %vm3656, %v5069, 0
        %5073 = vmatprep.subr.mxu0 %v5066
        %5074 = vmatpush1.msra.mxu0 %v5065
        %5075 = vmatprep.subr.mxu0 %v5068
        %5076 = vmatpush1.msra.mxu0 %v5067
        %5077 = vmatprep.subr.mxu0 0.0
        %5078 = vmatpush1.msra.mxu0 0.0
        %5079 = vmatprep.subr.mxu0 0.0
        %5080 = vmatpush1.msra.mxu0 0.0
        %5081 = vmatprep.subr.mxu0 0.0
        %5082 = vmatpush1.msra.mxu0 0.0
        %5083 = vmatprep.subr.mxu0 0.0
        %5084 = vmatpush1.msra.mxu0 0.0
        %5085 = vmatprep.subr.mxu0 0.0
        %5086 = vmatpush1.msra.mxu0 0.0
        %5087 = vmatprep.subr.mxu0 0.0
        %5088 = vmatpush1.msra.mxu0 0.0
        %5089 = vmatprep.subr.mxu0 0.0
        %5090 = vmatpush1.msra.mxu0 0.0
        %5091 = vmatprep.subr.mxu0 0.0
        %5092 = vmatpush1.msra.mxu0 0.0
        %5093 = vmatprep.subr.mxu0 0.0
        %5094 = vmatpush1.msra.mxu0 0.0
        %5095 = vmatprep.subr.mxu0 0.0
        %5096 = vmatpush1.msra.mxu0 0.0
        %5097 = vmatprep.subr.mxu0 0.0
        %5098 = vmatpush1.msra.mxu0 0.0
        %5099 = vmatprep.subr.mxu0 0.0
        %5100 = vmatpush1.msra.mxu0 0.0
        %5101 = vmatprep.subr.mxu0 0.0
        %5102 = vmatpush1.msra.mxu0 0.0
        %5103 = vmatprep.subr.mxu0 0.0
        %5104 = vmatpush1.msra.mxu0 0.0
        %5105 = vmatprep.subr.mxu0 0.0
        %5106 = vmatpush1.msra.mxu0 0.0
        %5107 = vmatprep.subr.mxu0 0.0
        %5108 = vmatpush1.msra.mxu0 0.0
        %5109 = vmatprep.subr.mxu0 0.0
        %5110 = vmatpush1.msra.mxu0 0.0
        %5111 = vmatprep.subr.mxu0 0.0
        %5112 = vmatpush1.msra.mxu0 0.0
        %5113 = vmatprep.subr.mxu0 0.0
        %5114 = vmatpush1.msra.mxu0 0.0
        %5115 = vmatprep.subr.mxu0 0.0
        %5116 = vmatpush1.msra.mxu0 0.0
        %5117 = vmatprep.subr.mxu0 0.0
        %5118 = vmatpush1.msra.mxu0 0.0
        %5119 = vmatprep.subr.mxu0 0.0
        %5120 = vmatpush1.msra.mxu0 0.0
        %5121 = vmatprep.subr.mxu0 0.0
        %5122 = vmatpush1.msra.mxu0 0.0
        %5123 = vmatprep.subr.mxu0 0.0
        %5124 = vmatpush1.msra.mxu0 0.0
        %5125 = vmatprep.subr.mxu0 0.0
        %5126 = vmatpush1.msra.mxu0 0.0
        %5127 = vmatprep.subr.mxu0 0.0
        %5128 = vmatpush1.msra.mxu0 0.0
        %5129 = vmatprep.subr.mxu0 0.0
        %5130 = vmatpush1.msra.mxu0 0.0
        %5131 = vmatprep.subr.mxu0 0.0
        %5132 = vmatpush1.msra.mxu0 0.0
        %5133 = vmatprep.subr.mxu0 0.0
        %5134 = vmatpush1.msra.mxu0 0.0
        %5135 = vmatprep.subr.mxu0 0.0
        %5136 = vmatpush1.msra.mxu0 0.0
        %5137 = vmatprep.mubr.f32.mxu0 0.0
        %5138 = vmatmul.mubr.f32.gmra.mrb[0].mxu0 %v5071
        %v5139 = vpop.f32.mrb[0].mxu0
        %v5140 = vadd.f32 0.0, %v5139
        %v5141 = vpop.f32.mrb[0].mxu0
        %v5142 = vadd.f32 0.0, %v5141
        %5143 = vdwg.mxu0
        %s5144 = scalar_lea.vmem [#allocation17], 8
        %v5145 = vld [vmem:[%s5144] sm:$0xff]
        %v5147 = vsel %vm3656, %v5145, 0
        %5149 = vmatprep.subr.mxu0 %v5066
        %5150 = vmatpush1.msra.mxu0 %v5065
        %5151 = vmatprep.subr.mxu0 %v5068
        %5152 = vmatpush1.msra.mxu0 %v5067
        %5153 = vmatprep.subr.mxu0 0.0
        %5154 = vmatpush1.msra.mxu0 0.0
        %5155 = vmatprep.subr.mxu0 0.0
        %5156 = vmatpush1.msra.mxu0 0.0
        %5157 = vmatprep.subr.mxu0 0.0
        %5158 = vmatpush1.msra.mxu0 0.0
        %5159 = vmatprep.subr.mxu0 0.0
        %5160 = vmatpush1.msra.mxu0 0.0
        %5161 = vmatprep.subr.mxu0 0.0
        %5162 = vmatpush1.msra.mxu0 0.0
        %5163 = vmatprep.subr.mxu0 0.0
        %5164 = vmatpush1.msra.mxu0 0.0
        %5165 = vmatprep.subr.mxu0 0.0
        %5166 = vmatpush1.msra.mxu0 0.0
        %5167 = vmatprep.subr.mxu0 0.0
        %5168 = vmatpush1.msra.mxu0 0.0
        %5169 = vmatprep.subr.mxu0 0.0
        %5170 = vmatpush1.msra.mxu0 0.0
        %5171 = vmatprep.subr.mxu0 0.0
        %5172 = vmatpush1.msra.mxu0 0.0
        %5173 = vmatprep.subr.mxu0 0.0
        %5174 = vmatpush1.msra.mxu0 0.0
        %5175 = vmatprep.subr.mxu0 0.0
        %5176 = vmatpush1.msra.mxu0 0.0
        %5177 = vmatprep.subr.mxu0 0.0
        %5178 = vmatpush1.msra.mxu0 0.0
        %5179 = vmatprep.subr.mxu0 0.0
        %5180 = vmatpush1.msra.mxu0 0.0
        %5181 = vmatprep.subr.mxu0 0.0
        %5182 = vmatpush1.msra.mxu0 0.0
        %5183 = vmatprep.subr.mxu0 0.0
        %5184 = vmatpush1.msra.mxu0 0.0
        %5185 = vmatprep.subr.mxu0 0.0
        %5186 = vmatpush1.msra.mxu0 0.0
        %5187 = vmatprep.subr.mxu0 0.0
        %5188 = vmatpush1.msra.mxu0 0.0
        %5189 = vmatprep.subr.mxu0 0.0
        %5190 = vmatpush1.msra.mxu0 0.0
        %5191 = vmatprep.subr.mxu0 0.0
        %5192 = vmatpush1.msra.mxu0 0.0
        %5193 = vmatprep.subr.mxu0 0.0
        %5194 = vmatpush1.msra.mxu0 0.0
        %5195 = vmatprep.subr.mxu0 0.0
        %5196 = vmatpush1.msra.mxu0 0.0
        %5197 = vmatprep.subr.mxu0 0.0
        %5198 = vmatpush1.msra.mxu0 0.0
        %5199 = vmatprep.subr.mxu0 0.0
        %5200 = vmatpush1.msra.mxu0 0.0
        %5201 = vmatprep.subr.mxu0 0.0
        %5202 = vmatpush1.msra.mxu0 0.0
        %5203 = vmatprep.subr.mxu0 0.0
        %5204 = vmatpush1.msra.mxu0 0.0
        %5205 = vmatprep.subr.mxu0 0.0
        %5206 = vmatpush1.msra.mxu0 0.0
        %5207 = vmatprep.subr.mxu0 0.0
        %5208 = vmatpush1.msra.mxu0 0.0
        %5209 = vmatprep.subr.mxu0 0.0
        %5210 = vmatpush1.msra.mxu0 0.0
        %5211 = vmatprep.subr.mxu0 0.0
        %5212 = vmatpush1.msra.mxu0 0.0
        %5213 = vmatprep.mubr.f32.mxu0 0.0
        %5214 = vmatmul.mubr.f32.gmra.mrb[0].mxu0 %v5147
        %v5215 = vpop.f32.mrb[0].mxu0
        %v5216 = vadd.f32 0.0, %v5215
        %v5217 = vpop.f32.mrb[0].mxu0
        %v5218 = vadd.f32 0.0, %v5217
        %5219 = vdwg.mxu0
        %v5220 = vmax.f32 %v5140, %v5216
        %v5221 = vmax.f32 %v5142, %v5218
        %v5222 = vld [vmem:[#allocation20] sm:$0xff]
        %v5223 = vld [vmem:[#allocation19] sm:$0xff]
        %v5224 = vld [vmem:[#allocation19 + $0x8] sm:$0xff]
        %v5225 = vld [vmem:[#allocation19 + $0x10] sm:$0xff]
        %v5226 = vld [vmem:[#allocation19 + $0x18] sm:$0xff]
        %v5227 = vld [vmem:[#allocation19 + $0x20] sm:$0xff]
        %v5228 = vld [vmem:[#allocation19 + $0x28] sm:$0xff]
        %v5229 = vld [vmem:[#allocation19 + $0x30] sm:$0xff]
        %v5230 = vld [vmem:[#allocation19 + $0x38] sm:$0xff]
        %v5231 = vld [vmem:[#allocation19 + $0x40] sm:$0xff]
        %v5232 = vld [vmem:[#allocation19 + $0x48] sm:$0xff]
        %v5233 = vld [vmem:[#allocation19 + $0x50] sm:$0xff]
        %v5234 = vld [vmem:[#allocation19 + $0x58] sm:$0xff]
        %v5235 = vld [vmem:[#allocation19 + $0x60] sm:$0xff]
        %v5236 = vld [vmem:[#allocation19 + $0x68] sm:$0xff]
        %v5237 = vld [vmem:[#allocation19 + $0x70] sm:$0xff]
        %v5238 = vld [vmem:[#allocation19 + $0x78] sm:$0xff]
        %v5239 = vld [vmem:[#allocation19 + $0x80] sm:$0xff]
        %v5240 = vld [vmem:[#allocation19 + $0x88] sm:$0xff]
        %v5241 = vld [vmem:[#allocation19 + $0x90] sm:$0xff]
        %v5242 = vld [vmem:[#allocation19 + $0x98] sm:$0xff]
        %v5243 = vld [vmem:[#allocation19 + $0xa0] sm:$0xff]
        %v5244 = vld [vmem:[#allocation19 + $0xa8] sm:$0xff]
        %v5245 = vld [vmem:[#allocation19 + $0xb0] sm:$0xff]
        %v5246 = vld [vmem:[#allocation19 + $0xb8] sm:$0xff]
        %v5247 = vld [vmem:[#allocation19 + $0xc0] sm:$0xff]
        %v5248 = vld [vmem:[#allocation19 + $0xc8] sm:$0xff]
        %v5249 = vld [vmem:[#allocation19 + $0xd0] sm:$0xff]
        %v5250 = vld [vmem:[#allocation19 + $0xd8] sm:$0xff]
        %v5251 = vld [vmem:[#allocation19 + $0xe0] sm:$0xff]
        %v5252 = vld [vmem:[#allocation19 + $0xe8] sm:$0xff]
        %v5253 = vld [vmem:[#allocation19 + $0xf0] sm:$0xff]
        %v5254 = vld [vmem:[#allocation19 + $0xf8] sm:$0xff]
        %v5255 = vld [vmem:[#allocation19 + $0x100] sm:$0xff]
        %v5256 = vld [vmem:[#allocation19 + $0x108] sm:$0xff]
        %v5257 = vld [vmem:[#allocation19 + $0x110] sm:$0xff]
        %v5258 = vld [vmem:[#allocation19 + $0x118] sm:$0xff]
        %v5259 = vld [vmem:[#allocation19 + $0x120] sm:$0xff]
        %v5260 = vld [vmem:[#allocation19 + $0x128] sm:$0xff]
        %v5261 = vld [vmem:[#allocation19 + $0x130] sm:$0xff]
        %v5262 = vld [vmem:[#allocation19 + $0x138] sm:$0xff]
        %v5263 = vld [vmem:[#allocation19 + $0x140] sm:$0xff]
        %v5264 = vld [vmem:[#allocation19 + $0x148] sm:$0xff]
        %v5265 = vld [vmem:[#allocation19 + $0x150] sm:$0xff]
        %v5266 = vld [vmem:[#allocation19 + $0x158] sm:$0xff]
        %v5267 = vld [vmem:[#allocation19 + $0x160] sm:$0xff]
        %v5268 = vld [vmem:[#allocation19 + $0x168] sm:$0xff]
        %v5269 = vld [vmem:[#allocation19 + $0x170] sm:$0xff]
        %v5270 = vld [vmem:[#allocation19 + $0x178] sm:$0xff]
        %v5271 = vld [vmem:[#allocation19 + $0x180] sm:$0xff]
        %v5272 = vld [vmem:[#allocation19 + $0x188] sm:$0xff]
        %v5273 = vld [vmem:[#allocation19 + $0x190] sm:$0xff]
        %v5274 = vld [vmem:[#allocation19 + $0x198] sm:$0xff]
        %v5275 = vld [vmem:[#allocation19 + $0x1a0] sm:$0xff]
        %v5276 = vld [vmem:[#allocation19 + $0x1a8] sm:$0xff]
        %v5277 = vld [vmem:[#allocation19 + $0x1b0] sm:$0xff]
        %v5278 = vld [vmem:[#allocation19 + $0x1b8] sm:$0xff]
        %v5279 = vld [vmem:[#allocation19 + $0x1c0] sm:$0xff]
        %v5280 = vld [vmem:[#allocation19 + $0x1c8] sm:$0xff]
        %v5281 = vld [vmem:[#allocation19 + $0x1d0] sm:$0xff]
        %v5282 = vld [vmem:[#allocation19 + $0x1d8] sm:$0xff]
        %v5283 = vld [vmem:[#allocation19 + $0x1e0] sm:$0xff]
        %v5284 = vld [vmem:[#allocation19 + $0x1e8] sm:$0xff]
        %v5285 = vld [vmem:[#allocation19 + $0x1f0] sm:$0xff]
        %v5286 = vld [vmem:[#allocation19 + $0x1f8] sm:$0xff]
        %v5287 = vld [vmem:[#allocation19 + $0x200] sm:$0xff]
        %v5288 = vld [vmem:[#allocation19 + $0x208] sm:$0xff]
        %v5289 = vld [vmem:[#allocation19 + $0x210] sm:$0xff]
        %v5290 = vld [vmem:[#allocation19 + $0x218] sm:$0xff]
        %v5291 = vld [vmem:[#allocation19 + $0x220] sm:$0xff]
        %v5292 = vld [vmem:[#allocation19 + $0x228] sm:$0xff]
        %v5293 = vld [vmem:[#allocation19 + $0x230] sm:$0xff]
        %v5294 = vld [vmem:[#allocation19 + $0x238] sm:$0xff]
        %v5295 = vld [vmem:[#allocation19 + $0x240] sm:$0xff]
        %v5296 = vld [vmem:[#allocation19 + $0x248] sm:$0xff]
        %v5297 = vld [vmem:[#allocation19 + $0x250] sm:$0xff]
        %v5298 = vld [vmem:[#allocation19 + $0x258] sm:$0xff]
        %v5299 = vld [vmem:[#allocation19 + $0x260] sm:$0xff]
        %v5300 = vld [vmem:[#allocation19 + $0x268] sm:$0xff]
        %v5301 = vld [vmem:[#allocation19 + $0x270] sm:$0xff]
        %v5302 = vld [vmem:[#allocation19 + $0x278] sm:$0xff]
        %v5303 = vld [vmem:[#allocation19 + $0x280] sm:$0xff]
        %v5304 = vld [vmem:[#allocation19 + $0x288] sm:$0xff]
        %v5305 = vld [vmem:[#allocation19 + $0x290] sm:$0xff]
        %v5306 = vld [vmem:[#allocation19 + $0x298] sm:$0xff]
        %v5307 = vld [vmem:[#allocation19 + $0x2a0] sm:$0xff]
        %v5308 = vld [vmem:[#allocation19 + $0x2a8] sm:$0xff]
        %v5309 = vld [vmem:[#allocation19 + $0x2b0] sm:$0xff]
        %v5310 = vld [vmem:[#allocation19 + $0x2b8] sm:$0xff]
        %v5311 = vld [vmem:[#allocation19 + $0x2c0] sm:$0xff]
        %v5312 = vld [vmem:[#allocation19 + $0x2c8] sm:$0xff]
        %v5313 = vld [vmem:[#allocation19 + $0x2d0] sm:$0xff]
        %v5314 = vld [vmem:[#allocation19 + $0x2d8] sm:$0xff]
        %v5315 = vld [vmem:[#allocation19 + $0x2e0] sm:$0xff]
        %v5316 = vld [vmem:[#allocation19 + $0x2e8] sm:$0xff]
        %v5317 = vld [vmem:[#allocation19 + $0x2f0] sm:$0xff]
        %v5318 = vld [vmem:[#allocation19 + $0x2f8] sm:$0xff]
        %v5319 = vld [vmem:[#allocation19 + $0x300] sm:$0xff]
        %v5320 = vld [vmem:[#allocation19 + $0x308] sm:$0xff]
        %v5321 = vld [vmem:[#allocation19 + $0x310] sm:$0xff]
        %v5322 = vld [vmem:[#allocation19 + $0x318] sm:$0xff]
        %v5323 = vld [vmem:[#allocation19 + $0x320] sm:$0xff]
        %v5324 = vld [vmem:[#allocation19 + $0x328] sm:$0xff]
        %v5325 = vld [vmem:[#allocation19 + $0x330] sm:$0xff]
        %v5326 = vld [vmem:[#allocation19 + $0x338] sm:$0xff]
        %v5327 = vld [vmem:[#allocation19 + $0x340] sm:$0xff]
        %v5328 = vld [vmem:[#allocation19 + $0x348] sm:$0xff]
        %v5329 = vld [vmem:[#allocation19 + $0x350] sm:$0xff]
        %v5330 = vld [vmem:[#allocation19 + $0x358] sm:$0xff]
        %v5331 = vld [vmem:[#allocation19 + $0x360] sm:$0xff]
        %v5332 = vld [vmem:[#allocation19 + $0x368] sm:$0xff]
        %v5333 = vld [vmem:[#allocation19 + $0x370] sm:$0xff]
        %v5334 = vld [vmem:[#allocation19 + $0x378] sm:$0xff]
        %v5335 = vld [vmem:[#allocation19 + $0x380] sm:$0xff]
        %v5336 = vld [vmem:[#allocation19 + $0x388] sm:$0xff]
        %v5337 = vld [vmem:[#allocation19 + $0x390] sm:$0xff]
        %v5338 = vld [vmem:[#allocation19 + $0x398] sm:$0xff]
        %v5339 = vld [vmem:[#allocation19 + $0x3a0] sm:$0xff]
        %v5340 = vld [vmem:[#allocation19 + $0x3a8] sm:$0xff]
        %v5341 = vld [vmem:[#allocation19 + $0x3b0] sm:$0xff]
        %v5342 = vld [vmem:[#allocation19 + $0x3b8] sm:$0xff]
        %v5343 = vld [vmem:[#allocation19 + $0x3c0] sm:$0xff]
        %v5344 = vld [vmem:[#allocation19 + $0x3c8] sm:$0xff]
        %v5345 = vld [vmem:[#allocation19 + $0x3d0] sm:$0xff]
        %v5346 = vld [vmem:[#allocation19 + $0x3d8] sm:$0xff]
        %v5347 = vld [vmem:[#allocation19 + $0x3e0] sm:$0xff]
        %v5348 = vld [vmem:[#allocation19 + $0x3e8] sm:$0xff]
        %v5349 = vld [vmem:[#allocation19 + $0x3f0] sm:$0xff]
        %v5350 = vld [vmem:[#allocation19 + $0x3f8] sm:$0xff]
        %5351 = vmatprep.subr.mxu0 %v5224
        %5352 = vmatpush1.msra.mxu0 %v5223
        %5353 = vmatprep.subr.mxu0 %v5228
        %5354 = vmatpush1.msra.mxu0 %v5227
        %5355 = vmatprep.subr.mxu0 %v5232
        %5356 = vmatpush1.msra.mxu0 %v5231
        %5357 = vmatprep.subr.mxu0 %v5236
        %5358 = vmatpush1.msra.mxu0 %v5235
        %5359 = vmatprep.subr.mxu0 %v5240
        %5360 = vmatpush1.msra.mxu0 %v5239
        %5361 = vmatprep.subr.mxu0 %v5244
        %5362 = vmatpush1.msra.mxu0 %v5243
        %5363 = vmatprep.subr.mxu0 %v5248
        %5364 = vmatpush1.msra.mxu0 %v5247
        %5365 = vmatprep.subr.mxu0 %v5252
        %5366 = vmatpush1.msra.mxu0 %v5251
        %5367 = vmatprep.subr.mxu0 %v5256
        %5368 = vmatpush1.msra.mxu0 %v5255
        %5369 = vmatprep.subr.mxu0 %v5260
        %5370 = vmatpush1.msra.mxu0 %v5259
        %5371 = vmatprep.subr.mxu0 %v5264
        %5372 = vmatpush1.msra.mxu0 %v5263
        %5373 = vmatprep.subr.mxu0 %v5268
        %5374 = vmatpush1.msra.mxu0 %v5267
        %5375 = vmatprep.subr.mxu0 %v5272
        %5376 = vmatpush1.msra.mxu0 %v5271
        %5377 = vmatprep.subr.mxu0 %v5276
        %5378 = vmatpush1.msra.mxu0 %v5275
        %5379 = vmatprep.subr.mxu0 %v5280
        %5380 = vmatpush1.msra.mxu0 %v5279
        %5381 = vmatprep.subr.mxu0 %v5284
        %5382 = vmatpush1.msra.mxu0 %v5283
        %5383 = vmatprep.subr.mxu0 %v5288
        %5384 = vmatpush1.msra.mxu0 %v5287
        %5385 = vmatprep.subr.mxu0 %v5292
        %5386 = vmatpush1.msra.mxu0 %v5291
        %5387 = vmatprep.subr.mxu0 %v5296
        %5388 = vmatpush1.msra.mxu0 %v5295
        %5389 = vmatprep.subr.mxu0 %v5300
        %5390 = vmatpush1.msra.mxu0 %v5299
        %5391 = vmatprep.subr.mxu0 %v5304
        %5392 = vmatpush1.msra.mxu0 %v5303
        %5393 = vmatprep.subr.mxu0 %v5308
        %5394 = vmatpush1.msra.mxu0 %v5307
        %5395 = vmatprep.subr.mxu0 %v5312
        %5396 = vmatpush1.msra.mxu0 %v5311
        %5397 = vmatprep.subr.mxu0 %v5316
        %5398 = vmatpush1.msra.mxu0 %v5315
        %5399 = vmatprep.subr.mxu0 %v5320
        %5400 = vmatpush1.msra.mxu0 %v5319
        %5401 = vmatprep.subr.mxu0 %v5324
        %5402 = vmatpush1.msra.mxu0 %v5323
        %5403 = vmatprep.subr.mxu0 %v5328
        %5404 = vmatpush1.msra.mxu0 %v5327
        %5405 = vmatprep.subr.mxu0 %v5332
        %5406 = vmatpush1.msra.mxu0 %v5331
        %5407 = vmatprep.subr.mxu0 %v5336
        %5408 = vmatpush1.msra.mxu0 %v5335
        %5409 = vmatprep.subr.mxu0 %v5340
        %5410 = vmatpush1.msra.mxu0 %v5339
        %5411 = vmatprep.subr.mxu0 %v5344
        %5412 = vmatpush1.msra.mxu0 %v5343
        %5413 = vmatprep.subr.mxu0 %v5348
        %5414 = vmatpush1.msra.mxu0 %v5347
        %5415 = vmatprep.mubr.f32.mxu0 %v5221
        %5416 = vmatmul.mubr.f32.gmra.mrb[0].mxu0 %v5220
        %v5417 = vpop.f32.mrb[0].mxu0
        %v5418 = vadd.f32 0.0, %v5417
        %v5419 = vpop.f32.mrb[0].mxu0
        %v5420 = vadd.f32 0.0, %v5419
        %5421 = vdwg.mxu0
        %5422 = vmatprep.subr.mxu0 %v5226
        %5423 = vmatpush1.msra.mxu0 %v5225
        %5424 = vmatprep.subr.mxu0 %v5230
        %5425 = vmatpush1.msra.mxu0 %v5229
        %5426 = vmatprep.subr.mxu0 %v5234
        %5427 = vmatpush1.msra.mxu0 %v5233
        %5428 = vmatprep.subr.mxu0 %v5238
        %5429 = vmatpush1.msra.mxu0 %v5237
        %5430 = vmatprep.subr.mxu0 %v5242
        %5431 = vmatpush1.msra.mxu0 %v5241
        %5432 = vmatprep.subr.mxu0 %v5246
        %5433 = vmatpush1.msra.mxu0 %v5245
        %5434 = vmatprep.subr.mxu0 %v5250
        %5435 = vmatpush1.msra.mxu0 %v5249
        %5436 = vmatprep.subr.mxu0 %v5254
        %5437 = vmatpush1.msra.mxu0 %v5253
        %5438 = vmatprep.subr.mxu0 %v5258
        %5439 = vmatpush1.msra.mxu0 %v5257
        %5440 = vmatprep.subr.mxu0 %v5262
        %5441 = vmatpush1.msra.mxu0 %v5261
        %5442 = vmatprep.subr.mxu0 %v5266
        %5443 = vmatpush1.msra.mxu0 %v5265
        %5444 = vmatprep.subr.mxu0 %v5270
        %5445 = vmatpush1.msra.mxu0 %v5269
        %5446 = vmatprep.subr.mxu0 %v5274
        %5447 = vmatpush1.msra.mxu0 %v5273
        %5448 = vmatprep.subr.mxu0 %v5278
        %5449 = vmatpush1.msra.mxu0 %v5277
        %5450 = vmatprep.subr.mxu0 %v5282
        %5451 = vmatpush1.msra.mxu0 %v5281
        %5452 = vmatprep.subr.mxu0 %v5286
        %5453 = vmatpush1.msra.mxu0 %v5285
        %5454 = vmatprep.subr.mxu0 %v5290
        %5455 = vmatpush1.msra.mxu0 %v5289
        %5456 = vmatprep.subr.mxu0 %v5294
        %5457 = vmatpush1.msra.mxu0 %v5293
        %5458 = vmatprep.subr.mxu0 %v5298
        %5459 = vmatpush1.msra.mxu0 %v5297
        %5460 = vmatprep.subr.mxu0 %v5302
        %5461 = vmatpush1.msra.mxu0 %v5301
        %5462 = vmatprep.subr.mxu0 %v5306
        %5463 = vmatpush1.msra.mxu0 %v5305
        %5464 = vmatprep.subr.mxu0 %v5310
        %5465 = vmatpush1.msra.mxu0 %v5309
        %5466 = vmatprep.subr.mxu0 %v5314
        %5467 = vmatpush1.msra.mxu0 %v5313
        %5468 = vmatprep.subr.mxu0 %v5318
        %5469 = vmatpush1.msra.mxu0 %v5317
        %5470 = vmatprep.subr.mxu0 %v5322
        %5471 = vmatpush1.msra.mxu0 %v5321
        %5472 = vmatprep.subr.mxu0 %v5326
        %5473 = vmatpush1.msra.mxu0 %v5325
        %5474 = vmatprep.subr.mxu0 %v5330
        %5475 = vmatpush1.msra.mxu0 %v5329
        %5476 = vmatprep.subr.mxu0 %v5334
        %5477 = vmatpush1.msra.mxu0 %v5333
        %5478 = vmatprep.subr.mxu0 %v5338
        %5479 = vmatpush1.msra.mxu0 %v5337
        %5480 = vmatprep.subr.mxu0 %v5342
        %5481 = vmatpush1.msra.mxu0 %v5341
        %5482 = vmatprep.subr.mxu0 %v5346
        %5483 = vmatpush1.msra.mxu0 %v5345
        %5484 = vmatprep.subr.mxu0 %v5350
        %5485 = vmatpush1.msra.mxu0 %v5349
        %5486 = vmatprep.mubr.f32.mxu0 %v5221
        %5487 = vmatmul.mubr.f32.gmra.mrb[0].mxu0 %v5220
        %v5488 = vpop.f32.mrb[0].mxu0
        %v5489 = vadd.f32 0.0, %v5488
        %v5490 = vpop.f32.mrb[0].mxu0
        %v5491 = vadd.f32 0.0, %v5490
        %5492 = vdwg.mxu0
        %s5493 = scalar_lea.vmem [#allocation20], 8
        %v5494 = vld [vmem:[%s5493] sm:$0xff]
        %s5495 = scalar_lea.vmem [#allocation19], 1024
        %v5496 = vld [vmem:[%s5495] sm:$0xff]
        %v5497 = vld [vmem:[%s5495 + $0x8] sm:$0xff]
        %v5498 = vld [vmem:[%s5495 + $0x10] sm:$0xff]
        %v5499 = vld [vmem:[%s5495 + $0x18] sm:$0xff]
        %v5500 = vld [vmem:[%s5495 + $0x20] sm:$0xff]
        %v5501 = vld [vmem:[%s5495 + $0x28] sm:$0xff]
        %v5502 = vld [vmem:[%s5495 + $0x30] sm:$0xff]
        %v5503 = vld [vmem:[%s5495 + $0x38] sm:$0xff]
        %v5504 = vld [vmem:[%s5495 + $0x40] sm:$0xff]
        %v5505 = vld [vmem:[%s5495 + $0x48] sm:$0xff]
        %v5506 = vld [vmem:[%s5495 + $0x50] sm:$0xff]
        %v5507 = vld [vmem:[%s5495 + $0x58] sm:$0xff]
        %v5508 = vld [vmem:[%s5495 + $0x60] sm:$0xff]
        %v5509 = vld [vmem:[%s5495 + $0x68] sm:$0xff]
        %v5510 = vld [vmem:[%s5495 + $0x70] sm:$0xff]
        %v5511 = vld [vmem:[%s5495 + $0x78] sm:$0xff]
        %v5512 = vld [vmem:[%s5495 + $0x80] sm:$0xff]
        %v5513 = vld [vmem:[%s5495 + $0x88] sm:$0xff]
        %v5514 = vld [vmem:[%s5495 + $0x90] sm:$0xff]
        %v5515 = vld [vmem:[%s5495 + $0x98] sm:$0xff]
        %v5516 = vld [vmem:[%s5495 + $0xa0] sm:$0xff]
        %v5517 = vld [vmem:[%s5495 + $0xa8] sm:$0xff]
        %v5518 = vld [vmem:[%s5495 + $0xb0] sm:$0xff]
        %v5519 = vld [vmem:[%s5495 + $0xb8] sm:$0xff]
        %v5520 = vld [vmem:[%s5495 + $0xc0] sm:$0xff]
        %v5521 = vld [vmem:[%s5495 + $0xc8] sm:$0xff]
        %v5522 = vld [vmem:[%s5495 + $0xd0] sm:$0xff]
        %v5523 = vld [vmem:[%s5495 + $0xd8] sm:$0xff]
        %v5524 = vld [vmem:[%s5495 + $0xe0] sm:$0xff]
        %v5525 = vld [vmem:[%s5495 + $0xe8] sm:$0xff]
        %v5526 = vld [vmem:[%s5495 + $0xf0] sm:$0xff]
        %v5527 = vld [vmem:[%s5495 + $0xf8] sm:$0xff]
        %v5528 = vld [vmem:[%s5495 + $0x100] sm:$0xff]
        %v5529 = vld [vmem:[%s5495 + $0x108] sm:$0xff]
        %v5530 = vld [vmem:[%s5495 + $0x110] sm:$0xff]
        %v5531 = vld [vmem:[%s5495 + $0x118] sm:$0xff]
        %v5532 = vld [vmem:[%s5495 + $0x120] sm:$0xff]
        %v5533 = vld [vmem:[%s5495 + $0x128] sm:$0xff]
        %v5534 = vld [vmem:[%s5495 + $0x130] sm:$0xff]
        %v5535 = vld [vmem:[%s5495 + $0x138] sm:$0xff]
        %v5536 = vld [vmem:[%s5495 + $0x140] sm:$0xff]
        %v5537 = vld [vmem:[%s5495 + $0x148] sm:$0xff]
        %v5538 = vld [vmem:[%s5495 + $0x150] sm:$0xff]
        %v5539 = vld [vmem:[%s5495 + $0x158] sm:$0xff]
        %v5540 = vld [vmem:[%s5495 + $0x160] sm:$0xff]
        %v5541 = vld [vmem:[%s5495 + $0x168] sm:$0xff]
        %v5542 = vld [vmem:[%s5495 + $0x170] sm:$0xff]
        %v5543 = vld [vmem:[%s5495 + $0x178] sm:$0xff]
        %v5544 = vld [vmem:[%s5495 + $0x180] sm:$0xff]
        %v5545 = vld [vmem:[%s5495 + $0x188] sm:$0xff]
        %v5546 = vld [vmem:[%s5495 + $0x190] sm:$0xff]
        %v5547 = vld [vmem:[%s5495 + $0x198] sm:$0xff]
        %v5548 = vld [vmem:[%s5495 + $0x1a0] sm:$0xff]
        %v5549 = vld [vmem:[%s5495 + $0x1a8] sm:$0xff]
        %v5550 = vld [vmem:[%s5495 + $0x1b0] sm:$0xff]
        %v5551 = vld [vmem:[%s5495 + $0x1b8] sm:$0xff]
        %v5552 = vld [vmem:[%s5495 + $0x1c0] sm:$0xff]
        %v5553 = vld [vmem:[%s5495 + $0x1c8] sm:$0xff]
        %v5554 = vld [vmem:[%s5495 + $0x1d0] sm:$0xff]
        %v5555 = vld [vmem:[%s5495 + $0x1d8] sm:$0xff]
        %v5556 = vld [vmem:[%s5495 + $0x1e0] sm:$0xff]
        %v5557 = vld [vmem:[%s5495 + $0x1e8] sm:$0xff]
        %v5558 = vld [vmem:[%s5495 + $0x1f0] sm:$0xff]
        %v5559 = vld [vmem:[%s5495 + $0x1f8] sm:$0xff]
        %v5560 = vld [vmem:[%s5495 + $0x200] sm:$0xff]
        %v5561 = vld [vmem:[%s5495 + $0x208] sm:$0xff]
        %v5562 = vld [vmem:[%s5495 + $0x210] sm:$0xff]
        %v5563 = vld [vmem:[%s5495 + $0x218] sm:$0xff]
        %v5564 = vld [vmem:[%s5495 + $0x220] sm:$0xff]
        %v5565 = vld [vmem:[%s5495 + $0x228] sm:$0xff]
        %v5566 = vld [vmem:[%s5495 + $0x230] sm:$0xff]
        %v5567 = vld [vmem:[%s5495 + $0x238] sm:$0xff]
        %v5568 = vld [vmem:[%s5495 + $0x240] sm:$0xff]
        %v5569 = vld [vmem:[%s5495 + $0x248] sm:$0xff]
        %v5570 = vld [vmem:[%s5495 + $0x250] sm:$0xff]
        %v5571 = vld [vmem:[%s5495 + $0x258] sm:$0xff]
        %v5572 = vld [vmem:[%s5495 + $0x260] sm:$0xff]
        %v5573 = vld [vmem:[%s5495 + $0x268] sm:$0xff]
        %v5574 = vld [vmem:[%s5495 + $0x270] sm:$0xff]
        %v5575 = vld [vmem:[%s5495 + $0x278] sm:$0xff]
        %v5576 = vld [vmem:[%s5495 + $0x280] sm:$0xff]
        %v5577 = vld [vmem:[%s5495 + $0x288] sm:$0xff]
        %v5578 = vld [vmem:[%s5495 + $0x290] sm:$0xff]
        %v5579 = vld [vmem:[%s5495 + $0x298] sm:$0xff]
        %v5580 = vld [vmem:[%s5495 + $0x2a0] sm:$0xff]
        %v5581 = vld [vmem:[%s5495 + $0x2a8] sm:$0xff]
        %v5582 = vld [vmem:[%s5495 + $0x2b0] sm:$0xff]
        %v5583 = vld [vmem:[%s5495 + $0x2b8] sm:$0xff]
        %v5584 = vld [vmem:[%s5495 + $0x2c0] sm:$0xff]
        %v5585 = vld [vmem:[%s5495 + $0x2c8] sm:$0xff]
        %v5586 = vld [vmem:[%s5495 + $0x2d0] sm:$0xff]
        %v5587 = vld [vmem:[%s5495 + $0x2d8] sm:$0xff]
        %v5588 = vld [vmem:[%s5495 + $0x2e0] sm:$0xff]
        %v5589 = vld [vmem:[%s5495 + $0x2e8] sm:$0xff]
        %v5590 = vld [vmem:[%s5495 + $0x2f0] sm:$0xff]
        %v5591 = vld [vmem:[%s5495 + $0x2f8] sm:$0xff]
        %v5592 = vld [vmem:[%s5495 + $0x300] sm:$0xff]
        %v5593 = vld [vmem:[%s5495 + $0x308] sm:$0xff]
        %v5594 = vld [vmem:[%s5495 + $0x310] sm:$0xff]
        %v5595 = vld [vmem:[%s5495 + $0x318] sm:$0xff]
        %v5596 = vld [vmem:[%s5495 + $0x320] sm:$0xff]
        %v5597 = vld [vmem:[%s5495 + $0x328] sm:$0xff]
        %v5598 = vld [vmem:[%s5495 + $0x330] sm:$0xff]
        %v5599 = vld [vmem:[%s5495 + $0x338] sm:$0xff]
        %v5600 = vld [vmem:[%s5495 + $0x340] sm:$0xff]
        %v5601 = vld [vmem:[%s5495 + $0x348] sm:$0xff]
        %v5602 = vld [vmem:[%s5495 + $0x350] sm:$0xff]
        %v5603 = vld [vmem:[%s5495 + $0x358] sm:$0xff]
        %v5604 = vld [vmem:[%s5495 + $0x360] sm:$0xff]
        %v5605 = vld [vmem:[%s5495 + $0x368] sm:$0xff]
        %v5606 = vld [vmem:[%s5495 + $0x370] sm:$0xff]
        %v5607 = vld [vmem:[%s5495 + $0x378] sm:$0xff]
        %v5608 = vld [vmem:[%s5495 + $0x380] sm:$0xff]
        %v5609 = vld [vmem:[%s5495 + $0x388] sm:$0xff]
        %v5610 = vld [vmem:[%s5495 + $0x390] sm:$0xff]
        %v5611 = vld [vmem:[%s5495 + $0x398] sm:$0xff]
        %v5612 = vld [vmem:[%s5495 + $0x3a0] sm:$0xff]
        %v5613 = vld [vmem:[%s5495 + $0x3a8] sm:$0xff]
        %v5614 = vld [vmem:[%s5495 + $0x3b0] sm:$0xff]
        %v5615 = vld [vmem:[%s5495 + $0x3b8] sm:$0xff]
        %v5616 = vld [vmem:[%s5495 + $0x3c0] sm:$0xff]
        %v5617 = vld [vmem:[%s5495 + $0x3c8] sm:$0xff]
        %v5618 = vld [vmem:[%s5495 + $0x3d0] sm:$0xff]
        %v5619 = vld [vmem:[%s5495 + $0x3d8] sm:$0xff]
        %v5620 = vld [vmem:[%s5495 + $0x3e0] sm:$0xff]
        %v5621 = vld [vmem:[%s5495 + $0x3e8] sm:$0xff]
        %v5622 = vld [vmem:[%s5495 + $0x3f0] sm:$0xff]
        %v5623 = vld [vmem:[%s5495 + $0x3f8] sm:$0xff]
        %5624 = vmatprep.subr.mxu0 %v5497
        %5625 = vmatpush1.msra.mxu0 %v5496
        %5626 = vmatprep.subr.mxu0 %v5501
        %5627 = vmatpush1.msra.mxu0 %v5500
        %5628 = vmatprep.subr.mxu0 %v5505
        %5629 = vmatpush1.msra.mxu0 %v5504
        %5630 = vmatprep.subr.mxu0 %v5509
        %5631 = vmatpush1.msra.mxu0 %v5508
        %5632 = vmatprep.subr.mxu0 %v5513
        %5633 = vmatpush1.msra.mxu0 %v5512
        %5634 = vmatprep.subr.mxu0 %v5517
        %5635 = vmatpush1.msra.mxu0 %v5516
        %5636 = vmatprep.subr.mxu0 %v5521
        %5637 = vmatpush1.msra.mxu0 %v5520
        %5638 = vmatprep.subr.mxu0 %v5525
        %5639 = vmatpush1.msra.mxu0 %v5524
        %5640 = vmatprep.subr.mxu0 %v5529
        %5641 = vmatpush1.msra.mxu0 %v5528
        %5642 = vmatprep.subr.mxu0 %v5533
        %5643 = vmatpush1.msra.mxu0 %v5532
        %5644 = vmatprep.subr.mxu0 %v5537
        %5645 = vmatpush1.msra.mxu0 %v5536
        %5646 = vmatprep.subr.mxu0 %v5541
        %5647 = vmatpush1.msra.mxu0 %v5540
        %5648 = vmatprep.subr.mxu0 %v5545
        %5649 = vmatpush1.msra.mxu0 %v5544
        %5650 = vmatprep.subr.mxu0 %v5549
        %5651 = vmatpush1.msra.mxu0 %v5548
        %5652 = vmatprep.subr.mxu0 %v5553
        %5653 = vmatpush1.msra.mxu0 %v5552
        %5654 = vmatprep.subr.mxu0 %v5557
        %5655 = vmatpush1.msra.mxu0 %v5556
        %5656 = vmatprep.subr.mxu0 %v5561
        %5657 = vmatpush1.msra.mxu0 %v5560
        %5658 = vmatprep.subr.mxu0 %v5565
        %5659 = vmatpush1.msra.mxu0 %v5564
        %5660 = vmatprep.subr.mxu0 %v5569
        %5661 = vmatpush1.msra.mxu0 %v5568
        %5662 = vmatprep.subr.mxu0 %v5573
        %5663 = vmatpush1.msra.mxu0 %v5572
        %5664 = vmatprep.subr.mxu0 %v5577
        %5665 = vmatpush1.msra.mxu0 %v5576
        %5666 = vmatprep.subr.mxu0 %v5581
        %5667 = vmatpush1.msra.mxu0 %v5580
        %5668 = vmatprep.subr.mxu0 %v5585
        %5669 = vmatpush1.msra.mxu0 %v5584
        %5670 = vmatprep.subr.mxu0 %v5589
        %5671 = vmatpush1.msra.mxu0 %v5588
        %5672 = vmatprep.subr.mxu0 %v5593
        %5673 = vmatpush1.msra.mxu0 %v5592
        %5674 = vmatprep.subr.mxu0 %v5597
        %5675 = vmatpush1.msra.mxu0 %v5596
        %5676 = vmatprep.subr.mxu0 %v5601
        %5677 = vmatpush1.msra.mxu0 %v5600
        %5678 = vmatprep.subr.mxu0 %v5605
        %5679 = vmatpush1.msra.mxu0 %v5604
        %5680 = vmatprep.subr.mxu0 %v5609
        %5681 = vmatpush1.msra.mxu0 %v5608
        %5682 = vmatprep.subr.mxu0 %v5613
        %5683 = vmatpush1.msra.mxu0 %v5612
        %5684 = vmatprep.subr.mxu0 %v5617
        %5685 = vmatpush1.msra.mxu0 %v5616
        %5686 = vmatprep.subr.mxu0 %v5621
        %5687 = vmatpush1.msra.mxu0 %v5620
        %5688 = vmatprep.mubr.f32.mxu0 %v5221
        %5689 = vmatmul.mubr.f32.gmra.mrb[0].mxu0 %v5220
        %v5690 = vpop.f32.mrb[0].mxu0
        %v5691 = vadd.f32 0.0, %v5690
        %v5692 = vpop.f32.mrb[0].mxu0
        %v5693 = vadd.f32 0.0, %v5692
        %5694 = vdwg.mxu0
        %5695 = vmatprep.subr.mxu0 %v5499
        %5696 = vmatpush1.msra.mxu0 %v5498
        %5697 = vmatprep.subr.mxu0 %v5503
        %5698 = vmatpush1.msra.mxu0 %v5502
        %5699 = vmatprep.subr.mxu0 %v5507
        %5700 = vmatpush1.msra.mxu0 %v5506
        %5701 = vmatprep.subr.mxu0 %v5511
        %5702 = vmatpush1.msra.mxu0 %v5510
        %5703 = vmatprep.subr.mxu0 %v5515
        %5704 = vmatpush1.msra.mxu0 %v5514
        %5705 = vmatprep.subr.mxu0 %v5519
        %5706 = vmatpush1.msra.mxu0 %v5518
        %5707 = vmatprep.subr.mxu0 %v5523
        %5708 = vmatpush1.msra.mxu0 %v5522
        %5709 = vmatprep.subr.mxu0 %v5527
        %5710 = vmatpush1.msra.mxu0 %v5526
        %5711 = vmatprep.subr.mxu0 %v5531
        %5712 = vmatpush1.msra.mxu0 %v5530
        %5713 = vmatprep.subr.mxu0 %v5535
        %5714 = vmatpush1.msra.mxu0 %v5534
        %5715 = vmatprep.subr.mxu0 %v5539
        %5716 = vmatpush1.msra.mxu0 %v5538
        %5717 = vmatprep.subr.mxu0 %v5543
        %5718 = vmatpush1.msra.mxu0 %v5542
        %5719 = vmatprep.subr.mxu0 %v5547
        %5720 = vmatpush1.msra.mxu0 %v5546
        %5721 = vmatprep.subr.mxu0 %v5551
        %5722 = vmatpush1.msra.mxu0 %v5550
        %5723 = vmatprep.subr.mxu0 %v5555
        %5724 = vmatpush1.msra.mxu0 %v5554
        %5725 = vmatprep.subr.mxu0 %v5559
        %5726 = vmatpush1.msra.mxu0 %v5558
        %5727 = vmatprep.subr.mxu0 %v5563
        %5728 = vmatpush1.msra.mxu0 %v5562
        %5729 = vmatprep.subr.mxu0 %v5567
        %5730 = vmatpush1.msra.mxu0 %v5566
        %5731 = vmatprep.subr.mxu0 %v5571
        %5732 = vmatpush1.msra.mxu0 %v5570
        %5733 = vmatprep.subr.mxu0 %v5575
        %5734 = vmatpush1.msra.mxu0 %v5574
        %5735 = vmatprep.subr.mxu0 %v5579
        %5736 = vmatpush1.msra.mxu0 %v5578
        %5737 = vmatprep.subr.mxu0 %v5583
        %5738 = vmatpush1.msra.mxu0 %v5582
        %5739 = vmatprep.subr.mxu0 %v5587
        %5740 = vmatpush1.msra.mxu0 %v5586
        %5741 = vmatprep.subr.mxu0 %v5591
        %5742 = vmatpush1.msra.mxu0 %v5590
        %5743 = vmatprep.subr.mxu0 %v5595
        %5744 = vmatpush1.msra.mxu0 %v5594
        %5745 = vmatprep.subr.mxu0 %v5599
        %5746 = vmatpush1.msra.mxu0 %v5598
        %5747 = vmatprep.subr.mxu0 %v5603
        %5748 = vmatpush1.msra.mxu0 %v5602
        %5749 = vmatprep.subr.mxu0 %v5607
        %5750 = vmatpush1.msra.mxu0 %v5606
        %5751 = vmatprep.subr.mxu0 %v5611
        %5752 = vmatpush1.msra.mxu0 %v5610
        %5753 = vmatprep.subr.mxu0 %v5615
        %5754 = vmatpush1.msra.mxu0 %v5614
        %5755 = vmatprep.subr.mxu0 %v5619
        %5756 = vmatpush1.msra.mxu0 %v5618
        %5757 = vmatprep.subr.mxu0 %v5623
        %5758 = vmatpush1.msra.mxu0 %v5622
        %5759 = vmatprep.mubr.f32.mxu0 %v5221
        %5760 = vmatmul.mubr.f32.gmra.mrb[0].mxu0 %v5220
        %v5761 = vpop.f32.mrb[0].mxu0
        %v5762 = vadd.f32 0.0, %v5761
        %v5763 = vpop.f32.mrb[0].mxu0
        %v5764 = vadd.f32 0.0, %v5763
        %5765 = vdwg.mxu0
        %vm5766 = vcmask 64512
        %v5768 = vsel %vm5766, %v5494, 0
        %5770 = vmatprep.subr.mxu0 %v5693
        %5771 = vmatpush1.msra.mxu0 %v5691
        %5772 = vmatprep.subr.mxu0 0.0
        %5773 = vmatpush1.msra.mxu0 0.0
        %5774 = vmatprep.subr.mxu0 0.0
        %5775 = vmatpush1.msra.mxu0 0.0
        %5776 = vmatprep.subr.mxu0 0.0
        %5777 = vmatpush1.msra.mxu0 0.0
        %5778 = vmatprep.subr.mxu0 0.0
        %5779 = vmatpush1.msra.mxu0 0.0
        %5780 = vmatprep.subr.mxu0 0.0
        %5781 = vmatpush1.msra.mxu0 0.0
        %5782 = vmatprep.subr.mxu0 0.0
        %5783 = vmatpush1.msra.mxu0 0.0
        %5784 = vmatprep.subr.mxu0 0.0
        %5785 = vmatpush1.msra.mxu0 0.0
        %5786 = vmatprep.subr.mxu0 0.0
        %5787 = vmatpush1.msra.mxu0 0.0
        %5788 = vmatprep.subr.mxu0 0.0
        %5789 = vmatpush1.msra.mxu0 0.0
        %5790 = vmatprep.subr.mxu0 0.0
        %5791 = vmatpush1.msra.mxu0 0.0
        %5792 = vmatprep.subr.mxu0 0.0
        %5793 = vmatpush1.msra.mxu0 0.0
        %5794 = vmatprep.subr.mxu0 0.0
        %5795 = vmatpush1.msra.mxu0 0.0
        %5796 = vmatprep.subr.mxu0 0.0
        %5797 = vmatpush1.msra.mxu0 0.0
        %5798 = vmatprep.subr.mxu0 0.0
        %5799 = vmatpush1.msra.mxu0 0.0
        %5800 = vmatprep.subr.mxu0 0.0
        %5801 = vmatpush1.msra.mxu0 0.0
        %5802 = vmatprep.subr.mxu0 0.0
        %5803 = vmatpush1.msra.mxu0 0.0
        %5804 = vmatprep.subr.mxu0 0.0
        %5805 = vmatpush1.msra.mxu0 0.0
        %5806 = vmatprep.subr.mxu0 0.0
        %5807 = vmatpush1.msra.mxu0 0.0
        %5808 = vmatprep.subr.mxu0 0.0
        %5809 = vmatpush1.msra.mxu0 0.0
        %5810 = vmatprep.subr.mxu0 0.0
        %5811 = vmatpush1.msra.mxu0 0.0
        %5812 = vmatprep.subr.mxu0 0.0
        %5813 = vmatpush1.msra.mxu0 0.0
        %5814 = vmatprep.subr.mxu0 0.0
        %5815 = vmatpush1.msra.mxu0 0.0
        %5816 = vmatprep.subr.mxu0 0.0
        %5817 = vmatpush1.msra.mxu0 0.0
        %5818 = vmatprep.subr.mxu0 0.0
        %5819 = vmatpush1.msra.mxu0 0.0
        %5820 = vmatprep.subr.mxu0 0.0
        %5821 = vmatpush1.msra.mxu0 0.0
        %5822 = vmatprep.subr.mxu0 0.0
        %5823 = vmatpush1.msra.mxu0 0.0
        %5824 = vmatprep.subr.mxu0 0.0
        %5825 = vmatpush1.msra.mxu0 0.0
        %5826 = vmatprep.subr.mxu0 0.0
        %5827 = vmatpush1.msra.mxu0 0.0
        %5828 = vmatprep.subr.mxu0 0.0
        %5829 = vmatpush1.msra.mxu0 0.0
        %5830 = vmatprep.subr.mxu0 0.0
        %5831 = vmatpush1.msra.mxu0 0.0
        %5832 = vmatprep.subr.mxu0 0.0
        %5833 = vmatpush1.msra.mxu0 0.0
        %5834 = vmatprep.mubr.f32.mxu0 0.0
        %5835 = vmatmul.mubr.f32.gmra.mrb[0].mxu0 %v5768
        %v5836 = vpop.f32.mrb[0].mxu0
        %v5837 = vadd.f32 0.0, %v5836
        %v5838 = vpop.f32.mrb[0].mxu0
        %v5839 = vadd.f32 0.0, %v5838
        %5840 = vdwg.mxu0
        %5841 = vmatprep.subr.mxu0 %v5764
        %5842 = vmatpush1.msra.mxu0 %v5762
        %5843 = vmatprep.subr.mxu0 0.0
        %5844 = vmatpush1.msra.mxu0 0.0
        %5845 = vmatprep.subr.mxu0 0.0
        %5846 = vmatpush1.msra.mxu0 0.0
        %5847 = vmatprep.subr.mxu0 0.0
        %5848 = vmatpush1.msra.mxu0 0.0
        %5849 = vmatprep.subr.mxu0 0.0
        %5850 = vmatpush1.msra.mxu0 0.0
        %5851 = vmatprep.subr.mxu0 0.0
        %5852 = vmatpush1.msra.mxu0 0.0
        %5853 = vmatprep.subr.mxu0 0.0
        %5854 = vmatpush1.msra.mxu0 0.0
        %5855 = vmatprep.subr.mxu0 0.0
        %5856 = vmatpush1.msra.mxu0 0.0
        %5857 = vmatprep.subr.mxu0 0.0
        %5858 = vmatpush1.msra.mxu0 0.0
        %5859 = vmatprep.subr.mxu0 0.0
        %5860 = vmatpush1.msra.mxu0 0.0
        %5861 = vmatprep.subr.mxu0 0.0
        %5862 = vmatpush1.msra.mxu0 0.0
        %5863 = vmatprep.subr.mxu0 0.0
        %5864 = vmatpush1.msra.mxu0 0.0
        %5865 = vmatprep.subr.mxu0 0.0
        %5866 = vmatpush1.msra.mxu0 0.0
        %5867 = vmatprep.subr.mxu0 0.0
        %5868 = vmatpush1.msra.mxu0 0.0
        %5869 = vmatprep.subr.mxu0 0.0
        %5870 = vmatpush1.msra.mxu0 0.0
        %5871 = vmatprep.subr.mxu0 0.0
        %5872 = vmatpush1.msra.mxu0 0.0
        %5873 = vmatprep.subr.mxu0 0.0
        %5874 = vmatpush1.msra.mxu0 0.0
        %5875 = vmatprep.subr.mxu0 0.0
        %5876 = vmatpush1.msra.mxu0 0.0
        %5877 = vmatprep.subr.mxu0 0.0
        %5878 = vmatpush1.msra.mxu0 0.0
        %5879 = vmatprep.subr.mxu0 0.0
        %5880 = vmatpush1.msra.mxu0 0.0
        %5881 = vmatprep.subr.mxu0 0.0
        %5882 = vmatpush1.msra.mxu0 0.0
        %5883 = vmatprep.subr.mxu0 0.0
        %5884 = vmatpush1.msra.mxu0 0.0
        %5885 = vmatprep.subr.mxu0 0.0
        %5886 = vmatpush1.msra.mxu0 0.0
        %5887 = vmatprep.subr.mxu0 0.0
        %5888 = vmatpush1.msra.mxu0 0.0
        %5889 = vmatprep.subr.mxu0 0.0
        %5890 = vmatpush1.msra.mxu0 0.0
        %5891 = vmatprep.subr.mxu0 0.0
        %5892 = vmatpush1.msra.mxu0 0.0
        %5893 = vmatprep.subr.mxu0 0.0
        %5894 = vmatpush1.msra.mxu0 0.0
        %5895 = vmatprep.subr.mxu0 0.0
        %5896 = vmatpush1.msra.mxu0 0.0
        %5897 = vmatprep.subr.mxu0 0.0
        %5898 = vmatpush1.msra.mxu0 0.0
        %5899 = vmatprep.subr.mxu0 0.0
        %5900 = vmatpush1.msra.mxu0 0.0
        %5901 = vmatprep.subr.mxu0 0.0
        %5902 = vmatpush1.msra.mxu0 0.0
        %5903 = vmatprep.subr.mxu0 0.0
        %5904 = vmatpush1.msra.mxu0 0.0
        %5905 = vmatprep.mubr.f32.mxu0 0.0
        %5906 = vmatmul.mubr.f32.gmra.mrb[0].mxu0 %v5768
        %v5907 = vpop.f32.mrb[0].mxu0
        %v5908 = vadd.f32 0.0, %v5907
        %v5909 = vpop.f32.mrb[0].mxu0
        %v5910 = vadd.f32 0.0, %v5909
        %5911 = vdwg.mxu0
        %v5913 = vsel %vm5766, %v5222, 0
        %5915 = vmatprep.subr.mxu0 %v5420
        %5916 = vmatpush1.msra.mxu0 %v5418
        %5917 = vmatprep.subr.mxu0 0.0
        %5918 = vmatpush1.msra.mxu0 0.0
        %5919 = vmatprep.subr.mxu0 0.0
        %5920 = vmatpush1.msra.mxu0 0.0
        %5921 = vmatprep.subr.mxu0 0.0
        %5922 = vmatpush1.msra.mxu0 0.0
        %5923 = vmatprep.subr.mxu0 0.0
        %5924 = vmatpush1.msra.mxu0 0.0
        %5925 = vmatprep.subr.mxu0 0.0
        %5926 = vmatpush1.msra.mxu0 0.0
        %5927 = vmatprep.subr.mxu0 0.0
        %5928 = vmatpush1.msra.mxu0 0.0
        %5929 = vmatprep.subr.mxu0 0.0
        %5930 = vmatpush1.msra.mxu0 0.0
        %5931 = vmatprep.subr.mxu0 0.0
        %5932 = vmatpush1.msra.mxu0 0.0
        %5933 = vmatprep.subr.mxu0 0.0
        %5934 = vmatpush1.msra.mxu0 0.0
        %5935 = vmatprep.subr.mxu0 0.0
        %5936 = vmatpush1.msra.mxu0 0.0
        %5937 = vmatprep.subr.mxu0 0.0
        %5938 = vmatpush1.msra.mxu0 0.0
        %5939 = vmatprep.subr.mxu0 0.0
        %5940 = vmatpush1.msra.mxu0 0.0
        %5941 = vmatprep.subr.mxu0 0.0
        %5942 = vmatpush1.msra.mxu0 0.0
        %5943 = vmatprep.subr.mxu0 0.0
        %5944 = vmatpush1.msra.mxu0 0.0
        %5945 = vmatprep.subr.mxu0 0.0
        %5946 = vmatpush1.msra.mxu0 0.0
        %5947 = vmatprep.subr.mxu0 0.0
        %5948 = vmatpush1.msra.mxu0 0.0
        %5949 = vmatprep.subr.mxu0 0.0
        %5950 = vmatpush1.msra.mxu0 0.0
        %5951 = vmatprep.subr.mxu0 0.0
        %5952 = vmatpush1.msra.mxu0 0.0
        %5953 = vmatprep.subr.mxu0 0.0
        %5954 = vmatpush1.msra.mxu0 0.0
        %5955 = vmatprep.subr.mxu0 0.0
        %5956 = vmatpush1.msra.mxu0 0.0
        %5957 = vmatprep.subr.mxu0 0.0
        %5958 = vmatpush1.msra.mxu0 0.0
        %5959 = vmatprep.subr.mxu0 0.0
        %5960 = vmatpush1.msra.mxu0 0.0
        %5961 = vmatprep.subr.mxu0 0.0
        %5962 = vmatpush1.msra.mxu0 0.0
        %5963 = vmatprep.subr.mxu0 0.0
        %5964 = vmatpush1.msra.mxu0 0.0
        %5965 = vmatprep.subr.mxu0 0.0
        %5966 = vmatpush1.msra.mxu0 0.0
        %5967 = vmatprep.subr.mxu0 0.0
        %5968 = vmatpush1.msra.mxu0 0.0
        %5969 = vmatprep.subr.mxu0 0.0
        %5970 = vmatpush1.msra.mxu0 0.0
        %5971 = vmatprep.subr.mxu0 0.0
        %5972 = vmatpush1.msra.mxu0 0.0
        %5973 = vmatprep.subr.mxu0 0.0
        %5974 = vmatpush1.msra.mxu0 0.0
        %5975 = vmatprep.subr.mxu0 0.0
        %5976 = vmatpush1.msra.mxu0 0.0
        %5977 = vmatprep.subr.mxu0 0.0
        %5978 = vmatpush1.msra.mxu0 0.0
        %5979 = vmatprep.mubr.f32.mxu0 0.0
        %5980 = vmatmul.mubr.f32.gmra.mrb[0].mxu0 %v5913
        %v5981 = vpop.f32.mrb[0].mxu0
        %v5982 = vadd.f32 %v5837, %v5981
        %v5983 = vpop.f32.mrb[0].mxu0
        %v5984 = vadd.f32 %v5839, %v5983
        %5985 = vdwg.mxu0
        %5986 = vmatprep.subr.mxu0 %v5491
        %5987 = vmatpush1.msra.mxu0 %v5489
        %5988 = vmatprep.subr.mxu0 0.0
        %5989 = vmatpush1.msra.mxu0 0.0
        %5990 = vmatprep.subr.mxu0 0.0
        %5991 = vmatpush1.msra.mxu0 0.0
        %5992 = vmatprep.subr.mxu0 0.0
        %5993 = vmatpush1.msra.mxu0 0.0
        %5994 = vmatprep.subr.mxu0 0.0
        %5995 = vmatpush1.msra.mxu0 0.0
        %5996 = vmatprep.subr.mxu0 0.0
        %5997 = vmatpush1.msra.mxu0 0.0
        %5998 = vmatprep.subr.mxu0 0.0
        %5999 = vmatpush1.msra.mxu0 0.0
        %6000 = vmatprep.subr.mxu0 0.0
        %6001 = vmatpush1.msra.mxu0 0.0
        %6002 = vmatprep.subr.mxu0 0.0
        %6003 = vmatpush1.msra.mxu0 0.0
        %6004 = vmatprep.subr.mxu0 0.0
        %6005 = vmatpush1.msra.mxu0 0.0
        %6006 = vmatprep.subr.mxu0 0.0
        %6007 = vmatpush1.msra.mxu0 0.0
        %6008 = vmatprep.subr.mxu0 0.0
        %6009 = vmatpush1.msra.mxu0 0.0
        %6010 = vmatprep.subr.mxu0 0.0
        %6011 = vmatpush1.msra.mxu0 0.0
        %6012 = vmatprep.subr.mxu0 0.0
        %6013 = vmatpush1.msra.mxu0 0.0
        %6014 = vmatprep.subr.mxu0 0.0
        %6015 = vmatpush1.msra.mxu0 0.0
        %6016 = vmatprep.subr.mxu0 0.0
        %6017 = vmatpush1.msra.mxu0 0.0
        %6018 = vmatprep.subr.mxu0 0.0
        %6019 = vmatpush1.msra.mxu0 0.0
        %6020 = vmatprep.subr.mxu0 0.0
        %6021 = vmatpush1.msra.mxu0 0.0
        %6022 = vmatprep.subr.mxu0 0.0
        %6023 = vmatpush1.msra.mxu0 0.0
        %6024 = vmatprep.subr.mxu0 0.0
        %6025 = vmatpush1.msra.mxu0 0.0
        %6026 = vmatprep.subr.mxu0 0.0
        %6027 = vmatpush1.msra.mxu0 0.0
        %6028 = vmatprep.subr.mxu0 0.0
        %6029 = vmatpush1.msra.mxu0 0.0
        %6030 = vmatprep.subr.mxu0 0.0
        %6031 = vmatpush1.msra.mxu0 0.0
        %6032 = vmatprep.subr.mxu0 0.0
        %6033 = vmatpush1.msra.mxu0 0.0
        %6034 = vmatprep.subr.mxu0 0.0
        %6035 = vmatpush1.msra.mxu0 0.0
        %6036 = vmatprep.subr.mxu0 0.0
        %6037 = vmatpush1.msra.mxu0 0.0
        %6038 = vmatprep.subr.mxu0 0.0
        %6039 = vmatpush1.msra.mxu0 0.0
        %6040 = vmatprep.subr.mxu0 0.0
        %6041 = vmatpush1.msra.mxu0 0.0
        %6042 = vmatprep.subr.mxu0 0.0
        %6043 = vmatpush1.msra.mxu0 0.0
        %6044 = vmatprep.subr.mxu0 0.0
        %6045 = vmatpush1.msra.mxu0 0.0
        %6046 = vmatprep.subr.mxu0 0.0
        %6047 = vmatpush1.msra.mxu0 0.0
        %6048 = vmatprep.subr.mxu0 0.0
        %6049 = vmatpush1.msra.mxu0 0.0
        %6050 = vmatprep.mubr.f32.mxu0 0.0
        %6051 = vmatmul.mubr.f32.gmra.mrb[0].mxu0 %v5913
        %v6052 = vpop.f32.mrb[0].mxu0
        %v6053 = vadd.f32 %v5908, %v6052
        %v6054 = vpop.f32.mrb[0].mxu0
        %v6055 = vadd.f32 %v5910, %v6054
        %6056 = vdwg.mxu0
        %s6057 = scalar_lea.vmem [#allocation20], 16
        %v6058 = vld [vmem:[%s6057] sm:$0xff]
        %s6059 = scalar_lea.vmem [#allocation19], 2048
        %v6060 = vld [vmem:[%s6059] sm:$0xff]
        %v6061 = vld [vmem:[%s6059 + $0x8] sm:$0xff]
        %v6062 = vld [vmem:[%s6059 + $0x10] sm:$0xff]
        %v6063 = vld [vmem:[%s6059 + $0x18] sm:$0xff]
        %v6064 = vld [vmem:[%s6059 + $0x20] sm:$0xff]
        %v6065 = vld [vmem:[%s6059 + $0x28] sm:$0xff]
        %v6066 = vld [vmem:[%s6059 + $0x30] sm:$0xff]
        %v6067 = vld [vmem:[%s6059 + $0x38] sm:$0xff]
        %v6068 = vld [vmem:[%s6059 + $0x40] sm:$0xff]
        %v6069 = vld [vmem:[%s6059 + $0x48] sm:$0xff]
        %v6070 = vld [vmem:[%s6059 + $0x50] sm:$0xff]
        %v6071 = vld [vmem:[%s6059 + $0x58] sm:$0xff]
        %v6072 = vld [vmem:[%s6059 + $0x60] sm:$0xff]
        %v6073 = vld [vmem:[%s6059 + $0x68] sm:$0xff]
        %v6074 = vld [vmem:[%s6059 + $0x70] sm:$0xff]
        %v6075 = vld [vmem:[%s6059 + $0x78] sm:$0xff]
        %v6076 = vld [vmem:[%s6059 + $0x80] sm:$0xff]
        %v6077 = vld [vmem:[%s6059 + $0x88] sm:$0xff]
        %v6078 = vld [vmem:[%s6059 + $0x90] sm:$0xff]
        %v6079 = vld [vmem:[%s6059 + $0x98] sm:$0xff]
        %v6080 = vld [vmem:[%s6059 + $0xa0] sm:$0xff]
        %v6081 = vld [vmem:[%s6059 + $0xa8] sm:$0xff]
        %v6082 = vld [vmem:[%s6059 + $0xb0] sm:$0xff]
        %v6083 = vld [vmem:[%s6059 + $0xb8] sm:$0xff]
        %v6084 = vld [vmem:[%s6059 + $0xc0] sm:$0xff]
        %v6085 = vld [vmem:[%s6059 + $0xc8] sm:$0xff]
        %v6086 = vld [vmem:[%s6059 + $0xd0] sm:$0xff]
        %v6087 = vld [vmem:[%s6059 + $0xd8] sm:$0xff]
        %v6088 = vld [vmem:[%s6059 + $0xe0] sm:$0xff]
        %v6089 = vld [vmem:[%s6059 + $0xe8] sm:$0xff]
        %v6090 = vld [vmem:[%s6059 + $0xf0] sm:$0xff]
        %v6091 = vld [vmem:[%s6059 + $0xf8] sm:$0xff]
        %v6092 = vld [vmem:[%s6059 + $0x100] sm:$0xff]
        %v6093 = vld [vmem:[%s6059 + $0x108] sm:$0xff]
        %v6094 = vld [vmem:[%s6059 + $0x110] sm:$0xff]
        %v6095 = vld [vmem:[%s6059 + $0x118] sm:$0xff]
        %v6096 = vld [vmem:[%s6059 + $0x120] sm:$0xff]
        %v6097 = vld [vmem:[%s6059 + $0x128] sm:$0xff]
        %v6098 = vld [vmem:[%s6059 + $0x130] sm:$0xff]
        %v6099 = vld [vmem:[%s6059 + $0x138] sm:$0xff]
        %v6100 = vld [vmem:[%s6059 + $0x140] sm:$0xff]
        %v6101 = vld [vmem:[%s6059 + $0x148] sm:$0xff]
        %v6102 = vld [vmem:[%s6059 + $0x150] sm:$0xff]
        %v6103 = vld [vmem:[%s6059 + $0x158] sm:$0xff]
        %v6104 = vld [vmem:[%s6059 + $0x160] sm:$0xff]
        %v6105 = vld [vmem:[%s6059 + $0x168] sm:$0xff]
        %v6106 = vld [vmem:[%s6059 + $0x170] sm:$0xff]
        %v6107 = vld [vmem:[%s6059 + $0x178] sm:$0xff]
        %v6108 = vld [vmem:[%s6059 + $0x180] sm:$0xff]
        %v6109 = vld [vmem:[%s6059 + $0x188] sm:$0xff]
        %v6110 = vld [vmem:[%s6059 + $0x190] sm:$0xff]
        %v6111 = vld [vmem:[%s6059 + $0x198] sm:$0xff]
        %v6112 = vld [vmem:[%s6059 + $0x1a0] sm:$0xff]
        %v6113 = vld [vmem:[%s6059 + $0x1a8] sm:$0xff]
        %v6114 = vld [vmem:[%s6059 + $0x1b0] sm:$0xff]
        %v6115 = vld [vmem:[%s6059 + $0x1b8] sm:$0xff]
        %v6116 = vld [vmem:[%s6059 + $0x1c0] sm:$0xff]
        %v6117 = vld [vmem:[%s6059 + $0x1c8] sm:$0xff]
        %v6118 = vld [vmem:[%s6059 + $0x1d0] sm:$0xff]
        %v6119 = vld [vmem:[%s6059 + $0x1d8] sm:$0xff]
        %v6120 = vld [vmem:[%s6059 + $0x1e0] sm:$0xff]
        %v6121 = vld [vmem:[%s6059 + $0x1e8] sm:$0xff]
        %v6122 = vld [vmem:[%s6059 + $0x1f0] sm:$0xff]
        %v6123 = vld [vmem:[%s6059 + $0x1f8] sm:$0xff]
        %v6124 = vld [vmem:[%s6059 + $0x200] sm:$0xff]
        %v6125 = vld [vmem:[%s6059 + $0x208] sm:$0xff]
        %v6126 = vld [vmem:[%s6059 + $0x210] sm:$0xff]
        %v6127 = vld [vmem:[%s6059 + $0x218] sm:$0xff]
        %v6128 = vld [vmem:[%s6059 + $0x220] sm:$0xff]
        %v6129 = vld [vmem:[%s6059 + $0x228] sm:$0xff]
        %v6130 = vld [vmem:[%s6059 + $0x230] sm:$0xff]
        %v6131 = vld [vmem:[%s6059 + $0x238] sm:$0xff]
        %v6132 = vld [vmem:[%s6059 + $0x240] sm:$0xff]
        %v6133 = vld [vmem:[%s6059 + $0x248] sm:$0xff]
        %v6134 = vld [vmem:[%s6059 + $0x250] sm:$0xff]
        %v6135 = vld [vmem:[%s6059 + $0x258] sm:$0xff]
        %v6136 = vld [vmem:[%s6059 + $0x260] sm:$0xff]
        %v6137 = vld [vmem:[%s6059 + $0x268] sm:$0xff]
        %v6138 = vld [vmem:[%s6059 + $0x270] sm:$0xff]
        %v6139 = vld [vmem:[%s6059 + $0x278] sm:$0xff]
        %v6140 = vld [vmem:[%s6059 + $0x280] sm:$0xff]
        %v6141 = vld [vmem:[%s6059 + $0x288] sm:$0xff]
        %v6142 = vld [vmem:[%s6059 + $0x290] sm:$0xff]
        %v6143 = vld [vmem:[%s6059 + $0x298] sm:$0xff]
        %v6144 = vld [vmem:[%s6059 + $0x2a0] sm:$0xff]
        %v6145 = vld [vmem:[%s6059 + $0x2a8] sm:$0xff]
        %v6146 = vld [vmem:[%s6059 + $0x2b0] sm:$0xff]
        %v6147 = vld [vmem:[%s6059 + $0x2b8] sm:$0xff]
        %v6148 = vld [vmem:[%s6059 + $0x2c0] sm:$0xff]
        %v6149 = vld [vmem:[%s6059 + $0x2c8] sm:$0xff]
        %v6150 = vld [vmem:[%s6059 + $0x2d0] sm:$0xff]
        %v6151 = vld [vmem:[%s6059 + $0x2d8] sm:$0xff]
        %v6152 = vld [vmem:[%s6059 + $0x2e0] sm:$0xff]
        %v6153 = vld [vmem:[%s6059 + $0x2e8] sm:$0xff]
        %v6154 = vld [vmem:[%s6059 + $0x2f0] sm:$0xff]
        %v6155 = vld [vmem:[%s6059 + $0x2f8] sm:$0xff]
        %v6156 = vld [vmem:[%s6059 + $0x300] sm:$0xff]
        %v6157 = vld [vmem:[%s6059 + $0x308] sm:$0xff]
        %v6158 = vld [vmem:[%s6059 + $0x310] sm:$0xff]
        %v6159 = vld [vmem:[%s6059 + $0x318] sm:$0xff]
        %v6160 = vld [vmem:[%s6059 + $0x320] sm:$0xff]
        %v6161 = vld [vmem:[%s6059 + $0x328] sm:$0xff]
        %v6162 = vld [vmem:[%s6059 + $0x330] sm:$0xff]
        %v6163 = vld [vmem:[%s6059 + $0x338] sm:$0xff]
        %v6164 = vld [vmem:[%s6059 + $0x340] sm:$0xff]
        %v6165 = vld [vmem:[%s6059 + $0x348] sm:$0xff]
        %v6166 = vld [vmem:[%s6059 + $0x350] sm:$0xff]
        %v6167 = vld [vmem:[%s6059 + $0x358] sm:$0xff]
        %v6168 = vld [vmem:[%s6059 + $0x360] sm:$0xff]
        %v6169 = vld [vmem:[%s6059 + $0x368] sm:$0xff]
        %v6170 = vld [vmem:[%s6059 + $0x370] sm:$0xff]
        %v6171 = vld [vmem:[%s6059 + $0x378] sm:$0xff]
        %v6172 = vld [vmem:[%s6059 + $0x380] sm:$0xff]
        %v6173 = vld [vmem:[%s6059 + $0x388] sm:$0xff]
        %v6174 = vld [vmem:[%s6059 + $0x390] sm:$0xff]
        %v6175 = vld [vmem:[%s6059 + $0x398] sm:$0xff]
        %v6176 = vld [vmem:[%s6059 + $0x3a0] sm:$0xff]
        %v6177 = vld [vmem:[%s6059 + $0x3a8] sm:$0xff]
        %v6178 = vld [vmem:[%s6059 + $0x3b0] sm:$0xff]
        %v6179 = vld [vmem:[%s6059 + $0x3b8] sm:$0xff]
        %v6180 = vld [vmem:[%s6059 + $0x3c0] sm:$0xff]
        %v6181 = vld [vmem:[%s6059 + $0x3c8] sm:$0xff]
        %v6182 = vld [vmem:[%s6059 + $0x3d0] sm:$0xff]
        %v6183 = vld [vmem:[%s6059 + $0x3d8] sm:$0xff]
        %v6184 = vld [vmem:[%s6059 + $0x3e0] sm:$0xff]
        %v6185 = vld [vmem:[%s6059 + $0x3e8] sm:$0xff]
        %v6186 = vld [vmem:[%s6059 + $0x3f0] sm:$0xff]
        %v6187 = vld [vmem:[%s6059 + $0x3f8] sm:$0xff]
        %6188 = vmatprep.subr.mxu0 %v6061
        %6189 = vmatpush1.msra.mxu0 %v6060
        %6190 = vmatprep.subr.mxu0 %v6065
        %6191 = vmatpush1.msra.mxu0 %v6064
        %6192 = vmatprep.subr.mxu0 %v6069
        %6193 = vmatpush1.msra.mxu0 %v6068
        %6194 = vmatprep.subr.mxu0 %v6073
        %6195 = vmatpush1.msra.mxu0 %v6072
        %6196 = vmatprep.subr.mxu0 %v6077
        %6197 = vmatpush1.msra.mxu0 %v6076
        %6198 = vmatprep.subr.mxu0 %v6081
        %6199 = vmatpush1.msra.mxu0 %v6080
        %6200 = vmatprep.subr.mxu0 %v6085
        %6201 = vmatpush1.msra.mxu0 %v6084
        %6202 = vmatprep.subr.mxu0 %v6089
        %6203 = vmatpush1.msra.mxu0 %v6088
        %6204 = vmatprep.subr.mxu0 %v6093
        %6205 = vmatpush1.msra.mxu0 %v6092
        %6206 = vmatprep.subr.mxu0 %v6097
        %6207 = vmatpush1.msra.mxu0 %v6096
        %6208 = vmatprep.subr.mxu0 %v6101
        %6209 = vmatpush1.msra.mxu0 %v6100
        %6210 = vmatprep.subr.mxu0 %v6105
        %6211 = vmatpush1.msra.mxu0 %v6104
        %6212 = vmatprep.subr.mxu0 %v6109
        %6213 = vmatpush1.msra.mxu0 %v6108
        %6214 = vmatprep.subr.mxu0 %v6113
        %6215 = vmatpush1.msra.mxu0 %v6112
        %6216 = vmatprep.subr.mxu0 %v6117
        %6217 = vmatpush1.msra.mxu0 %v6116
        %6218 = vmatprep.subr.mxu0 %v6121
        %6219 = vmatpush1.msra.mxu0 %v6120
        %6220 = vmatprep.subr.mxu0 %v6125
        %6221 = vmatpush1.msra.mxu0 %v6124
        %6222 = vmatprep.subr.mxu0 %v6129
        %6223 = vmatpush1.msra.mxu0 %v6128
        %6224 = vmatprep.subr.mxu0 %v6133
        %6225 = vmatpush1.msra.mxu0 %v6132
        %6226 = vmatprep.subr.mxu0 %v6137
        %6227 = vmatpush1.msra.mxu0 %v6136
        %6228 = vmatprep.subr.mxu0 %v6141
        %6229 = vmatpush1.msra.mxu0 %v6140
        %6230 = vmatprep.subr.mxu0 %v6145
        %6231 = vmatpush1.msra.mxu0 %v6144
        %6232 = vmatprep.subr.mxu0 %v6149
        %6233 = vmatpush1.msra.mxu0 %v6148
        %6234 = vmatprep.subr.mxu0 %v6153
        %6235 = vmatpush1.msra.mxu0 %v6152
        %6236 = vmatprep.subr.mxu0 %v6157
        %6237 = vmatpush1.msra.mxu0 %v6156
        %6238 = vmatprep.subr.mxu0 %v6161
        %6239 = vmatpush1.msra.mxu0 %v6160
        %6240 = vmatprep.subr.mxu0 %v6165
        %6241 = vmatpush1.msra.mxu0 %v6164
        %6242 = vmatprep.subr.mxu0 %v6169
        %6243 = vmatpush1.msra.mxu0 %v6168
        %6244 = vmatprep.subr.mxu0 %v6173
        %6245 = vmatpush1.msra.mxu0 %v6172
        %6246 = vmatprep.subr.mxu0 %v6177
        %6247 = vmatpush1.msra.mxu0 %v6176
        %6248 = vmatprep.subr.mxu0 %v6181
        %6249 = vmatpush1.msra.mxu0 %v6180
        %6250 = vmatprep.subr.mxu0 %v6185
        %6251 = vmatpush1.msra.mxu0 %v6184
        %6252 = vmatprep.mubr.f32.mxu0 %v5221
        %6253 = vmatmul.mubr.f32.gmra.mrb[0].mxu0 %v5220
        %v6254 = vpop.f32.mrb[0].mxu0
        %v6255 = vadd.f32 0.0, %v6254
        %v6256 = vpop.f32.mrb[0].mxu0
        %v6257 = vadd.f32 0.0, %v6256
        %6258 = vdwg.mxu0
        %6259 = vmatprep.subr.mxu0 %v6063
        %6260 = vmatpush1.msra.mxu0 %v6062
        %6261 = vmatprep.subr.mxu0 %v6067
        %6262 = vmatpush1.msra.mxu0 %v6066
        %6263 = vmatprep.subr.mxu0 %v6071
        %6264 = vmatpush1.msra.mxu0 %v6070
        %6265 = vmatprep.subr.mxu0 %v6075
        %6266 = vmatpush1.msra.mxu0 %v6074
        %6267 = vmatprep.subr.mxu0 %v6079
        %6268 = vmatpush1.msra.mxu0 %v6078
        %6269 = vmatprep.subr.mxu0 %v6083
        %6270 = vmatpush1.msra.mxu0 %v6082
        %6271 = vmatprep.subr.mxu0 %v6087
        %6272 = vmatpush1.msra.mxu0 %v6086
        %6273 = vmatprep.subr.mxu0 %v6091
        %6274 = vmatpush1.msra.mxu0 %v6090
        %6275 = vmatprep.subr.mxu0 %v6095
        %6276 = vmatpush1.msra.mxu0 %v6094
        %6277 = vmatprep.subr.mxu0 %v6099
        %6278 = vmatpush1.msra.mxu0 %v6098
        %6279 = vmatprep.subr.mxu0 %v6103
        %6280 = vmatpush1.msra.mxu0 %v6102
        %6281 = vmatprep.subr.mxu0 %v6107
        %6282 = vmatpush1.msra.mxu0 %v6106
        %6283 = vmatprep.subr.mxu0 %v6111
        %6284 = vmatpush1.msra.mxu0 %v6110
        %6285 = vmatprep.subr.mxu0 %v6115
        %6286 = vmatpush1.msra.mxu0 %v6114
        %6287 = vmatprep.subr.mxu0 %v6119
        %6288 = vmatpush1.msra.mxu0 %v6118
        %6289 = vmatprep.subr.mxu0 %v6123
        %6290 = vmatpush1.msra.mxu0 %v6122
        %6291 = vmatprep.subr.mxu0 %v6127
        %6292 = vmatpush1.msra.mxu0 %v6126
        %6293 = vmatprep.subr.mxu0 %v6131
        %6294 = vmatpush1.msra.mxu0 %v6130
        %6295 = vmatprep.subr.mxu0 %v6135
        %6296 = vmatpush1.msra.mxu0 %v6134
        %6297 = vmatprep.subr.mxu0 %v6139
        %6298 = vmatpush1.msra.mxu0 %v6138
        %6299 = vmatprep.subr.mxu0 %v6143
        %6300 = vmatpush1.msra.mxu0 %v6142
        %6301 = vmatprep.subr.mxu0 %v6147
        %6302 = vmatpush1.msra.mxu0 %v6146
        %6303 = vmatprep.subr.mxu0 %v6151
        %6304 = vmatpush1.msra.mxu0 %v6150
        %6305 = vmatprep.subr.mxu0 %v6155
        %6306 = vmatpush1.msra.mxu0 %v6154
        %6307 = vmatprep.subr.mxu0 %v6159
        %6308 = vmatpush1.msra.mxu0 %v6158
        %6309 = vmatprep.subr.mxu0 %v6163
        %6310 = vmatpush1.msra.mxu0 %v6162
        %6311 = vmatprep.subr.mxu0 %v6167
        %6312 = vmatpush1.msra.mxu0 %v6166
        %6313 = vmatprep.subr.mxu0 %v6171
        %6314 = vmatpush1.msra.mxu0 %v6170
        %6315 = vmatprep.subr.mxu0 %v6175
        %6316 = vmatpush1.msra.mxu0 %v6174
        %6317 = vmatprep.subr.mxu0 %v6179
        %6318 = vmatpush1.msra.mxu0 %v6178
        %6319 = vmatprep.subr.mxu0 %v6183
        %6320 = vmatpush1.msra.mxu0 %v6182
        %6321 = vmatprep.subr.mxu0 %v6187
        %6322 = vmatpush1.msra.mxu0 %v6186
        %6323 = vmatprep.mubr.f32.mxu0 %v5221
        %6324 = vmatmul.mubr.f32.gmra.mrb[0].mxu0 %v5220
        %v6325 = vpop.f32.mrb[0].mxu0
        %v6326 = vadd.f32 0.0, %v6325
        %v6327 = vpop.f32.mrb[0].mxu0
        %v6328 = vadd.f32 0.0, %v6327
        %6329 = vdwg.mxu0
        %v6331 = vsel %vm5766, %v6058, 0
        %6333 = vmatprep.subr.mxu0 %v6257
        %6334 = vmatpush1.msra.mxu0 %v6255
        %6335 = vmatprep.subr.mxu0 0.0
        %6336 = vmatpush1.msra.mxu0 0.0
        %6337 = vmatprep.subr.mxu0 0.0
        %6338 = vmatpush1.msra.mxu0 0.0
        %6339 = vmatprep.subr.mxu0 0.0
        %6340 = vmatpush1.msra.mxu0 0.0
        %6341 = vmatprep.subr.mxu0 0.0
        %6342 = vmatpush1.msra.mxu0 0.0
        %6343 = vmatprep.subr.mxu0 0.0
        %6344 = vmatpush1.msra.mxu0 0.0
        %6345 = vmatprep.subr.mxu0 0.0
        %6346 = vmatpush1.msra.mxu0 0.0
        %6347 = vmatprep.subr.mxu0 0.0
        %6348 = vmatpush1.msra.mxu0 0.0
        %6349 = vmatprep.subr.mxu0 0.0
        %6350 = vmatpush1.msra.mxu0 0.0
        %6351 = vmatprep.subr.mxu0 0.0
        %6352 = vmatpush1.msra.mxu0 0.0
        %6353 = vmatprep.subr.mxu0 0.0
        %6354 = vmatpush1.msra.mxu0 0.0
        %6355 = vmatprep.subr.mxu0 0.0
        %6356 = vmatpush1.msra.mxu0 0.0
        %6357 = vmatprep.subr.mxu0 0.0
        %6358 = vmatpush1.msra.mxu0 0.0
        %6359 = vmatprep.subr.mxu0 0.0
        %6360 = vmatpush1.msra.mxu0 0.0
        %6361 = vmatprep.subr.mxu0 0.0
        %6362 = vmatpush1.msra.mxu0 0.0
        %6363 = vmatprep.subr.mxu0 0.0
        %6364 = vmatpush1.msra.mxu0 0.0
        %6365 = vmatprep.subr.mxu0 0.0
        %6366 = vmatpush1.msra.mxu0 0.0
        %6367 = vmatprep.subr.mxu0 0.0
        %6368 = vmatpush1.msra.mxu0 0.0
        %6369 = vmatprep.subr.mxu0 0.0
        %6370 = vmatpush1.msra.mxu0 0.0
        %6371 = vmatprep.subr.mxu0 0.0
        %6372 = vmatpush1.msra.mxu0 0.0
        %6373 = vmatprep.subr.mxu0 0.0
        %6374 = vmatpush1.msra.mxu0 0.0
        %6375 = vmatprep.subr.mxu0 0.0
        %6376 = vmatpush1.msra.mxu0 0.0
        %6377 = vmatprep.subr.mxu0 0.0
        %6378 = vmatpush1.msra.mxu0 0.0
        %6379 = vmatprep.subr.mxu0 0.0
        %6380 = vmatpush1.msra.mxu0 0.0
        %6381 = vmatprep.subr.mxu0 0.0
        %6382 = vmatpush1.msra.mxu0 0.0
        %6383 = vmatprep.subr.mxu0 0.0
        %6384 = vmatpush1.msra.mxu0 0.0
        %6385 = vmatprep.subr.mxu0 0.0
        %6386 = vmatpush1.msra.mxu0 0.0
        %6387 = vmatprep.subr.mxu0 0.0
        %6388 = vmatpush1.msra.mxu0 0.0
        %6389 = vmatprep.subr.mxu0 0.0
        %6390 = vmatpush1.msra.mxu0 0.0
        %6391 = vmatprep.subr.mxu0 0.0
        %6392 = vmatpush1.msra.mxu0 0.0
        %6393 = vmatprep.subr.mxu0 0.0
        %6394 = vmatpush1.msra.mxu0 0.0
        %6395 = vmatprep.subr.mxu0 0.0
        %6396 = vmatpush1.msra.mxu0 0.0
        %6397 = vmatprep.mubr.f32.mxu0 0.0
        %6398 = vmatmul.mubr.f32.gmra.mrb[0].mxu0 %v6331
        %v6399 = vpop.f32.mrb[0].mxu0
        %v6400 = vadd.f32 0.0, %v6399
        %v6401 = vpop.f32.mrb[0].mxu0
        %v6402 = vadd.f32 0.0, %v6401
        %6403 = vdwg.mxu0
        %6404 = vmatprep.subr.mxu0 %v6328
        %6405 = vmatpush1.msra.mxu0 %v6326
        %6406 = vmatprep.subr.mxu0 0.0
        %6407 = vmatpush1.msra.mxu0 0.0
        %6408 = vmatprep.subr.mxu0 0.0
        %6409 = vmatpush1.msra.mxu0 0.0
        %6410 = vmatprep.subr.mxu0 0.0
        %6411 = vmatpush1.msra.mxu0 0.0
        %6412 = vmatprep.subr.mxu0 0.0
        %6413 = vmatpush1.msra.mxu0 0.0
        %6414 = vmatprep.subr.mxu0 0.0
        %6415 = vmatpush1.msra.mxu0 0.0
        %6416 = vmatprep.subr.mxu0 0.0
        %6417 = vmatpush1.msra.mxu0 0.0
        %6418 = vmatprep.subr.mxu0 0.0
        %6419 = vmatpush1.msra.mxu0 0.0
        %6420 = vmatprep.subr.mxu0 0.0
        %6421 = vmatpush1.msra.mxu0 0.0
        %6422 = vmatprep.subr.mxu0 0.0
        %6423 = vmatpush1.msra.mxu0 0.0
        %6424 = vmatprep.subr.mxu0 0.0
        %6425 = vmatpush1.msra.mxu0 0.0
        %6426 = vmatprep.subr.mxu0 0.0
        %6427 = vmatpush1.msra.mxu0 0.0
        %6428 = vmatprep.subr.mxu0 0.0
        %6429 = vmatpush1.msra.mxu0 0.0
        %6430 = vmatprep.subr.mxu0 0.0
        %6431 = vmatpush1.msra.mxu0 0.0
        %6432 = vmatprep.subr.mxu0 0.0
        %6433 = vmatpush1.msra.mxu0 0.0
        %6434 = vmatprep.subr.mxu0 0.0
        %6435 = vmatpush1.msra.mxu0 0.0
        %6436 = vmatprep.subr.mxu0 0.0
        %6437 = vmatpush1.msra.mxu0 0.0
        %6438 = vmatprep.subr.mxu0 0.0
        %6439 = vmatpush1.msra.mxu0 0.0
        %6440 = vmatprep.subr.mxu0 0.0
        %6441 = vmatpush1.msra.mxu0 0.0
        %6442 = vmatprep.subr.mxu0 0.0
        %6443 = vmatpush1.msra.mxu0 0.0
        %6444 = vmatprep.subr.mxu0 0.0
        %6445 = vmatpush1.msra.mxu0 0.0
        %6446 = vmatprep.subr.mxu0 0.0
        %6447 = vmatpush1.msra.mxu0 0.0
        %6448 = vmatprep.subr.mxu0 0.0
        %6449 = vmatpush1.msra.mxu0 0.0
        %6450 = vmatprep.subr.mxu0 0.0
        %6451 = vmatpush1.msra.mxu0 0.0
        %6452 = vmatprep.subr.mxu0 0.0
        %6453 = vmatpush1.msra.mxu0 0.0
        %6454 = vmatprep.subr.mxu0 0.0
        %6455 = vmatpush1.msra.mxu0 0.0
        %6456 = vmatprep.subr.mxu0 0.0
        %6457 = vmatpush1.msra.mxu0 0.0
        %6458 = vmatprep.subr.mxu0 0.0
        %6459 = vmatpush1.msra.mxu0 0.0
        %6460 = vmatprep.subr.mxu0 0.0
        %6461 = vmatpush1.msra.mxu0 0.0
        %6462 = vmatprep.subr.mxu0 0.0
        %6463 = vmatpush1.msra.mxu0 0.0
        %6464 = vmatprep.subr.mxu0 0.0
        %6465 = vmatpush1.msra.mxu0 0.0
        %6466 = vmatprep.subr.mxu0 0.0
        %6467 = vmatpush1.msra.mxu0 0.0
        %6468 = vmatprep.mubr.f32.mxu0 0.0
        %6469 = vmatmul.mubr.f32.gmra.mrb[0].mxu0 %v6331
        %v6470 = vpop.f32.mrb[0].mxu0
        %v6471 = vadd.f32 0.0, %v6470
        %v6472 = vpop.f32.mrb[0].mxu0
        %v6473 = vadd.f32 0.0, %v6472
        %6474 = vdwg.mxu0
        %v6475 = vadd.f32 %v5982, %v6400
        %v6476 = vadd.f32 %v5984, %v6402
        %v6477 = vadd.f32 %v6053, %v6471
        %v6478 = vadd.f32 %v6055, %v6473
        %v6479 = vld [vmem:[#allocation23] sm:$0xf]
        %v6481 = vlaneseq
        %v6482 = vshrl.u32 %v6481, 7
        %v6483 = vsub.s32 0, %v6482
        %v6484 = vrot.slane %v6479, %v6483
        %v6485 = vlaneseq
        %v6486 = vshrl.u32 %v6485, 7
        %v6487 = vsub.s32 1, %v6486
        %v6488 = vrot.slane %v6479, %v6487
        %v6489 = vlaneseq
        %v6490 = vshrl.u32 %v6489, 7
        %v6491 = vsub.s32 2, %v6490
        %v6492 = vrot.slane %v6479, %v6491
        %v6493 = vlaneseq
        %v6494 = vshrl.u32 %v6493, 7
        %v6495 = vsub.s32 3, %v6494
        %v6496 = vrot.slane %v6479, %v6495
        %v6501 = vmul.f32 %v6475, %v6484
        %v6502 = vmul.f32 %v6476, %v6488
        %v6503 = vmul.f32 %v6477, %v6492
        %v6504 = vmul.f32 %v6478, %v6496
        %s6505 = scalar_lea.vmem [#allocation23], 4
        %v6506 = vld [vmem:[%s6505] sm:$0xf]
        %v6508 = vlaneseq
        %v6509 = vshrl.u32 %v6508, 7
        %v6510 = vsub.s32 0, %v6509
        %v6511 = vrot.slane %v6506, %v6510
        %v6512 = vlaneseq
        %v6513 = vshrl.u32 %v6512, 7
        %v6514 = vsub.s32 1, %v6513
        %v6515 = vrot.slane %v6506, %v6514
        %v6516 = vlaneseq
        %v6517 = vshrl.u32 %v6516, 7
        %v6518 = vsub.s32 2, %v6517
        %v6519 = vrot.slane %v6506, %v6518
        %v6520 = vlaneseq
        %v6521 = vshrl.u32 %v6520, 7
        %v6522 = vsub.s32 3, %v6521
        %v6523 = vrot.slane %v6506, %v6522
        %v6528 = vadd.f32 %v6501, %v6511
        %v6529 = vadd.f32 %v6502, %v6515
        %v6530 = vadd.f32 %v6503, %v6519
        %v6531 = vadd.f32 %v6504, %v6523
        %v6532 = vmax.f32 %v6528, 0.0
        %v6533 = vmax.f32 %v6529, 0.0
        %v6534 = vmax.f32 %v6530, 0.0
        %v6535 = vmax.f32 %v6531, 0.0
        %v6536 = vld [vmem:[#allocation22] sm:$0xff]
        %v6537 = vld [vmem:[#allocation22 + $0x8] sm:$0xff]
        %v6538 = vld [vmem:[#allocation22 + $0x10] sm:$0xff]
        %v6539 = vld [vmem:[#allocation22 + $0x18] sm:$0xff]
        %v6540 = vld [vmem:[#allocation22 + $0x20] sm:$0xff]
        %v6541 = vld [vmem:[#allocation22 + $0x28] sm:$0xff]
        %v6542 = vld [vmem:[#allocation22 + $0x30] sm:$0xff]
        %v6543 = vld [vmem:[#allocation22 + $0x38] sm:$0xff]
        %v6544 = vld [vmem:[#allocation22 + $0x40] sm:$0xff]
        %v6545 = vld [vmem:[#allocation22 + $0x48] sm:$0xff]
        %v6546 = vld [vmem:[#allocation22 + $0x50] sm:$0xff]
        %v6547 = vld [vmem:[#allocation22 + $0x58] sm:$0xff]
        %v6548 = vld [vmem:[#allocation22 + $0x60] sm:$0xff]
        %v6549 = vld [vmem:[#allocation22 + $0x68] sm:$0xff]
        %v6550 = vld [vmem:[#allocation22 + $0x70] sm:$0xff]
        %v6551 = vld [vmem:[#allocation22 + $0x78] sm:$0xff]
        %v6552 = vld [vmem:[#allocation22 + $0x80] sm:$0xff]
        %v6553 = vld [vmem:[#allocation22 + $0x88] sm:$0xff]
        %v6554 = vld [vmem:[#allocation22 + $0x90] sm:$0xff]
        %v6555 = vld [vmem:[#allocation22 + $0x98] sm:$0xff]
        %v6556 = vld [vmem:[#allocation22 + $0xa0] sm:$0xff]
        %v6557 = vld [vmem:[#allocation22 + $0xa8] sm:$0xff]
        %v6558 = vld [vmem:[#allocation22 + $0xb0] sm:$0xff]
        %v6559 = vld [vmem:[#allocation22 + $0xb8] sm:$0xff]
        %v6560 = vld [vmem:[#allocation22 + $0xc0] sm:$0xff]
        %v6561 = vld [vmem:[#allocation22 + $0xc8] sm:$0xff]
        %v6562 = vld [vmem:[#allocation22 + $0xd0] sm:$0xff]
        %v6563 = vld [vmem:[#allocation22 + $0xd8] sm:$0xff]
        %v6564 = vld [vmem:[#allocation22 + $0xe0] sm:$0xff]
        %v6565 = vld [vmem:[#allocation22 + $0xe8] sm:$0xff]
        %v6566 = vld [vmem:[#allocation22 + $0xf0] sm:$0xff]
        %v6567 = vld [vmem:[#allocation22 + $0xf8] sm:$0xff]
        %v6568 = vld [vmem:[#allocation22 + $0x100] sm:$0xff]
        %v6569 = vld [vmem:[#allocation22 + $0x108] sm:$0xff]
        %v6570 = vld [vmem:[#allocation22 + $0x110] sm:$0xff]
        %v6571 = vld [vmem:[#allocation22 + $0x118] sm:$0xff]
        %v6572 = vld [vmem:[#allocation22 + $0x120] sm:$0xff]
        %v6573 = vld [vmem:[#allocation22 + $0x128] sm:$0xff]
        %v6574 = vld [vmem:[#allocation22 + $0x130] sm:$0xff]
        %v6575 = vld [vmem:[#allocation22 + $0x138] sm:$0xff]
        %v6576 = vld [vmem:[#allocation22 + $0x140] sm:$0xff]
        %v6577 = vld [vmem:[#allocation22 + $0x148] sm:$0xff]
        %v6578 = vld [vmem:[#allocation22 + $0x150] sm:$0xff]
        %v6579 = vld [vmem:[#allocation22 + $0x158] sm:$0xff]
        %v6580 = vld [vmem:[#allocation22 + $0x160] sm:$0xff]
        %v6581 = vld [vmem:[#allocation22 + $0x168] sm:$0xff]
        %v6582 = vld [vmem:[#allocation22 + $0x170] sm:$0xff]
        %v6583 = vld [vmem:[#allocation22 + $0x178] sm:$0xff]
        %v6584 = vld [vmem:[#allocation22 + $0x180] sm:$0xff]
        %v6585 = vld [vmem:[#allocation22 + $0x188] sm:$0xff]
        %v6586 = vld [vmem:[#allocation22 + $0x190] sm:$0xff]
        %v6587 = vld [vmem:[#allocation22 + $0x198] sm:$0xff]
        %v6588 = vld [vmem:[#allocation22 + $0x1a0] sm:$0xff]
        %v6589 = vld [vmem:[#allocation22 + $0x1a8] sm:$0xff]
        %v6590 = vld [vmem:[#allocation22 + $0x1b0] sm:$0xff]
        %v6591 = vld [vmem:[#allocation22 + $0x1b8] sm:$0xff]
        %v6592 = vld [vmem:[#allocation22 + $0x1c0] sm:$0xff]
        %v6593 = vld [vmem:[#allocation22 + $0x1c8] sm:$0xff]
        %v6594 = vld [vmem:[#allocation22 + $0x1d0] sm:$0xff]
        %v6595 = vld [vmem:[#allocation22 + $0x1d8] sm:$0xff]
        %v6596 = vld [vmem:[#allocation22 + $0x1e0] sm:$0xff]
        %v6597 = vld [vmem:[#allocation22 + $0x1e8] sm:$0xff]
        %v6598 = vld [vmem:[#allocation22 + $0x1f0] sm:$0xff]
        %v6599 = vld [vmem:[#allocation22 + $0x1f8] sm:$0xff]
        %v6600 = vld [vmem:[#allocation22 + $0x200] sm:$0xff]
        %v6601 = vld [vmem:[#allocation22 + $0x208] sm:$0xff]
        %v6602 = vld [vmem:[#allocation22 + $0x210] sm:$0xff]
        %v6603 = vld [vmem:[#allocation22 + $0x218] sm:$0xff]
        %v6604 = vld [vmem:[#allocation22 + $0x220] sm:$0xff]
        %v6605 = vld [vmem:[#allocation22 + $0x228] sm:$0xff]
        %v6606 = vld [vmem:[#allocation22 + $0x230] sm:$0xff]
        %v6607 = vld [vmem:[#allocation22 + $0x238] sm:$0xff]
        %v6608 = vld [vmem:[#allocation22 + $0x240] sm:$0xff]
        %v6609 = vld [vmem:[#allocation22 + $0x248] sm:$0xff]
        %v6610 = vld [vmem:[#allocation22 + $0x250] sm:$0xff]
        %v6611 = vld [vmem:[#allocation22 + $0x258] sm:$0xff]
        %v6612 = vld [vmem:[#allocation22 + $0x260] sm:$0xff]
        %v6613 = vld [vmem:[#allocation22 + $0x268] sm:$0xff]
        %v6614 = vld [vmem:[#allocation22 + $0x270] sm:$0xff]
        %v6615 = vld [vmem:[#allocation22 + $0x278] sm:$0xff]
        %v6616 = vld [vmem:[#allocation22 + $0x280] sm:$0xff]
        %v6617 = vld [vmem:[#allocation22 + $0x288] sm:$0xff]
        %v6618 = vld [vmem:[#allocation22 + $0x290] sm:$0xff]
        %v6619 = vld [vmem:[#allocation22 + $0x298] sm:$0xff]
        %v6620 = vld [vmem:[#allocation22 + $0x2a0] sm:$0xff]
        %v6621 = vld [vmem:[#allocation22 + $0x2a8] sm:$0xff]
        %v6622 = vld [vmem:[#allocation22 + $0x2b0] sm:$0xff]
        %v6623 = vld [vmem:[#allocation22 + $0x2b8] sm:$0xff]
        %v6624 = vld [vmem:[#allocation22 + $0x2c0] sm:$0xff]
        %v6625 = vld [vmem:[#allocation22 + $0x2c8] sm:$0xff]
        %v6626 = vld [vmem:[#allocation22 + $0x2d0] sm:$0xff]
        %v6627 = vld [vmem:[#allocation22 + $0x2d8] sm:$0xff]
        %v6628 = vld [vmem:[#allocation22 + $0x2e0] sm:$0xff]
        %v6629 = vld [vmem:[#allocation22 + $0x2e8] sm:$0xff]
        %v6630 = vld [vmem:[#allocation22 + $0x2f0] sm:$0xff]
        %v6631 = vld [vmem:[#allocation22 + $0x2f8] sm:$0xff]
        %v6632 = vld [vmem:[#allocation22 + $0x300] sm:$0xff]
        %v6633 = vld [vmem:[#allocation22 + $0x308] sm:$0xff]
        %v6634 = vld [vmem:[#allocation22 + $0x310] sm:$0xff]
        %v6635 = vld [vmem:[#allocation22 + $0x318] sm:$0xff]
        %v6636 = vld [vmem:[#allocation22 + $0x320] sm:$0xff]
        %v6637 = vld [vmem:[#allocation22 + $0x328] sm:$0xff]
        %v6638 = vld [vmem:[#allocation22 + $0x330] sm:$0xff]
        %v6639 = vld [vmem:[#allocation22 + $0x338] sm:$0xff]
        %v6640 = vld [vmem:[#allocation22 + $0x340] sm:$0xff]
        %v6641 = vld [vmem:[#allocation22 + $0x348] sm:$0xff]
        %v6642 = vld [vmem:[#allocation22 + $0x350] sm:$0xff]
        %v6643 = vld [vmem:[#allocation22 + $0x358] sm:$0xff]
        %v6644 = vld [vmem:[#allocation22 + $0x360] sm:$0xff]
        %v6645 = vld [vmem:[#allocation22 + $0x368] sm:$0xff]
        %v6646 = vld [vmem:[#allocation22 + $0x370] sm:$0xff]
        %v6647 = vld [vmem:[#allocation22 + $0x378] sm:$0xff]
        %v6648 = vld [vmem:[#allocation22 + $0x380] sm:$0xff]
        %v6649 = vld [vmem:[#allocation22 + $0x388] sm:$0xff]
        %v6650 = vld [vmem:[#allocation22 + $0x390] sm:$0xff]
        %v6651 = vld [vmem:[#allocation22 + $0x398] sm:$0xff]
        %v6652 = vld [vmem:[#allocation22 + $0x3a0] sm:$0xff]
        %v6653 = vld [vmem:[#allocation22 + $0x3a8] sm:$0xff]
        %v6654 = vld [vmem:[#allocation22 + $0x3b0] sm:$0xff]
        %v6655 = vld [vmem:[#allocation22 + $0x3b8] sm:$0xff]
        %v6656 = vld [vmem:[#allocation22 + $0x3c0] sm:$0xff]
        %v6657 = vld [vmem:[#allocation22 + $0x3c8] sm:$0xff]
        %v6658 = vld [vmem:[#allocation22 + $0x3d0] sm:$0xff]
        %v6659 = vld [vmem:[#allocation22 + $0x3d8] sm:$0xff]
        %v6660 = vld [vmem:[#allocation22 + $0x3e0] sm:$0xff]
        %v6661 = vld [vmem:[#allocation22 + $0x3e8] sm:$0xff]
        %v6662 = vld [vmem:[#allocation22 + $0x3f0] sm:$0xff]
        %v6663 = vld [vmem:[#allocation22 + $0x3f8] sm:$0xff]
        %6664 = vmatprep.subr.mxu0 %v6537
        %6665 = vmatpush1.msra.mxu0 %v6536
        %6666 = vmatprep.subr.mxu0 %v6539
        %6667 = vmatpush1.msra.mxu0 %v6538
        %6668 = vmatprep.subr.mxu0 %v6541
        %6669 = vmatpush1.msra.mxu0 %v6540
        %6670 = vmatprep.subr.mxu0 %v6543
        %6671 = vmatpush1.msra.mxu0 %v6542
        %6672 = vmatprep.subr.mxu0 %v6545
        %6673 = vmatpush1.msra.mxu0 %v6544
        %6674 = vmatprep.subr.mxu0 %v6547
        %6675 = vmatpush1.msra.mxu0 %v6546
        %6676 = vmatprep.subr.mxu0 %v6549
        %6677 = vmatpush1.msra.mxu0 %v6548
        %6678 = vmatprep.subr.mxu0 %v6551
        %6679 = vmatpush1.msra.mxu0 %v6550
        %6680 = vmatprep.subr.mxu0 %v6553
        %6681 = vmatpush1.msra.mxu0 %v6552
        %6682 = vmatprep.subr.mxu0 %v6555
        %6683 = vmatpush1.msra.mxu0 %v6554
        %6684 = vmatprep.subr.mxu0 %v6557
        %6685 = vmatpush1.msra.mxu0 %v6556
        %6686 = vmatprep.subr.mxu0 %v6559
        %6687 = vmatpush1.msra.mxu0 %v6558
        %6688 = vmatprep.subr.mxu0 %v6561
        %6689 = vmatpush1.msra.mxu0 %v6560
        %6690 = vmatprep.subr.mxu0 %v6563
        %6691 = vmatpush1.msra.mxu0 %v6562
        %6692 = vmatprep.subr.mxu0 %v6565
        %6693 = vmatpush1.msra.mxu0 %v6564
        %6694 = vmatprep.subr.mxu0 %v6567
        %6695 = vmatpush1.msra.mxu0 %v6566
        %6696 = vmatprep.subr.mxu0 %v6569
        %6697 = vmatpush1.msra.mxu0 %v6568
        %6698 = vmatprep.subr.mxu0 %v6571
        %6699 = vmatpush1.msra.mxu0 %v6570
        %6700 = vmatprep.subr.mxu0 %v6573
        %6701 = vmatpush1.msra.mxu0 %v6572
        %6702 = vmatprep.subr.mxu0 %v6575
        %6703 = vmatpush1.msra.mxu0 %v6574
        %6704 = vmatprep.subr.mxu0 %v6577
        %6705 = vmatpush1.msra.mxu0 %v6576
        %6706 = vmatprep.subr.mxu0 %v6579
        %6707 = vmatpush1.msra.mxu0 %v6578
        %6708 = vmatprep.subr.mxu0 %v6581
        %6709 = vmatpush1.msra.mxu0 %v6580
        %6710 = vmatprep.subr.mxu0 %v6583
        %6711 = vmatpush1.msra.mxu0 %v6582
        %6712 = vmatprep.subr.mxu0 %v6585
        %6713 = vmatpush1.msra.mxu0 %v6584
        %6714 = vmatprep.subr.mxu0 %v6587
        %6715 = vmatpush1.msra.mxu0 %v6586
        %6716 = vmatprep.subr.mxu0 %v6589
        %6717 = vmatpush1.msra.mxu0 %v6588
        %6718 = vmatprep.subr.mxu0 %v6591
        %6719 = vmatpush1.msra.mxu0 %v6590
        %6720 = vmatprep.subr.mxu0 %v6593
        %6721 = vmatpush1.msra.mxu0 %v6592
        %6722 = vmatprep.subr.mxu0 %v6595
        %6723 = vmatpush1.msra.mxu0 %v6594
        %6724 = vmatprep.subr.mxu0 %v6597
        %6725 = vmatpush1.msra.mxu0 %v6596
        %6726 = vmatprep.subr.mxu0 %v6599
        %6727 = vmatpush1.msra.mxu0 %v6598
        %6728 = vmatprep.mubr.f32.mxu0 %v6533
        %6729 = vmatmul.mubr.f32.gmra.mrb[0].mxu0 %v6532
        %v6730 = vpop.f32.mrb[0].mxu0
        %v6731 = vadd.f32 0.0, %v6730
        %v6732 = vpop.f32.mrb[0].mxu0
        %v6733 = vadd.f32 0.0, %v6732
        %6734 = vdwg.mxu0
        %6735 = vmatprep.subr.mxu0 %v6601
        %6736 = vmatpush1.msra.mxu0 %v6600
        %6737 = vmatprep.subr.mxu0 %v6603
        %6738 = vmatpush1.msra.mxu0 %v6602
        %6739 = vmatprep.subr.mxu0 %v6605
        %6740 = vmatpush1.msra.mxu0 %v6604
        %6741 = vmatprep.subr.mxu0 %v6607
        %6742 = vmatpush1.msra.mxu0 %v6606
        %6743 = vmatprep.subr.mxu0 %v6609
        %6744 = vmatpush1.msra.mxu0 %v6608
        %6745 = vmatprep.subr.mxu0 %v6611
        %6746 = vmatpush1.msra.mxu0 %v6610
        %6747 = vmatprep.subr.mxu0 %v6613
        %6748 = vmatpush1.msra.mxu0 %v6612
        %6749 = vmatprep.subr.mxu0 %v6615
        %6750 = vmatpush1.msra.mxu0 %v6614
        %6751 = vmatprep.subr.mxu0 %v6617
        %6752 = vmatpush1.msra.mxu0 %v6616
        %6753 = vmatprep.subr.mxu0 %v6619
        %6754 = vmatpush1.msra.mxu0 %v6618
        %6755 = vmatprep.subr.mxu0 %v6621
        %6756 = vmatpush1.msra.mxu0 %v6620
        %6757 = vmatprep.subr.mxu0 %v6623
        %6758 = vmatpush1.msra.mxu0 %v6622
        %6759 = vmatprep.subr.mxu0 %v6625
        %6760 = vmatpush1.msra.mxu0 %v6624
        %6761 = vmatprep.subr.mxu0 %v6627
        %6762 = vmatpush1.msra.mxu0 %v6626
        %6763 = vmatprep.subr.mxu0 %v6629
        %6764 = vmatpush1.msra.mxu0 %v6628
        %6765 = vmatprep.subr.mxu0 %v6631
        %6766 = vmatpush1.msra.mxu0 %v6630
        %6767 = vmatprep.subr.mxu0 %v6633
        %6768 = vmatpush1.msra.mxu0 %v6632
        %6769 = vmatprep.subr.mxu0 %v6635
        %6770 = vmatpush1.msra.mxu0 %v6634
        %6771 = vmatprep.subr.mxu0 %v6637
        %6772 = vmatpush1.msra.mxu0 %v6636
        %6773 = vmatprep.subr.mxu0 %v6639
        %6774 = vmatpush1.msra.mxu0 %v6638
        %6775 = vmatprep.subr.mxu0 %v6641
        %6776 = vmatpush1.msra.mxu0 %v6640
        %6777 = vmatprep.subr.mxu0 %v6643
        %6778 = vmatpush1.msra.mxu0 %v6642
        %6779 = vmatprep.subr.mxu0 %v6645
        %6780 = vmatpush1.msra.mxu0 %v6644
        %6781 = vmatprep.subr.mxu0 %v6647
        %6782 = vmatpush1.msra.mxu0 %v6646
        %6783 = vmatprep.subr.mxu0 %v6649
        %6784 = vmatpush1.msra.mxu0 %v6648
        %6785 = vmatprep.subr.mxu0 %v6651
        %6786 = vmatpush1.msra.mxu0 %v6650
        %6787 = vmatprep.subr.mxu0 %v6653
        %6788 = vmatpush1.msra.mxu0 %v6652
        %6789 = vmatprep.subr.mxu0 %v6655
        %6790 = vmatpush1.msra.mxu0 %v6654
        %6791 = vmatprep.subr.mxu0 %v6657
        %6792 = vmatpush1.msra.mxu0 %v6656
        %6793 = vmatprep.subr.mxu0 %v6659
        %6794 = vmatpush1.msra.mxu0 %v6658
        %6795 = vmatprep.subr.mxu0 %v6661
        %6796 = vmatpush1.msra.mxu0 %v6660
        %6797 = vmatprep.subr.mxu0 %v6663
        %6798 = vmatpush1.msra.mxu0 %v6662
        %6799 = vmatprep.mubr.f32.mxu0 %v6535
        %6800 = vmatmul.mubr.f32.gmra.mrb[0].mxu0 %v6534
        %v6801 = vpop.f32.mrb[0].mxu0
        %v6802 = vadd.f32 %v6731, %v6801
        %v6803 = vpop.f32.mrb[0].mxu0
        %v6804 = vadd.f32 %v6733, %v6803
        %6805 = vdwg.mxu0
        %s6806 = scalar_lea.vmem [#allocation22], 1024
        %v6807 = vld [vmem:[%s6806] sm:$0xff]
        %v6808 = vld [vmem:[%s6806 + $0x8] sm:$0xff]
        %v6809 = vld [vmem:[%s6806 + $0x10] sm:$0xff]
        %v6810 = vld [vmem:[%s6806 + $0x18] sm:$0xff]
        %v6811 = vld [vmem:[%s6806 + $0x20] sm:$0xff]
        %v6812 = vld [vmem:[%s6806 + $0x28] sm:$0xff]
        %v6813 = vld [vmem:[%s6806 + $0x30] sm:$0xff]
        %v6814 = vld [vmem:[%s6806 + $0x38] sm:$0xff]
        %v6815 = vld [vmem:[%s6806 + $0x40] sm:$0xff]
        %v6816 = vld [vmem:[%s6806 + $0x48] sm:$0xff]
        %v6817 = vld [vmem:[%s6806 + $0x50] sm:$0xff]
        %v6818 = vld [vmem:[%s6806 + $0x58] sm:$0xff]
        %v6819 = vld [vmem:[%s6806 + $0x60] sm:$0xff]
        %v6820 = vld [vmem:[%s6806 + $0x68] sm:$0xff]
        %v6821 = vld [vmem:[%s6806 + $0x70] sm:$0xff]
        %v6822 = vld [vmem:[%s6806 + $0x78] sm:$0xff]
        %v6823 = vld [vmem:[%s6806 + $0x80] sm:$0xff]
        %v6824 = vld [vmem:[%s6806 + $0x88] sm:$0xff]
        %v6825 = vld [vmem:[%s6806 + $0x90] sm:$0xff]
        %v6826 = vld [vmem:[%s6806 + $0x98] sm:$0xff]
        %v6827 = vld [vmem:[%s6806 + $0xa0] sm:$0xff]
        %v6828 = vld [vmem:[%s6806 + $0xa8] sm:$0xff]
        %v6829 = vld [vmem:[%s6806 + $0xb0] sm:$0xff]
        %v6830 = vld [vmem:[%s6806 + $0xb8] sm:$0xff]
        %v6831 = vld [vmem:[%s6806 + $0xc0] sm:$0xff]
        %v6832 = vld [vmem:[%s6806 + $0xc8] sm:$0xff]
        %v6833 = vld [vmem:[%s6806 + $0xd0] sm:$0xff]
        %v6834 = vld [vmem:[%s6806 + $0xd8] sm:$0xff]
        %v6835 = vld [vmem:[%s6806 + $0xe0] sm:$0xff]
        %v6836 = vld [vmem:[%s6806 + $0xe8] sm:$0xff]
        %v6837 = vld [vmem:[%s6806 + $0xf0] sm:$0xff]
        %v6838 = vld [vmem:[%s6806 + $0xf8] sm:$0xff]
        %v6839 = vld [vmem:[%s6806 + $0x100] sm:$0xff]
        %v6840 = vld [vmem:[%s6806 + $0x108] sm:$0xff]
        %v6841 = vld [vmem:[%s6806 + $0x110] sm:$0xff]
        %v6842 = vld [vmem:[%s6806 + $0x118] sm:$0xff]
        %v6843 = vld [vmem:[%s6806 + $0x120] sm:$0xff]
        %v6844 = vld [vmem:[%s6806 + $0x128] sm:$0xff]
        %v6845 = vld [vmem:[%s6806 + $0x130] sm:$0xff]
        %v6846 = vld [vmem:[%s6806 + $0x138] sm:$0xff]
        %v6847 = vld [vmem:[%s6806 + $0x140] sm:$0xff]
        %v6848 = vld [vmem:[%s6806 + $0x148] sm:$0xff]
        %v6849 = vld [vmem:[%s6806 + $0x150] sm:$0xff]
        %v6850 = vld [vmem:[%s6806 + $0x158] sm:$0xff]
        %v6851 = vld [vmem:[%s6806 + $0x160] sm:$0xff]
        %v6852 = vld [vmem:[%s6806 + $0x168] sm:$0xff]
        %v6853 = vld [vmem:[%s6806 + $0x170] sm:$0xff]
        %v6854 = vld [vmem:[%s6806 + $0x178] sm:$0xff]
        %v6855 = vld [vmem:[%s6806 + $0x180] sm:$0xff]
        %v6856 = vld [vmem:[%s6806 + $0x188] sm:$0xff]
        %v6857 = vld [vmem:[%s6806 + $0x190] sm:$0xff]
        %v6858 = vld [vmem:[%s6806 + $0x198] sm:$0xff]
        %v6859 = vld [vmem:[%s6806 + $0x1a0] sm:$0xff]
        %v6860 = vld [vmem:[%s6806 + $0x1a8] sm:$0xff]
        %v6861 = vld [vmem:[%s6806 + $0x1b0] sm:$0xff]
        %v6862 = vld [vmem:[%s6806 + $0x1b8] sm:$0xff]
        %v6863 = vld [vmem:[%s6806 + $0x1c0] sm:$0xff]
        %v6864 = vld [vmem:[%s6806 + $0x1c8] sm:$0xff]
        %v6865 = vld [vmem:[%s6806 + $0x1d0] sm:$0xff]
        %v6866 = vld [vmem:[%s6806 + $0x1d8] sm:$0xff]
        %v6867 = vld [vmem:[%s6806 + $0x1e0] sm:$0xff]
        %v6868 = vld [vmem:[%s6806 + $0x1e8] sm:$0xff]
        %v6869 = vld [vmem:[%s6806 + $0x1f0] sm:$0xff]
        %v6870 = vld [vmem:[%s6806 + $0x1f8] sm:$0xff]
        %v6871 = vld [vmem:[%s6806 + $0x200] sm:$0xff]
        %v6872 = vld [vmem:[%s6806 + $0x208] sm:$0xff]
        %v6873 = vld [vmem:[%s6806 + $0x210] sm:$0xff]
        %v6874 = vld [vmem:[%s6806 + $0x218] sm:$0xff]
        %v6875 = vld [vmem:[%s6806 + $0x220] sm:$0xff]
        %v6876 = vld [vmem:[%s6806 + $0x228] sm:$0xff]
        %v6877 = vld [vmem:[%s6806 + $0x230] sm:$0xff]
        %v6878 = vld [vmem:[%s6806 + $0x238] sm:$0xff]
        %v6879 = vld [vmem:[%s6806 + $0x240] sm:$0xff]
        %v6880 = vld [vmem:[%s6806 + $0x248] sm:$0xff]
        %v6881 = vld [vmem:[%s6806 + $0x250] sm:$0xff]
        %v6882 = vld [vmem:[%s6806 + $0x258] sm:$0xff]
        %v6883 = vld [vmem:[%s6806 + $0x260] sm:$0xff]
        %v6884 = vld [vmem:[%s6806 + $0x268] sm:$0xff]
        %v6885 = vld [vmem:[%s6806 + $0x270] sm:$0xff]
        %v6886 = vld [vmem:[%s6806 + $0x278] sm:$0xff]
        %v6887 = vld [vmem:[%s6806 + $0x280] sm:$0xff]
        %v6888 = vld [vmem:[%s6806 + $0x288] sm:$0xff]
        %v6889 = vld [vmem:[%s6806 + $0x290] sm:$0xff]
        %v6890 = vld [vmem:[%s6806 + $0x298] sm:$0xff]
        %v6891 = vld [vmem:[%s6806 + $0x2a0] sm:$0xff]
        %v6892 = vld [vmem:[%s6806 + $0x2a8] sm:$0xff]
        %v6893 = vld [vmem:[%s6806 + $0x2b0] sm:$0xff]
        %v6894 = vld [vmem:[%s6806 + $0x2b8] sm:$0xff]
        %v6895 = vld [vmem:[%s6806 + $0x2c0] sm:$0xff]
        %v6896 = vld [vmem:[%s6806 + $0x2c8] sm:$0xff]
        %v6897 = vld [vmem:[%s6806 + $0x2d0] sm:$0xff]
        %v6898 = vld [vmem:[%s6806 + $0x2d8] sm:$0xff]
        %v6899 = vld [vmem:[%s6806 + $0x2e0] sm:$0xff]
        %v6900 = vld [vmem:[%s6806 + $0x2e8] sm:$0xff]
        %v6901 = vld [vmem:[%s6806 + $0x2f0] sm:$0xff]
        %v6902 = vld [vmem:[%s6806 + $0x2f8] sm:$0xff]
        %v6903 = vld [vmem:[%s6806 + $0x300] sm:$0xff]
        %v6904 = vld [vmem:[%s6806 + $0x308] sm:$0xff]
        %v6905 = vld [vmem:[%s6806 + $0x310] sm:$0xff]
        %v6906 = vld [vmem:[%s6806 + $0x318] sm:$0xff]
        %v6907 = vld [vmem:[%s6806 + $0x320] sm:$0xff]
        %v6908 = vld [vmem:[%s6806 + $0x328] sm:$0xff]
        %v6909 = vld [vmem:[%s6806 + $0x330] sm:$0xff]
        %v6910 = vld [vmem:[%s6806 + $0x338] sm:$0xff]
        %v6911 = vld [vmem:[%s6806 + $0x340] sm:$0xff]
        %v6912 = vld [vmem:[%s6806 + $0x348] sm:$0xff]
        %v6913 = vld [vmem:[%s6806 + $0x350] sm:$0xff]
        %v6914 = vld [vmem:[%s6806 + $0x358] sm:$0xff]
        %v6915 = vld [vmem:[%s6806 + $0x360] sm:$0xff]
        %v6916 = vld [vmem:[%s6806 + $0x368] sm:$0xff]
        %v6917 = vld [vmem:[%s6806 + $0x370] sm:$0xff]
        %v6918 = vld [vmem:[%s6806 + $0x378] sm:$0xff]
        %v6919 = vld [vmem:[%s6806 + $0x380] sm:$0xff]
        %v6920 = vld [vmem:[%s6806 + $0x388] sm:$0xff]
        %v6921 = vld [vmem:[%s6806 + $0x390] sm:$0xff]
        %v6922 = vld [vmem:[%s6806 + $0x398] sm:$0xff]
        %v6923 = vld [vmem:[%s6806 + $0x3a0] sm:$0xff]
        %v6924 = vld [vmem:[%s6806 + $0x3a8] sm:$0xff]
        %v6925 = vld [vmem:[%s6806 + $0x3b0] sm:$0xff]
        %v6926 = vld [vmem:[%s6806 + $0x3b8] sm:$0xff]
        %v6927 = vld [vmem:[%s6806 + $0x3c0] sm:$0xff]
        %v6928 = vld [vmem:[%s6806 + $0x3c8] sm:$0xff]
        %v6929 = vld [vmem:[%s6806 + $0x3d0] sm:$0xff]
        %v6930 = vld [vmem:[%s6806 + $0x3d8] sm:$0xff]
        %v6931 = vld [vmem:[%s6806 + $0x3e0] sm:$0xff]
        %v6932 = vld [vmem:[%s6806 + $0x3e8] sm:$0xff]
        %v6933 = vld [vmem:[%s6806 + $0x3f0] sm:$0xff]
        %v6934 = vld [vmem:[%s6806 + $0x3f8] sm:$0xff]
        %6935 = vmatprep.subr.mxu0 %v6808
        %6936 = vmatpush1.msra.mxu0 %v6807
        %6937 = vmatprep.subr.mxu0 %v6810
        %6938 = vmatpush1.msra.mxu0 %v6809
        %6939 = vmatprep.subr.mxu0 %v6812
        %6940 = vmatpush1.msra.mxu0 %v6811
        %6941 = vmatprep.subr.mxu0 %v6814
        %6942 = vmatpush1.msra.mxu0 %v6813
        %6943 = vmatprep.subr.mxu0 %v6816
        %6944 = vmatpush1.msra.mxu0 %v6815
        %6945 = vmatprep.subr.mxu0 %v6818
        %6946 = vmatpush1.msra.mxu0 %v6817
        %6947 = vmatprep.subr.mxu0 %v6820
        %6948 = vmatpush1.msra.mxu0 %v6819
        %6949 = vmatprep.subr.mxu0 %v6822
        %6950 = vmatpush1.msra.mxu0 %v6821
        %6951 = vmatprep.subr.mxu0 %v6824
        %6952 = vmatpush1.msra.mxu0 %v6823
        %6953 = vmatprep.subr.mxu0 %v6826
        %6954 = vmatpush1.msra.mxu0 %v6825
        %6955 = vmatprep.subr.mxu0 %v6828
        %6956 = vmatpush1.msra.mxu0 %v6827
        %6957 = vmatprep.subr.mxu0 %v6830
        %6958 = vmatpush1.msra.mxu0 %v6829
        %6959 = vmatprep.subr.mxu0 %v6832
        %6960 = vmatpush1.msra.mxu0 %v6831
        %6961 = vmatprep.subr.mxu0 %v6834
        %6962 = vmatpush1.msra.mxu0 %v6833
        %6963 = vmatprep.subr.mxu0 %v6836
        %6964 = vmatpush1.msra.mxu0 %v6835
        %6965 = vmatprep.subr.mxu0 %v6838
        %6966 = vmatpush1.msra.mxu0 %v6837
        %6967 = vmatprep.subr.mxu0 %v6840
        %6968 = vmatpush1.msra.mxu0 %v6839
        %6969 = vmatprep.subr.mxu0 %v6842
        %6970 = vmatpush1.msra.mxu0 %v6841
        %6971 = vmatprep.subr.mxu0 %v6844
        %6972 = vmatpush1.msra.mxu0 %v6843
        %6973 = vmatprep.subr.mxu0 %v6846
        %6974 = vmatpush1.msra.mxu0 %v6845
        %6975 = vmatprep.subr.mxu0 %v6848
        %6976 = vmatpush1.msra.mxu0 %v6847
        %6977 = vmatprep.subr.mxu0 %v6850
        %6978 = vmatpush1.msra.mxu0 %v6849
        %6979 = vmatprep.subr.mxu0 %v6852
        %6980 = vmatpush1.msra.mxu0 %v6851
        %6981 = vmatprep.subr.mxu0 %v6854
        %6982 = vmatpush1.msra.mxu0 %v6853
        %6983 = vmatprep.subr.mxu0 %v6856
        %6984 = vmatpush1.msra.mxu0 %v6855
        %6985 = vmatprep.subr.mxu0 %v6858
        %6986 = vmatpush1.msra.mxu0 %v6857
        %6987 = vmatprep.subr.mxu0 %v6860
        %6988 = vmatpush1.msra.mxu0 %v6859
        %6989 = vmatprep.subr.mxu0 %v6862
        %6990 = vmatpush1.msra.mxu0 %v6861
        %6991 = vmatprep.subr.mxu0 %v6864
        %6992 = vmatpush1.msra.mxu0 %v6863
        %6993 = vmatprep.subr.mxu0 %v6866
        %6994 = vmatpush1.msra.mxu0 %v6865
        %6995 = vmatprep.subr.mxu0 %v6868
        %6996 = vmatpush1.msra.mxu0 %v6867
        %6997 = vmatprep.subr.mxu0 %v6870
        %6998 = vmatpush1.msra.mxu0 %v6869
        %6999 = vmatprep.mubr.f32.mxu0 %v6533
        %7000 = vmatmul.mubr.f32.gmra.mrb[0].mxu0 %v6532
        %v7001 = vpop.f32.mrb[0].mxu0
        %v7002 = vadd.f32 0.0, %v7001
        %v7003 = vpop.f32.mrb[0].mxu0
        %v7004 = vadd.f32 0.0, %v7003
        %7005 = vdwg.mxu0
        %7006 = vmatprep.subr.mxu0 %v6872
        %7007 = vmatpush1.msra.mxu0 %v6871
        %7008 = vmatprep.subr.mxu0 %v6874
        %7009 = vmatpush1.msra.mxu0 %v6873
        %7010 = vmatprep.subr.mxu0 %v6876
        %7011 = vmatpush1.msra.mxu0 %v6875
        %7012 = vmatprep.subr.mxu0 %v6878
        %7013 = vmatpush1.msra.mxu0 %v6877
        %7014 = vmatprep.subr.mxu0 %v6880
        %7015 = vmatpush1.msra.mxu0 %v6879
        %7016 = vmatprep.subr.mxu0 %v6882
        %7017 = vmatpush1.msra.mxu0 %v6881
        %7018 = vmatprep.subr.mxu0 %v6884
        %7019 = vmatpush1.msra.mxu0 %v6883
        %7020 = vmatprep.subr.mxu0 %v6886
        %7021 = vmatpush1.msra.mxu0 %v6885
        %7022 = vmatprep.subr.mxu0 %v6888
        %7023 = vmatpush1.msra.mxu0 %v6887
        %7024 = vmatprep.subr.mxu0 %v6890
        %7025 = vmatpush1.msra.mxu0 %v6889
        %7026 = vmatprep.subr.mxu0 %v6892
        %7027 = vmatpush1.msra.mxu0 %v6891
        %7028 = vmatprep.subr.mxu0 %v6894
        %7029 = vmatpush1.msra.mxu0 %v6893
        %7030 = vmatprep.subr.mxu0 %v6896
        %7031 = vmatpush1.msra.mxu0 %v6895
        %7032 = vmatprep.subr.mxu0 %v6898
        %7033 = vmatpush1.msra.mxu0 %v6897
        %7034 = vmatprep.subr.mxu0 %v6900
        %7035 = vmatpush1.msra.mxu0 %v6899
        %7036 = vmatprep.subr.mxu0 %v6902
        %7037 = vmatpush1.msra.mxu0 %v6901
        %7038 = vmatprep.subr.mxu0 %v6904
        %7039 = vmatpush1.msra.mxu0 %v6903
        %7040 = vmatprep.subr.mxu0 %v6906
        %7041 = vmatpush1.msra.mxu0 %v6905
        %7042 = vmatprep.subr.mxu0 %v6908
        %7043 = vmatpush1.msra.mxu0 %v6907
        %7044 = vmatprep.subr.mxu0 %v6910
        %7045 = vmatpush1.msra.mxu0 %v6909
        %7046 = vmatprep.subr.mxu0 %v6912
        %7047 = vmatpush1.msra.mxu0 %v6911
        %7048 = vmatprep.subr.mxu0 %v6914
        %7049 = vmatpush1.msra.mxu0 %v6913
        %7050 = vmatprep.subr.mxu0 %v6916
        %7051 = vmatpush1.msra.mxu0 %v6915
        %7052 = vmatprep.subr.mxu0 %v6918
        %7053 = vmatpush1.msra.mxu0 %v6917
        %7054 = vmatprep.subr.mxu0 %v6920
        %7055 = vmatpush1.msra.mxu0 %v6919
        %7056 = vmatprep.subr.mxu0 %v6922
        %7057 = vmatpush1.msra.mxu0 %v6921
        %7058 = vmatprep.subr.mxu0 %v6924
        %7059 = vmatpush1.msra.mxu0 %v6923
        %7060 = vmatprep.subr.mxu0 %v6926
        %7061 = vmatpush1.msra.mxu0 %v6925
        %7062 = vmatprep.subr.mxu0 %v6928
        %7063 = vmatpush1.msra.mxu0 %v6927
        %7064 = vmatprep.subr.mxu0 %v6930
        %7065 = vmatpush1.msra.mxu0 %v6929
        %7066 = vmatprep.subr.mxu0 %v6932
        %7067 = vmatpush1.msra.mxu0 %v6931
        %7068 = vmatprep.subr.mxu0 %v6934
        %7069 = vmatpush1.msra.mxu0 %v6933
        %7070 = vmatprep.mubr.f32.mxu0 %v6535
        %7071 = vmatmul.mubr.f32.gmra.mrb[0].mxu0 %v6534
        %v7072 = vpop.f32.mrb[0].mxu0
        %v7073 = vadd.f32 %v7002, %v7072
        %v7074 = vpop.f32.mrb[0].mxu0
        %v7075 = vadd.f32 %v7004, %v7074
        %7076 = vdwg.mxu0
        %v7077 = vmax.f32 %v6802, %v7073
        %v7078 = vmax.f32 %v6804, %v7075
        %v7079 = vld [vmem:[#allocation25] sm:$0xf]
        %v7081 = vsel %vm5766, %v7079, 0
        %7083 = vmatprep.subr.mxu0 %v7078
        %7084 = vmatpush1.msra.mxu0 %v7077
        %7085 = vmatprep.subr.mxu0 0.0
        %7086 = vmatpush1.msra.mxu0 0.0
        %7087 = vmatprep.subr.mxu0 0.0
        %7088 = vmatpush1.msra.mxu0 0.0
        %7089 = vmatprep.subr.mxu0 0.0
        %7090 = vmatpush1.msra.mxu0 0.0
        %7091 = vmatprep.subr.mxu0 0.0
        %7092 = vmatpush1.msra.mxu0 0.0
        %7093 = vmatprep.subr.mxu0 0.0
        %7094 = vmatpush1.msra.mxu0 0.0
        %7095 = vmatprep.subr.mxu0 0.0
        %7096 = vmatpush1.msra.mxu0 0.0
        %7097 = vmatprep.subr.mxu0 0.0
        %7098 = vmatpush1.msra.mxu0 0.0
        %7099 = vmatprep.subr.mxu0 0.0
        %7100 = vmatpush1.msra.mxu0 0.0
        %7101 = vmatprep.subr.mxu0 0.0
        %7102 = vmatpush1.msra.mxu0 0.0
        %7103 = vmatprep.subr.mxu0 0.0
        %7104 = vmatpush1.msra.mxu0 0.0
        %7105 = vmatprep.subr.mxu0 0.0
        %7106 = vmatpush1.msra.mxu0 0.0
        %7107 = vmatprep.subr.mxu0 0.0
        %7108 = vmatpush1.msra.mxu0 0.0
        %7109 = vmatprep.subr.mxu0 0.0
        %7110 = vmatpush1.msra.mxu0 0.0
        %7111 = vmatprep.subr.mxu0 0.0
        %7112 = vmatpush1.msra.mxu0 0.0
        %7113 = vmatprep.subr.mxu0 0.0
        %7114 = vmatpush1.msra.mxu0 0.0
        %7115 = vmatprep.subr.mxu0 0.0
        %7116 = vmatpush1.msra.mxu0 0.0
        %7117 = vmatprep.subr.mxu0 0.0
        %7118 = vmatpush1.msra.mxu0 0.0
        %7119 = vmatprep.subr.mxu0 0.0
        %7120 = vmatpush1.msra.mxu0 0.0
        %7121 = vmatprep.subr.mxu0 0.0
        %7122 = vmatpush1.msra.mxu0 0.0
        %7123 = vmatprep.subr.mxu0 0.0
        %7124 = vmatpush1.msra.mxu0 0.0
        %7125 = vmatprep.subr.mxu0 0.0
        %7126 = vmatpush1.msra.mxu0 0.0
        %7127 = vmatprep.subr.mxu0 0.0
        %7128 = vmatpush1.msra.mxu0 0.0
        %7129 = vmatprep.subr.mxu0 0.0
        %7130 = vmatpush1.msra.mxu0 0.0
        %7131 = vmatprep.subr.mxu0 0.0
        %7132 = vmatpush1.msra.mxu0 0.0
        %7133 = vmatprep.subr.mxu0 0.0
        %7134 = vmatpush1.msra.mxu0 0.0
        %7135 = vmatprep.subr.mxu0 0.0
        %7136 = vmatpush1.msra.mxu0 0.0
        %7137 = vmatprep.subr.mxu0 0.0
        %7138 = vmatpush1.msra.mxu0 0.0
        %7139 = vmatprep.subr.mxu0 0.0
        %7140 = vmatpush1.msra.mxu0 0.0
        %7141 = vmatprep.subr.mxu0 0.0
        %7142 = vmatpush1.msra.mxu0 0.0
        %7143 = vmatprep.subr.mxu0 0.0
        %7144 = vmatpush1.msra.mxu0 0.0
        %7145 = vmatprep.subr.mxu0 0.0
        %7146 = vmatpush1.msra.mxu0 0.0
        %7147 = vmatprep.mubr.f32.mxu0 0.0
        %7148 = vmatmul.mubr.f32.gmra.mrb[0].mxu0 %v7081
        %v7149 = vpop.f32.mrb[0].mxu0
        %v7150 = vadd.f32 0.0, %v7149
        %v7151 = vpop.f32.mrb[0].mxu0
        %v7152 = vadd.f32 0.0, %v7151
        %7153 = vdwg.mxu0
        %s7154 = scalar_lea.vmem [#allocation25], 4
        %v7155 = vld [vmem:[%s7154] sm:$0xf]
        %v7157 = vsel %vm5766, %v7155, 0
        %7159 = vmatprep.subr.mxu0 %v7078
        %7160 = vmatpush1.msra.mxu0 %v7077
        %7161 = vmatprep.subr.mxu0 0.0
        %7162 = vmatpush1.msra.mxu0 0.0
        %7163 = vmatprep.subr.mxu0 0.0
        %7164 = vmatpush1.msra.mxu0 0.0
        %7165 = vmatprep.subr.mxu0 0.0
        %7166 = vmatpush1.msra.mxu0 0.0
        %7167 = vmatprep.subr.mxu0 0.0
        %7168 = vmatpush1.msra.mxu0 0.0
        %7169 = vmatprep.subr.mxu0 0.0
        %7170 = vmatpush1.msra.mxu0 0.0
        %7171 = vmatprep.subr.mxu0 0.0
        %7172 = vmatpush1.msra.mxu0 0.0
        %7173 = vmatprep.subr.mxu0 0.0
        %7174 = vmatpush1.msra.mxu0 0.0
        %7175 = vmatprep.subr.mxu0 0.0
        %7176 = vmatpush1.msra.mxu0 0.0
        %7177 = vmatprep.subr.mxu0 0.0
        %7178 = vmatpush1.msra.mxu0 0.0
        %7179 = vmatprep.subr.mxu0 0.0
        %7180 = vmatpush1.msra.mxu0 0.0
        %7181 = vmatprep.subr.mxu0 0.0
        %7182 = vmatpush1.msra.mxu0 0.0
        %7183 = vmatprep.subr.mxu0 0.0
        %7184 = vmatpush1.msra.mxu0 0.0
        %7185 = vmatprep.subr.mxu0 0.0
        %7186 = vmatpush1.msra.mxu0 0.0
        %7187 = vmatprep.subr.mxu0 0.0
        %7188 = vmatpush1.msra.mxu0 0.0
        %7189 = vmatprep.subr.mxu0 0.0
        %7190 = vmatpush1.msra.mxu0 0.0
        %7191 = vmatprep.subr.mxu0 0.0
        %7192 = vmatpush1.msra.mxu0 0.0
        %7193 = vmatprep.subr.mxu0 0.0
        %7194 = vmatpush1.msra.mxu0 0.0
        %7195 = vmatprep.subr.mxu0 0.0
        %7196 = vmatpush1.msra.mxu0 0.0
        %7197 = vmatprep.subr.mxu0 0.0
        %7198 = vmatpush1.msra.mxu0 0.0
        %7199 = vmatprep.subr.mxu0 0.0
        %7200 = vmatpush1.msra.mxu0 0.0
        %7201 = vmatprep.subr.mxu0 0.0
        %7202 = vmatpush1.msra.mxu0 0.0
        %7203 = vmatprep.subr.mxu0 0.0
        %7204 = vmatpush1.msra.mxu0 0.0
        %7205 = vmatprep.subr.mxu0 0.0
        %7206 = vmatpush1.msra.mxu0 0.0
        %7207 = vmatprep.subr.mxu0 0.0
        %7208 = vmatpush1.msra.mxu0 0.0
        %7209 = vmatprep.subr.mxu0 0.0
        %7210 = vmatpush1.msra.mxu0 0.0
        %7211 = vmatprep.subr.mxu0 0.0
        %7212 = vmatpush1.msra.mxu0 0.0
        %7213 = vmatprep.subr.mxu0 0.0
        %7214 = vmatpush1.msra.mxu0 0.0
        %7215 = vmatprep.subr.mxu0 0.0
        %7216 = vmatpush1.msra.mxu0 0.0
        %7217 = vmatprep.subr.mxu0 0.0
        %7218 = vmatpush1.msra.mxu0 0.0
        %7219 = vmatprep.subr.mxu0 0.0
        %7220 = vmatpush1.msra.mxu0 0.0
        %7221 = vmatprep.subr.mxu0 0.0
        %7222 = vmatpush1.msra.mxu0 0.0
        %7223 = vmatprep.mubr.f32.mxu0 0.0
        %7224 = vmatmul.mubr.f32.gmra.mrb[0].mxu0 %v7157
        %v7225 = vpop.f32.mrb[0].mxu0
        %v7226 = vadd.f32 0.0, %v7225
        %v7227 = vpop.f32.mrb[0].mxu0
        %v7228 = vadd.f32 0.0, %v7227
        %7229 = vdwg.mxu0
        %v7230 = vmax.f32 %v7150, %v7226
        %v7231 = vmax.f32 %v7152, %v7228
        %v7232 = vlaneseq
        %v7233 = vand.u32 %v7232, 127
        %vm7234 = vcmp.eq.s32.totalorder %v7233, 0
        %v7235 = vsel %vm7234, 1, 0
        %v7236 = vcvt.s32.f32 %v7235
        %vm7237 = vcmask 31744
        %v7239 = vsel %vm7237, %v7236, 0
        %vm7241 = vcmask 1043456
        %v7243 = vsel %vm7241, %v7230, 0
        %v7246 = vsel %vm7241, %v7231, 0
        %7248 = vmatprep.subr.mxu0 %v7246
        %7249 = vmatpush1.msra.mxu0 %v7243
        %7250 = vmatprep.subr.mxu0 0.0
        %7251 = vmatpush1.msra.mxu0 0.0
        %7252 = vmatprep.subr.mxu0 0.0
        %7253 = vmatpush1.msra.mxu0 0.0
        %7254 = vmatprep.subr.mxu0 0.0
        %7255 = vmatpush1.msra.mxu0 0.0
        %7256 = vmatprep.subr.mxu0 0.0
        %7257 = vmatpush1.msra.mxu0 0.0
        %7258 = vmatprep.subr.mxu0 0.0
        %7259 = vmatpush1.msra.mxu0 0.0
        %7260 = vmatprep.subr.mxu0 0.0
        %7261 = vmatpush1.msra.mxu0 0.0
        %7262 = vmatprep.subr.mxu0 0.0
        %7263 = vmatpush1.msra.mxu0 0.0
        %7264 = vmatprep.subr.mxu0 0.0
        %7265 = vmatpush1.msra.mxu0 0.0
        %7266 = vmatprep.subr.mxu0 0.0
        %7267 = vmatpush1.msra.mxu0 0.0
        %7268 = vmatprep.subr.mxu0 0.0
        %7269 = vmatpush1.msra.mxu0 0.0
        %7270 = vmatprep.subr.mxu0 0.0
        %7271 = vmatpush1.msra.mxu0 0.0
        %7272 = vmatprep.subr.mxu0 0.0
        %7273 = vmatpush1.msra.mxu0 0.0
        %7274 = vmatprep.subr.mxu0 0.0
        %7275 = vmatpush1.msra.mxu0 0.0
        %7276 = vmatprep.subr.mxu0 0.0
        %7277 = vmatpush1.msra.mxu0 0.0
        %7278 = vmatprep.subr.mxu0 0.0
        %7279 = vmatpush1.msra.mxu0 0.0
        %7280 = vmatprep.subr.mxu0 0.0
        %7281 = vmatpush1.msra.mxu0 0.0
        %7282 = vmatprep.subr.mxu0 0.0
        %7283 = vmatpush1.msra.mxu0 0.0
        %7284 = vmatprep.subr.mxu0 0.0
        %7285 = vmatpush1.msra.mxu0 0.0
        %7286 = vmatprep.subr.mxu0 0.0
        %7287 = vmatpush1.msra.mxu0 0.0
        %7288 = vmatprep.subr.mxu0 0.0
        %7289 = vmatpush1.msra.mxu0 0.0
        %7290 = vmatprep.subr.mxu0 0.0
        %7291 = vmatpush1.msra.mxu0 0.0
        %7292 = vmatprep.subr.mxu0 0.0
        %7293 = vmatpush1.msra.mxu0 0.0
        %7294 = vmatprep.subr.mxu0 0.0
        %7295 = vmatpush1.msra.mxu0 0.0
        %7296 = vmatprep.subr.mxu0 0.0
        %7297 = vmatpush1.msra.mxu0 0.0
        %7298 = vmatprep.subr.mxu0 0.0
        %7299 = vmatpush1.msra.mxu0 0.0
        %7300 = vmatprep.subr.mxu0 0.0
        %7301 = vmatpush1.msra.mxu0 0.0
        %7302 = vmatprep.subr.mxu0 0.0
        %7303 = vmatpush1.msra.mxu0 0.0
        %7304 = vmatprep.subr.mxu0 0.0
        %7305 = vmatpush1.msra.mxu0 0.0
        %7306 = vmatprep.subr.mxu0 0.0
        %7307 = vmatpush1.msra.mxu0 0.0
        %7308 = vmatprep.subr.mxu0 0.0
        %7309 = vmatpush1.msra.mxu0 0.0
        %7310 = vmatprep.subr.mxu0 0.0
        %7311 = vmatpush1.msra.mxu0 0.0
        %7312 = vmatprep.mubr.f32.mxu0 0.0
        %7313 = vmatmul.mubr.f32.gmra.mrb[0].mxu0 %v7239
        %v7314 = vpop.f32.mrb[0].mxu0
        %v7315 = vadd.f32 0.0, %v7314
        %v7316 = vpop.f32.mrb[0].mxu0
        %v7317 = vadd.f32 0.0, %v7316
        %7318 = vdwg.mxu0
        %vm7319 = vcmp.eq.s32.totalorder %v7233, 1
        %v7320 = vsel %vm7319, 1, 0
        %v7321 = vcvt.s32.f32 %v7320
        %v7323 = vsel %vm7237, %v7321, 0
        %7325 = vmatprep.subr.mxu0 %v7246
        %7326 = vmatpush1.msra.mxu0 %v7243
        %7327 = vmatprep.subr.mxu0 0.0
        %7328 = vmatpush1.msra.mxu0 0.0
        %7329 = vmatprep.subr.mxu0 0.0
        %7330 = vmatpush1.msra.mxu0 0.0
        %7331 = vmatprep.subr.mxu0 0.0
        %7332 = vmatpush1.msra.mxu0 0.0
        %7333 = vmatprep.subr.mxu0 0.0
        %7334 = vmatpush1.msra.mxu0 0.0
        %7335 = vmatprep.subr.mxu0 0.0
        %7336 = vmatpush1.msra.mxu0 0.0
        %7337 = vmatprep.subr.mxu0 0.0
        %7338 = vmatpush1.msra.mxu0 0.0
        %7339 = vmatprep.subr.mxu0 0.0
        %7340 = vmatpush1.msra.mxu0 0.0
        %7341 = vmatprep.subr.mxu0 0.0
        %7342 = vmatpush1.msra.mxu0 0.0
        %7343 = vmatprep.subr.mxu0 0.0
        %7344 = vmatpush1.msra.mxu0 0.0
        %7345 = vmatprep.subr.mxu0 0.0
        %7346 = vmatpush1.msra.mxu0 0.0
        %7347 = vmatprep.subr.mxu0 0.0
        %7348 = vmatpush1.msra.mxu0 0.0
        %7349 = vmatprep.subr.mxu0 0.0
        %7350 = vmatpush1.msra.mxu0 0.0
        %7351 = vmatprep.subr.mxu0 0.0
        %7352 = vmatpush1.msra.mxu0 0.0
        %7353 = vmatprep.subr.mxu0 0.0
        %7354 = vmatpush1.msra.mxu0 0.0
        %7355 = vmatprep.subr.mxu0 0.0
        %7356 = vmatpush1.msra.mxu0 0.0
        %7357 = vmatprep.subr.mxu0 0.0
        %7358 = vmatpush1.msra.mxu0 0.0
        %7359 = vmatprep.subr.mxu0 0.0
        %7360 = vmatpush1.msra.mxu0 0.0
        %7361 = vmatprep.subr.mxu0 0.0
        %7362 = vmatpush1.msra.mxu0 0.0
        %7363 = vmatprep.subr.mxu0 0.0
        %7364 = vmatpush1.msra.mxu0 0.0
        %7365 = vmatprep.subr.mxu0 0.0
        %7366 = vmatpush1.msra.mxu0 0.0
        %7367 = vmatprep.subr.mxu0 0.0
        %7368 = vmatpush1.msra.mxu0 0.0
        %7369 = vmatprep.subr.mxu0 0.0
        %7370 = vmatpush1.msra.mxu0 0.0
        %7371 = vmatprep.subr.mxu0 0.0
        %7372 = vmatpush1.msra.mxu0 0.0
        %7373 = vmatprep.subr.mxu0 0.0
        %7374 = vmatpush1.msra.mxu0 0.0
        %7375 = vmatprep.subr.mxu0 0.0
        %7376 = vmatpush1.msra.mxu0 0.0
        %7377 = vmatprep.subr.mxu0 0.0
        %7378 = vmatpush1.msra.mxu0 0.0
        %7379 = vmatprep.subr.mxu0 0.0
        %7380 = vmatpush1.msra.mxu0 0.0
        %7381 = vmatprep.subr.mxu0 0.0
        %7382 = vmatpush1.msra.mxu0 0.0
        %7383 = vmatprep.subr.mxu0 0.0
        %7384 = vmatpush1.msra.mxu0 0.0
        %7385 = vmatprep.subr.mxu0 0.0
        %7386 = vmatpush1.msra.mxu0 0.0
        %7387 = vmatprep.subr.mxu0 0.0
        %7388 = vmatpush1.msra.mxu0 0.0
        %7389 = vmatprep.mubr.f32.mxu0 0.0
        %7390 = vmatmul.mubr.f32.gmra.mrb[0].mxu0 %v7323
        %v7391 = vpop.f32.mrb[0].mxu0
        %v7392 = vadd.f32 0.0, %v7391
        %v7393 = vpop.f32.mrb[0].mxu0
        %v7394 = vadd.f32 0.0, %v7393
        %7395 = vdwg.mxu0
        %vm7396 = vcmp.eq.s32.totalorder %v7233, 2
        %v7397 = vsel %vm7396, 1, 0
        %v7398 = vcvt.s32.f32 %v7397
        %v7400 = vsel %vm7237, %v7398, 0
        %7402 = vmatprep.subr.mxu0 %v7246
        %7403 = vmatpush1.msra.mxu0 %v7243
        %7404 = vmatprep.subr.mxu0 0.0
        %7405 = vmatpush1.msra.mxu0 0.0
        %7406 = vmatprep.subr.mxu0 0.0
        %7407 = vmatpush1.msra.mxu0 0.0
        %7408 = vmatprep.subr.mxu0 0.0
        %7409 = vmatpush1.msra.mxu0 0.0
        %7410 = vmatprep.subr.mxu0 0.0
        %7411 = vmatpush1.msra.mxu0 0.0
        %7412 = vmatprep.subr.mxu0 0.0
        %7413 = vmatpush1.msra.mxu0 0.0
        %7414 = vmatprep.subr.mxu0 0.0
        %7415 = vmatpush1.msra.mxu0 0.0
        %7416 = vmatprep.subr.mxu0 0.0
        %7417 = vmatpush1.msra.mxu0 0.0
        %7418 = vmatprep.subr.mxu0 0.0
        %7419 = vmatpush1.msra.mxu0 0.0
        %7420 = vmatprep.subr.mxu0 0.0
        %7421 = vmatpush1.msra.mxu0 0.0
        %7422 = vmatprep.subr.mxu0 0.0
        %7423 = vmatpush1.msra.mxu0 0.0
        %7424 = vmatprep.subr.mxu0 0.0
        %7425 = vmatpush1.msra.mxu0 0.0
        %7426 = vmatprep.subr.mxu0 0.0
        %7427 = vmatpush1.msra.mxu0 0.0
        %7428 = vmatprep.subr.mxu0 0.0
        %7429 = vmatpush1.msra.mxu0 0.0
        %7430 = vmatprep.subr.mxu0 0.0
        %7431 = vmatpush1.msra.mxu0 0.0
        %7432 = vmatprep.subr.mxu0 0.0
        %7433 = vmatpush1.msra.mxu0 0.0
        %7434 = vmatprep.subr.mxu0 0.0
        %7435 = vmatpush1.msra.mxu0 0.0
        %7436 = vmatprep.subr.mxu0 0.0
        %7437 = vmatpush1.msra.mxu0 0.0
        %7438 = vmatprep.subr.mxu0 0.0
        %7439 = vmatpush1.msra.mxu0 0.0
        %7440 = vmatprep.subr.mxu0 0.0
        %7441 = vmatpush1.msra.mxu0 0.0
        %7442 = vmatprep.subr.mxu0 0.0
        %7443 = vmatpush1.msra.mxu0 0.0
        %7444 = vmatprep.subr.mxu0 0.0
        %7445 = vmatpush1.msra.mxu0 0.0
        %7446 = vmatprep.subr.mxu0 0.0
        %7447 = vmatpush1.msra.mxu0 0.0
        %7448 = vmatprep.subr.mxu0 0.0
        %7449 = vmatpush1.msra.mxu0 0.0
        %7450 = vmatprep.subr.mxu0 0.0
        %7451 = vmatpush1.msra.mxu0 0.0
        %7452 = vmatprep.subr.mxu0 0.0
        %7453 = vmatpush1.msra.mxu0 0.0
        %7454 = vmatprep.subr.mxu0 0.0
        %7455 = vmatpush1.msra.mxu0 0.0
        %7456 = vmatprep.subr.mxu0 0.0
        %7457 = vmatpush1.msra.mxu0 0.0
        %7458 = vmatprep.subr.mxu0 0.0
        %7459 = vmatpush1.msra.mxu0 0.0
        %7460 = vmatprep.subr.mxu0 0.0
        %7461 = vmatpush1.msra.mxu0 0.0
        %7462 = vmatprep.subr.mxu0 0.0
        %7463 = vmatpush1.msra.mxu0 0.0
        %7464 = vmatprep.subr.mxu0 0.0
        %7465 = vmatpush1.msra.mxu0 0.0
        %7466 = vmatprep.mubr.f32.mxu0 0.0
        %7467 = vmatmul.mubr.f32.gmra.mrb[0].mxu0 %v7400
        %v7468 = vpop.f32.mrb[0].mxu0
        %v7469 = vadd.f32 0.0, %v7468
        %v7470 = vpop.f32.mrb[0].mxu0
        %v7471 = vadd.f32 0.0, %v7470
        %7472 = vdwg.mxu0
        %vm7473 = vcmp.eq.s32.totalorder %v7233, 3
        %v7474 = vsel %vm7473, 1, 0
        %v7475 = vcvt.s32.f32 %v7474
        %v7477 = vsel %vm7237, %v7475, 0
        %7479 = vmatprep.subr.mxu0 %v7246
        %7480 = vmatpush1.msra.mxu0 %v7243
        %7481 = vmatprep.subr.mxu0 0.0
        %7482 = vmatpush1.msra.mxu0 0.0
        %7483 = vmatprep.subr.mxu0 0.0
        %7484 = vmatpush1.msra.mxu0 0.0
        %7485 = vmatprep.subr.mxu0 0.0
        %7486 = vmatpush1.msra.mxu0 0.0
        %7487 = vmatprep.subr.mxu0 0.0
        %7488 = vmatpush1.msra.mxu0 0.0
        %7489 = vmatprep.subr.mxu0 0.0
        %7490 = vmatpush1.msra.mxu0 0.0
        %7491 = vmatprep.subr.mxu0 0.0
        %7492 = vmatpush1.msra.mxu0 0.0
        %7493 = vmatprep.subr.mxu0 0.0
        %7494 = vmatpush1.msra.mxu0 0.0
        %7495 = vmatprep.subr.mxu0 0.0
        %7496 = vmatpush1.msra.mxu0 0.0
        %7497 = vmatprep.subr.mxu0 0.0
        %7498 = vmatpush1.msra.mxu0 0.0
        %7499 = vmatprep.subr.mxu0 0.0
        %7500 = vmatpush1.msra.mxu0 0.0
        %7501 = vmatprep.subr.mxu0 0.0
        %7502 = vmatpush1.msra.mxu0 0.0
        %7503 = vmatprep.subr.mxu0 0.0
        %7504 = vmatpush1.msra.mxu0 0.0
        %7505 = vmatprep.subr.mxu0 0.0
        %7506 = vmatpush1.msra.mxu0 0.0
        %7507 = vmatprep.subr.mxu0 0.0
        %7508 = vmatpush1.msra.mxu0 0.0
        %7509 = vmatprep.subr.mxu0 0.0
        %7510 = vmatpush1.msra.mxu0 0.0
        %7511 = vmatprep.subr.mxu0 0.0
        %7512 = vmatpush1.msra.mxu0 0.0
        %7513 = vmatprep.subr.mxu0 0.0
        %7514 = vmatpush1.msra.mxu0 0.0
        %7515 = vmatprep.subr.mxu0 0.0
        %7516 = vmatpush1.msra.mxu0 0.0
        %7517 = vmatprep.subr.mxu0 0.0
        %7518 = vmatpush1.msra.mxu0 0.0
        %7519 = vmatprep.subr.mxu0 0.0
        %7520 = vmatpush1.msra.mxu0 0.0
        %7521 = vmatprep.subr.mxu0 0.0
        %7522 = vmatpush1.msra.mxu0 0.0
        %7523 = vmatprep.subr.mxu0 0.0
        %7524 = vmatpush1.msra.mxu0 0.0
        %7525 = vmatprep.subr.mxu0 0.0
        %7526 = vmatpush1.msra.mxu0 0.0
        %7527 = vmatprep.subr.mxu0 0.0
        %7528 = vmatpush1.msra.mxu0 0.0
        %7529 = vmatprep.subr.mxu0 0.0
        %7530 = vmatpush1.msra.mxu0 0.0
        %7531 = vmatprep.subr.mxu0 0.0
        %7532 = vmatpush1.msra.mxu0 0.0
        %7533 = vmatprep.subr.mxu0 0.0
        %7534 = vmatpush1.msra.mxu0 0.0
        %7535 = vmatprep.subr.mxu0 0.0
        %7536 = vmatpush1.msra.mxu0 0.0
        %7537 = vmatprep.subr.mxu0 0.0
        %7538 = vmatpush1.msra.mxu0 0.0
        %7539 = vmatprep.subr.mxu0 0.0
        %7540 = vmatpush1.msra.mxu0 0.0
        %7541 = vmatprep.subr.mxu0 0.0
        %7542 = vmatpush1.msra.mxu0 0.0
        %7543 = vmatprep.mubr.f32.mxu0 0.0
        %7544 = vmatmul.mubr.f32.gmra.mrb[0].mxu0 %v7477
        %v7545 = vpop.f32.mrb[0].mxu0
        %v7546 = vadd.f32 0.0, %v7545
        %v7547 = vpop.f32.mrb[0].mxu0
        %v7548 = vadd.f32 0.0, %v7547
        %7549 = vdwg.mxu0
        %v7550 = vld [vmem:[#allocation26] sm:$0xff]
        %v7551 = vld [vmem:[#allocation26 + $0x8] sm:$0xff]
        %v7552 = vld [vmem:[#allocation26 + $0x10] sm:$0xff]
        %v7553 = vld [vmem:[#allocation26 + $0x18] sm:$0xff]
        %v7554 = vld [vmem:[#allocation26 + $0x20] sm:$0xff]
        %v7555 = vld [vmem:[#allocation26 + $0x28] sm:$0xff]
        %v7556 = vld [vmem:[#allocation26 + $0x30] sm:$0xff]
        %v7557 = vld [vmem:[#allocation26 + $0x38] sm:$0xff]
        %v7558 = vld [vmem:[#allocation26 + $0x40] sm:$0xff]
        %v7559 = vld [vmem:[#allocation26 + $0x48] sm:$0xff]
        %v7560 = vld [vmem:[#allocation26 + $0x50] sm:$0xff]
        %v7561 = vld [vmem:[#allocation26 + $0x58] sm:$0xff]
        %v7562 = vld [vmem:[#allocation26 + $0x60] sm:$0xff]
        %v7563 = vld [vmem:[#allocation26 + $0x68] sm:$0xff]
        %v7564 = vld [vmem:[#allocation26 + $0x70] sm:$0xff]
        %v7565 = vld [vmem:[#allocation26 + $0x78] sm:$0xff]
        %v7566 = vld [vmem:[#allocation26 + $0x80] sm:$0xff]
        %v7567 = vld [vmem:[#allocation26 + $0x88] sm:$0xff]
        %v7568 = vld [vmem:[#allocation26 + $0x90] sm:$0xff]
        %v7569 = vld [vmem:[#allocation26 + $0x98] sm:$0xff]
        %v7570 = vld [vmem:[#allocation26 + $0xa0] sm:$0xff]
        %v7571 = vld [vmem:[#allocation26 + $0xa8] sm:$0xff]
        %v7572 = vld [vmem:[#allocation26 + $0xb0] sm:$0xff]
        %v7573 = vld [vmem:[#allocation26 + $0xb8] sm:$0xff]
        %v7574 = vld [vmem:[#allocation26 + $0xc0] sm:$0xff]
        %v7575 = vld [vmem:[#allocation26 + $0xc8] sm:$0xff]
        %v7576 = vld [vmem:[#allocation26 + $0xd0] sm:$0xff]
        %v7577 = vld [vmem:[#allocation26 + $0xd8] sm:$0xff]
        %v7578 = vld [vmem:[#allocation26 + $0xe0] sm:$0xff]
        %v7579 = vld [vmem:[#allocation26 + $0xe8] sm:$0xff]
        %v7580 = vld [vmem:[#allocation26 + $0xf0] sm:$0xff]
        %v7581 = vld [vmem:[#allocation26 + $0xf8] sm:$0xff]
        %v7582 = vld [vmem:[#allocation26 + $0x100] sm:$0xff]
        %v7583 = vld [vmem:[#allocation26 + $0x108] sm:$0xff]
        %v7584 = vld [vmem:[#allocation26 + $0x110] sm:$0xff]
        %v7585 = vld [vmem:[#allocation26 + $0x118] sm:$0xff]
        %v7586 = vld [vmem:[#allocation26 + $0x120] sm:$0xff]
        %v7587 = vld [vmem:[#allocation26 + $0x128] sm:$0xff]
        %v7588 = vld [vmem:[#allocation26 + $0x130] sm:$0xff]
        %v7589 = vld [vmem:[#allocation26 + $0x138] sm:$0xff]
        %v7590 = vld [vmem:[#allocation26 + $0x140] sm:$0xff]
        %v7591 = vld [vmem:[#allocation26 + $0x148] sm:$0xff]
        %v7592 = vld [vmem:[#allocation26 + $0x150] sm:$0xff]
        %v7593 = vld [vmem:[#allocation26 + $0x158] sm:$0xff]
        %v7594 = vld [vmem:[#allocation26 + $0x160] sm:$0xff]
        %v7595 = vld [vmem:[#allocation26 + $0x168] sm:$0xff]
        %v7596 = vld [vmem:[#allocation26 + $0x170] sm:$0xff]
        %v7597 = vld [vmem:[#allocation26 + $0x178] sm:$0xff]
        %v7598 = vld [vmem:[#allocation26 + $0x180] sm:$0xff]
        %v7599 = vld [vmem:[#allocation26 + $0x188] sm:$0xff]
        %v7600 = vld [vmem:[#allocation26 + $0x190] sm:$0xff]
        %v7601 = vld [vmem:[#allocation26 + $0x198] sm:$0xff]
        %v7602 = vld [vmem:[#allocation26 + $0x1a0] sm:$0xff]
        %v7603 = vld [vmem:[#allocation26 + $0x1a8] sm:$0xff]
        %v7604 = vld [vmem:[#allocation26 + $0x1b0] sm:$0xff]
        %v7605 = vld [vmem:[#allocation26 + $0x1b8] sm:$0xff]
        %v7606 = vld [vmem:[#allocation26 + $0x1c0] sm:$0xff]
        %v7607 = vld [vmem:[#allocation26 + $0x1c8] sm:$0xff]
        %v7608 = vld [vmem:[#allocation26 + $0x1d0] sm:$0xff]
        %v7609 = vld [vmem:[#allocation26 + $0x1d8] sm:$0xff]
        %v7610 = vld [vmem:[#allocation26 + $0x1e0] sm:$0xff]
        %v7611 = vld [vmem:[#allocation26 + $0x1e8] sm:$0xff]
        %v7612 = vld [vmem:[#allocation26 + $0x1f0] sm:$0xff]
        %v7613 = vld [vmem:[#allocation26 + $0x1f8] sm:$0xff]
        %v7614 = vld [vmem:[#allocation26 + $0x200] sm:$0xff]
        %v7615 = vld [vmem:[#allocation26 + $0x208] sm:$0xff]
        %v7616 = vld [vmem:[#allocation26 + $0x210] sm:$0xff]
        %v7617 = vld [vmem:[#allocation26 + $0x218] sm:$0xff]
        %v7618 = vld [vmem:[#allocation26 + $0x220] sm:$0xff]
        %v7619 = vld [vmem:[#allocation26 + $0x228] sm:$0xff]
        %v7620 = vld [vmem:[#allocation26 + $0x230] sm:$0xff]
        %v7621 = vld [vmem:[#allocation26 + $0x238] sm:$0xff]
        %v7622 = vld [vmem:[#allocation26 + $0x240] sm:$0xff]
        %v7623 = vld [vmem:[#allocation26 + $0x248] sm:$0xff]
        %v7624 = vld [vmem:[#allocation26 + $0x250] sm:$0xff]
        %v7625 = vld [vmem:[#allocation26 + $0x258] sm:$0xff]
        %v7626 = vld [vmem:[#allocation26 + $0x260] sm:$0xff]
        %v7627 = vld [vmem:[#allocation26 + $0x268] sm:$0xff]
        %v7628 = vld [vmem:[#allocation26 + $0x270] sm:$0xff]
        %v7629 = vld [vmem:[#allocation26 + $0x278] sm:$0xff]
        %v7630 = vld [vmem:[#allocation26 + $0x280] sm:$0xff]
        %v7631 = vld [vmem:[#allocation26 + $0x288] sm:$0xff]
        %v7632 = vld [vmem:[#allocation26 + $0x290] sm:$0xff]
        %v7633 = vld [vmem:[#allocation26 + $0x298] sm:$0xff]
        %v7634 = vld [vmem:[#allocation26 + $0x2a0] sm:$0xff]
        %v7635 = vld [vmem:[#allocation26 + $0x2a8] sm:$0xff]
        %v7636 = vld [vmem:[#allocation26 + $0x2b0] sm:$0xff]
        %v7637 = vld [vmem:[#allocation26 + $0x2b8] sm:$0xff]
        %v7638 = vld [vmem:[#allocation26 + $0x2c0] sm:$0xff]
        %v7639 = vld [vmem:[#allocation26 + $0x2c8] sm:$0xff]
        %v7640 = vld [vmem:[#allocation26 + $0x2d0] sm:$0xff]
        %v7641 = vld [vmem:[#allocation26 + $0x2d8] sm:$0xff]
        %v7642 = vld [vmem:[#allocation26 + $0x2e0] sm:$0xff]
        %v7643 = vld [vmem:[#allocation26 + $0x2e8] sm:$0xff]
        %v7644 = vld [vmem:[#allocation26 + $0x2f0] sm:$0xff]
        %v7645 = vld [vmem:[#allocation26 + $0x2f8] sm:$0xff]
        %v7646 = vld [vmem:[#allocation26 + $0x300] sm:$0xff]
        %v7647 = vld [vmem:[#allocation26 + $0x308] sm:$0xff]
        %v7648 = vld [vmem:[#allocation26 + $0x310] sm:$0xff]
        %v7649 = vld [vmem:[#allocation26 + $0x318] sm:$0xff]
        %v7650 = vld [vmem:[#allocation26 + $0x320] sm:$0xff]
        %v7651 = vld [vmem:[#allocation26 + $0x328] sm:$0xff]
        %v7652 = vld [vmem:[#allocation26 + $0x330] sm:$0xff]
        %v7653 = vld [vmem:[#allocation26 + $0x338] sm:$0xff]
        %v7654 = vld [vmem:[#allocation26 + $0x340] sm:$0xff]
        %v7655 = vld [vmem:[#allocation26 + $0x348] sm:$0xff]
        %v7656 = vld [vmem:[#allocation26 + $0x350] sm:$0xff]
        %v7657 = vld [vmem:[#allocation26 + $0x358] sm:$0xff]
        %v7658 = vld [vmem:[#allocation26 + $0x360] sm:$0xff]
        %v7659 = vld [vmem:[#allocation26 + $0x368] sm:$0xff]
        %v7660 = vld [vmem:[#allocation26 + $0x370] sm:$0xff]
        %v7661 = vld [vmem:[#allocation26 + $0x378] sm:$0xff]
        %v7662 = vld [vmem:[#allocation26 + $0x380] sm:$0xff]
        %v7663 = vld [vmem:[#allocation26 + $0x388] sm:$0xff]
        %v7664 = vld [vmem:[#allocation26 + $0x390] sm:$0xff]
        %v7665 = vld [vmem:[#allocation26 + $0x398] sm:$0xff]
        %v7666 = vld [vmem:[#allocation26 + $0x3a0] sm:$0xff]
        %v7667 = vld [vmem:[#allocation26 + $0x3a8] sm:$0xff]
        %v7668 = vld [vmem:[#allocation26 + $0x3b0] sm:$0xff]
        %v7669 = vld [vmem:[#allocation26 + $0x3b8] sm:$0xff]
        %v7670 = vld [vmem:[#allocation26 + $0x3c0] sm:$0xff]
        %v7671 = vld [vmem:[#allocation26 + $0x3c8] sm:$0xff]
        %v7672 = vld [vmem:[#allocation26 + $0x3d0] sm:$0xff]
        %v7673 = vld [vmem:[#allocation26 + $0x3d8] sm:$0xff]
        %v7674 = vld [vmem:[#allocation26 + $0x3e0] sm:$0xff]
        %v7675 = vld [vmem:[#allocation26 + $0x3e8] sm:$0xff]
        %v7676 = vld [vmem:[#allocation26 + $0x3f0] sm:$0xff]
        %v7677 = vld [vmem:[#allocation26 + $0x3f8] sm:$0xff]
        %v7678 = vld [vmem:[#allocation26 + $0x400] sm:$0xff]
        %v7679 = vld [vmem:[#allocation26 + $0x408] sm:$0xff]
        %v7680 = vld [vmem:[#allocation26 + $0x410] sm:$0xff]
        %v7681 = vld [vmem:[#allocation26 + $0x418] sm:$0xff]
        %v7682 = vld [vmem:[#allocation26 + $0x420] sm:$0xff]
        %v7683 = vld [vmem:[#allocation26 + $0x428] sm:$0xff]
        %v7684 = vld [vmem:[#allocation26 + $0x430] sm:$0xff]
        %v7685 = vld [vmem:[#allocation26 + $0x438] sm:$0xff]
        %v7686 = vld [vmem:[#allocation26 + $0x440] sm:$0xff]
        %v7687 = vld [vmem:[#allocation26 + $0x448] sm:$0xff]
        %v7688 = vld [vmem:[#allocation26 + $0x450] sm:$0xff]
        %v7689 = vld [vmem:[#allocation26 + $0x458] sm:$0xff]
        %v7690 = vld [vmem:[#allocation26 + $0x460] sm:$0xff]
        %v7691 = vld [vmem:[#allocation26 + $0x468] sm:$0xff]
        %v7692 = vld [vmem:[#allocation26 + $0x470] sm:$0xff]
        %v7693 = vld [vmem:[#allocation26 + $0x478] sm:$0xff]
        %v7694 = vld [vmem:[#allocation26 + $0x480] sm:$0xff]
        %v7695 = vld [vmem:[#allocation26 + $0x488] sm:$0xff]
        %v7696 = vld [vmem:[#allocation26 + $0x490] sm:$0xff]
        %v7697 = vld [vmem:[#allocation26 + $0x498] sm:$0xff]
        %v7698 = vld [vmem:[#allocation26 + $0x4a0] sm:$0xff]
        %v7699 = vld [vmem:[#allocation26 + $0x4a8] sm:$0xff]
        %v7700 = vld [vmem:[#allocation26 + $0x4b0] sm:$0xff]
        %v7701 = vld [vmem:[#allocation26 + $0x4b8] sm:$0xff]
        %v7702 = vld [vmem:[#allocation26 + $0x4c0] sm:$0xff]
        %v7703 = vld [vmem:[#allocation26 + $0x4c8] sm:$0xff]
        %v7704 = vld [vmem:[#allocation26 + $0x4d0] sm:$0xff]
        %v7705 = vld [vmem:[#allocation26 + $0x4d8] sm:$0xff]
        %v7706 = vld [vmem:[#allocation26 + $0x4e0] sm:$0xff]
        %v7707 = vld [vmem:[#allocation26 + $0x4e8] sm:$0xff]
        %v7708 = vld [vmem:[#allocation26 + $0x4f0] sm:$0xff]
        %v7709 = vld [vmem:[#allocation26 + $0x4f8] sm:$0xff]
        %v7710 = vld [vmem:[#allocation26 + $0x500] sm:$0xff]
        %v7711 = vld [vmem:[#allocation26 + $0x508] sm:$0xff]
        %v7712 = vld [vmem:[#allocation26 + $0x510] sm:$0xff]
        %v7713 = vld [vmem:[#allocation26 + $0x518] sm:$0xff]
        %v7714 = vld [vmem:[#allocation26 + $0x520] sm:$0xff]
        %v7715 = vld [vmem:[#allocation26 + $0x528] sm:$0xff]
        %v7716 = vld [vmem:[#allocation26 + $0x530] sm:$0xff]
        %v7717 = vld [vmem:[#allocation26 + $0x538] sm:$0xff]
        %v7718 = vld [vmem:[#allocation26 + $0x540] sm:$0xff]
        %v7719 = vld [vmem:[#allocation26 + $0x548] sm:$0xff]
        %v7720 = vld [vmem:[#allocation26 + $0x550] sm:$0xff]
        %v7721 = vld [vmem:[#allocation26 + $0x558] sm:$0xff]
        %v7722 = vld [vmem:[#allocation26 + $0x560] sm:$0xff]
        %v7723 = vld [vmem:[#allocation26 + $0x568] sm:$0xff]
        %v7724 = vld [vmem:[#allocation26 + $0x570] sm:$0xff]
        %v7725 = vld [vmem:[#allocation26 + $0x578] sm:$0xff]
        %v7726 = vld [vmem:[#allocation26 + $0x580] sm:$0xff]
        %v7727 = vld [vmem:[#allocation26 + $0x588] sm:$0xff]
        %v7728 = vld [vmem:[#allocation26 + $0x590] sm:$0xff]
        %v7729 = vld [vmem:[#allocation26 + $0x598] sm:$0xff]
        %v7730 = vld [vmem:[#allocation26 + $0x5a0] sm:$0xff]
        %v7731 = vld [vmem:[#allocation26 + $0x5a8] sm:$0xff]
        %v7732 = vld [vmem:[#allocation26 + $0x5b0] sm:$0xff]
        %v7733 = vld [vmem:[#allocation26 + $0x5b8] sm:$0xff]
        %v7734 = vld [vmem:[#allocation26 + $0x5c0] sm:$0xff]
        %v7735 = vld [vmem:[#allocation26 + $0x5c8] sm:$0xff]
        %v7736 = vld [vmem:[#allocation26 + $0x5d0] sm:$0xff]
        %v7737 = vld [vmem:[#allocation26 + $0x5d8] sm:$0xff]
        %v7738 = vld [vmem:[#allocation26 + $0x5e0] sm:$0xff]
        %v7739 = vld [vmem:[#allocation26 + $0x5e8] sm:$0xff]
        %v7740 = vld [vmem:[#allocation26 + $0x5f0] sm:$0xff]
        %v7741 = vld [vmem:[#allocation26 + $0x5f8] sm:$0xff]
        %v7742 = vld [vmem:[#allocation26 + $0x600] sm:$0xff]
        %v7743 = vld [vmem:[#allocation26 + $0x608] sm:$0xff]
        %v7744 = vld [vmem:[#allocation26 + $0x610] sm:$0xff]
        %v7745 = vld [vmem:[#allocation26 + $0x618] sm:$0xff]
        %v7746 = vld [vmem:[#allocation26 + $0x620] sm:$0xff]
        %v7747 = vld [vmem:[#allocation26 + $0x628] sm:$0xff]
        %v7748 = vld [vmem:[#allocation26 + $0x630] sm:$0xff]
        %v7749 = vld [vmem:[#allocation26 + $0x638] sm:$0xff]
        %v7750 = vld [vmem:[#allocation26 + $0x640] sm:$0xff]
        %v7751 = vld [vmem:[#allocation26 + $0x648] sm:$0xff]
        %v7752 = vld [vmem:[#allocation26 + $0x650] sm:$0xff]
        %v7753 = vld [vmem:[#allocation26 + $0x658] sm:$0xff]
        %v7754 = vld [vmem:[#allocation26 + $0x660] sm:$0xff]
        %v7755 = vld [vmem:[#allocation26 + $0x668] sm:$0xff]
        %v7756 = vld [vmem:[#allocation26 + $0x670] sm:$0xff]
        %v7757 = vld [vmem:[#allocation26 + $0x678] sm:$0xff]
        %v7758 = vld [vmem:[#allocation26 + $0x680] sm:$0xff]
        %v7759 = vld [vmem:[#allocation26 + $0x688] sm:$0xff]
        %v7760 = vld [vmem:[#allocation26 + $0x690] sm:$0xff]
        %v7761 = vld [vmem:[#allocation26 + $0x698] sm:$0xff]
        %v7762 = vld [vmem:[#allocation26 + $0x6a0] sm:$0xff]
        %v7763 = vld [vmem:[#allocation26 + $0x6a8] sm:$0xff]
        %v7764 = vld [vmem:[#allocation26 + $0x6b0] sm:$0xff]
        %v7765 = vld [vmem:[#allocation26 + $0x6b8] sm:$0xff]
        %v7766 = vld [vmem:[#allocation26 + $0x6c0] sm:$0xff]
        %v7767 = vld [vmem:[#allocation26 + $0x6c8] sm:$0xff]
        %v7768 = vld [vmem:[#allocation26 + $0x6d0] sm:$0xff]
        %v7769 = vld [vmem:[#allocation26 + $0x6d8] sm:$0xff]
        %v7770 = vld [vmem:[#allocation26 + $0x6e0] sm:$0xff]
        %v7771 = vld [vmem:[#allocation26 + $0x6e8] sm:$0xff]
        %v7772 = vld [vmem:[#allocation26 + $0x6f0] sm:$0xff]
        %v7773 = vld [vmem:[#allocation26 + $0x6f8] sm:$0xff]
        %v7774 = vld [vmem:[#allocation26 + $0x700] sm:$0xff]
        %v7775 = vld [vmem:[#allocation26 + $0x708] sm:$0xff]
        %v7776 = vld [vmem:[#allocation26 + $0x710] sm:$0xff]
        %v7777 = vld [vmem:[#allocation26 + $0x718] sm:$0xff]
        %v7778 = vld [vmem:[#allocation26 + $0x720] sm:$0xff]
        %v7779 = vld [vmem:[#allocation26 + $0x728] sm:$0xff]
        %v7780 = vld [vmem:[#allocation26 + $0x730] sm:$0xff]
        %v7781 = vld [vmem:[#allocation26 + $0x738] sm:$0xff]
        %v7782 = vld [vmem:[#allocation26 + $0x740] sm:$0xff]
        %v7783 = vld [vmem:[#allocation26 + $0x748] sm:$0xff]
        %v7784 = vld [vmem:[#allocation26 + $0x750] sm:$0xff]
        %v7785 = vld [vmem:[#allocation26 + $0x758] sm:$0xff]
        %v7786 = vld [vmem:[#allocation26 + $0x760] sm:$0xff]
        %v7787 = vld [vmem:[#allocation26 + $0x768] sm:$0xff]
        %v7788 = vld [vmem:[#allocation26 + $0x770] sm:$0xff]
        %v7789 = vld [vmem:[#allocation26 + $0x778] sm:$0xff]
        %v7790 = vld [vmem:[#allocation26 + $0x780] sm:$0xff]
        %v7791 = vld [vmem:[#allocation26 + $0x788] sm:$0xff]
        %v7792 = vld [vmem:[#allocation26 + $0x790] sm:$0xff]
        %v7793 = vld [vmem:[#allocation26 + $0x798] sm:$0xff]
        %v7794 = vld [vmem:[#allocation26 + $0x7a0] sm:$0xff]
        %v7795 = vld [vmem:[#allocation26 + $0x7a8] sm:$0xff]
        %v7796 = vld [vmem:[#allocation26 + $0x7b0] sm:$0xff]
        %v7797 = vld [vmem:[#allocation26 + $0x7b8] sm:$0xff]
        %v7798 = vld [vmem:[#allocation26 + $0x7c0] sm:$0xff]
        %v7799 = vld [vmem:[#allocation26 + $0x7c8] sm:$0xff]
        %v7800 = vld [vmem:[#allocation26 + $0x7d0] sm:$0xff]
        %v7801 = vld [vmem:[#allocation26 + $0x7d8] sm:$0xff]
        %v7802 = vld [vmem:[#allocation26 + $0x7e0] sm:$0xff]
        %v7803 = vld [vmem:[#allocation26 + $0x7e8] sm:$0xff]
        %v7804 = vld [vmem:[#allocation26 + $0x7f0] sm:$0xff]
        %v7805 = vld [vmem:[#allocation26 + $0x7f8] sm:$0xff]
        %v7806 = vld [vmem:[#allocation28] sm:$0x3]
        %v7808 = vlaneseq
        %v7809 = vshrl.u32 %v7808, 7
        %v7810 = vsub.s32 0, %v7809
        %v7811 = vrot.slane %v7806, %v7810
        %v7812 = vlaneseq
        %v7813 = vshrl.u32 %v7812, 7
        %v7814 = vsub.s32 1, %v7813
        %v7815 = vrot.slane %v7806, %v7814
        %7818 = vmatprep.subr.mxu0 %v7551
        %7819 = vmatpush1.msra.mxu0 %v7550
        %7820 = vmatprep.subr.mxu0 %v7553
        %7821 = vmatpush1.msra.mxu0 %v7552
        %7822 = vmatprep.subr.mxu0 %v7555
        %7823 = vmatpush1.msra.mxu0 %v7554
        %7824 = vmatprep.subr.mxu0 %v7557
        %7825 = vmatpush1.msra.mxu0 %v7556
        %7826 = vmatprep.subr.mxu0 %v7559
        %7827 = vmatpush1.msra.mxu0 %v7558
        %7828 = vmatprep.subr.mxu0 %v7561
        %7829 = vmatpush1.msra.mxu0 %v7560
        %7830 = vmatprep.subr.mxu0 %v7563
        %7831 = vmatpush1.msra.mxu0 %v7562
        %7832 = vmatprep.subr.mxu0 %v7565
        %7833 = vmatpush1.msra.mxu0 %v7564
        %7834 = vmatprep.subr.mxu0 %v7567
        %7835 = vmatpush1.msra.mxu0 %v7566
        %7836 = vmatprep.subr.mxu0 %v7569
        %7837 = vmatpush1.msra.mxu0 %v7568
        %7838 = vmatprep.subr.mxu0 %v7571
        %7839 = vmatpush1.msra.mxu0 %v7570
        %7840 = vmatprep.subr.mxu0 %v7573
        %7841 = vmatpush1.msra.mxu0 %v7572
        %7842 = vmatprep.subr.mxu0 %v7575
        %7843 = vmatpush1.msra.mxu0 %v7574
        %7844 = vmatprep.subr.mxu0 %v7577
        %7845 = vmatpush1.msra.mxu0 %v7576
        %7846 = vmatprep.subr.mxu0 %v7579
        %7847 = vmatpush1.msra.mxu0 %v7578
        %7848 = vmatprep.subr.mxu0 %v7581
        %7849 = vmatpush1.msra.mxu0 %v7580
        %7850 = vmatprep.subr.mxu0 %v7583
        %7851 = vmatpush1.msra.mxu0 %v7582
        %7852 = vmatprep.subr.mxu0 %v7585
        %7853 = vmatpush1.msra.mxu0 %v7584
        %7854 = vmatprep.subr.mxu0 %v7587
        %7855 = vmatpush1.msra.mxu0 %v7586
        %7856 = vmatprep.subr.mxu0 %v7589
        %7857 = vmatpush1.msra.mxu0 %v7588
        %7858 = vmatprep.subr.mxu0 %v7591
        %7859 = vmatpush1.msra.mxu0 %v7590
        %7860 = vmatprep.subr.mxu0 %v7593
        %7861 = vmatpush1.msra.mxu0 %v7592
        %7862 = vmatprep.subr.mxu0 %v7595
        %7863 = vmatpush1.msra.mxu0 %v7594
        %7864 = vmatprep.subr.mxu0 %v7597
        %7865 = vmatpush1.msra.mxu0 %v7596
        %7866 = vmatprep.subr.mxu0 %v7599
        %7867 = vmatpush1.msra.mxu0 %v7598
        %7868 = vmatprep.subr.mxu0 %v7601
        %7869 = vmatpush1.msra.mxu0 %v7600
        %7870 = vmatprep.subr.mxu0 %v7603
        %7871 = vmatpush1.msra.mxu0 %v7602
        %7872 = vmatprep.subr.mxu0 %v7605
        %7873 = vmatpush1.msra.mxu0 %v7604
        %7874 = vmatprep.subr.mxu0 %v7607
        %7875 = vmatpush1.msra.mxu0 %v7606
        %7876 = vmatprep.subr.mxu0 %v7609
        %7877 = vmatpush1.msra.mxu0 %v7608
        %7878 = vmatprep.subr.mxu0 %v7611
        %7879 = vmatpush1.msra.mxu0 %v7610
        %7880 = vmatprep.subr.mxu0 %v7613
        %7881 = vmatpush1.msra.mxu0 %v7612
        %7882 = vmatprep.mubr.f32.mxu0 %v7317
        %7883 = vmatmul.mubr.f32.gmra.mrb[0].mxu0 %v7315
        %v7884 = vpop.f32.mrb[0].mxu0
        %v7885 = vadd.f32 %v7811, %v7884
        %v7886 = vpop.f32.mrb[0].mxu0
        %v7887 = vadd.f32 %v7815, %v7886
        %7888 = vdwg.mxu0
        %7889 = vmatprep.subr.mxu0 %v7615
        %7890 = vmatpush1.msra.mxu0 %v7614
        %7891 = vmatprep.subr.mxu0 %v7617
        %7892 = vmatpush1.msra.mxu0 %v7616
        %7893 = vmatprep.subr.mxu0 %v7619
        %7894 = vmatpush1.msra.mxu0 %v7618
        %7895 = vmatprep.subr.mxu0 %v7621
        %7896 = vmatpush1.msra.mxu0 %v7620
        %7897 = vmatprep.subr.mxu0 %v7623
        %7898 = vmatpush1.msra.mxu0 %v7622
        %7899 = vmatprep.subr.mxu0 %v7625
        %7900 = vmatpush1.msra.mxu0 %v7624
        %7901 = vmatprep.subr.mxu0 %v7627
        %7902 = vmatpush1.msra.mxu0 %v7626
        %7903 = vmatprep.subr.mxu0 %v7629
        %7904 = vmatpush1.msra.mxu0 %v7628
        %7905 = vmatprep.subr.mxu0 %v7631
        %7906 = vmatpush1.msra.mxu0 %v7630
        %7907 = vmatprep.subr.mxu0 %v7633
        %7908 = vmatpush1.msra.mxu0 %v7632
        %7909 = vmatprep.subr.mxu0 %v7635
        %7910 = vmatpush1.msra.mxu0 %v7634
        %7911 = vmatprep.subr.mxu0 %v7637
        %7912 = vmatpush1.msra.mxu0 %v7636
        %7913 = vmatprep.subr.mxu0 %v7639
        %7914 = vmatpush1.msra.mxu0 %v7638
        %7915 = vmatprep.subr.mxu0 %v7641
        %7916 = vmatpush1.msra.mxu0 %v7640
        %7917 = vmatprep.subr.mxu0 %v7643
        %7918 = vmatpush1.msra.mxu0 %v7642
        %7919 = vmatprep.subr.mxu0 %v7645
        %7920 = vmatpush1.msra.mxu0 %v7644
        %7921 = vmatprep.subr.mxu0 %v7647
        %7922 = vmatpush1.msra.mxu0 %v7646
        %7923 = vmatprep.subr.mxu0 %v7649
        %7924 = vmatpush1.msra.mxu0 %v7648
        %7925 = vmatprep.subr.mxu0 %v7651
        %7926 = vmatpush1.msra.mxu0 %v7650
        %7927 = vmatprep.subr.mxu0 %v7653
        %7928 = vmatpush1.msra.mxu0 %v7652
        %7929 = vmatprep.subr.mxu0 %v7655
        %7930 = vmatpush1.msra.mxu0 %v7654
        %7931 = vmatprep.subr.mxu0 %v7657
        %7932 = vmatpush1.msra.mxu0 %v7656
        %7933 = vmatprep.subr.mxu0 %v7659
        %7934 = vmatpush1.msra.mxu0 %v7658
        %7935 = vmatprep.subr.mxu0 %v7661
        %7936 = vmatpush1.msra.mxu0 %v7660
        %7937 = vmatprep.subr.mxu0 %v7663
        %7938 = vmatpush1.msra.mxu0 %v7662
        %7939 = vmatprep.subr.mxu0 %v7665
        %7940 = vmatpush1.msra.mxu0 %v7664
        %7941 = vmatprep.subr.mxu0 %v7667
        %7942 = vmatpush1.msra.mxu0 %v7666
        %7943 = vmatprep.subr.mxu0 %v7669
        %7944 = vmatpush1.msra.mxu0 %v7668
        %7945 = vmatprep.subr.mxu0 %v7671
        %7946 = vmatpush1.msra.mxu0 %v7670
        %7947 = vmatprep.subr.mxu0 %v7673
        %7948 = vmatpush1.msra.mxu0 %v7672
        %7949 = vmatprep.subr.mxu0 %v7675
        %7950 = vmatpush1.msra.mxu0 %v7674
        %7951 = vmatprep.subr.mxu0 %v7677
        %7952 = vmatpush1.msra.mxu0 %v7676
        %7953 = vmatprep.mubr.f32.mxu0 %v7394
        %7954 = vmatmul.mubr.f32.gmra.mrb[0].mxu0 %v7392
        %v7955 = vpop.f32.mrb[0].mxu0
        %v7956 = vadd.f32 %v7885, %v7955
        %v7957 = vpop.f32.mrb[0].mxu0
        %v7958 = vadd.f32 %v7887, %v7957
        %7959 = vdwg.mxu0
        %7960 = vmatprep.subr.mxu0 %v7679
        %7961 = vmatpush1.msra.mxu0 %v7678
        %7962 = vmatprep.subr.mxu0 %v7681
        %7963 = vmatpush1.msra.mxu0 %v7680
        %7964 = vmatprep.subr.mxu0 %v7683
        %7965 = vmatpush1.msra.mxu0 %v7682
        %7966 = vmatprep.subr.mxu0 %v7685
        %7967 = vmatpush1.msra.mxu0 %v7684
        %7968 = vmatprep.subr.mxu0 %v7687
        %7969 = vmatpush1.msra.mxu0 %v7686
        %7970 = vmatprep.subr.mxu0 %v7689
        %7971 = vmatpush1.msra.mxu0 %v7688
        %7972 = vmatprep.subr.mxu0 %v7691
        %7973 = vmatpush1.msra.mxu0 %v7690
        %7974 = vmatprep.subr.mxu0 %v7693
        %7975 = vmatpush1.msra.mxu0 %v7692
        %7976 = vmatprep.subr.mxu0 %v7695
        %7977 = vmatpush1.msra.mxu0 %v7694
        %7978 = vmatprep.subr.mxu0 %v7697
        %7979 = vmatpush1.msra.mxu0 %v7696
        %7980 = vmatprep.subr.mxu0 %v7699
        %7981 = vmatpush1.msra.mxu0 %v7698
        %7982 = vmatprep.subr.mxu0 %v7701
        %7983 = vmatpush1.msra.mxu0 %v7700
        %7984 = vmatprep.subr.mxu0 %v7703
        %7985 = vmatpush1.msra.mxu0 %v7702
        %7986 = vmatprep.subr.mxu0 %v7705
        %7987 = vmatpush1.msra.mxu0 %v7704
        %7988 = vmatprep.subr.mxu0 %v7707
        %7989 = vmatpush1.msra.mxu0 %v7706
        %7990 = vmatprep.subr.mxu0 %v7709
        %7991 = vmatpush1.msra.mxu0 %v7708
        %7992 = vmatprep.subr.mxu0 %v7711
        %7993 = vmatpush1.msra.mxu0 %v7710
        %7994 = vmatprep.subr.mxu0 %v7713
        %7995 = vmatpush1.msra.mxu0 %v7712
        %7996 = vmatprep.subr.mxu0 %v7715
        %7997 = vmatpush1.msra.mxu0 %v7714
        %7998 = vmatprep.subr.mxu0 %v7717
        %7999 = vmatpush1.msra.mxu0 %v7716
        %8000 = vmatprep.subr.mxu0 %v7719
        %8001 = vmatpush1.msra.mxu0 %v7718
        %8002 = vmatprep.subr.mxu0 %v7721
        %8003 = vmatpush1.msra.mxu0 %v7720
        %8004 = vmatprep.subr.mxu0 %v7723
        %8005 = vmatpush1.msra.mxu0 %v7722
        %8006 = vmatprep.subr.mxu0 %v7725
        %8007 = vmatpush1.msra.mxu0 %v7724
        %8008 = vmatprep.subr.mxu0 %v7727
        %8009 = vmatpush1.msra.mxu0 %v7726
        %8010 = vmatprep.subr.mxu0 %v7729
        %8011 = vmatpush1.msra.mxu0 %v7728
        %8012 = vmatprep.subr.mxu0 %v7731
        %8013 = vmatpush1.msra.mxu0 %v7730
        %8014 = vmatprep.subr.mxu0 %v7733
        %8015 = vmatpush1.msra.mxu0 %v7732
        %8016 = vmatprep.subr.mxu0 %v7735
        %8017 = vmatpush1.msra.mxu0 %v7734
        %8018 = vmatprep.subr.mxu0 %v7737
        %8019 = vmatpush1.msra.mxu0 %v7736
        %8020 = vmatprep.subr.mxu0 %v7739
        %8021 = vmatpush1.msra.mxu0 %v7738
        %8022 = vmatprep.subr.mxu0 %v7741
        %8023 = vmatpush1.msra.mxu0 %v7740
        %8024 = vmatprep.mubr.f32.mxu0 %v7471
        %8025 = vmatmul.mubr.f32.gmra.mrb[0].mxu0 %v7469
        %v8026 = vpop.f32.mrb[0].mxu0
        %v8027 = vadd.f32 %v7956, %v8026
        %v8028 = vpop.f32.mrb[0].mxu0
        %v8029 = vadd.f32 %v7958, %v8028
        %8030 = vdwg.mxu0
        %8031 = vmatprep.subr.mxu0 %v7743
        %8032 = vmatpush1.msra.mxu0 %v7742
        %8033 = vmatprep.subr.mxu0 %v7745
        %8034 = vmatpush1.msra.mxu0 %v7744
        %8035 = vmatprep.subr.mxu0 %v7747
        %8036 = vmatpush1.msra.mxu0 %v7746
        %8037 = vmatprep.subr.mxu0 %v7749
        %8038 = vmatpush1.msra.mxu0 %v7748
        %8039 = vmatprep.subr.mxu0 %v7751
        %8040 = vmatpush1.msra.mxu0 %v7750
        %8041 = vmatprep.subr.mxu0 %v7753
        %8042 = vmatpush1.msra.mxu0 %v7752
        %8043 = vmatprep.subr.mxu0 %v7755
        %8044 = vmatpush1.msra.mxu0 %v7754
        %8045 = vmatprep.subr.mxu0 %v7757
        %8046 = vmatpush1.msra.mxu0 %v7756
        %8047 = vmatprep.subr.mxu0 %v7759
        %8048 = vmatpush1.msra.mxu0 %v7758
        %8049 = vmatprep.subr.mxu0 %v7761
        %8050 = vmatpush1.msra.mxu0 %v7760
        %8051 = vmatprep.subr.mxu0 %v7763
        %8052 = vmatpush1.msra.mxu0 %v7762
        %8053 = vmatprep.subr.mxu0 %v7765
        %8054 = vmatpush1.msra.mxu0 %v7764
        %8055 = vmatprep.subr.mxu0 %v7767
        %8056 = vmatpush1.msra.mxu0 %v7766
        %8057 = vmatprep.subr.mxu0 %v7769
        %8058 = vmatpush1.msra.mxu0 %v7768
        %8059 = vmatprep.subr.mxu0 %v7771
        %8060 = vmatpush1.msra.mxu0 %v7770
        %8061 = vmatprep.subr.mxu0 %v7773
        %8062 = vmatpush1.msra.mxu0 %v7772
        %8063 = vmatprep.subr.mxu0 %v7775
        %8064 = vmatpush1.msra.mxu0 %v7774
        %8065 = vmatprep.subr.mxu0 %v7777
        %8066 = vmatpush1.msra.mxu0 %v7776
        %8067 = vmatprep.subr.mxu0 %v7779
        %8068 = vmatpush1.msra.mxu0 %v7778
        %8069 = vmatprep.subr.mxu0 %v7781
        %8070 = vmatpush1.msra.mxu0 %v7780
        %8071 = vmatprep.subr.mxu0 %v7783
        %8072 = vmatpush1.msra.mxu0 %v7782
        %8073 = vmatprep.subr.mxu0 %v7785
        %8074 = vmatpush1.msra.mxu0 %v7784
        %8075 = vmatprep.subr.mxu0 %v7787
        %8076 = vmatpush1.msra.mxu0 %v7786
        %8077 = vmatprep.subr.mxu0 %v7789
        %8078 = vmatpush1.msra.mxu0 %v7788
        %8079 = vmatprep.subr.mxu0 %v7791
        %8080 = vmatpush1.msra.mxu0 %v7790
        %8081 = vmatprep.subr.mxu0 %v7793
        %8082 = vmatpush1.msra.mxu0 %v7792
        %8083 = vmatprep.subr.mxu0 %v7795
        %8084 = vmatpush1.msra.mxu0 %v7794
        %8085 = vmatprep.subr.mxu0 %v7797
        %8086 = vmatpush1.msra.mxu0 %v7796
        %8087 = vmatprep.subr.mxu0 %v7799
        %8088 = vmatpush1.msra.mxu0 %v7798
        %8089 = vmatprep.subr.mxu0 %v7801
        %8090 = vmatpush1.msra.mxu0 %v7800
        %8091 = vmatprep.subr.mxu0 %v7803
        %8092 = vmatpush1.msra.mxu0 %v7802
        %8093 = vmatprep.subr.mxu0 %v7805
        %8094 = vmatpush1.msra.mxu0 %v7804
        %8095 = vmatprep.mubr.f32.mxu0 %v7548
        %8096 = vmatmul.mubr.f32.gmra.mrb[0].mxu0 %v7546
        %v8097 = vpop.f32.mrb[0].mxu0
        %v8098 = vadd.f32 %v8027, %v8097
        %v8099 = vpop.f32.mrb[0].mxu0
        %v8100 = vadd.f32 %v8029, %v8099
        %8101 = vdwg.mxu0
        %v8102 = vmax.f32 %v8098, 0.0
        %v8103 = vmax.f32 %v8100, 0.0
        %v8104 = vld [vmem:[#allocation29] sm:$0xff]
        %v8105 = vld [vmem:[#allocation29 + $0x8] sm:$0xff]
        %v8106 = vld [vmem:[#allocation29 + $0x10] sm:$0xff]
        %v8107 = vld [vmem:[#allocation29 + $0x18] sm:$0xff]
        %v8108 = vld [vmem:[#allocation29 + $0x20] sm:$0xff]
        %v8109 = vld [vmem:[#allocation29 + $0x28] sm:$0xff]
        %v8110 = vld [vmem:[#allocation29 + $0x30] sm:$0xff]
        %v8111 = vld [vmem:[#allocation29 + $0x38] sm:$0xff]
        %v8112 = vld [vmem:[#allocation29 + $0x40] sm:$0xff]
        %v8113 = vld [vmem:[#allocation29 + $0x48] sm:$0xff]
        %v8114 = vld [vmem:[#allocation29 + $0x50] sm:$0xff]
        %v8115 = vld [vmem:[#allocation29 + $0x58] sm:$0xff]
        %v8116 = vld [vmem:[#allocation29 + $0x60] sm:$0xff]
        %v8117 = vld [vmem:[#allocation29 + $0x68] sm:$0xff]
        %v8118 = vld [vmem:[#allocation29 + $0x70] sm:$0xff]
        %v8119 = vld [vmem:[#allocation29 + $0x78] sm:$0xff]
        %v8120 = vld [vmem:[#allocation29 + $0x80] sm:$0xff]
        %v8121 = vld [vmem:[#allocation29 + $0x88] sm:$0xff]
        %v8122 = vld [vmem:[#allocation29 + $0x90] sm:$0xff]
        %v8123 = vld [vmem:[#allocation29 + $0x98] sm:$0xff]
        %v8124 = vld [vmem:[#allocation29 + $0xa0] sm:$0xff]
        %v8125 = vld [vmem:[#allocation29 + $0xa8] sm:$0xff]
        %v8126 = vld [vmem:[#allocation29 + $0xb0] sm:$0xff]
        %v8127 = vld [vmem:[#allocation29 + $0xb8] sm:$0xff]
        %v8128 = vld [vmem:[#allocation29 + $0xc0] sm:$0xff]
        %v8129 = vld [vmem:[#allocation29 + $0xc8] sm:$0xff]
        %v8130 = vld [vmem:[#allocation29 + $0xd0] sm:$0xff]
        %v8131 = vld [vmem:[#allocation29 + $0xd8] sm:$0xff]
        %v8132 = vld [vmem:[#allocation29 + $0xe0] sm:$0xff]
        %v8133 = vld [vmem:[#allocation29 + $0xe8] sm:$0xff]
        %v8134 = vld [vmem:[#allocation29 + $0xf0] sm:$0xff]
        %v8135 = vld [vmem:[#allocation29 + $0xf8] sm:$0xff]
        %v8136 = vld [vmem:[#allocation31] sm:$0x1]
        %8137 = vmatprep.subr.mxu0 0.0
        %8138 = vmatpush1.msra.mxu0 %v8104
        %8139 = vmatprep.subr.mxu0 0.0
        %8140 = vmatpush1.msra.mxu0 %v8105
        %8141 = vmatprep.subr.mxu0 0.0
        %8142 = vmatpush1.msra.mxu0 %v8106
        %8143 = vmatprep.subr.mxu0 0.0
        %8144 = vmatpush1.msra.mxu0 %v8107
        %8145 = vmatprep.subr.mxu0 0.0
        %8146 = vmatpush1.msra.mxu0 %v8108
        %8147 = vmatprep.subr.mxu0 0.0
        %8148 = vmatpush1.msra.mxu0 %v8109
        %8149 = vmatprep.subr.mxu0 0.0
        %8150 = vmatpush1.msra.mxu0 %v8110
        %8151 = vmatprep.subr.mxu0 0.0
        %8152 = vmatpush1.msra.mxu0 %v8111
        %8153 = vmatprep.subr.mxu0 0.0
        %8154 = vmatpush1.msra.mxu0 %v8112
        %8155 = vmatprep.subr.mxu0 0.0
        %8156 = vmatpush1.msra.mxu0 %v8113
        %8157 = vmatprep.subr.mxu0 0.0
        %8158 = vmatpush1.msra.mxu0 %v8114
        %8159 = vmatprep.subr.mxu0 0.0
        %8160 = vmatpush1.msra.mxu0 %v8115
        %8161 = vmatprep.subr.mxu0 0.0
        %8162 = vmatpush1.msra.mxu0 %v8116
        %8163 = vmatprep.subr.mxu0 0.0
        %8164 = vmatpush1.msra.mxu0 %v8117
        %8165 = vmatprep.subr.mxu0 0.0
        %8166 = vmatpush1.msra.mxu0 %v8118
        %8167 = vmatprep.subr.mxu0 0.0
        %8168 = vmatpush1.msra.mxu0 %v8119
        %8169 = vmatprep.subr.mxu0 0.0
        %8170 = vmatpush1.msra.mxu0 %v8120
        %8171 = vmatprep.subr.mxu0 0.0
        %8172 = vmatpush1.msra.mxu0 %v8121
        %8173 = vmatprep.subr.mxu0 0.0
        %8174 = vmatpush1.msra.mxu0 %v8122
        %8175 = vmatprep.subr.mxu0 0.0
        %8176 = vmatpush1.msra.mxu0 %v8123
        %8177 = vmatprep.subr.mxu0 0.0
        %8178 = vmatpush1.msra.mxu0 %v8124
        %8179 = vmatprep.subr.mxu0 0.0
        %8180 = vmatpush1.msra.mxu0 %v8125
        %8181 = vmatprep.subr.mxu0 0.0
        %8182 = vmatpush1.msra.mxu0 %v8126
        %8183 = vmatprep.subr.mxu0 0.0
        %8184 = vmatpush1.msra.mxu0 %v8127
        %8185 = vmatprep.subr.mxu0 0.0
        %8186 = vmatpush1.msra.mxu0 %v8128
        %8187 = vmatprep.subr.mxu0 0.0
        %8188 = vmatpush1.msra.mxu0 %v8129
        %8189 = vmatprep.subr.mxu0 0.0
        %8190 = vmatpush1.msra.mxu0 %v8130
        %8191 = vmatprep.subr.mxu0 0.0
        %8192 = vmatpush1.msra.mxu0 %v8131
        %8193 = vmatprep.subr.mxu0 0.0
        %8194 = vmatpush1.msra.mxu0 %v8132
        %8195 = vmatprep.subr.mxu0 0.0
        %8196 = vmatpush1.msra.mxu0 %v8133
        %8197 = vmatprep.subr.mxu0 0.0
        %8198 = vmatpush1.msra.mxu0 %v8134
        %8199 = vmatprep.subr.mxu0 0.0
        %8200 = vmatpush1.msra.mxu0 %v8135
        %8201 = vmatprep.mubr.f32.mxu0 %v8103
        %8202 = vmatmul.mubr.f32.gmra.mrb[0].mxu0 %v8102
        %v8203 = vpop.f32.mrb[0].mxu0
        %v8204 = vadd.f32 %v8136, %v8203
        %v8205 = vpop.f32.mrb[0].mxu0
        %8206 = vdwg.mxu0
        %8207 = vst [vmem:[%s893] sm:$0x1] %v8204
        %s8208 = sand.u32 %s477, 1
        %s8209 = scalar_lea.sflag [#allocation4], %s8208
        %s8210 = sand.u32 %s477, 1
        %s8211 = scalar_lea.vmem [#allocation32], %s8210
        // Predicated region
        $region177: #{convnet_forward.1} parent=99 // pred_check
          %p8212 = pneg %p487
        $region178: #{convnet_forward.1} parent=99 // pred_check_branch
          %8214 = sbr.rel (%p8212) target = $region180
        $region179: #{convnet_forward.1} parent=99 // pred_region
          %s8216 = ssub.s32 16, 16
          %8217 = vsyncadd %s8209, %s8216
          %s8218 = smul.addr %s44, 16
          %s8219 = scalar_lea.hbm %s20, %s8218
          %s8221 = sshll.u32 %s8211, 4
          %s8222 = int_to_ptr.vmem [resolvable:$true] %s8221
          %8224 = dma.vmem_to_hbm [thread:$0]  %s8222, 16, %s8219, %s8209
        $region180: #{convnet_forward.1} parent=99 // pred_fallthru
          _
      $region100: #{convnet_forward.1} parent=5 // pred_fallthru
        _
      %p8225 = scmp.le.s32.totalorder 2, %s39
      // Predicated region
      $region181: #{convnet_forward.1} parent=5 // pred_check
        %p8226 = pneg %p8225
      $region182: #{convnet_forward.1} parent=5 // pred_check_branch
        %8228 = sbr.rel (%p8226) target = $region184
      $region183: #{convnet_forward.1} parent=5 // pred_region
        %s8229 = ssub.s32 %s39, 2
        // Predicated region
        $region185: #{convnet_forward.1} parent=183 // pred_check
          %p8230 = pneg %p493
        $region186: #{convnet_forward.1} parent=183 // pred_check_branch
          %8232 = sbr.rel (%p8230) target = $region188
        $region187: #{convnet_forward.1} parent=183 // pred_region
          %s8233 = sand.u32 %s478, 1
          %s8234 = scalar_lea.sflag [#allocation4], %s8233
          %s8235 = sand.u32 %s478, 1
          %s8236 = scalar_lea.vmem [#allocation32], %s8235
          %8237 = dma.done %s8234, 16
        $region188: #{convnet_forward.1} parent=183 // pred_fallthru
          _
      $region184: #{convnet_forward.1} parent=5 // pred_fallthru
        _
    $region6: #{convnet_forward.1} parent=1 // loop_footer
      %s43 = sadd.s32 1, %s39
    $region7: #{convnet_forward.1} parent=1 // loop_footer_branch
      %38 = sbr.rel target = $region3
    $region8: #{convnet_forward.1} parent=1 // loop_exit
      _
    %8238 = vsyncpa [#allocation3], 1
    %s8239 = scalar_lea.sflag [#allocation3], 1
    %8240 = vsyncpa %s8239, 1
    %8241 = vsyncpa [#allocation6], 1
    %8242 = vsyncpa [#allocation9], 1
    %8243 = vsyncpa [#allocation12], 1
    %8244 = vsyncpa [#allocation15], 1
    %8245 = vsyncpa [#allocation18], 1
    %8246 = vsyncpa [#allocation21], 1
    %8247 = vsyncpa [#allocation24], 1
    %8248 = vsyncpa [#allocation27], 1
    %8249 = vsyncpa [#allocation30], 1
    %8250 = vsyncpa [#allocation4], 1
    %s8251 = scalar_lea.sflag [#allocation4], 1
    %8252 = vsyncpa %s8251, 1

</llo_original>
